<compile_context>
chip_gen: v5e
topology: v5e:2x2
jax: 0.10.0
libtpu: 0.0.40
codegen_flags: <defaults>
</compile_context>

<pallas_src>
import functools

import jax
import jax.numpy as jnp
from jax.experimental import pallas as pl
from jax.experimental.pallas import tpu as pltpu


def _mhsa_kernel(x_ref, wqkv_ref, wfc_ref, bqkv_ref, bfc_ref,
                 mask_cp_ref, mask_pc_ref, bd_ref, expand_ref, o_ref,
                 *, heads, compute_dtype):
    C, P = mask_cp_ref.shape          # P = heads * N packed score lanes
    N = P // heads
    Bb = x_ref.shape[0]
    R = Bb * N
    cdt = compute_dtype

    # ---- layout: lane-dense (Bb, C*N) slab -> row form (Bb*N, C) -----------
    x_ncw = x_ref[...].reshape(Bb, C, N)                        # (Bb, C, N) NCW tile
    x_rows = jnp.transpose(x_ncw, (0, 2, 1)).reshape(R, C)      # (R, C) rows, f32

    # ---- fused Q/K/V projection: ONE MXU matmul -----------------------------
    qkv = jnp.dot(x_rows.astype(cdt), wqkv_ref[...],
                  preferred_element_type=jnp.float32) + bqkv_ref[...]
    q = qkv[:, :C].reshape(Bb, N, C)                            # 32-lane aligned slices
    k = qkv[:, C:2 * C].reshape(Bb, N, C)
    v = qkv[:, 2 * C:].reshape(Bb, N, C)

    # ---- scores for ALL heads in one canonical batched matmul ---------------
    # K to contraction-major once (small (16,32) tile per batch), lane-tile the
    # `heads` copies and zero cross-head channels with the resident block mask.
    kT = jnp.transpose(k, (0, 2, 1)).astype(cdt)                # (Bb, C, N)
    k_big = jnp.tile(kT, (1, 1, heads)) * mask_cp_ref[...]      # (Bb, C, P)
    # energy[b, n, h*N + m] = sum_{c in head h} q[b,n,c] * k[b,m,c]
    # (no 1/sqrt(Dh) scaling -- matches the PyTorch module)
    energy = jnp.einsum('bnc,bcp->bnp', q.astype(cdt), k_big,
                        preferred_element_type=jnp.float32)     # (Bb, N, P)

    # ---- lane-dense segmented softmax (per head, over its N lanes) ----------
    e2 = energy.reshape(R, P)
    # per-head max: small relayout for the max ONLY, broadcast back via a tiny
    # exact selection matmul (each expand row has a single 1 per column).
    m8 = jnp.max(e2.reshape(R, heads, N), axis=-1)              # (R, heads)
    m_full = jnp.dot(m8, expand_ref[...],
                     preferred_element_type=jnp.float32)        # (R, P)
    p = jnp.exp(e2 - m_full)                                    # full 128-lane EUP occupancy
    # segmented per-head sum on the MXU via block-diagonal ones (f32 stats).
    denom = jnp.dot(p, bd_ref[...], preferred_element_type=jnp.float32)
    att = (p / denom).reshape(Bb, N, P)

    # ---- attention-weighted values (all heads at once) -----------------------
    v_big = jnp.tile(v.astype(cdt), (1, heads, 1)) * mask_pc_ref[...]   # (Bb, P, C)
    out = jnp.einsum('bnp,bpc->bnc', att.astype(cdt), v_big,
                     preferred_element_type=jnp.float32).reshape(R, C)

    # ---- final 1x1 conv + residual; back to NCW; lane-dense (Bb, C*N) store --
    y = jnp.dot(out.astype(cdt), wfc_ref[...],
                preferred_element_type=jnp.float32) + bfc_ref[...] + x_rows
    y_ncw = jnp.transpose(y.reshape(Bb, N, C), (0, 2, 1))       # (Bb, C, N)
    o_ref[...] = y_ncw.reshape(Bb, C * N).astype(o_ref.dtype)


def _round_up(a, m):
    return (a + m - 1) // m * m


def mhsa_forward(x_bcn, params, heads, compute_dtype=jnp.float32):
    """x_bcn: (B, C, N) float32, PyTorch NCW convention."""
    wq, wk, wv, wfc, bq, bk, bv, bfc = params
    B, C, N = x_bcn.shape
    assert C % heads == 0
    Dh = C // heads
    P = heads * N
    cdt = compute_dtype

    # Pack / pre-transpose weights once (host side, free, done once).
    wqkv_t = jnp.concatenate([wq.T, wk.T, wv.T], axis=1).astype(cdt)    # (C, 3C)
    bqkv = jnp.concatenate([bq, bk, bv]).reshape(1, 3 * C).astype(jnp.float32)
    wfc_t = wfc.T.astype(cdt)                                           # (C, C)
    bfc2 = bfc.reshape(1, C).astype(jnp.float32)

    # Head-structure constants, built ONCE and kept resident in VMEM
    # (constant index_map) instead of per-step iota/compare in the kernel.
    c_head = jnp.arange(C, dtype=jnp.int32) // Dh
    p_head = jnp.arange(P, dtype=jnp.int32) // N
    mask_cp = (c_head[:, None] == p_head[None, :]).astype(cdt)          # (C, P)
    mask_pc = (p_head[:, None] == c_head[None, :]).astype(cdt)          # (P, C)
    bd = (p_head[:, None] == p_head[None, :]).astype(jnp.float32)       # (P, P) block-diag ones
    expand = (jnp.arange(heads, dtype=jnp.int32)[:, None]
              == p_head[None, :]).astype(jnp.float32)                   # (heads, P)

    # Lane-dense (B, C*N) slab: free reshape of the NCW input, no HBM transpose.
    x_slab = x_bcn.reshape(B, C * N)

    # Batch block: multiple of 8, capped at 128 (Bb*N up to 2048 matmul rows,
    # ~13 MiB live f32 intermediates -- fits v7x's smaller VMEM); keep >= 2 grid
    # steps whenever possible so ("parallel",) shards across both v7x cores.
    n8 = _round_up(B, 8) // 8
    block_b = 8 * min(16, max(1, n8 // 2)) if n8 >= 2 else 8
    B_pad = _round_up(B, block_b)
    if B_pad != B:
        x_slab = jnp.pad(x_slab, ((0, B_pad - B), (0, 0)))   # padded rows dropped on output
    grid = (B_pad // block_b,)

    kernel = functools.partial(_mhsa_kernel, heads=heads, compute_dtype=cdt)

    out_slab = pl.pallas_call(
        kernel,
        out_shape=jax.ShapeDtypeStruct((B_pad, C * N), x_bcn.dtype),
        grid_spec=pltpu.PrefetchScalarGridSpec(
            num_scalar_prefetch=0,
            grid=grid,
            in_specs=[
                pl.BlockSpec((block_b, C * N), lambda g: (g, 0)),   # x slab
                pl.BlockSpec((C, 3 * C), lambda g: (0, 0)),         # fused Wqkv^T (resident)
                pl.BlockSpec((C, C), lambda g: (0, 0)),             # Wfc^T (resident)
                pl.BlockSpec((1, 3 * C), lambda g: (0, 0)),         # fused bias
                pl.BlockSpec((1, C), lambda g: (0, 0)),             # fc bias
                pl.BlockSpec((C, P), lambda g: (0, 0)),             # head mask (C, P)
                pl.BlockSpec((P, C), lambda g: (0, 0)),             # head mask (P, C)
                pl.BlockSpec((P, P), lambda g: (0, 0)),             # block-diag ones
                pl.BlockSpec((heads, P), lambda g: (0, 0)),         # head-expand selection
            ],
            out_specs=pl.BlockSpec((block_b, C * N), lambda g: (g, 0)),
        ),
        compiler_params=pltpu.CompilerParams(
            dimension_semantics=("parallel",)),
    )(x_slab, wqkv_t, wfc_t, bqkv, bfc2, mask_cp, mask_pc, bd, expand)

    # Free reshape back to NCW; drop batch padding.
    return out_slab[:B].reshape(B, C, N)


def mhsa_reference(x_bcn, params, heads):
    """Pure-JAX reference mirroring the PyTorch forward."""
    wq, wk, wv, wfc, bq, bk, bv, bfc = params
    B, C, N = x_bcn.shape
    Dh = C // heads

    def conv1x1(x, w, b):
        return jnp.einsum('oc,bcn->bon', w, x) + b[None, :, None]

    q = conv1x1(x_bcn, wq, bq).reshape(B, heads, Dh, N)
    k = conv1x1(x_bcn, wk, bk).reshape(B, heads, Dh, N)
    v = conv1x1(x_bcn, wv, bv).reshape(B, heads, Dh, N)
    energy = jnp.einsum('bhcn,bhcm->bhnm', q, k)
    att = jax.nn.softmax(energy, axis=-1)
    out = jnp.einsum('bhnm,bhcm->bhcn', att, v).reshape(B, C, N)
    return conv1x1(out, wfc, bfc) + x_bcn


if __name__ == "__main__":
    C, N, HEADS = 32, 16, 8

    key = jax.random.PRNGKey(0)
    keys = jax.random.split(key, 10)
    scale = 0.1
    wq = scale * jax.random.normal(keys[0], (C, C), jnp.float32)
    wk = scale * jax.random.normal(keys[1], (C, C), jnp.float32)
    wv = scale * jax.random.normal(keys[2], (C, C), jnp.float32)
    wfc = scale * jax.random.normal(keys[3], (C, C), jnp.float32)
    bq = scale * jax.random.normal(keys[4], (C,), jnp.float32)
    bk = scale * jax.random.normal(keys[5], (C,), jnp.float32)
    bv = scale * jax.random.normal(keys[6], (C,), jnp.float32)
    bfc = scale * jax.random.normal(keys[7], (C,), jnp.float32)
    params = (wq, wk, wv, wfc, bq, bk, bv, bfc)

    # B=16 exercises the multi-step "parallel" grid (2 blocks of 8); B=2
    # exercises the pad-to-block path (batch padded 2 -> 8, single grid step).
    for i, B in enumerate((16, 2)):
        x = jax.random.normal(keys[8 + i], (B, C, N), jnp.float32)
        ref = mhsa_reference(x, params, HEADS)

        # f32 MXU operands: exact parity with the f32 reference.
        out = mhsa_forward(x, params, HEADS)
        jax.block_until_ready(out)
        assert out.shape == (B, C, N)
        err = float(jnp.max(jnp.abs(out - ref)))
        assert err < 1e-4, f"f32 mismatch vs reference (B={B}, err={err})"

        # bf16 MXU operands (f32 accumulation, f32 softmax stats): relaxed tol.
        out_bf16 = mhsa_forward(x, params, HEADS, compute_dtype=jnp.bfloat16)
        jax.block_until_ready(out_bf16)
        err_bf16 = float(jnp.max(jnp.abs(out_bf16 - ref)))
        assert err_bf16 < 2e-1, f"bf16 mismatch vs reference (B={B}, err={err_bf16})"

    print("KERNEL_OK")
</pallas_src>

<mosaic_0001>
module attributes {stable_mosaic.version = 11 : i64} {
  func.func @_mhsa_kernel(%arg0: i32, %arg1: memref<8x512xf32, #tpu.memory_space<vmem>>, %arg2: memref<32x96xf32, #tpu.memory_space<vmem>>, %arg3: memref<32x32xf32, #tpu.memory_space<vmem>>, %arg4: memref<1x96xf32, #tpu.memory_space<vmem>>, %arg5: memref<1x32xf32, #tpu.memory_space<vmem>>, %arg6: memref<32x128xf32, #tpu.memory_space<vmem>>, %arg7: memref<128x32xf32, #tpu.memory_space<vmem>>, %arg8: memref<128x128xf32, #tpu.memory_space<vmem>>, %arg9: memref<8x128xf32, #tpu.memory_space<vmem>>, %arg10: memref<8x512xf32, #tpu.memory_space<vmem>>) attributes {dimension_semantics = [#tpu.dimension_semantics<parallel>], iteration_bounds = array<i64: 2>, scalar_prefetch = 0 : i64, scratch_operands = 0 : i64, tpu.core_type = #tpu.core_type<tc>, window_params = [{transform_indices = @transform_0, window_bounds = array<i64: 8, 512>}, {pipeline_mode = #tpu.pipeline_mode<synchronous>, transform_indices = @transform_1, window_bounds = array<i64: 32, 96>}, {pipeline_mode = #tpu.pipeline_mode<synchronous>, transform_indices = @transform_2, window_bounds = array<i64: 32, 32>}, {pipeline_mode = #tpu.pipeline_mode<synchronous>, transform_indices = @transform_3, window_bounds = array<i64: 1, 96>}, {pipeline_mode = #tpu.pipeline_mode<synchronous>, transform_indices = @transform_4, window_bounds = array<i64: 1, 32>}, {pipeline_mode = #tpu.pipeline_mode<synchronous>, transform_indices = @transform_5, window_bounds = array<i64: 32, 128>}, {pipeline_mode = #tpu.pipeline_mode<synchronous>, transform_indices = @transform_6, window_bounds = array<i64: 128, 32>}, {pipeline_mode = #tpu.pipeline_mode<synchronous>, transform_indices = @transform_7, window_bounds = array<i64: 128, 128>}, {pipeline_mode = #tpu.pipeline_mode<synchronous>, transform_indices = @transform_8, window_bounds = array<i64: 8, 128>}, {transform_indices = @transform_9, window_bounds = array<i64: 8, 512>}]} {
    %c0 = arith.constant 0 : index
    %c0_0 = arith.constant 0 : index
    %0 = vector.load %arg1[%c0, %c0_0] : memref<8x512xf32, #tpu.memory_space<vmem>>, vector<8x512xf32>
    %1 = vector.shape_cast %0 : vector<8x512xf32> to vector<8x32x16xf32>
    %2 = tpu.transpose %1, [0, 2, 1] : vector<8x32x16xf32> -> vector<8x16x32xf32>
    %3 = vector.shape_cast %2 : vector<8x16x32xf32> to vector<128x32xf32>
    %c0_1 = arith.constant 0 : index
    %c0_2 = arith.constant 0 : index
    %4 = vector.load %arg2[%c0_1, %c0_2] : memref<32x96xf32, #tpu.memory_space<vmem>>, vector<32x96xf32>
    %cst = arith.constant dense<0.000000e+00> : vector<128x96xf32>
    %5 = tpu.matmul %3, %4, %cst {dimension_numbers = #tpu.dot_dimension_numbers<[1], [0], [0], [1], [0, 0, 1, 1], [], []>} : vector<128x32xf32>, vector<32x96xf32>, vector<128x96xf32> -> vector<128x96xf32>
    %c0_3 = arith.constant 0 : index
    %c0_4 = arith.constant 0 : index
    %6 = vector.load %arg4[%c0_3, %c0_4] : memref<1x96xf32, #tpu.memory_space<vmem>>, vector<1x96xf32>
    %7 = vector.broadcast %6 : vector<1x96xf32> to vector<128x96xf32>
    %8 = arith.addf %5, %7 : vector<128x96xf32>
    %9 = vector.extract_strided_slice %8 {offsets = [0, 0], sizes = [128, 32], strides = [1, 1]} : vector<128x96xf32> to vector<128x32xf32>
    %10 = vector.shape_cast %9 : vector<128x32xf32> to vector<8x16x32xf32>
    %11 = vector.extract_strided_slice %8 {offsets = [0, 32], sizes = [128, 32], strides = [1, 1]} : vector<128x96xf32> to vector<128x32xf32>
    %12 = vector.shape_cast %11 : vector<128x32xf32> to vector<8x16x32xf32>
    %13 = vector.extract_strided_slice %8 {offsets = [0, 64], sizes = [128, 32], strides = [1, 1]} : vector<128x96xf32> to vector<128x32xf32>
    %14 = vector.shape_cast %13 : vector<128x32xf32> to vector<8x16x32xf32>
    %15 = tpu.transpose %12, [0, 2, 1] : vector<8x16x32xf32> -> vector<8x32x16xf32>
    %16 = tpu.concatenate %15, %15, %15, %15, %15, %15, %15, %15 in 2 : vector<8x32x16xf32>, vector<8x32x16xf32>, vector<8x32x16xf32>, vector<8x32x16xf32>, vector<8x32x16xf32>, vector<8x32x16xf32>, vector<8x32x16xf32>, vector<8x32x16xf32> -> vector<8x32x128xf32>
    %c0_5 = arith.constant 0 : index
    %c0_6 = arith.constant 0 : index
    %17 = vector.load %arg6[%c0_5, %c0_6] : memref<32x128xf32, #tpu.memory_space<vmem>>, vector<32x128xf32>
    %18 = vector.shape_cast %17 : vector<32x128xf32> to vector<1x32x128xf32>
    %19 = vector.broadcast %18 : vector<1x32x128xf32> to vector<8x32x128xf32>
    %20 = arith.mulf %16, %19 : vector<8x32x128xf32>
    "tpu.trace_start"() <{level = 10 : i32, message = "bnc,bcp->bnp"}> : () -> ()
    %cst_7 = arith.constant dense<0.000000e+00> : vector<8x16x128xf32>
    %21 = tpu.matmul %10, %20, %cst_7 {dimension_numbers = #tpu.dot_dimension_numbers<[2], [1], [1], [2], [0, 0, 0, 1, 1, 2], [0], [0]>} : vector<8x16x32xf32>, vector<8x32x128xf32>, vector<8x16x128xf32> -> vector<8x16x128xf32>
    "tpu.trace_stop"() : () -> ()
    %22 = vector.shape_cast %21 : vector<8x16x128xf32> to vector<128x128xf32>
    %23 = vector.shape_cast %22 : vector<128x128xf32> to vector<128x8x16xf32>
    %cst_8 = arith.constant dense<0xFF800000> : vector<128x8xf32>
    %24 = vector.multi_reduction <maximumf>, %23, %cst_8 [2] : vector<128x8x16xf32> to vector<128x8xf32>
    %c0_9 = arith.constant 0 : index
    %c0_10 = arith.constant 0 : index
    %25 = vector.load %arg9[%c0_9, %c0_10] : memref<8x128xf32, #tpu.memory_space<vmem>>, vector<8x128xf32>
    %cst_11 = arith.constant dense<0.000000e+00> : vector<128x128xf32>
    %26 = tpu.matmul %24, %25, %cst_11 {dimension_numbers = #tpu.dot_dimension_numbers<[1], [0], [0], [1], [0, 0, 1, 1], [], []>} : vector<128x8xf32>, vector<8x128xf32>, vector<128x128xf32> -> vector<128x128xf32>
    %27 = arith.subf %22, %26 : vector<128x128xf32>
    %28 = math.exp %27 : vector<128x128xf32>
    %c0_12 = arith.constant 0 : index
    %c0_13 = arith.constant 0 : index
    %29 = vector.load %arg8[%c0_12, %c0_13] : memref<128x128xf32, #tpu.memory_space<vmem>>, vector<128x128xf32>
    %cst_14 = arith.constant dense<0.000000e+00> : vector<128x128xf32>
    %30 = tpu.matmul %28, %29, %cst_14 {dimension_numbers = #tpu.dot_dimension_numbers<[1], [0], [0], [1], [0, 0, 1, 1], [], []>} : vector<128x128xf32>, vector<128x128xf32>, vector<128x128xf32> -> vector<128x128xf32>
    %31 = arith.divf %28, %30 : vector<128x128xf32>
    %32 = vector.shape_cast %31 : vector<128x128xf32> to vector<8x16x128xf32>
    %33 = tpu.concatenate %14, %14, %14, %14, %14, %14, %14, %14 in 1 : vector<8x16x32xf32>, vector<8x16x32xf32>, vector<8x16x32xf32>, vector<8x16x32xf32>, vector<8x16x32xf32>, vector<8x16x32xf32>, vector<8x16x32xf32>, vector<8x16x32xf32> -> vector<8x128x32xf32>
    %c0_15 = arith.constant 0 : index
    %c0_16 = arith.constant 0 : index
    %34 = vector.load %arg7[%c0_15, %c0_16] : memref<128x32xf32, #tpu.memory_space<vmem>>, vector<128x32xf32>
    %35 = vector.shape_cast %34 : vector<128x32xf32> to vector<1x128x32xf32>
    %36 = vector.broadcast %35 : vector<1x128x32xf32> to vector<8x128x32xf32>
    %37 = arith.mulf %33, %36 : vector<8x128x32xf32>
    "tpu.trace_start"() <{level = 10 : i32, message = "bnp,bpc->bnc"}> : () -> ()
    %cst_17 = arith.constant dense<0.000000e+00> : vector<8x16x32xf32>
    %38 = tpu.matmul %32, %37, %cst_17 {dimension_numbers = #tpu.dot_dimension_numbers<[2], [1], [1], [2], [0, 0, 0, 1, 1, 2], [0], [0]>} : vector<8x16x128xf32>, vector<8x128x32xf32>, vector<8x16x32xf32> -> vector<8x16x32xf32>
    "tpu.trace_stop"() : () -> ()
    %39 = vector.shape_cast %38 : vector<8x16x32xf32> to vector<128x32xf32>
    %c0_18 = arith.constant 0 : index
    %c0_19 = arith.constant 0 : index
    %40 = vector.load %arg3[%c0_18, %c0_19] : memref<32x32xf32, #tpu.memory_space<vmem>>, vector<32x32xf32>
    %cst_20 = arith.constant dense<0.000000e+00> : vector<128x32xf32>
    %41 = tpu.matmul %39, %40, %cst_20 {dimension_numbers = #tpu.dot_dimension_numbers<[1], [0], [0], [1], [0, 0, 1, 1], [], []>} : vector<128x32xf32>, vector<32x32xf32>, vector<128x32xf32> -> vector<128x32xf32>
    %c0_21 = arith.constant 0 : index
    %c0_22 = arith.constant 0 : index
    %42 = vector.load %arg5[%c0_21, %c0_22] : memref<1x32xf32, #tpu.memory_space<vmem>>, vector<1x32xf32>
    %43 = vector.broadcast %42 : vector<1x32xf32> to vector<128x32xf32>
    %44 = arith.addf %41, %43 : vector<128x32xf32>
    %45 = arith.addf %44, %3 : vector<128x32xf32>
    %46 = vector.shape_cast %45 : vector<128x32xf32> to vector<8x16x32xf32>
    %47 = tpu.transpose %46, [0, 2, 1] : vector<8x16x32xf32> -> vector<8x32x16xf32>
    %48 = vector.shape_cast %47 : vector<8x32x16xf32> to vector<8x512xf32>
    %c0_23 = arith.constant 0 : index
    %c0_24 = arith.constant 0 : index
    %49 = vector.load %arg10[%c0_23, %c0_24] : memref<8x512xf32, #tpu.memory_space<vmem>>, vector<8x512xf32>
    tpu.vector_store %arg10[%c0_23, %c0_24], %48 {strides = array<i32>} : memref<8x512xf32, #tpu.memory_space<vmem>>, vector<8x512xf32>,
    return
  }
  func.func @transform_0(%arg0: i32) -> (i32, i32) {
    %c0_i32 = arith.constant 0 : i32
    %c0_i32_0 = arith.constant 0 : i32
    return %arg0, %c0_i32 : i32, i32
  }
  func.func @transform_1(%arg0: i32) -> (i32, i32) {
    %c0_i32 = arith.constant 0 : i32
    %c0_i32_0 = arith.constant 0 : i32
    %c0_i32_1 = arith.constant 0 : i32
    return %c0_i32, %c0_i32_0 : i32, i32
  }
  func.func @transform_2(%arg0: i32) -> (i32, i32) {
    %c0_i32 = arith.constant 0 : i32
    %c0_i32_0 = arith.constant 0 : i32
    %c0_i32_1 = arith.constant 0 : i32
    return %c0_i32, %c0_i32_0 : i32, i32
  }
  func.func @transform_3(%arg0: i32) -> (i32, i32) {
    %c0_i32 = arith.constant 0 : i32
    %c0_i32_0 = arith.constant 0 : i32
    %c0_i32_1 = arith.constant 0 : i32
    return %c0_i32, %c0_i32_0 : i32, i32
  }
  func.func @transform_4(%arg0: i32) -> (i32, i32) {
    %c0_i32 = arith.constant 0 : i32
    %c0_i32_0 = arith.constant 0 : i32
    %c0_i32_1 = arith.constant 0 : i32
    return %c0_i32, %c0_i32_0 : i32, i32
  }
  func.func @transform_5(%arg0: i32) -> (i32, i32) {
    %c0_i32 = arith.constant 0 : i32
    %c0_i32_0 = arith.constant 0 : i32
    %c0_i32_1 = arith.constant 0 : i32
    return %c0_i32, %c0_i32_0 : i32, i32
  }
  func.func @transform_6(%arg0: i32) -> (i32, i32) {
    %c0_i32 = arith.constant 0 : i32
    %c0_i32_0 = arith.constant 0 : i32
    %c0_i32_1 = arith.constant 0 : i32
    return %c0_i32, %c0_i32_0 : i32, i32
  }
  func.func @transform_7(%arg0: i32) -> (i32, i32) {
    %c0_i32 = arith.constant 0 : i32
    %c0_i32_0 = arith.constant 0 : i32
    %c0_i32_1 = arith.constant 0 : i32
    return %c0_i32, %c0_i32_0 : i32, i32
  }
  func.func @transform_8(%arg0: i32) -> (i32, i32) {
    %c0_i32 = arith.constant 0 : i32
    %c0_i32_0 = arith.constant 0 : i32
    %c0_i32_1 = arith.constant 0 : i32
    return %c0_i32, %c0_i32_0 : i32, i32
  }
  func.func @transform_9(%arg0: i32) -> (i32, i32) {
    %c0_i32 = arith.constant 0 : i32
    %c0_i32_0 = arith.constant 0 : i32
    return %arg0, %c0_i32 : i32, i32
  }
}

</mosaic_0001>

<llo_original>
// kernel: tpu_custom_call.1
$region0: #{tpu_custom_call.1}
  #allocation0 [shape = 'u32[]', space=smem, size = 0x4, offset = 0x4, fixed_abs, tag = 'smem constant byte address 0x4 - core index']
  #allocation1 [shape = 'u32[72,128]{1,0:T(1,128)}', space=vmem, size = 0x9000, scoped, tag = 'internal scratch']
  %s0 = inlined_call_operand.hbm [shape: f32[16,512], index: 0, kind: input, shape index: {}]
  %s1 = inlined_call_operand.vmem [shape: f32[32,96], index: 1, kind: input, shape index: {}]
  %s2 = inlined_call_operand.hbm [shape: f32[32,32], index: 2, kind: input, shape index: {}]
  %s3 = inlined_call_operand.vmem [shape: f32[1,96], index: 3, kind: input, shape index: {}]
  %s4 = inlined_call_operand.vmem [shape: f32[1,32], index: 4, kind: input, shape index: {}]
  %s5 = inlined_call_operand.hbm [shape: f32[32,128], index: 5, kind: input, shape index: {}]
  %s6 = inlined_call_operand.vmem [shape: f32[128,32], index: 6, kind: input, shape index: {}]
  %s7 = inlined_call_operand.vmem [shape: f32[128,128], index: 7, kind: input, shape index: {}]
  %s8 = inlined_call_operand.hbm [shape: f32[8,128], index: 8, kind: input, shape index: {}]
  %s9 = inlined_call_operand.hbm [shape: f32[16,512], index: 9, kind: output, shape index: {}]
  %s10 = sld [smem:[#allocation0]]
  $region85: #{tpu_custom_call.1} parent=0
    _
  %s12 = ssub.s32 1, %s10
  %s13 = scalar_select 0, %s12, %s10
  $region1: #{tpu_custom_call.1} parent=0
    #allocation2 [shape = 'u8[32768]{0}', space=vmem, size = 0x8000, scoped, tag = 'input window, operand 0']
    #allocation3 [shape = 's32[2]{0}', space=sflag, size = 0x8, scoped, tag = 'scoped memory for tpu_custom_call.1']
    #allocation4 [shape = 's32[2]{0}', space=sflag, size = 0x8, scoped, tag = 'scoped memory for tpu_custom_call.1']
    #allocation5 [shape = 'u8[16384]{0}', space=vmem, size = 0x4000, scoped, tag = 'input window, operand 2, single buffered']
    #allocation6 [shape = 's32[1]{0}', space=sflag, size = 0x4, scoped, tag = 'scoped memory for tpu_custom_call.1']
    #allocation7 [shape = 'u8[16384]{0}', space=vmem, size = 0x4000, scoped, tag = 'input window, operand 5, single buffered']
    #allocation8 [shape = 'u8[4096]{0}', space=vmem, size = 0x1000, scoped, tag = 'input window, operand 8, single buffered']
    #allocation9 [shape = 's32[1]{0}', space=sflag, size = 0x4, scoped, tag = 'scoped memory for tpu_custom_call.1']
    #allocation10 [shape = 'u8[32768]{0}', space=vmem, size = 0x8000, scoped, tag = 'output window, operand 0']
    %14 = vsyncpa [#allocation3], 0
    %s15 = scalar_lea.sflag [#allocation3], 1
    %16 = vsyncpa %s15, 0
    %17 = vsyncpa [#allocation6], 0
    %18 = vsyncpa [#allocation9], 0
    %19 = vsyncpa [#allocation4], 0
    %s20 = scalar_lea.sflag [#allocation4], 1
    %21 = vsyncpa %s20, 0
    loop: start=0, step=1, limit=4
    $region2: #{tpu_custom_call.1} parent=1 // loop_pre_header
      _
    $region3: #{tpu_custom_call.1} parent=1 // loop_header
      %s23 = sphi 0, %s27
      %p24 = scmp.ge.s32.totalorder %s23, 4
      %s33 = sphi 0, %s35
      %s36 = sphi 0, %s33
      %s37 = sphi 0, %s36
      %s53 = sphi 0, %s37
      %s57 = sphi 0, %s57
      %s59 = sphi 0, %s57
      %s60 = sphi 0, %s59
      %s74 = sphi 0, %s60
      %s78 = sphi 0, %s78
      %s80 = sphi 0, %s78
      %s81 = sphi 0, %s80
      %s95 = sphi 0, %s81
      %s99 = sphi 0, %s99
      %s101 = sphi 0, %s99
      %s102 = sphi 0, %s101
      %s116 = sphi 0, %s102
      %s120 = sphi 0, %s120
      %s122 = sphi 0, %s120
      %s123 = sphi 0, %s122
      %s137 = sphi 0, %s123
      %s141 = sphi 0, %s141
      %s143 = sphi 0, %s141
      %s144 = sphi 0, %s143
      %s158 = sphi 0, %s144
      %s162 = sphi 0, %s162
      %s164 = sphi 0, %s162
      %s165 = sphi 0, %s164
      %s179 = sphi 0, %s165
      %s183 = sphi 0, %s183
      %s185 = sphi 0, %s183
      %s186 = sphi 0, %s185
      %s200 = sphi 0, %s186
      %s204 = sphi 0, %s204
      %s206 = sphi 0, %s204
      %s207 = sphi 0, %s206
      %s221 = sphi 0, %s207
      %s227 = sphi 0, %s229
      %s230 = sphi 0, %s227
      %s231 = sphi 0, %s230
      %s247 = sphi 0, %s231
    $region4: #{tpu_custom_call.1} parent=1 // loop_header_branch
      %26 = sbr.rel (%p24) target = $region8
    $region5: #{tpu_custom_call.1} parent=1 // loop_body
      %s28 = ssub.s32 %s23, 1
      %s29 = ssub.s32 %s23, 2
      %s30 = sadd.s32 %s23, 1
      %s31 = ssub.s32 %s23, %s30
      %p32 = scmp.eq.s32.totalorder %s31, 0
      %s34 = sadd.s32 %s33, 1
      %s35 = scalar_select %p32, %s33, %s34
      %p38 = pneg %p32
      %p39 = scmp.eq.s32.totalorder %s23, 1
      %p40 = por %p38, %p39
      %p41 = scmp.ne.s32.totalorder %s33, %s36
      %p42 = scmp.eq.s32.totalorder %s23, 0
      %p43 = por %p41, %p42
      %p44 = scmp.ne.s32.totalorder %s33, %s36
      %p45 = scmp.eq.s32.totalorder %s28, 1
      %p46 = por %p44, %p45
      %p47 = scmp.ne.s32.totalorder %s36, %s37
      %p48 = scmp.eq.s32.totalorder %s28, 0
      %p49 = por %p47, %p48
      %p50 = scmp.ne.s32.totalorder %s36, %s37
      %p51 = scmp.eq.s32.totalorder %s29, 1
      %p52 = por %p50, %p51
      %p54 = scmp.ne.s32.totalorder %s37, %s53
      %p55 = scmp.eq.s32.totalorder %s29, 0
      %p56 = por %p54, %p55
      %s58 = sadd.s32 %s57, 1
      %p61 = scmp.eq.s32.totalorder %s23, 1
      %p62 = scmp.ne.s32.totalorder %s57, %s59
      %p63 = scmp.eq.s32.totalorder %s23, 0
      %p64 = por %p62, %p63
      %p65 = scmp.ne.s32.totalorder %s57, %s59
      %p66 = scmp.eq.s32.totalorder %s28, 1
      %p67 = por %p65, %p66
      %p68 = scmp.ne.s32.totalorder %s59, %s60
      %p69 = scmp.eq.s32.totalorder %s28, 0
      %p70 = por %p68, %p69
      %p71 = scmp.ne.s32.totalorder %s59, %s60
      %p72 = scmp.eq.s32.totalorder %s29, 1
      %p73 = por %p71, %p72
      %p75 = scmp.ne.s32.totalorder %s60, %s74
      %p76 = scmp.eq.s32.totalorder %s29, 0
      %p77 = por %p75, %p76
      %s79 = sadd.s32 %s78, 1
      %p82 = scmp.eq.s32.totalorder %s23, 1
      %p83 = scmp.ne.s32.totalorder %s78, %s80
      %p84 = scmp.eq.s32.totalorder %s23, 0
      %p85 = por %p83, %p84
      %p86 = scmp.ne.s32.totalorder %s78, %s80
      %p87 = scmp.eq.s32.totalorder %s28, 1
      %p88 = por %p86, %p87
      %p89 = scmp.ne.s32.totalorder %s80, %s81
      %p90 = scmp.eq.s32.totalorder %s28, 0
      %p91 = por %p89, %p90
      %p92 = scmp.ne.s32.totalorder %s80, %s81
      %p93 = scmp.eq.s32.totalorder %s29, 1
      %p94 = por %p92, %p93
      %p96 = scmp.ne.s32.totalorder %s81, %s95
      %p97 = scmp.eq.s32.totalorder %s29, 0
      %p98 = por %p96, %p97
      %s100 = sadd.s32 %s99, 1
      %p103 = scmp.eq.s32.totalorder %s23, 1
      %p104 = scmp.ne.s32.totalorder %s99, %s101
      %p105 = scmp.eq.s32.totalorder %s23, 0
      %p106 = por %p104, %p105
      %p107 = scmp.ne.s32.totalorder %s99, %s101
      %p108 = scmp.eq.s32.totalorder %s28, 1
      %p109 = por %p107, %p108
      %p110 = scmp.ne.s32.totalorder %s101, %s102
      %p111 = scmp.eq.s32.totalorder %s28, 0
      %p112 = por %p110, %p111
      %p113 = scmp.ne.s32.totalorder %s101, %s102
      %p114 = scmp.eq.s32.totalorder %s29, 1
      %p115 = por %p113, %p114
      %p117 = scmp.ne.s32.totalorder %s102, %s116
      %p118 = scmp.eq.s32.totalorder %s29, 0
      %p119 = por %p117, %p118
      %s121 = sadd.s32 %s120, 1
      %p124 = scmp.eq.s32.totalorder %s23, 1
      %p125 = scmp.ne.s32.totalorder %s120, %s122
      %p126 = scmp.eq.s32.totalorder %s23, 0
      %p127 = por %p125, %p126
      %p128 = scmp.ne.s32.totalorder %s120, %s122
      %p129 = scmp.eq.s32.totalorder %s28, 1
      %p130 = por %p128, %p129
      %p131 = scmp.ne.s32.totalorder %s122, %s123
      %p132 = scmp.eq.s32.totalorder %s28, 0
      %p133 = por %p131, %p132
      %p134 = scmp.ne.s32.totalorder %s122, %s123
      %p135 = scmp.eq.s32.totalorder %s29, 1
      %p136 = por %p134, %p135
      %p138 = scmp.ne.s32.totalorder %s123, %s137
      %p139 = scmp.eq.s32.totalorder %s29, 0
      %p140 = por %p138, %p139
      %s142 = sadd.s32 %s141, 1
      %p145 = scmp.eq.s32.totalorder %s23, 1
      %p146 = scmp.ne.s32.totalorder %s141, %s143
      %p147 = scmp.eq.s32.totalorder %s23, 0
      %p148 = por %p146, %p147
      %p149 = scmp.ne.s32.totalorder %s141, %s143
      %p150 = scmp.eq.s32.totalorder %s28, 1
      %p151 = por %p149, %p150
      %p152 = scmp.ne.s32.totalorder %s143, %s144
      %p153 = scmp.eq.s32.totalorder %s28, 0
      %p154 = por %p152, %p153
      %p155 = scmp.ne.s32.totalorder %s143, %s144
      %p156 = scmp.eq.s32.totalorder %s29, 1
      %p157 = por %p155, %p156
      %p159 = scmp.ne.s32.totalorder %s144, %s158
      %p160 = scmp.eq.s32.totalorder %s29, 0
      %p161 = por %p159, %p160
      %s163 = sadd.s32 %s162, 1
      %p166 = scmp.eq.s32.totalorder %s23, 1
      %p167 = scmp.ne.s32.totalorder %s162, %s164
      %p168 = scmp.eq.s32.totalorder %s23, 0
      %p169 = por %p167, %p168
      %p170 = scmp.ne.s32.totalorder %s162, %s164
      %p171 = scmp.eq.s32.totalorder %s28, 1
      %p172 = por %p170, %p171
      %p173 = scmp.ne.s32.totalorder %s164, %s165
      %p174 = scmp.eq.s32.totalorder %s28, 0
      %p175 = por %p173, %p174
      %p176 = scmp.ne.s32.totalorder %s164, %s165
      %p177 = scmp.eq.s32.totalorder %s29, 1
      %p178 = por %p176, %p177
      %p180 = scmp.ne.s32.totalorder %s165, %s179
      %p181 = scmp.eq.s32.totalorder %s29, 0
      %p182 = por %p180, %p181
      %s184 = sadd.s32 %s183, 1
      %p187 = scmp.eq.s32.totalorder %s23, 1
      %p188 = scmp.ne.s32.totalorder %s183, %s185
      %p189 = scmp.eq.s32.totalorder %s23, 0
      %p190 = por %p188, %p189
      %p191 = scmp.ne.s32.totalorder %s183, %s185
      %p192 = scmp.eq.s32.totalorder %s28, 1
      %p193 = por %p191, %p192
      %p194 = scmp.ne.s32.totalorder %s185, %s186
      %p195 = scmp.eq.s32.totalorder %s28, 0
      %p196 = por %p194, %p195
      %p197 = scmp.ne.s32.totalorder %s185, %s186
      %p198 = scmp.eq.s32.totalorder %s29, 1
      %p199 = por %p197, %p198
      %p201 = scmp.ne.s32.totalorder %s186, %s200
      %p202 = scmp.eq.s32.totalorder %s29, 0
      %p203 = por %p201, %p202
      %s205 = sadd.s32 %s204, 1
      %p208 = scmp.eq.s32.totalorder %s23, 1
      %p209 = scmp.ne.s32.totalorder %s204, %s206
      %p210 = scmp.eq.s32.totalorder %s23, 0
      %p211 = por %p209, %p210
      %p212 = scmp.ne.s32.totalorder %s204, %s206
      %p213 = scmp.eq.s32.totalorder %s28, 1
      %p214 = por %p212, %p213
      %p215 = scmp.ne.s32.totalorder %s206, %s207
      %p216 = scmp.eq.s32.totalorder %s28, 0
      %p217 = por %p215, %p216
      %p218 = scmp.ne.s32.totalorder %s206, %s207
      %p219 = scmp.eq.s32.totalorder %s29, 1
      %p220 = por %p218, %p219
      %p222 = scmp.ne.s32.totalorder %s207, %s221
      %p223 = scmp.eq.s32.totalorder %s29, 0
      %p224 = por %p222, %p223
      %s225 = ssub.s32 %s23, %s30
      %p226 = scmp.eq.s32.totalorder %s225, 0
      %s228 = sadd.s32 %s227, 1
      %s229 = scalar_select %p226, %s227, %s228
      %p232 = pneg %p226
      %p233 = scmp.eq.s32.totalorder %s23, 1
      %p234 = por %p232, %p233
      %p235 = scmp.ne.s32.totalorder %s227, %s230
      %p236 = scmp.eq.s32.totalorder %s23, 0
      %p237 = por %p235, %p236
      %p238 = scmp.ne.s32.totalorder %s227, %s230
      %p239 = scmp.eq.s32.totalorder %s28, 1
      %p240 = por %p238, %p239
      %p241 = scmp.ne.s32.totalorder %s230, %s231
      %p242 = scmp.eq.s32.totalorder %s28, 0
      %p243 = por %p241, %p242
      %p244 = scmp.ne.s32.totalorder %s230, %s231
      %p245 = scmp.eq.s32.totalorder %s29, 1
      %p246 = por %p244, %p245
      %p248 = scmp.ne.s32.totalorder %s231, %s247
      %p249 = scmp.eq.s32.totalorder %s29, 0
      %p250 = por %p248, %p249
      %p251 = scmp.le.s32.totalorder 1, %s23
      %p252 = scmp.lt.s32.totalorder %s23, 3
      %p253 = pnand %p251, %p252
      %p254 = pneg %p253
      // Predicated region
      $region9: #{tpu_custom_call.1} parent=5 // pred_check
        _
      $region10: #{tpu_custom_call.1} parent=5 // pred_check_branch
        %256 = sbr.rel (%p253) target = $region12
      $region11: #{tpu_custom_call.1} parent=5 // pred_region
        %s257 = ssub.s32 %s23, 1
        // Predicated region
        $region13: #{tpu_custom_call.1} parent=11 // pred_check
          %p258 = pneg %p70
        $region14: #{tpu_custom_call.1} parent=11 // pred_check_branch
          %260 = sbr.rel (%p258) target = $region16
        $region15: #{tpu_custom_call.1} parent=11 // pred_region
          _
        $region16: #{tpu_custom_call.1} parent=11 // pred_fallthru
          _
        // Predicated region
        $region17: #{tpu_custom_call.1} parent=11 // pred_check
          %p261 = pneg %p91
        $region18: #{tpu_custom_call.1} parent=11 // pred_check_branch
          %263 = sbr.rel (%p261) target = $region20
        $region19: #{tpu_custom_call.1} parent=11 // pred_region
          %265 = vsyncadd [#allocation6], 0
          %s266 = sshll.u32 %s2, 4
          %s267 = int_to_ptr.hbm [resolvable:$true] %s266
          %s268 = sshll.u32 [#allocation5], 4
          %s269 = int_to_ptr.vmem [resolvable:$true] %s268
          %274 = dma.hbm_to_vmem [thread:$0]  %s267, 512, %s269, [#allocation6], 128, 128, 8
        $region20: #{tpu_custom_call.1} parent=11 // pred_fallthru
          _
        // Predicated region
        $region21: #{tpu_custom_call.1} parent=11 // pred_check
          %p275 = pneg %p112
        $region22: #{tpu_custom_call.1} parent=11 // pred_check_branch
          %277 = sbr.rel (%p275) target = $region24
        $region23: #{tpu_custom_call.1} parent=11 // pred_region
          _
        $region24: #{tpu_custom_call.1} parent=11 // pred_fallthru
          _
        // Predicated region
        $region25: #{tpu_custom_call.1} parent=11 // pred_check
          %p278 = pneg %p133
        $region26: #{tpu_custom_call.1} parent=11 // pred_check_branch
          %280 = sbr.rel (%p278) target = $region28
        $region27: #{tpu_custom_call.1} parent=11 // pred_region
          _
        $region28: #{tpu_custom_call.1} parent=11 // pred_fallthru
          _
        // Predicated region
        $region29: #{tpu_custom_call.1} parent=11 // pred_check
          %p281 = pneg %p154
        $region30: #{tpu_custom_call.1} parent=11 // pred_check_branch
          %283 = sbr.rel (%p281) target = $region32
        $region31: #{tpu_custom_call.1} parent=11 // pred_region
          %285 = vsyncadd [#allocation6], 0
          %s286 = sshll.u32 %s5, 4
          %s287 = int_to_ptr.hbm [resolvable:$true] %s286
          %s288 = sshll.u32 [#allocation7], 4
          %s289 = int_to_ptr.vmem [resolvable:$true] %s288
          %294 = dma.hbm_to_vmem [thread:$0]  %s287, 512, %s289, [#allocation6], 128, 128, 8
        $region32: #{tpu_custom_call.1} parent=11 // pred_fallthru
          _
        // Predicated region
        $region33: #{tpu_custom_call.1} parent=11 // pred_check
          %p295 = pneg %p175
        $region34: #{tpu_custom_call.1} parent=11 // pred_check_branch
          %297 = sbr.rel (%p295) target = $region36
        $region35: #{tpu_custom_call.1} parent=11 // pred_region
          _
        $region36: #{tpu_custom_call.1} parent=11 // pred_fallthru
          _
        // Predicated region
        $region37: #{tpu_custom_call.1} parent=11 // pred_check
          %p298 = pneg %p196
        $region38: #{tpu_custom_call.1} parent=11 // pred_check_branch
          %300 = sbr.rel (%p298) target = $region40
        $region39: #{tpu_custom_call.1} parent=11 // pred_region
          _
        $region40: #{tpu_custom_call.1} parent=11 // pred_fallthru
          _
        // Predicated region
        $region41: #{tpu_custom_call.1} parent=11 // pred_check
          %p301 = pneg %p217
        $region42: #{tpu_custom_call.1} parent=11 // pred_check_branch
          %303 = sbr.rel (%p301) target = $region44
        $region43: #{tpu_custom_call.1} parent=11 // pred_region
          %305 = vsyncadd [#allocation9], 0
          %s307 = sshll.u32 %s8, 4
          %s308 = int_to_ptr.hbm [resolvable:$true] %s307
          %s309 = sshll.u32 [#allocation8], 4
          %s310 = int_to_ptr.vmem [resolvable:$true] %s309
          %312 = dma.hbm_to_vmem [thread:$0]  %s308, 128, %s310, [#allocation9]
        $region44: #{tpu_custom_call.1} parent=11 // pred_fallthru
          _
      $region12: #{tpu_custom_call.1} parent=5 // pred_fallthru
        _
      %p313 = scmp.lt.s32.totalorder %s23, 2
      // Predicated region
      $region45: #{tpu_custom_call.1} parent=5 // pred_check
        %p314 = pneg %p313
      $region46: #{tpu_custom_call.1} parent=5 // pred_check_branch
        %316 = sbr.rel (%p314) target = $region48
      $region47: #{tpu_custom_call.1} parent=5 // pred_region
        // Predicated region
        $region49: #{tpu_custom_call.1} parent=47 // pred_check
          %p317 = pneg %p43
        $region50: #{tpu_custom_call.1} parent=47 // pred_check_branch
          %319 = sbr.rel (%p317) target = $region52
        $region51: #{tpu_custom_call.1} parent=47 // pred_region
          %s320 = sand.u32 %s33, 1
          %s321 = scalar_lea.sflag [#allocation3], %s320
          %s322 = sand.u32 %s33, 1
          %s323 = smul.addr %s322, 32
          %s324 = scalar_lea.vmem [#allocation2], %s323
          %326 = vsyncadd %s321, 0
          %s327 = smul.addr %s23, 4
          %s328 = smul.addr %s327, 8
          %s329 = scalar_lea.hbm %s0, %s328
          %s331 = sshll.u32 %s329, 4
          %s332 = int_to_ptr.hbm [resolvable:$true] %s331
          %s333 = sshll.u32 %s324, 4
          %s334 = int_to_ptr.vmem [resolvable:$true] %s333
          %336 = dma.hbm_to_vmem [thread:$0]  %s332, 512, %s334, %s321
        $region52: #{tpu_custom_call.1} parent=47 // pred_fallthru
          _
      $region48: #{tpu_custom_call.1} parent=5 // pred_fallthru
        _
      %p337 = scmp.le.s32.totalorder 1, %s23
      %p338 = scmp.lt.s32.totalorder %s23, 3
      %p339 = pnand %p337, %p338
      %p340 = pneg %p339
      // Predicated region
      $region53: #{tpu_custom_call.1} parent=5 // pred_check
        _
      $region54: #{tpu_custom_call.1} parent=5 // pred_check_branch
        %342 = sbr.rel (%p339) target = $region56
      $region55: #{tpu_custom_call.1} parent=5 // pred_region
        %s343 = ssub.s32 %s23, 1
        %s344 = sand.u32 %s36, 1
        %s345 = scalar_lea.sflag [#allocation3], %s344
        %s346 = sand.u32 %s36, 1
        %s347 = smul.addr %s346, 32
        %s348 = scalar_lea.vmem [#allocation2], %s347
        // Predicated region
        $region57: #{tpu_custom_call.1} parent=55 // pred_check
          %p349 = pneg %p49
        $region58: #{tpu_custom_call.1} parent=55 // pred_check_branch
          %351 = sbr.rel (%p349) target = $region60
        $region59: #{tpu_custom_call.1} parent=55 // pred_region
          %353 = dma.done %s345, 512
        $region60: #{tpu_custom_call.1} parent=55 // pred_fallthru
          _
        // Predicated region
        $region61: #{tpu_custom_call.1} parent=55 // pred_check
          %p354 = pneg %p91
        $region62: #{tpu_custom_call.1} parent=55 // pred_check_branch
          %356 = sbr.rel (%p354) target = $region64
        $region63: #{tpu_custom_call.1} parent=55 // pred_region
          %358 = dma.done [#allocation6], 512
        $region64: #{tpu_custom_call.1} parent=55 // pred_fallthru
          _
        // Predicated region
        $region65: #{tpu_custom_call.1} parent=55 // pred_check
          %p359 = pneg %p154
        $region66: #{tpu_custom_call.1} parent=55 // pred_check_branch
          %361 = sbr.rel (%p359) target = $region68
        $region67: #{tpu_custom_call.1} parent=55 // pred_region
          %363 = dma.done [#allocation6], 512
        $region68: #{tpu_custom_call.1} parent=55 // pred_fallthru
          _
        // Predicated region
        $region69: #{tpu_custom_call.1} parent=55 // pred_check
          %p364 = pneg %p217
        $region70: #{tpu_custom_call.1} parent=55 // pred_check_branch
          %366 = sbr.rel (%p364) target = $region72
        $region71: #{tpu_custom_call.1} parent=55 // pred_region
          %368 = dma.done [#allocation9], 128
        $region72: #{tpu_custom_call.1} parent=55 // pred_fallthru
          _
        %s369 = sand.u32 %s36, 1
        %s370 = scalar_lea.sflag [#allocation3], %s369
        %s371 = sand.u32 %s36, 1
        %s372 = smul.addr %s371, 32
        %s373 = scalar_lea.vmem [#allocation2], %s372
        %p374 = pneg %p49
        %p375 = pneg %p46
        %p376 = pneg %p70
        %p377 = pneg %p67
        %p378 = pneg %p91
        %p379 = pneg %p88
        %p380 = pneg %p112
        %p381 = pneg %p109
        %p382 = pneg %p133
        %p383 = pneg %p130
        %p384 = pneg %p154
        %p385 = pneg %p151
        %p386 = pneg %p175
        %p387 = pneg %p172
        %p388 = pneg %p196
        %p389 = pneg %p193
        %p390 = pneg %p217
        %p391 = pneg %p214
        %p392 = pneg %p243
        %p393 = pneg %p240
        %s394 = sand.u32 %s230, 1
        %s395 = scalar_lea.sflag [#allocation4], %s394
        %s396 = sand.u32 %s230, 1
        %s397 = smul.addr %s396, 32
        %s398 = scalar_lea.vmem [#allocation10], %s397
        %v399 = vld [vmem:[%s348] sm:$0xff]
        %v400 = vld [vmem:[%s348 + $0x8] sm:$0xff]
        %v401 = vld [vmem:[%s348 + $0x10] sm:$0xff]
        %v402 = vld [vmem:[%s348 + $0x18] sm:$0xff]
        %404 = vrot.lane.b32.xlu0 %v399, 112
        %v405 = vpop.permute.xlu0 %404
        %407 = vrot.lane.b32.xlu0 %v399, 96
        %v408 = vpop.permute.xlu0 %407
        %410 = vrot.lane.b32.xlu0 %v399, 80
        %v411 = vpop.permute.xlu0 %410
        %413 = vrot.lane.b32.xlu0 %v399, 64
        %v414 = vpop.permute.xlu0 %413
        %416 = vrot.lane.b32.xlu0 %v399, 48
        %v417 = vpop.permute.xlu0 %416
        %419 = vrot.lane.b32.xlu0 %v399, 32
        %v420 = vpop.permute.xlu0 %419
        %422 = vrot.lane.b32.xlu0 %v399, 16
        %v423 = vpop.permute.xlu0 %422
        %426 = vrot.lane.b32.xlu0 %v400, 112
        %v427 = vpop.permute.xlu0 %426
        %429 = vrot.lane.b32.xlu0 %v400, 96
        %v430 = vpop.permute.xlu0 %429
        %432 = vrot.lane.b32.xlu0 %v400, 80
        %v433 = vpop.permute.xlu0 %432
        %435 = vrot.lane.b32.xlu0 %v400, 64
        %v436 = vpop.permute.xlu0 %435
        %438 = vrot.lane.b32.xlu0 %v400, 48
        %v439 = vpop.permute.xlu0 %438
        %441 = vrot.lane.b32.xlu0 %v400, 32
        %v442 = vpop.permute.xlu0 %441
        %444 = vrot.lane.b32.xlu0 %v400, 16
        %v445 = vpop.permute.xlu0 %444
        %448 = vrot.lane.b32.xlu0 %v401, 112
        %v449 = vpop.permute.xlu0 %448
        %451 = vrot.lane.b32.xlu0 %v401, 96
        %v452 = vpop.permute.xlu0 %451
        %454 = vrot.lane.b32.xlu0 %v401, 80
        %v455 = vpop.permute.xlu0 %454
        %457 = vrot.lane.b32.xlu0 %v401, 64
        %v458 = vpop.permute.xlu0 %457
        %460 = vrot.lane.b32.xlu0 %v401, 48
        %v461 = vpop.permute.xlu0 %460
        %463 = vrot.lane.b32.xlu0 %v401, 32
        %v464 = vpop.permute.xlu0 %463
        %466 = vrot.lane.b32.xlu0 %v401, 16
        %v467 = vpop.permute.xlu0 %466
        %470 = vrot.lane.b32.xlu0 %v402, 112
        %v471 = vpop.permute.xlu0 %470
        %473 = vrot.lane.b32.xlu0 %v402, 96
        %v474 = vpop.permute.xlu0 %473
        %476 = vrot.lane.b32.xlu0 %v402, 80
        %v477 = vpop.permute.xlu0 %476
        %479 = vrot.lane.b32.xlu0 %v402, 64
        %v480 = vpop.permute.xlu0 %479
        %482 = vrot.lane.b32.xlu0 %v402, 48
        %v483 = vpop.permute.xlu0 %482
        %485 = vrot.lane.b32.xlu0 %v402, 32
        %v486 = vpop.permute.xlu0 %485
        %488 = vrot.lane.b32.xlu0 %v402, 16
        %v489 = vpop.permute.xlu0 %488
        %v491 = vrot.slane %v408, 4
        %vm492 = vcmask 1047556
        %v493 = vsel %vm492, %v491, %v399
        %v494 = vrot.slane %v399, 4
        %v495 = vsel %vm492, %v408, %v494
        %v497 = vunpack.c.l.s4 1983009808
        %v498 = vunpack.c.0.s8 %v497
        %v499 = vperm.slane %v493, %v498
        %v501 = vunpack.c.l.s4 1983009808
        %v502 = vunpack.c.0.s8 %v501
        %v503 = vperm.slane %v495, %v502
        %v504 = vrot.slane %v411, 4
        %v505 = vsel %vm492, %v504, %v405
        %v506 = vrot.slane %v405, 4
        %v507 = vsel %vm492, %v411, %v506
        %v509 = vunpack.c.l.s4 1983009808
        %v510 = vunpack.c.0.s8 %v509
        %v511 = vperm.slane %v505, %v510
        %v513 = vunpack.c.l.s4 1983009808
        %v514 = vunpack.c.0.s8 %v513
        %v515 = vperm.slane %v507, %v514
        %v516 = vrot.slane %v420, 4
        %v517 = vsel %vm492, %v516, %v414
        %v518 = vrot.slane %v414, 4
        %v519 = vsel %vm492, %v420, %v518
        %v521 = vunpack.c.l.s4 1983009808
        %v522 = vunpack.c.0.s8 %v521
        %v523 = vperm.slane %v517, %v522
        %v525 = vunpack.c.l.s4 1983009808
        %v526 = vunpack.c.0.s8 %v525
        %v527 = vperm.slane %v519, %v526
        %v528 = vrot.slane %v423, 4
        %v529 = vsel %vm492, %v528, %v417
        %v530 = vrot.slane %v417, 4
        %v531 = vsel %vm492, %v423, %v530
        %v533 = vunpack.c.l.s4 1983009808
        %v534 = vunpack.c.0.s8 %v533
        %v535 = vperm.slane %v529, %v534
        %v537 = vunpack.c.l.s4 1983009808
        %v538 = vunpack.c.0.s8 %v537
        %v539 = vperm.slane %v531, %v538
        %v540 = vrot.slane %v511, 4
        %v541 = vsel %vm492, %v540, %v499
        %v542 = vrot.slane %v499, 4
        %v543 = vsel %vm492, %v511, %v542
        %v545 = vunpack.c.l.s4 1934713408
        %v546 = vunpack.c.0.s8 %v545
        %v547 = vperm.slane %v541, %v546
        %v549 = vunpack.c.l.s4 1934713408
        %v550 = vunpack.c.0.s8 %v549
        %v551 = vperm.slane %v543, %v550
        %v552 = vrot.slane %v515, 4
        %v553 = vsel %vm492, %v552, %v503
        %v554 = vrot.slane %v503, 4
        %v555 = vsel %vm492, %v515, %v554
        %v557 = vunpack.c.l.s4 1934713408
        %v558 = vunpack.c.0.s8 %v557
        %v559 = vperm.slane %v553, %v558
        %v561 = vunpack.c.l.s4 1934713408
        %v562 = vunpack.c.0.s8 %v561
        %v563 = vperm.slane %v555, %v562
        %v564 = vrot.slane %v535, 4
        %v565 = vsel %vm492, %v564, %v523
        %v566 = vrot.slane %v523, 4
        %v567 = vsel %vm492, %v535, %v566
        %v569 = vunpack.c.l.s4 1934713408
        %v570 = vunpack.c.0.s8 %v569
        %v571 = vperm.slane %v565, %v570
        %v573 = vunpack.c.l.s4 1934713408
        %v574 = vunpack.c.0.s8 %v573
        %v575 = vperm.slane %v567, %v574
        %v576 = vrot.slane %v539, 4
        %v577 = vsel %vm492, %v576, %v527
        %v578 = vrot.slane %v527, 4
        %v579 = vsel %vm492, %v539, %v578
        %v581 = vunpack.c.l.s4 1934713408
        %v582 = vunpack.c.0.s8 %v581
        %v583 = vperm.slane %v577, %v582
        %v585 = vunpack.c.l.s4 1934713408
        %v586 = vunpack.c.0.s8 %v585
        %v587 = vperm.slane %v579, %v586
        %v588 = vrot.slane %v571, 4
        %v589 = vsel %vm492, %v588, %v547
        %v590 = vrot.slane %v547, 4
        %v591 = vsel %vm492, %v571, %v590
        %v592 = vrot.slane %v575, 4
        %v593 = vsel %vm492, %v592, %v551
        %v594 = vrot.slane %v551, 4
        %v595 = vsel %vm492, %v575, %v594
        %v596 = vrot.slane %v583, 4
        %v597 = vsel %vm492, %v596, %v559
        %v598 = vrot.slane %v559, 4
        %v599 = vsel %vm492, %v583, %v598
        %v600 = vrot.slane %v587, 4
        %v601 = vsel %vm492, %v600, %v563
        %v602 = vrot.slane %v563, 4
        %v603 = vsel %vm492, %v587, %v602
        %v604 = vrot.slane %v430, 4
        %v605 = vsel %vm492, %v604, %v400
        %v606 = vrot.slane %v400, 4
        %v607 = vsel %vm492, %v430, %v606
        %v609 = vunpack.c.l.s4 1983009808
        %v610 = vunpack.c.0.s8 %v609
        %v611 = vperm.slane %v605, %v610
        %v613 = vunpack.c.l.s4 1983009808
        %v614 = vunpack.c.0.s8 %v613
        %v615 = vperm.slane %v607, %v614
        %v616 = vrot.slane %v433, 4
        %v617 = vsel %vm492, %v616, %v427
        %v618 = vrot.slane %v427, 4
        %v619 = vsel %vm492, %v433, %v618
        %v621 = vunpack.c.l.s4 1983009808
        %v622 = vunpack.c.0.s8 %v621
        %v623 = vperm.slane %v617, %v622
        %v625 = vunpack.c.l.s4 1983009808
        %v626 = vunpack.c.0.s8 %v625
        %v627 = vperm.slane %v619, %v626
        %v628 = vrot.slane %v442, 4
        %v629 = vsel %vm492, %v628, %v436
        %v630 = vrot.slane %v436, 4
        %v631 = vsel %vm492, %v442, %v630
        %v633 = vunpack.c.l.s4 1983009808
        %v634 = vunpack.c.0.s8 %v633
        %v635 = vperm.slane %v629, %v634
        %v637 = vunpack.c.l.s4 1983009808
        %v638 = vunpack.c.0.s8 %v637
        %v639 = vperm.slane %v631, %v638
        %v640 = vrot.slane %v445, 4
        %v641 = vsel %vm492, %v640, %v439
        %v642 = vrot.slane %v439, 4
        %v643 = vsel %vm492, %v445, %v642
        %v645 = vunpack.c.l.s4 1983009808
        %v646 = vunpack.c.0.s8 %v645
        %v647 = vperm.slane %v641, %v646
        %v649 = vunpack.c.l.s4 1983009808
        %v650 = vunpack.c.0.s8 %v649
        %v651 = vperm.slane %v643, %v650
        %v652 = vrot.slane %v623, 4
        %v653 = vsel %vm492, %v652, %v611
        %v654 = vrot.slane %v611, 4
        %v655 = vsel %vm492, %v623, %v654
        %v657 = vunpack.c.l.s4 1934713408
        %v658 = vunpack.c.0.s8 %v657
        %v659 = vperm.slane %v653, %v658
        %v661 = vunpack.c.l.s4 1934713408
        %v662 = vunpack.c.0.s8 %v661
        %v663 = vperm.slane %v655, %v662
        %v664 = vrot.slane %v627, 4
        %v665 = vsel %vm492, %v664, %v615
        %v666 = vrot.slane %v615, 4
        %v667 = vsel %vm492, %v627, %v666
        %v669 = vunpack.c.l.s4 1934713408
        %v670 = vunpack.c.0.s8 %v669
        %v671 = vperm.slane %v665, %v670
        %v673 = vunpack.c.l.s4 1934713408
        %v674 = vunpack.c.0.s8 %v673
        %v675 = vperm.slane %v667, %v674
        %v676 = vrot.slane %v647, 4
        %v677 = vsel %vm492, %v676, %v635
        %v678 = vrot.slane %v635, 4
        %v679 = vsel %vm492, %v647, %v678
        %v681 = vunpack.c.l.s4 1934713408
        %v682 = vunpack.c.0.s8 %v681
        %v683 = vperm.slane %v677, %v682
        %v685 = vunpack.c.l.s4 1934713408
        %v686 = vunpack.c.0.s8 %v685
        %v687 = vperm.slane %v679, %v686
        %v688 = vrot.slane %v651, 4
        %v689 = vsel %vm492, %v688, %v639
        %v690 = vrot.slane %v639, 4
        %v691 = vsel %vm492, %v651, %v690
        %v693 = vunpack.c.l.s4 1934713408
        %v694 = vunpack.c.0.s8 %v693
        %v695 = vperm.slane %v689, %v694
        %v697 = vunpack.c.l.s4 1934713408
        %v698 = vunpack.c.0.s8 %v697
        %v699 = vperm.slane %v691, %v698
        %v700 = vrot.slane %v683, 4
        %v701 = vsel %vm492, %v700, %v659
        %v702 = vrot.slane %v659, 4
        %v703 = vsel %vm492, %v683, %v702
        %v704 = vrot.slane %v687, 4
        %v705 = vsel %vm492, %v704, %v663
        %v706 = vrot.slane %v663, 4
        %v707 = vsel %vm492, %v687, %v706
        %v708 = vrot.slane %v695, 4
        %v709 = vsel %vm492, %v708, %v671
        %v710 = vrot.slane %v671, 4
        %v711 = vsel %vm492, %v695, %v710
        %v712 = vrot.slane %v699, 4
        %v713 = vsel %vm492, %v712, %v675
        %v714 = vrot.slane %v675, 4
        %v715 = vsel %vm492, %v699, %v714
        %v716 = vrot.slane %v452, 4
        %v717 = vsel %vm492, %v716, %v401
        %v718 = vrot.slane %v401, 4
        %v719 = vsel %vm492, %v452, %v718
        %v721 = vunpack.c.l.s4 1983009808
        %v722 = vunpack.c.0.s8 %v721
        %v723 = vperm.slane %v717, %v722
        %v725 = vunpack.c.l.s4 1983009808
        %v726 = vunpack.c.0.s8 %v725
        %v727 = vperm.slane %v719, %v726
        %v728 = vrot.slane %v455, 4
        %v729 = vsel %vm492, %v728, %v449
        %v730 = vrot.slane %v449, 4
        %v731 = vsel %vm492, %v455, %v730
        %v733 = vunpack.c.l.s4 1983009808
        %v734 = vunpack.c.0.s8 %v733
        %v735 = vperm.slane %v729, %v734
        %v737 = vunpack.c.l.s4 1983009808
        %v738 = vunpack.c.0.s8 %v737
        %v739 = vperm.slane %v731, %v738
        %v740 = vrot.slane %v464, 4
        %v741 = vsel %vm492, %v740, %v458
        %v742 = vrot.slane %v458, 4
        %v743 = vsel %vm492, %v464, %v742
        %v745 = vunpack.c.l.s4 1983009808
        %v746 = vunpack.c.0.s8 %v745
        %v747 = vperm.slane %v741, %v746
        %v749 = vunpack.c.l.s4 1983009808
        %v750 = vunpack.c.0.s8 %v749
        %v751 = vperm.slane %v743, %v750
        %v752 = vrot.slane %v467, 4
        %v753 = vsel %vm492, %v752, %v461
        %v754 = vrot.slane %v461, 4
        %v755 = vsel %vm492, %v467, %v754
        %v757 = vunpack.c.l.s4 1983009808
        %v758 = vunpack.c.0.s8 %v757
        %v759 = vperm.slane %v753, %v758
        %v761 = vunpack.c.l.s4 1983009808
        %v762 = vunpack.c.0.s8 %v761
        %v763 = vperm.slane %v755, %v762
        %v764 = vrot.slane %v735, 4
        %v765 = vsel %vm492, %v764, %v723
        %v766 = vrot.slane %v723, 4
        %v767 = vsel %vm492, %v735, %v766
        %v769 = vunpack.c.l.s4 1934713408
        %v770 = vunpack.c.0.s8 %v769
        %v771 = vperm.slane %v765, %v770
        %v773 = vunpack.c.l.s4 1934713408
        %v774 = vunpack.c.0.s8 %v773
        %v775 = vperm.slane %v767, %v774
        %v776 = vrot.slane %v739, 4
        %v777 = vsel %vm492, %v776, %v727
        %v778 = vrot.slane %v727, 4
        %v779 = vsel %vm492, %v739, %v778
        %v781 = vunpack.c.l.s4 1934713408
        %v782 = vunpack.c.0.s8 %v781
        %v783 = vperm.slane %v777, %v782
        %v785 = vunpack.c.l.s4 1934713408
        %v786 = vunpack.c.0.s8 %v785
        %v787 = vperm.slane %v779, %v786
        %v788 = vrot.slane %v759, 4
        %v789 = vsel %vm492, %v788, %v747
        %v790 = vrot.slane %v747, 4
        %v791 = vsel %vm492, %v759, %v790
        %v793 = vunpack.c.l.s4 1934713408
        %v794 = vunpack.c.0.s8 %v793
        %v795 = vperm.slane %v789, %v794
        %v797 = vunpack.c.l.s4 1934713408
        %v798 = vunpack.c.0.s8 %v797
        %v799 = vperm.slane %v791, %v798
        %v800 = vrot.slane %v763, 4
        %v801 = vsel %vm492, %v800, %v751
        %v802 = vrot.slane %v751, 4
        %v803 = vsel %vm492, %v763, %v802
        %v805 = vunpack.c.l.s4 1934713408
        %v806 = vunpack.c.0.s8 %v805
        %v807 = vperm.slane %v801, %v806
        %v809 = vunpack.c.l.s4 1934713408
        %v810 = vunpack.c.0.s8 %v809
        %v811 = vperm.slane %v803, %v810
        %v812 = vrot.slane %v795, 4
        %v813 = vsel %vm492, %v812, %v771
        %v814 = vrot.slane %v771, 4
        %v815 = vsel %vm492, %v795, %v814
        %v816 = vrot.slane %v799, 4
        %v817 = vsel %vm492, %v816, %v775
        %v818 = vrot.slane %v775, 4
        %v819 = vsel %vm492, %v799, %v818
        %v820 = vrot.slane %v807, 4
        %v821 = vsel %vm492, %v820, %v783
        %v822 = vrot.slane %v783, 4
        %v823 = vsel %vm492, %v807, %v822
        %v824 = vrot.slane %v811, 4
        %v825 = vsel %vm492, %v824, %v787
        %v826 = vrot.slane %v787, 4
        %v827 = vsel %vm492, %v811, %v826
        %v828 = vrot.slane %v474, 4
        %v829 = vsel %vm492, %v828, %v402
        %v830 = vrot.slane %v402, 4
        %v831 = vsel %vm492, %v474, %v830
        %v833 = vunpack.c.l.s4 1983009808
        %v834 = vunpack.c.0.s8 %v833
        %v835 = vperm.slane %v829, %v834
        %v837 = vunpack.c.l.s4 1983009808
        %v838 = vunpack.c.0.s8 %v837
        %v839 = vperm.slane %v831, %v838
        %v840 = vrot.slane %v477, 4
        %v841 = vsel %vm492, %v840, %v471
        %v842 = vrot.slane %v471, 4
        %v843 = vsel %vm492, %v477, %v842
        %v845 = vunpack.c.l.s4 1983009808
        %v846 = vunpack.c.0.s8 %v845
        %v847 = vperm.slane %v841, %v846
        %v849 = vunpack.c.l.s4 1983009808
        %v850 = vunpack.c.0.s8 %v849
        %v851 = vperm.slane %v843, %v850
        %v852 = vrot.slane %v486, 4
        %v853 = vsel %vm492, %v852, %v480
        %v854 = vrot.slane %v480, 4
        %v855 = vsel %vm492, %v486, %v854
        %v857 = vunpack.c.l.s4 1983009808
        %v858 = vunpack.c.0.s8 %v857
        %v859 = vperm.slane %v853, %v858
        %v861 = vunpack.c.l.s4 1983009808
        %v862 = vunpack.c.0.s8 %v861
        %v863 = vperm.slane %v855, %v862
        %v864 = vrot.slane %v489, 4
        %v865 = vsel %vm492, %v864, %v483
        %v866 = vrot.slane %v483, 4
        %v867 = vsel %vm492, %v489, %v866
        %v869 = vunpack.c.l.s4 1983009808
        %v870 = vunpack.c.0.s8 %v869
        %v871 = vperm.slane %v865, %v870
        %v873 = vunpack.c.l.s4 1983009808
        %v874 = vunpack.c.0.s8 %v873
        %v875 = vperm.slane %v867, %v874
        %v876 = vrot.slane %v847, 4
        %v877 = vsel %vm492, %v876, %v835
        %v878 = vrot.slane %v835, 4
        %v879 = vsel %vm492, %v847, %v878
        %v881 = vunpack.c.l.s4 1934713408
        %v882 = vunpack.c.0.s8 %v881
        %v883 = vperm.slane %v877, %v882
        %v885 = vunpack.c.l.s4 1934713408
        %v886 = vunpack.c.0.s8 %v885
        %v887 = vperm.slane %v879, %v886
        %v888 = vrot.slane %v851, 4
        %v889 = vsel %vm492, %v888, %v839
        %v890 = vrot.slane %v839, 4
        %v891 = vsel %vm492, %v851, %v890
        %v893 = vunpack.c.l.s4 1934713408
        %v894 = vunpack.c.0.s8 %v893
        %v895 = vperm.slane %v889, %v894
        %v897 = vunpack.c.l.s4 1934713408
        %v898 = vunpack.c.0.s8 %v897
        %v899 = vperm.slane %v891, %v898
        %v900 = vrot.slane %v871, 4
        %v901 = vsel %vm492, %v900, %v859
        %v902 = vrot.slane %v859, 4
        %v903 = vsel %vm492, %v871, %v902
        %v905 = vunpack.c.l.s4 1934713408
        %v906 = vunpack.c.0.s8 %v905
        %v907 = vperm.slane %v901, %v906
        %v909 = vunpack.c.l.s4 1934713408
        %v910 = vunpack.c.0.s8 %v909
        %v911 = vperm.slane %v903, %v910
        %v912 = vrot.slane %v875, 4
        %v913 = vsel %vm492, %v912, %v863
        %v914 = vrot.slane %v863, 4
        %v915 = vsel %vm492, %v875, %v914
        %v917 = vunpack.c.l.s4 1934713408
        %v918 = vunpack.c.0.s8 %v917
        %v919 = vperm.slane %v913, %v918
        %v921 = vunpack.c.l.s4 1934713408
        %v922 = vunpack.c.0.s8 %v921
        %v923 = vperm.slane %v915, %v922
        %v924 = vrot.slane %v907, 4
        %v925 = vsel %vm492, %v924, %v883
        %v926 = vrot.slane %v883, 4
        %v927 = vsel %vm492, %v907, %v926
        %v928 = vrot.slane %v911, 4
        %v929 = vsel %vm492, %v928, %v887
        %v930 = vrot.slane %v887, 4
        %v931 = vsel %vm492, %v911, %v930
        %v932 = vrot.slane %v919, 4
        %v933 = vsel %vm492, %v932, %v895
        %v934 = vrot.slane %v895, 4
        %v935 = vsel %vm492, %v919, %v934
        %v936 = vrot.slane %v923, 4
        %v937 = vsel %vm492, %v936, %v899
        %v938 = vrot.slane %v899, 4
        %v939 = vsel %vm492, %v923, %v938
        %940 = vxpose.xlu0.b32.start [1/16] %v589, 128
        %941 = vxpose.xlu0.b32.cont [2/16] %v701, 128
        %942 = vxpose.xlu0.b32.cont [3/16] %v813, 128
        %943 = vxpose.xlu0.b32.cont [4/16] %v925, 128
        %944 = vxpose.xlu0.b32.cont [5/16] 0.0, 128
        %945 = vxpose.xlu0.b32.cont [6/16] 0.0, 128
        %946 = vxpose.xlu0.b32.cont [7/16] 0.0, 128
        %947 = vxpose.xlu0.b32.cont [8/16] 0.0, 128
        %948 = vxpose.xlu0.b32.cont [9/16] 0.0, 128
        %949 = vxpose.xlu0.b32.cont [10/16] 0.0, 128
        %950 = vxpose.xlu0.b32.cont [11/16] 0.0, 128
        %951 = vxpose.xlu0.b32.cont [12/16] 0.0, 128
        %952 = vxpose.xlu0.b32.cont [13/16] 0.0, 128
        %953 = vxpose.xlu0.b32.cont [14/16] 0.0, 128
        %954 = vxpose.xlu0.b32.cont [15/16] 0.0, 128
        %955 = vxpose.xlu0.b32.end [16/16] 0.0, 128
        %v956 = vpop.trf.xlu0
        %v957 = vpop.trf.xlu0
        %v958 = vpop.trf.xlu0
        %v959 = vpop.trf.xlu0
        %v960 = vpop.trf.xlu0
        %v961 = vpop.trf.xlu0
        %v962 = vpop.trf.xlu0
        %v963 = vpop.trf.xlu0
        %v964 = vpop.trf.xlu0
        %v965 = vpop.trf.xlu0
        %v966 = vpop.trf.xlu0
        %v967 = vpop.trf.xlu0
        %v968 = vpop.trf.xlu0
        %v969 = vpop.trf.xlu0
        %v970 = vpop.trf.xlu0
        %v971 = vpop.trf.xlu0
        %972 = vxpose.xlu0.b32.start [1/16] %v591, 128
        %973 = vxpose.xlu0.b32.cont [2/16] %v703, 128
        %974 = vxpose.xlu0.b32.cont [3/16] %v815, 128
        %975 = vxpose.xlu0.b32.cont [4/16] %v927, 128
        %976 = vxpose.xlu0.b32.cont [5/16] 0.0, 128
        %977 = vxpose.xlu0.b32.cont [6/16] 0.0, 128
        %978 = vxpose.xlu0.b32.cont [7/16] 0.0, 128
        %979 = vxpose.xlu0.b32.cont [8/16] 0.0, 128
        %980 = vxpose.xlu0.b32.cont [9/16] 0.0, 128
        %981 = vxpose.xlu0.b32.cont [10/16] 0.0, 128
        %982 = vxpose.xlu0.b32.cont [11/16] 0.0, 128
        %983 = vxpose.xlu0.b32.cont [12/16] 0.0, 128
        %984 = vxpose.xlu0.b32.cont [13/16] 0.0, 128
        %985 = vxpose.xlu0.b32.cont [14/16] 0.0, 128
        %986 = vxpose.xlu0.b32.cont [15/16] 0.0, 128
        %987 = vxpose.xlu0.b32.end [16/16] 0.0, 128
        %v988 = vpop.trf.xlu0
        %v989 = vpop.trf.xlu0
        %v990 = vpop.trf.xlu0
        %v991 = vpop.trf.xlu0
        %v992 = vpop.trf.xlu0
        %v993 = vpop.trf.xlu0
        %v994 = vpop.trf.xlu0
        %v995 = vpop.trf.xlu0
        %v996 = vpop.trf.xlu0
        %v997 = vpop.trf.xlu0
        %v998 = vpop.trf.xlu0
        %v999 = vpop.trf.xlu0
        %v1000 = vpop.trf.xlu0
        %v1001 = vpop.trf.xlu0
        %v1002 = vpop.trf.xlu0
        %v1003 = vpop.trf.xlu0
        %1004 = vxpose.xlu0.b32.start [1/16] %v593, 128
        %1005 = vxpose.xlu0.b32.cont [2/16] %v705, 128
        %1006 = vxpose.xlu0.b32.cont [3/16] %v817, 128
        %1007 = vxpose.xlu0.b32.cont [4/16] %v929, 128
        %1008 = vxpose.xlu0.b32.cont [5/16] 0.0, 128
        %1009 = vxpose.xlu0.b32.cont [6/16] 0.0, 128
        %1010 = vxpose.xlu0.b32.cont [7/16] 0.0, 128
        %1011 = vxpose.xlu0.b32.cont [8/16] 0.0, 128
        %1012 = vxpose.xlu0.b32.cont [9/16] 0.0, 128
        %1013 = vxpose.xlu0.b32.cont [10/16] 0.0, 128
        %1014 = vxpose.xlu0.b32.cont [11/16] 0.0, 128
        %1015 = vxpose.xlu0.b32.cont [12/16] 0.0, 128
        %1016 = vxpose.xlu0.b32.cont [13/16] 0.0, 128
        %1017 = vxpose.xlu0.b32.cont [14/16] 0.0, 128
        %1018 = vxpose.xlu0.b32.cont [15/16] 0.0, 128
        %1019 = vxpose.xlu0.b32.end [16/16] 0.0, 128
        %v1020 = vpop.trf.xlu0
        %v1021 = vpop.trf.xlu0
        %v1022 = vpop.trf.xlu0
        %v1023 = vpop.trf.xlu0
        %v1024 = vpop.trf.xlu0
        %v1025 = vpop.trf.xlu0
        %v1026 = vpop.trf.xlu0
        %v1027 = vpop.trf.xlu0
        %v1028 = vpop.trf.xlu0
        %v1029 = vpop.trf.xlu0
        %v1030 = vpop.trf.xlu0
        %v1031 = vpop.trf.xlu0
        %v1032 = vpop.trf.xlu0
        %v1033 = vpop.trf.xlu0
        %v1034 = vpop.trf.xlu0
        %v1035 = vpop.trf.xlu0
        %1036 = vxpose.xlu0.b32.start [1/16] %v595, 128
        %1037 = vxpose.xlu0.b32.cont [2/16] %v707, 128
        %1038 = vxpose.xlu0.b32.cont [3/16] %v819, 128
        %1039 = vxpose.xlu0.b32.cont [4/16] %v931, 128
        %1040 = vxpose.xlu0.b32.cont [5/16] 0.0, 128
        %1041 = vxpose.xlu0.b32.cont [6/16] 0.0, 128
        %1042 = vxpose.xlu0.b32.cont [7/16] 0.0, 128
        %1043 = vxpose.xlu0.b32.cont [8/16] 0.0, 128
        %1044 = vxpose.xlu0.b32.cont [9/16] 0.0, 128
        %1045 = vxpose.xlu0.b32.cont [10/16] 0.0, 128
        %1046 = vxpose.xlu0.b32.cont [11/16] 0.0, 128
        %1047 = vxpose.xlu0.b32.cont [12/16] 0.0, 128
        %1048 = vxpose.xlu0.b32.cont [13/16] 0.0, 128
        %1049 = vxpose.xlu0.b32.cont [14/16] 0.0, 128
        %1050 = vxpose.xlu0.b32.cont [15/16] 0.0, 128
        %1051 = vxpose.xlu0.b32.end [16/16] 0.0, 128
        %v1052 = vpop.trf.xlu0
        %v1053 = vpop.trf.xlu0
        %v1054 = vpop.trf.xlu0
        %v1055 = vpop.trf.xlu0
        %v1056 = vpop.trf.xlu0
        %v1057 = vpop.trf.xlu0
        %v1058 = vpop.trf.xlu0
        %v1059 = vpop.trf.xlu0
        %v1060 = vpop.trf.xlu0
        %v1061 = vpop.trf.xlu0
        %v1062 = vpop.trf.xlu0
        %v1063 = vpop.trf.xlu0
        %v1064 = vpop.trf.xlu0
        %v1065 = vpop.trf.xlu0
        %v1066 = vpop.trf.xlu0
        %v1067 = vpop.trf.xlu0
        %1068 = vxpose.xlu0.b32.start [1/16] %v597, 128
        %1069 = vxpose.xlu0.b32.cont [2/16] %v709, 128
        %1070 = vxpose.xlu0.b32.cont [3/16] %v821, 128
        %1071 = vxpose.xlu0.b32.cont [4/16] %v933, 128
        %1072 = vxpose.xlu0.b32.cont [5/16] 0.0, 128
        %1073 = vxpose.xlu0.b32.cont [6/16] 0.0, 128
        %1074 = vxpose.xlu0.b32.cont [7/16] 0.0, 128
        %1075 = vxpose.xlu0.b32.cont [8/16] 0.0, 128
        %1076 = vxpose.xlu0.b32.cont [9/16] 0.0, 128
        %1077 = vxpose.xlu0.b32.cont [10/16] 0.0, 128
        %1078 = vxpose.xlu0.b32.cont [11/16] 0.0, 128
        %1079 = vxpose.xlu0.b32.cont [12/16] 0.0, 128
        %1080 = vxpose.xlu0.b32.cont [13/16] 0.0, 128
        %1081 = vxpose.xlu0.b32.cont [14/16] 0.0, 128
        %1082 = vxpose.xlu0.b32.cont [15/16] 0.0, 128
        %1083 = vxpose.xlu0.b32.end [16/16] 0.0, 128
        %v1084 = vpop.trf.xlu0
        %v1085 = vpop.trf.xlu0
        %v1086 = vpop.trf.xlu0
        %v1087 = vpop.trf.xlu0
        %v1088 = vpop.trf.xlu0
        %v1089 = vpop.trf.xlu0
        %v1090 = vpop.trf.xlu0
        %v1091 = vpop.trf.xlu0
        %v1092 = vpop.trf.xlu0
        %v1093 = vpop.trf.xlu0
        %v1094 = vpop.trf.xlu0
        %v1095 = vpop.trf.xlu0
        %v1096 = vpop.trf.xlu0
        %v1097 = vpop.trf.xlu0
        %v1098 = vpop.trf.xlu0
        %v1099 = vpop.trf.xlu0
        %1100 = vxpose.xlu0.b32.start [1/16] %v599, 128
        %1101 = vxpose.xlu0.b32.cont [2/16] %v711, 128
        %1102 = vxpose.xlu0.b32.cont [3/16] %v823, 128
        %1103 = vxpose.xlu0.b32.cont [4/16] %v935, 128
        %1104 = vxpose.xlu0.b32.cont [5/16] 0.0, 128
        %1105 = vxpose.xlu0.b32.cont [6/16] 0.0, 128
        %1106 = vxpose.xlu0.b32.cont [7/16] 0.0, 128
        %1107 = vxpose.xlu0.b32.cont [8/16] 0.0, 128
        %1108 = vxpose.xlu0.b32.cont [9/16] 0.0, 128
        %1109 = vxpose.xlu0.b32.cont [10/16] 0.0, 128
        %1110 = vxpose.xlu0.b32.cont [11/16] 0.0, 128
        %1111 = vxpose.xlu0.b32.cont [12/16] 0.0, 128
        %1112 = vxpose.xlu0.b32.cont [13/16] 0.0, 128
        %1113 = vxpose.xlu0.b32.cont [14/16] 0.0, 128
        %1114 = vxpose.xlu0.b32.cont [15/16] 0.0, 128
        %1115 = vxpose.xlu0.b32.end [16/16] 0.0, 128
        %v1116 = vpop.trf.xlu0
        %v1117 = vpop.trf.xlu0
        %v1118 = vpop.trf.xlu0
        %v1119 = vpop.trf.xlu0
        %v1120 = vpop.trf.xlu0
        %v1121 = vpop.trf.xlu0
        %v1122 = vpop.trf.xlu0
        %v1123 = vpop.trf.xlu0
        %v1124 = vpop.trf.xlu0
        %v1125 = vpop.trf.xlu0
        %v1126 = vpop.trf.xlu0
        %v1127 = vpop.trf.xlu0
        %v1128 = vpop.trf.xlu0
        %v1129 = vpop.trf.xlu0
        %v1130 = vpop.trf.xlu0
        %v1131 = vpop.trf.xlu0
        %1132 = vxpose.xlu0.b32.start [1/16] %v601, 128
        %1133 = vxpose.xlu0.b32.cont [2/16] %v713, 128
        %1134 = vxpose.xlu0.b32.cont [3/16] %v825, 128
        %1135 = vxpose.xlu0.b32.cont [4/16] %v937, 128
        %1136 = vxpose.xlu0.b32.cont [5/16] 0.0, 128
        %1137 = vxpose.xlu0.b32.cont [6/16] 0.0, 128
        %1138 = vxpose.xlu0.b32.cont [7/16] 0.0, 128
        %1139 = vxpose.xlu0.b32.cont [8/16] 0.0, 128
        %1140 = vxpose.xlu0.b32.cont [9/16] 0.0, 128
        %1141 = vxpose.xlu0.b32.cont [10/16] 0.0, 128
        %1142 = vxpose.xlu0.b32.cont [11/16] 0.0, 128
        %1143 = vxpose.xlu0.b32.cont [12/16] 0.0, 128
        %1144 = vxpose.xlu0.b32.cont [13/16] 0.0, 128
        %1145 = vxpose.xlu0.b32.cont [14/16] 0.0, 128
        %1146 = vxpose.xlu0.b32.cont [15/16] 0.0, 128
        %1147 = vxpose.xlu0.b32.end [16/16] 0.0, 128
        %v1148 = vpop.trf.xlu0
        %v1149 = vpop.trf.xlu0
        %v1150 = vpop.trf.xlu0
        %v1151 = vpop.trf.xlu0
        %v1152 = vpop.trf.xlu0
        %v1153 = vpop.trf.xlu0
        %v1154 = vpop.trf.xlu0
        %v1155 = vpop.trf.xlu0
        %v1156 = vpop.trf.xlu0
        %v1157 = vpop.trf.xlu0
        %v1158 = vpop.trf.xlu0
        %v1159 = vpop.trf.xlu0
        %v1160 = vpop.trf.xlu0
        %v1161 = vpop.trf.xlu0
        %v1162 = vpop.trf.xlu0
        %v1163 = vpop.trf.xlu0
        %1164 = vxpose.xlu0.b32.start [1/16] %v603, 128
        %1165 = vxpose.xlu0.b32.cont [2/16] %v715, 128
        %1166 = vxpose.xlu0.b32.cont [3/16] %v827, 128
        %1167 = vxpose.xlu0.b32.cont [4/16] %v939, 128
        %1168 = vxpose.xlu0.b32.cont [5/16] 0.0, 128
        %1169 = vxpose.xlu0.b32.cont [6/16] 0.0, 128
        %1170 = vxpose.xlu0.b32.cont [7/16] 0.0, 128
        %1171 = vxpose.xlu0.b32.cont [8/16] 0.0, 128
        %1172 = vxpose.xlu0.b32.cont [9/16] 0.0, 128
        %1173 = vxpose.xlu0.b32.cont [10/16] 0.0, 128
        %1174 = vxpose.xlu0.b32.cont [11/16] 0.0, 128
        %1175 = vxpose.xlu0.b32.cont [12/16] 0.0, 128
        %1176 = vxpose.xlu0.b32.cont [13/16] 0.0, 128
        %1177 = vxpose.xlu0.b32.cont [14/16] 0.0, 128
        %1178 = vxpose.xlu0.b32.cont [15/16] 0.0, 128
        %1179 = vxpose.xlu0.b32.end [16/16] 0.0, 128
        %v1180 = vpop.trf.xlu0
        %v1181 = vpop.trf.xlu0
        %v1182 = vpop.trf.xlu0
        %v1183 = vpop.trf.xlu0
        %v1184 = vpop.trf.xlu0
        %v1185 = vpop.trf.xlu0
        %v1186 = vpop.trf.xlu0
        %v1187 = vpop.trf.xlu0
        %v1188 = vpop.trf.xlu0
        %v1189 = vpop.trf.xlu0
        %v1190 = vpop.trf.xlu0
        %v1191 = vpop.trf.xlu0
        %v1192 = vpop.trf.xlu0
        %v1193 = vpop.trf.xlu0
        %v1194 = vpop.trf.xlu0
        %v1195 = vpop.trf.xlu0
        %v1196 = vld [vmem:[%s1] sm:$0xff]
        %v1197 = vld [vmem:[%s1 + $0x8] sm:$0xff]
        %v1198 = vld [vmem:[%s1 + $0x10] sm:$0xff]
        %v1199 = vld [vmem:[%s1 + $0x18] sm:$0xff]
        %v1200 = vld [vmem:[%s3] sm:$0x1]
        %v1202 = vperm.slane %v1200, 0
        %vm1204 = vcmask 261120
        %v1206 = vsel %vm1204, %v956, 0
        %v1209 = vsel %vm1204, %v957, 0
        %v1212 = vsel %vm1204, %v988, 0
        %v1215 = vsel %vm1204, %v989, 0
        %v1218 = vsel %vm1204, %v1020, 0
        %v1221 = vsel %vm1204, %v1021, 0
        %v1224 = vsel %vm1204, %v1052, 0
        %v1227 = vsel %vm1204, %v1053, 0
        %v1230 = vsel %vm1204, %v1084, 0
        %v1233 = vsel %vm1204, %v1085, 0
        %v1236 = vsel %vm1204, %v1116, 0
        %v1239 = vsel %vm1204, %v1117, 0
        %v1242 = vsel %vm1204, %v1148, 0
        %v1245 = vsel %vm1204, %v1149, 0
        %v1248 = vsel %vm1204, %v1180, 0
        %v1251 = vsel %vm1204, %v1181, 0
        %1253 = vmatpush.msra.mxu0 0.0
        %1254 = vmatpush.msra.mxu0 0.0
        %1255 = vmatpush.msra.mxu0 0.0
        %1256 = vmatpush.msra.mxu0 0.0
        %1257 = vmatpush.msra.mxu0 0.0
        %1258 = vmatpush.msra.mxu0 0.0
        %1259 = vmatpush.msra.mxu0 0.0
        %1260 = vmatpush.msra.mxu0 0.0
        %1261 = vmatpush.msra.mxu0 0.0
        %1262 = vmatpush.msra.mxu0 0.0
        %1263 = vmatpush.msra.mxu0 0.0
        %1264 = vmatpush.msra.mxu0 0.0
        %1265 = vmatpush.msra.mxu0 %v1199
        %1266 = vmatpush.msra.mxu0 %v1198
        %1267 = vmatpush.msra.mxu0 %v1197
        %1268 = vmatpush.msra.mxu0 %v1196
        %1269 = vmatmul.f32.gmra.mxu0 %v1206
        %v1270 = vpop.f32.mrf.mxu0
        %v1271 = vadd.f32 %v1202, %v1270
        %1272 = vmatmul.f32.gmra.mxu0 %v1209
        %v1273 = vpop.f32.mrf.mxu0
        %v1274 = vadd.f32 %v1202, %v1273
        %1275 = vmatmul.f32.gmra.mxu0 %v1212
        %v1276 = vpop.f32.mrf.mxu0
        %v1277 = vadd.f32 %v1202, %v1276
        %1278 = vmatmul.f32.gmra.mxu0 %v1215
        %v1279 = vpop.f32.mrf.mxu0
        %v1280 = vadd.f32 %v1202, %v1279
        %1281 = vmatmul.f32.gmra.mxu0 %v1218
        %v1282 = vpop.f32.mrf.mxu0
        %v1283 = vadd.f32 %v1202, %v1282
        %1284 = vmatmul.f32.gmra.mxu0 %v1221
        %v1285 = vpop.f32.mrf.mxu0
        %v1286 = vadd.f32 %v1202, %v1285
        %1287 = vmatmul.f32.gmra.mxu0 %v1224
        %v1288 = vpop.f32.mrf.mxu0
        %v1289 = vadd.f32 %v1202, %v1288
        %1290 = vmatmul.f32.gmra.mxu0 %v1227
        %v1291 = vpop.f32.mrf.mxu0
        %v1292 = vadd.f32 %v1202, %v1291
        %1293 = vmatmul.f32.gmra.mxu0 %v1230
        %v1294 = vpop.f32.mrf.mxu0
        %v1295 = vadd.f32 %v1202, %v1294
        %1296 = vmatmul.f32.gmra.mxu0 %v1233
        %v1297 = vpop.f32.mrf.mxu0
        %v1298 = vadd.f32 %v1202, %v1297
        %1299 = vmatmul.f32.gmra.mxu0 %v1236
        %v1300 = vpop.f32.mrf.mxu0
        %v1301 = vadd.f32 %v1202, %v1300
        %1302 = vmatmul.f32.gmra.mxu0 %v1239
        %v1303 = vpop.f32.mrf.mxu0
        %v1304 = vadd.f32 %v1202, %v1303
        %1305 = vmatmul.f32.gmra.mxu0 %v1242
        %v1306 = vpop.f32.mrf.mxu0
        %v1307 = vadd.f32 %v1202, %v1306
        %1308 = vmatmul.f32.gmra.mxu0 %v1245
        %v1309 = vpop.f32.mrf.mxu0
        %v1310 = vadd.f32 %v1202, %v1309
        %1311 = vmatmul.f32.gmra.mxu0 %v1248
        %v1312 = vpop.f32.mrf.mxu0
        %v1313 = vadd.f32 %v1202, %v1312
        %1314 = vmatmul.f32.gmra.mxu0 %v1251
        %v1315 = vpop.f32.mrf.mxu0
        %v1316 = vadd.f32 %v1202, %v1315
        %1317 = vdwg.mxu0
        %1334 = vrot.lane.b32.xlu0 %v1271, 96
        %v1335 = vpop.permute.xlu0 %1334
        %1336 = vrot.lane.b32.xlu0 %v1274, 96
        %v1337 = vpop.permute.xlu0 %1336
        %1338 = vrot.lane.b32.xlu0 %v1277, 96
        %v1339 = vpop.permute.xlu0 %1338
        %1340 = vrot.lane.b32.xlu0 %v1280, 96
        %v1341 = vpop.permute.xlu0 %1340
        %1342 = vrot.lane.b32.xlu0 %v1283, 96
        %v1343 = vpop.permute.xlu0 %1342
        %1344 = vrot.lane.b32.xlu0 %v1286, 96
        %v1345 = vpop.permute.xlu0 %1344
        %1346 = vrot.lane.b32.xlu0 %v1289, 96
        %v1347 = vpop.permute.xlu0 %1346
        %1348 = vrot.lane.b32.xlu0 %v1292, 96
        %v1349 = vpop.permute.xlu0 %1348
        %1350 = vrot.lane.b32.xlu0 %v1295, 96
        %v1351 = vpop.permute.xlu0 %1350
        %1352 = vrot.lane.b32.xlu0 %v1298, 96
        %v1353 = vpop.permute.xlu0 %1352
        %1354 = vrot.lane.b32.xlu0 %v1301, 96
        %v1355 = vpop.permute.xlu0 %1354
        %1356 = vrot.lane.b32.xlu0 %v1304, 96
        %v1357 = vpop.permute.xlu0 %1356
        %1358 = vrot.lane.b32.xlu0 %v1307, 96
        %v1359 = vpop.permute.xlu0 %1358
        %1360 = vrot.lane.b32.xlu0 %v1310, 96
        %v1361 = vpop.permute.xlu0 %1360
        %1362 = vrot.lane.b32.xlu0 %v1313, 96
        %v1363 = vpop.permute.xlu0 %1362
        %1364 = vrot.lane.b32.xlu0 %v1316, 96
        %v1365 = vpop.permute.xlu0 %1364
        %1382 = vxpose.xlu0.b32.start [1/16] %v1335, 128
        %1383 = vxpose.xlu0.b32.cont [2/16] %v1337, 128
        %1384 = vxpose.xlu0.b32.cont [3/16] 0.0, 128
        %1385 = vxpose.xlu0.b32.cont [4/16] 0.0, 128
        %1386 = vxpose.xlu0.b32.cont [5/16] 0.0, 128
        %1387 = vxpose.xlu0.b32.cont [6/16] 0.0, 128
        %1388 = vxpose.xlu0.b32.cont [7/16] 0.0, 128
        %1389 = vxpose.xlu0.b32.cont [8/16] 0.0, 128
        %1390 = vxpose.xlu0.b32.cont [9/16] 0.0, 128
        %1391 = vxpose.xlu0.b32.cont [10/16] 0.0, 128
        %1392 = vxpose.xlu0.b32.cont [11/16] 0.0, 128
        %1393 = vxpose.xlu0.b32.cont [12/16] 0.0, 128
        %1394 = vxpose.xlu0.b32.cont [13/16] 0.0, 128
        %1395 = vxpose.xlu0.b32.cont [14/16] 0.0, 128
        %1396 = vxpose.xlu0.b32.cont [15/16] 0.0, 128
        %1397 = vxpose.xlu0.b32.end [16/16] 0.0, 128
        %v1398 = vpop.trf.xlu0
        %v1399 = vpop.trf.xlu0
        %v1400 = vpop.trf.xlu0
        %v1401 = vpop.trf.xlu0
        %v1402 = vpop.trf.xlu0
        %v1403 = vpop.trf.xlu0
        %v1404 = vpop.trf.xlu0
        %v1405 = vpop.trf.xlu0
        %v1406 = vpop.trf.xlu0
        %v1407 = vpop.trf.xlu0
        %v1408 = vpop.trf.xlu0
        %v1409 = vpop.trf.xlu0
        %v1410 = vpop.trf.xlu0
        %v1411 = vpop.trf.xlu0
        %v1412 = vpop.trf.xlu0
        %v1413 = vpop.trf.xlu0
        %1414 = vxpose.xlu0.b32.start [1/16] %v1339, 128
        %1415 = vxpose.xlu0.b32.cont [2/16] %v1341, 128
        %1416 = vxpose.xlu0.b32.cont [3/16] 0.0, 128
        %1417 = vxpose.xlu0.b32.cont [4/16] 0.0, 128
        %1418 = vxpose.xlu0.b32.cont [5/16] 0.0, 128
        %1419 = vxpose.xlu0.b32.cont [6/16] 0.0, 128
        %1420 = vxpose.xlu0.b32.cont [7/16] 0.0, 128
        %1421 = vxpose.xlu0.b32.cont [8/16] 0.0, 128
        %1422 = vxpose.xlu0.b32.cont [9/16] 0.0, 128
        %1423 = vxpose.xlu0.b32.cont [10/16] 0.0, 128
        %1424 = vxpose.xlu0.b32.cont [11/16] 0.0, 128
        %1425 = vxpose.xlu0.b32.cont [12/16] 0.0, 128
        %1426 = vxpose.xlu0.b32.cont [13/16] 0.0, 128
        %1427 = vxpose.xlu0.b32.cont [14/16] 0.0, 128
        %1428 = vxpose.xlu0.b32.cont [15/16] 0.0, 128
        %1429 = vxpose.xlu0.b32.end [16/16] 0.0, 128
        %v1430 = vpop.trf.xlu0
        %v1431 = vpop.trf.xlu0
        %v1432 = vpop.trf.xlu0
        %v1433 = vpop.trf.xlu0
        %v1434 = vpop.trf.xlu0
        %v1435 = vpop.trf.xlu0
        %v1436 = vpop.trf.xlu0
        %v1437 = vpop.trf.xlu0
        %v1438 = vpop.trf.xlu0
        %v1439 = vpop.trf.xlu0
        %v1440 = vpop.trf.xlu0
        %v1441 = vpop.trf.xlu0
        %v1442 = vpop.trf.xlu0
        %v1443 = vpop.trf.xlu0
        %v1444 = vpop.trf.xlu0
        %v1445 = vpop.trf.xlu0
        %1446 = vxpose.xlu0.b32.start [1/16] %v1343, 128
        %1447 = vxpose.xlu0.b32.cont [2/16] %v1345, 128
        %1448 = vxpose.xlu0.b32.cont [3/16] 0.0, 128
        %1449 = vxpose.xlu0.b32.cont [4/16] 0.0, 128
        %1450 = vxpose.xlu0.b32.cont [5/16] 0.0, 128
        %1451 = vxpose.xlu0.b32.cont [6/16] 0.0, 128
        %1452 = vxpose.xlu0.b32.cont [7/16] 0.0, 128
        %1453 = vxpose.xlu0.b32.cont [8/16] 0.0, 128
        %1454 = vxpose.xlu0.b32.cont [9/16] 0.0, 128
        %1455 = vxpose.xlu0.b32.cont [10/16] 0.0, 128
        %1456 = vxpose.xlu0.b32.cont [11/16] 0.0, 128
        %1457 = vxpose.xlu0.b32.cont [12/16] 0.0, 128
        %1458 = vxpose.xlu0.b32.cont [13/16] 0.0, 128
        %1459 = vxpose.xlu0.b32.cont [14/16] 0.0, 128
        %1460 = vxpose.xlu0.b32.cont [15/16] 0.0, 128
        %1461 = vxpose.xlu0.b32.end [16/16] 0.0, 128
        %v1462 = vpop.trf.xlu0
        %v1463 = vpop.trf.xlu0
        %v1464 = vpop.trf.xlu0
        %v1465 = vpop.trf.xlu0
        %v1466 = vpop.trf.xlu0
        %v1467 = vpop.trf.xlu0
        %v1468 = vpop.trf.xlu0
        %v1469 = vpop.trf.xlu0
        %v1470 = vpop.trf.xlu0
        %v1471 = vpop.trf.xlu0
        %v1472 = vpop.trf.xlu0
        %v1473 = vpop.trf.xlu0
        %v1474 = vpop.trf.xlu0
        %v1475 = vpop.trf.xlu0
        %v1476 = vpop.trf.xlu0
        %v1477 = vpop.trf.xlu0
        %1478 = vxpose.xlu0.b32.start [1/16] %v1347, 128
        %1479 = vxpose.xlu0.b32.cont [2/16] %v1349, 128
        %1480 = vxpose.xlu0.b32.cont [3/16] 0.0, 128
        %1481 = vxpose.xlu0.b32.cont [4/16] 0.0, 128
        %1482 = vxpose.xlu0.b32.cont [5/16] 0.0, 128
        %1483 = vxpose.xlu0.b32.cont [6/16] 0.0, 128
        %1484 = vxpose.xlu0.b32.cont [7/16] 0.0, 128
        %1485 = vxpose.xlu0.b32.cont [8/16] 0.0, 128
        %1486 = vxpose.xlu0.b32.cont [9/16] 0.0, 128
        %1487 = vxpose.xlu0.b32.cont [10/16] 0.0, 128
        %1488 = vxpose.xlu0.b32.cont [11/16] 0.0, 128
        %1489 = vxpose.xlu0.b32.cont [12/16] 0.0, 128
        %1490 = vxpose.xlu0.b32.cont [13/16] 0.0, 128
        %1491 = vxpose.xlu0.b32.cont [14/16] 0.0, 128
        %1492 = vxpose.xlu0.b32.cont [15/16] 0.0, 128
        %1493 = vxpose.xlu0.b32.end [16/16] 0.0, 128
        %v1494 = vpop.trf.xlu0
        %v1495 = vpop.trf.xlu0
        %v1496 = vpop.trf.xlu0
        %v1497 = vpop.trf.xlu0
        %v1498 = vpop.trf.xlu0
        %v1499 = vpop.trf.xlu0
        %v1500 = vpop.trf.xlu0
        %v1501 = vpop.trf.xlu0
        %v1502 = vpop.trf.xlu0
        %v1503 = vpop.trf.xlu0
        %v1504 = vpop.trf.xlu0
        %v1505 = vpop.trf.xlu0
        %v1506 = vpop.trf.xlu0
        %v1507 = vpop.trf.xlu0
        %v1508 = vpop.trf.xlu0
        %v1509 = vpop.trf.xlu0
        %1510 = vxpose.xlu0.b32.start [1/16] %v1351, 128
        %1511 = vxpose.xlu0.b32.cont [2/16] %v1353, 128
        %1512 = vxpose.xlu0.b32.cont [3/16] 0.0, 128
        %1513 = vxpose.xlu0.b32.cont [4/16] 0.0, 128
        %1514 = vxpose.xlu0.b32.cont [5/16] 0.0, 128
        %1515 = vxpose.xlu0.b32.cont [6/16] 0.0, 128
        %1516 = vxpose.xlu0.b32.cont [7/16] 0.0, 128
        %1517 = vxpose.xlu0.b32.cont [8/16] 0.0, 128
        %1518 = vxpose.xlu0.b32.cont [9/16] 0.0, 128
        %1519 = vxpose.xlu0.b32.cont [10/16] 0.0, 128
        %1520 = vxpose.xlu0.b32.cont [11/16] 0.0, 128
        %1521 = vxpose.xlu0.b32.cont [12/16] 0.0, 128
        %1522 = vxpose.xlu0.b32.cont [13/16] 0.0, 128
        %1523 = vxpose.xlu0.b32.cont [14/16] 0.0, 128
        %1524 = vxpose.xlu0.b32.cont [15/16] 0.0, 128
        %1525 = vxpose.xlu0.b32.end [16/16] 0.0, 128
        %v1526 = vpop.trf.xlu0
        %v1527 = vpop.trf.xlu0
        %v1528 = vpop.trf.xlu0
        %v1529 = vpop.trf.xlu0
        %v1530 = vpop.trf.xlu0
        %v1531 = vpop.trf.xlu0
        %v1532 = vpop.trf.xlu0
        %v1533 = vpop.trf.xlu0
        %v1534 = vpop.trf.xlu0
        %v1535 = vpop.trf.xlu0
        %v1536 = vpop.trf.xlu0
        %v1537 = vpop.trf.xlu0
        %v1538 = vpop.trf.xlu0
        %v1539 = vpop.trf.xlu0
        %v1540 = vpop.trf.xlu0
        %v1541 = vpop.trf.xlu0
        %1542 = vxpose.xlu0.b32.start [1/16] %v1355, 128
        %1543 = vxpose.xlu0.b32.cont [2/16] %v1357, 128
        %1544 = vxpose.xlu0.b32.cont [3/16] 0.0, 128
        %1545 = vxpose.xlu0.b32.cont [4/16] 0.0, 128
        %1546 = vxpose.xlu0.b32.cont [5/16] 0.0, 128
        %1547 = vxpose.xlu0.b32.cont [6/16] 0.0, 128
        %1548 = vxpose.xlu0.b32.cont [7/16] 0.0, 128
        %1549 = vxpose.xlu0.b32.cont [8/16] 0.0, 128
        %1550 = vxpose.xlu0.b32.cont [9/16] 0.0, 128
        %1551 = vxpose.xlu0.b32.cont [10/16] 0.0, 128
        %1552 = vxpose.xlu0.b32.cont [11/16] 0.0, 128
        %1553 = vxpose.xlu0.b32.cont [12/16] 0.0, 128
        %1554 = vxpose.xlu0.b32.cont [13/16] 0.0, 128
        %1555 = vxpose.xlu0.b32.cont [14/16] 0.0, 128
        %1556 = vxpose.xlu0.b32.cont [15/16] 0.0, 128
        %1557 = vxpose.xlu0.b32.end [16/16] 0.0, 128
        %v1558 = vpop.trf.xlu0
        %v1559 = vpop.trf.xlu0
        %v1560 = vpop.trf.xlu0
        %v1561 = vpop.trf.xlu0
        %v1562 = vpop.trf.xlu0
        %v1563 = vpop.trf.xlu0
        %v1564 = vpop.trf.xlu0
        %v1565 = vpop.trf.xlu0
        %v1566 = vpop.trf.xlu0
        %v1567 = vpop.trf.xlu0
        %v1568 = vpop.trf.xlu0
        %v1569 = vpop.trf.xlu0
        %v1570 = vpop.trf.xlu0
        %v1571 = vpop.trf.xlu0
        %v1572 = vpop.trf.xlu0
        %v1573 = vpop.trf.xlu0
        %1574 = vxpose.xlu0.b32.start [1/16] %v1359, 128
        %1575 = vxpose.xlu0.b32.cont [2/16] %v1361, 128
        %1576 = vxpose.xlu0.b32.cont [3/16] 0.0, 128
        %1577 = vxpose.xlu0.b32.cont [4/16] 0.0, 128
        %1578 = vxpose.xlu0.b32.cont [5/16] 0.0, 128
        %1579 = vxpose.xlu0.b32.cont [6/16] 0.0, 128
        %1580 = vxpose.xlu0.b32.cont [7/16] 0.0, 128
        %1581 = vxpose.xlu0.b32.cont [8/16] 0.0, 128
        %1582 = vxpose.xlu0.b32.cont [9/16] 0.0, 128
        %1583 = vxpose.xlu0.b32.cont [10/16] 0.0, 128
        %1584 = vxpose.xlu0.b32.cont [11/16] 0.0, 128
        %1585 = vxpose.xlu0.b32.cont [12/16] 0.0, 128
        %1586 = vxpose.xlu0.b32.cont [13/16] 0.0, 128
        %1587 = vxpose.xlu0.b32.cont [14/16] 0.0, 128
        %1588 = vxpose.xlu0.b32.cont [15/16] 0.0, 128
        %1589 = vxpose.xlu0.b32.end [16/16] 0.0, 128
        %v1590 = vpop.trf.xlu0
        %v1591 = vpop.trf.xlu0
        %v1592 = vpop.trf.xlu0
        %v1593 = vpop.trf.xlu0
        %v1594 = vpop.trf.xlu0
        %v1595 = vpop.trf.xlu0
        %v1596 = vpop.trf.xlu0
        %v1597 = vpop.trf.xlu0
        %v1598 = vpop.trf.xlu0
        %v1599 = vpop.trf.xlu0
        %v1600 = vpop.trf.xlu0
        %v1601 = vpop.trf.xlu0
        %v1602 = vpop.trf.xlu0
        %v1603 = vpop.trf.xlu0
        %v1604 = vpop.trf.xlu0
        %v1605 = vpop.trf.xlu0
        %1606 = vxpose.xlu0.b32.start [1/16] %v1363, 128
        %1607 = vxpose.xlu0.b32.cont [2/16] %v1365, 128
        %1608 = vxpose.xlu0.b32.cont [3/16] 0.0, 128
        %1609 = vxpose.xlu0.b32.cont [4/16] 0.0, 128
        %1610 = vxpose.xlu0.b32.cont [5/16] 0.0, 128
        %1611 = vxpose.xlu0.b32.cont [6/16] 0.0, 128
        %1612 = vxpose.xlu0.b32.cont [7/16] 0.0, 128
        %1613 = vxpose.xlu0.b32.cont [8/16] 0.0, 128
        %1614 = vxpose.xlu0.b32.cont [9/16] 0.0, 128
        %1615 = vxpose.xlu0.b32.cont [10/16] 0.0, 128
        %1616 = vxpose.xlu0.b32.cont [11/16] 0.0, 128
        %1617 = vxpose.xlu0.b32.cont [12/16] 0.0, 128
        %1618 = vxpose.xlu0.b32.cont [13/16] 0.0, 128
        %1619 = vxpose.xlu0.b32.cont [14/16] 0.0, 128
        %1620 = vxpose.xlu0.b32.cont [15/16] 0.0, 128
        %1621 = vxpose.xlu0.b32.end [16/16] 0.0, 128
        %v1622 = vpop.trf.xlu0
        %v1623 = vpop.trf.xlu0
        %v1624 = vpop.trf.xlu0
        %v1625 = vpop.trf.xlu0
        %v1626 = vpop.trf.xlu0
        %v1627 = vpop.trf.xlu0
        %v1628 = vpop.trf.xlu0
        %v1629 = vpop.trf.xlu0
        %v1630 = vpop.trf.xlu0
        %v1631 = vpop.trf.xlu0
        %v1632 = vpop.trf.xlu0
        %v1633 = vpop.trf.xlu0
        %v1634 = vpop.trf.xlu0
        %v1635 = vpop.trf.xlu0
        %v1636 = vpop.trf.xlu0
        %v1637 = vpop.trf.xlu0
        %1670 = vrot.lane.b32.xlu0 %v1398, 16
        %v1671 = vpop.permute.xlu0 %1670
        %1672 = vrot.lane.b32.xlu0 %v1399, 16
        %v1673 = vpop.permute.xlu0 %1672
        %1674 = vrot.lane.b32.xlu0 %v1400, 16
        %v1675 = vpop.permute.xlu0 %1674
        %1676 = vrot.lane.b32.xlu0 %v1401, 16
        %v1677 = vpop.permute.xlu0 %1676
        %1678 = vrot.lane.b32.xlu0 %v1430, 16
        %v1679 = vpop.permute.xlu0 %1678
        %1680 = vrot.lane.b32.xlu0 %v1431, 16
        %v1681 = vpop.permute.xlu0 %1680
        %1682 = vrot.lane.b32.xlu0 %v1432, 16
        %v1683 = vpop.permute.xlu0 %1682
        %1684 = vrot.lane.b32.xlu0 %v1433, 16
        %v1685 = vpop.permute.xlu0 %1684
        %1686 = vrot.lane.b32.xlu0 %v1462, 16
        %v1687 = vpop.permute.xlu0 %1686
        %1688 = vrot.lane.b32.xlu0 %v1463, 16
        %v1689 = vpop.permute.xlu0 %1688
        %1690 = vrot.lane.b32.xlu0 %v1464, 16
        %v1691 = vpop.permute.xlu0 %1690
        %1692 = vrot.lane.b32.xlu0 %v1465, 16
        %v1693 = vpop.permute.xlu0 %1692
        %1694 = vrot.lane.b32.xlu0 %v1494, 16
        %v1695 = vpop.permute.xlu0 %1694
        %1696 = vrot.lane.b32.xlu0 %v1495, 16
        %v1697 = vpop.permute.xlu0 %1696
        %1698 = vrot.lane.b32.xlu0 %v1496, 16
        %v1699 = vpop.permute.xlu0 %1698
        %1700 = vrot.lane.b32.xlu0 %v1497, 16
        %v1701 = vpop.permute.xlu0 %1700
        %1702 = vrot.lane.b32.xlu0 %v1526, 16
        %v1703 = vpop.permute.xlu0 %1702
        %1704 = vrot.lane.b32.xlu0 %v1527, 16
        %v1705 = vpop.permute.xlu0 %1704
        %1706 = vrot.lane.b32.xlu0 %v1528, 16
        %v1707 = vpop.permute.xlu0 %1706
        %1708 = vrot.lane.b32.xlu0 %v1529, 16
        %v1709 = vpop.permute.xlu0 %1708
        %1710 = vrot.lane.b32.xlu0 %v1558, 16
        %v1711 = vpop.permute.xlu0 %1710
        %1712 = vrot.lane.b32.xlu0 %v1559, 16
        %v1713 = vpop.permute.xlu0 %1712
        %1714 = vrot.lane.b32.xlu0 %v1560, 16
        %v1715 = vpop.permute.xlu0 %1714
        %1716 = vrot.lane.b32.xlu0 %v1561, 16
        %v1717 = vpop.permute.xlu0 %1716
        %1718 = vrot.lane.b32.xlu0 %v1590, 16
        %v1719 = vpop.permute.xlu0 %1718
        %1720 = vrot.lane.b32.xlu0 %v1591, 16
        %v1721 = vpop.permute.xlu0 %1720
        %1722 = vrot.lane.b32.xlu0 %v1592, 16
        %v1723 = vpop.permute.xlu0 %1722
        %1724 = vrot.lane.b32.xlu0 %v1593, 16
        %v1725 = vpop.permute.xlu0 %1724
        %1726 = vrot.lane.b32.xlu0 %v1622, 16
        %v1727 = vpop.permute.xlu0 %1726
        %1728 = vrot.lane.b32.xlu0 %v1623, 16
        %v1729 = vpop.permute.xlu0 %1728
        %1730 = vrot.lane.b32.xlu0 %v1624, 16
        %v1731 = vpop.permute.xlu0 %1730
        %1732 = vrot.lane.b32.xlu0 %v1625, 16
        %v1733 = vpop.permute.xlu0 %1732
        %1766 = vrot.lane.b32.xlu0 %v1398, 32
        %v1767 = vpop.permute.xlu0 %1766
        %1768 = vrot.lane.b32.xlu0 %v1399, 32
        %v1769 = vpop.permute.xlu0 %1768
        %1770 = vrot.lane.b32.xlu0 %v1400, 32
        %v1771 = vpop.permute.xlu0 %1770
        %1772 = vrot.lane.b32.xlu0 %v1401, 32
        %v1773 = vpop.permute.xlu0 %1772
        %1774 = vrot.lane.b32.xlu0 %v1430, 32
        %v1775 = vpop.permute.xlu0 %1774
        %1776 = vrot.lane.b32.xlu0 %v1431, 32
        %v1777 = vpop.permute.xlu0 %1776
        %1778 = vrot.lane.b32.xlu0 %v1432, 32
        %v1779 = vpop.permute.xlu0 %1778
        %1780 = vrot.lane.b32.xlu0 %v1433, 32
        %v1781 = vpop.permute.xlu0 %1780
        %1782 = vrot.lane.b32.xlu0 %v1462, 32
        %v1783 = vpop.permute.xlu0 %1782
        %1784 = vrot.lane.b32.xlu0 %v1463, 32
        %v1785 = vpop.permute.xlu0 %1784
        %1786 = vrot.lane.b32.xlu0 %v1464, 32
        %v1787 = vpop.permute.xlu0 %1786
        %1788 = vrot.lane.b32.xlu0 %v1465, 32
        %v1789 = vpop.permute.xlu0 %1788
        %1790 = vrot.lane.b32.xlu0 %v1494, 32
        %v1791 = vpop.permute.xlu0 %1790
        %1792 = vrot.lane.b32.xlu0 %v1495, 32
        %v1793 = vpop.permute.xlu0 %1792
        %1794 = vrot.lane.b32.xlu0 %v1496, 32
        %v1795 = vpop.permute.xlu0 %1794
        %1796 = vrot.lane.b32.xlu0 %v1497, 32
        %v1797 = vpop.permute.xlu0 %1796
        %1798 = vrot.lane.b32.xlu0 %v1526, 32
        %v1799 = vpop.permute.xlu0 %1798
        %1800 = vrot.lane.b32.xlu0 %v1527, 32
        %v1801 = vpop.permute.xlu0 %1800
        %1802 = vrot.lane.b32.xlu0 %v1528, 32
        %v1803 = vpop.permute.xlu0 %1802
        %1804 = vrot.lane.b32.xlu0 %v1529, 32
        %v1805 = vpop.permute.xlu0 %1804
        %1806 = vrot.lane.b32.xlu0 %v1558, 32
        %v1807 = vpop.permute.xlu0 %1806
        %1808 = vrot.lane.b32.xlu0 %v1559, 32
        %v1809 = vpop.permute.xlu0 %1808
        %1810 = vrot.lane.b32.xlu0 %v1560, 32
        %v1811 = vpop.permute.xlu0 %1810
        %1812 = vrot.lane.b32.xlu0 %v1561, 32
        %v1813 = vpop.permute.xlu0 %1812
        %1814 = vrot.lane.b32.xlu0 %v1590, 32
        %v1815 = vpop.permute.xlu0 %1814
        %1816 = vrot.lane.b32.xlu0 %v1591, 32
        %v1817 = vpop.permute.xlu0 %1816
        %1818 = vrot.lane.b32.xlu0 %v1592, 32
        %v1819 = vpop.permute.xlu0 %1818
        %1820 = vrot.lane.b32.xlu0 %v1593, 32
        %v1821 = vpop.permute.xlu0 %1820
        %1822 = vrot.lane.b32.xlu0 %v1622, 32
        %v1823 = vpop.permute.xlu0 %1822
        %1824 = vrot.lane.b32.xlu0 %v1623, 32
        %v1825 = vpop.permute.xlu0 %1824
        %1826 = vrot.lane.b32.xlu0 %v1624, 32
        %v1827 = vpop.permute.xlu0 %1826
        %1828 = vrot.lane.b32.xlu0 %v1625, 32
        %v1829 = vpop.permute.xlu0 %1828
        %1862 = vrot.lane.b32.xlu0 %v1398, 48
        %v1863 = vpop.permute.xlu0 %1862
        %1864 = vrot.lane.b32.xlu0 %v1399, 48
        %v1865 = vpop.permute.xlu0 %1864
        %1866 = vrot.lane.b32.xlu0 %v1400, 48
        %v1867 = vpop.permute.xlu0 %1866
        %1868 = vrot.lane.b32.xlu0 %v1401, 48
        %v1869 = vpop.permute.xlu0 %1868
        %1870 = vrot.lane.b32.xlu0 %v1430, 48
        %v1871 = vpop.permute.xlu0 %1870
        %1872 = vrot.lane.b32.xlu0 %v1431, 48
        %v1873 = vpop.permute.xlu0 %1872
        %1874 = vrot.lane.b32.xlu0 %v1432, 48
        %v1875 = vpop.permute.xlu0 %1874
        %1876 = vrot.lane.b32.xlu0 %v1433, 48
        %v1877 = vpop.permute.xlu0 %1876
        %1878 = vrot.lane.b32.xlu0 %v1462, 48
        %v1879 = vpop.permute.xlu0 %1878
        %1880 = vrot.lane.b32.xlu0 %v1463, 48
        %v1881 = vpop.permute.xlu0 %1880
        %1882 = vrot.lane.b32.xlu0 %v1464, 48
        %v1883 = vpop.permute.xlu0 %1882
        %1884 = vrot.lane.b32.xlu0 %v1465, 48
        %v1885 = vpop.permute.xlu0 %1884
        %1886 = vrot.lane.b32.xlu0 %v1494, 48
        %v1887 = vpop.permute.xlu0 %1886
        %1888 = vrot.lane.b32.xlu0 %v1495, 48
        %v1889 = vpop.permute.xlu0 %1888
        %1890 = vrot.lane.b32.xlu0 %v1496, 48
        %v1891 = vpop.permute.xlu0 %1890
        %1892 = vrot.lane.b32.xlu0 %v1497, 48
        %v1893 = vpop.permute.xlu0 %1892
        %1894 = vrot.lane.b32.xlu0 %v1526, 48
        %v1895 = vpop.permute.xlu0 %1894
        %1896 = vrot.lane.b32.xlu0 %v1527, 48
        %v1897 = vpop.permute.xlu0 %1896
        %1898 = vrot.lane.b32.xlu0 %v1528, 48
        %v1899 = vpop.permute.xlu0 %1898
        %1900 = vrot.lane.b32.xlu0 %v1529, 48
        %v1901 = vpop.permute.xlu0 %1900
        %1902 = vrot.lane.b32.xlu0 %v1558, 48
        %v1903 = vpop.permute.xlu0 %1902
        %1904 = vrot.lane.b32.xlu0 %v1559, 48
        %v1905 = vpop.permute.xlu0 %1904
        %1906 = vrot.lane.b32.xlu0 %v1560, 48
        %v1907 = vpop.permute.xlu0 %1906
        %1908 = vrot.lane.b32.xlu0 %v1561, 48
        %v1909 = vpop.permute.xlu0 %1908
        %1910 = vrot.lane.b32.xlu0 %v1590, 48
        %v1911 = vpop.permute.xlu0 %1910
        %1912 = vrot.lane.b32.xlu0 %v1591, 48
        %v1913 = vpop.permute.xlu0 %1912
        %1914 = vrot.lane.b32.xlu0 %v1592, 48
        %v1915 = vpop.permute.xlu0 %1914
        %1916 = vrot.lane.b32.xlu0 %v1593, 48
        %v1917 = vpop.permute.xlu0 %1916
        %1918 = vrot.lane.b32.xlu0 %v1622, 48
        %v1919 = vpop.permute.xlu0 %1918
        %1920 = vrot.lane.b32.xlu0 %v1623, 48
        %v1921 = vpop.permute.xlu0 %1920
        %1922 = vrot.lane.b32.xlu0 %v1624, 48
        %v1923 = vpop.permute.xlu0 %1922
        %1924 = vrot.lane.b32.xlu0 %v1625, 48
        %v1925 = vpop.permute.xlu0 %1924
        %1958 = vrot.lane.b32.xlu0 %v1398, 64
        %v1959 = vpop.permute.xlu0 %1958
        %1960 = vrot.lane.b32.xlu0 %v1399, 64
        %v1961 = vpop.permute.xlu0 %1960
        %1962 = vrot.lane.b32.xlu0 %v1400, 64
        %v1963 = vpop.permute.xlu0 %1962
        %1964 = vrot.lane.b32.xlu0 %v1401, 64
        %v1965 = vpop.permute.xlu0 %1964
        %1966 = vrot.lane.b32.xlu0 %v1430, 64
        %v1967 = vpop.permute.xlu0 %1966
        %1968 = vrot.lane.b32.xlu0 %v1431, 64
        %v1969 = vpop.permute.xlu0 %1968
        %1970 = vrot.lane.b32.xlu0 %v1432, 64
        %v1971 = vpop.permute.xlu0 %1970
        %1972 = vrot.lane.b32.xlu0 %v1433, 64
        %v1973 = vpop.permute.xlu0 %1972
        %1974 = vrot.lane.b32.xlu0 %v1462, 64
        %v1975 = vpop.permute.xlu0 %1974
        %1976 = vrot.lane.b32.xlu0 %v1463, 64
        %v1977 = vpop.permute.xlu0 %1976
        %1978 = vrot.lane.b32.xlu0 %v1464, 64
        %v1979 = vpop.permute.xlu0 %1978
        %1980 = vrot.lane.b32.xlu0 %v1465, 64
        %v1981 = vpop.permute.xlu0 %1980
        %1982 = vrot.lane.b32.xlu0 %v1494, 64
        %v1983 = vpop.permute.xlu0 %1982
        %1984 = vrot.lane.b32.xlu0 %v1495, 64
        %v1985 = vpop.permute.xlu0 %1984
        %1986 = vrot.lane.b32.xlu0 %v1496, 64
        %v1987 = vpop.permute.xlu0 %1986
        %1988 = vrot.lane.b32.xlu0 %v1497, 64
        %v1989 = vpop.permute.xlu0 %1988
        %1990 = vrot.lane.b32.xlu0 %v1526, 64
        %v1991 = vpop.permute.xlu0 %1990
        %1992 = vrot.lane.b32.xlu0 %v1527, 64
        %v1993 = vpop.permute.xlu0 %1992
        %1994 = vrot.lane.b32.xlu0 %v1528, 64
        %v1995 = vpop.permute.xlu0 %1994
        %1996 = vrot.lane.b32.xlu0 %v1529, 64
        %v1997 = vpop.permute.xlu0 %1996
        %1998 = vrot.lane.b32.xlu0 %v1558, 64
        %v1999 = vpop.permute.xlu0 %1998
        %2000 = vrot.lane.b32.xlu0 %v1559, 64
        %v2001 = vpop.permute.xlu0 %2000
        %2002 = vrot.lane.b32.xlu0 %v1560, 64
        %v2003 = vpop.permute.xlu0 %2002
        %2004 = vrot.lane.b32.xlu0 %v1561, 64
        %v2005 = vpop.permute.xlu0 %2004
        %2006 = vrot.lane.b32.xlu0 %v1590, 64
        %v2007 = vpop.permute.xlu0 %2006
        %2008 = vrot.lane.b32.xlu0 %v1591, 64
        %v2009 = vpop.permute.xlu0 %2008
        %2010 = vrot.lane.b32.xlu0 %v1592, 64
        %v2011 = vpop.permute.xlu0 %2010
        %2012 = vrot.lane.b32.xlu0 %v1593, 64
        %v2013 = vpop.permute.xlu0 %2012
        %2014 = vrot.lane.b32.xlu0 %v1622, 64
        %v2015 = vpop.permute.xlu0 %2014
        %2016 = vrot.lane.b32.xlu0 %v1623, 64
        %v2017 = vpop.permute.xlu0 %2016
        %2018 = vrot.lane.b32.xlu0 %v1624, 64
        %v2019 = vpop.permute.xlu0 %2018
        %2020 = vrot.lane.b32.xlu0 %v1625, 64
        %v2021 = vpop.permute.xlu0 %2020
        %2054 = vrot.lane.b32.xlu0 %v1398, 80
        %v2055 = vpop.permute.xlu0 %2054
        %2056 = vrot.lane.b32.xlu0 %v1399, 80
        %v2057 = vpop.permute.xlu0 %2056
        %2058 = vrot.lane.b32.xlu0 %v1400, 80
        %v2059 = vpop.permute.xlu0 %2058
        %2060 = vrot.lane.b32.xlu0 %v1401, 80
        %v2061 = vpop.permute.xlu0 %2060
        %2062 = vrot.lane.b32.xlu0 %v1430, 80
        %v2063 = vpop.permute.xlu0 %2062
        %2064 = vrot.lane.b32.xlu0 %v1431, 80
        %v2065 = vpop.permute.xlu0 %2064
        %2066 = vrot.lane.b32.xlu0 %v1432, 80
        %v2067 = vpop.permute.xlu0 %2066
        %2068 = vrot.lane.b32.xlu0 %v1433, 80
        %v2069 = vpop.permute.xlu0 %2068
        %2070 = vrot.lane.b32.xlu0 %v1462, 80
        %v2071 = vpop.permute.xlu0 %2070
        %2072 = vrot.lane.b32.xlu0 %v1463, 80
        %v2073 = vpop.permute.xlu0 %2072
        %2074 = vrot.lane.b32.xlu0 %v1464, 80
        %v2075 = vpop.permute.xlu0 %2074
        %2076 = vrot.lane.b32.xlu0 %v1465, 80
        %v2077 = vpop.permute.xlu0 %2076
        %2078 = vrot.lane.b32.xlu0 %v1494, 80
        %v2079 = vpop.permute.xlu0 %2078
        %2080 = vrot.lane.b32.xlu0 %v1495, 80
        %v2081 = vpop.permute.xlu0 %2080
        %2082 = vrot.lane.b32.xlu0 %v1496, 80
        %v2083 = vpop.permute.xlu0 %2082
        %2084 = vrot.lane.b32.xlu0 %v1497, 80
        %v2085 = vpop.permute.xlu0 %2084
        %2086 = vrot.lane.b32.xlu0 %v1526, 80
        %v2087 = vpop.permute.xlu0 %2086
        %2088 = vrot.lane.b32.xlu0 %v1527, 80
        %v2089 = vpop.permute.xlu0 %2088
        %2090 = vrot.lane.b32.xlu0 %v1528, 80
        %v2091 = vpop.permute.xlu0 %2090
        %2092 = vrot.lane.b32.xlu0 %v1529, 80
        %v2093 = vpop.permute.xlu0 %2092
        %2094 = vrot.lane.b32.xlu0 %v1558, 80
        %v2095 = vpop.permute.xlu0 %2094
        %2096 = vrot.lane.b32.xlu0 %v1559, 80
        %v2097 = vpop.permute.xlu0 %2096
        %2098 = vrot.lane.b32.xlu0 %v1560, 80
        %v2099 = vpop.permute.xlu0 %2098
        %2100 = vrot.lane.b32.xlu0 %v1561, 80
        %v2101 = vpop.permute.xlu0 %2100
        %2102 = vrot.lane.b32.xlu0 %v1590, 80
        %v2103 = vpop.permute.xlu0 %2102
        %2104 = vrot.lane.b32.xlu0 %v1591, 80
        %v2105 = vpop.permute.xlu0 %2104
        %2106 = vrot.lane.b32.xlu0 %v1592, 80
        %v2107 = vpop.permute.xlu0 %2106
        %2108 = vrot.lane.b32.xlu0 %v1593, 80
        %v2109 = vpop.permute.xlu0 %2108
        %2110 = vrot.lane.b32.xlu0 %v1622, 80
        %v2111 = vpop.permute.xlu0 %2110
        %2112 = vrot.lane.b32.xlu0 %v1623, 80
        %v2113 = vpop.permute.xlu0 %2112
        %2114 = vrot.lane.b32.xlu0 %v1624, 80
        %v2115 = vpop.permute.xlu0 %2114
        %2116 = vrot.lane.b32.xlu0 %v1625, 80
        %v2117 = vpop.permute.xlu0 %2116
        %2150 = vrot.lane.b32.xlu0 %v1398, 96
        %v2151 = vpop.permute.xlu0 %2150
        %2152 = vrot.lane.b32.xlu0 %v1399, 96
        %v2153 = vpop.permute.xlu0 %2152
        %2154 = vrot.lane.b32.xlu0 %v1400, 96
        %v2155 = vpop.permute.xlu0 %2154
        %2156 = vrot.lane.b32.xlu0 %v1401, 96
        %v2157 = vpop.permute.xlu0 %2156
        %2158 = vrot.lane.b32.xlu0 %v1430, 96
        %v2159 = vpop.permute.xlu0 %2158
        %2160 = vrot.lane.b32.xlu0 %v1431, 96
        %v2161 = vpop.permute.xlu0 %2160
        %2162 = vrot.lane.b32.xlu0 %v1432, 96
        %v2163 = vpop.permute.xlu0 %2162
        %2164 = vrot.lane.b32.xlu0 %v1433, 96
        %v2165 = vpop.permute.xlu0 %2164
        %2166 = vrot.lane.b32.xlu0 %v1462, 96
        %v2167 = vpop.permute.xlu0 %2166
        %2168 = vrot.lane.b32.xlu0 %v1463, 96
        %v2169 = vpop.permute.xlu0 %2168
        %2170 = vrot.lane.b32.xlu0 %v1464, 96
        %v2171 = vpop.permute.xlu0 %2170
        %2172 = vrot.lane.b32.xlu0 %v1465, 96
        %v2173 = vpop.permute.xlu0 %2172
        %2174 = vrot.lane.b32.xlu0 %v1494, 96
        %v2175 = vpop.permute.xlu0 %2174
        %2176 = vrot.lane.b32.xlu0 %v1495, 96
        %v2177 = vpop.permute.xlu0 %2176
        %2178 = vrot.lane.b32.xlu0 %v1496, 96
        %v2179 = vpop.permute.xlu0 %2178
        %2180 = vrot.lane.b32.xlu0 %v1497, 96
        %v2181 = vpop.permute.xlu0 %2180
        %2182 = vrot.lane.b32.xlu0 %v1526, 96
        %v2183 = vpop.permute.xlu0 %2182
        %2184 = vrot.lane.b32.xlu0 %v1527, 96
        %v2185 = vpop.permute.xlu0 %2184
        %2186 = vrot.lane.b32.xlu0 %v1528, 96
        %v2187 = vpop.permute.xlu0 %2186
        %2188 = vrot.lane.b32.xlu0 %v1529, 96
        %v2189 = vpop.permute.xlu0 %2188
        %2190 = vrot.lane.b32.xlu0 %v1558, 96
        %v2191 = vpop.permute.xlu0 %2190
        %2192 = vrot.lane.b32.xlu0 %v1559, 96
        %v2193 = vpop.permute.xlu0 %2192
        %2194 = vrot.lane.b32.xlu0 %v1560, 96
        %v2195 = vpop.permute.xlu0 %2194
        %2196 = vrot.lane.b32.xlu0 %v1561, 96
        %v2197 = vpop.permute.xlu0 %2196
        %2198 = vrot.lane.b32.xlu0 %v1590, 96
        %v2199 = vpop.permute.xlu0 %2198
        %2200 = vrot.lane.b32.xlu0 %v1591, 96
        %v2201 = vpop.permute.xlu0 %2200
        %2202 = vrot.lane.b32.xlu0 %v1592, 96
        %v2203 = vpop.permute.xlu0 %2202
        %2204 = vrot.lane.b32.xlu0 %v1593, 96
        %v2205 = vpop.permute.xlu0 %2204
        %2206 = vrot.lane.b32.xlu0 %v1622, 96
        %v2207 = vpop.permute.xlu0 %2206
        %2208 = vrot.lane.b32.xlu0 %v1623, 96
        %v2209 = vpop.permute.xlu0 %2208
        %2210 = vrot.lane.b32.xlu0 %v1624, 96
        %v2211 = vpop.permute.xlu0 %2210
        %2212 = vrot.lane.b32.xlu0 %v1625, 96
        %v2213 = vpop.permute.xlu0 %2212
        %2246 = vrot.lane.b32.xlu0 %v1398, 112
        %v2247 = vpop.permute.xlu0 %2246
        %2248 = vrot.lane.b32.xlu0 %v1399, 112
        %v2249 = vpop.permute.xlu0 %2248
        %2250 = vrot.lane.b32.xlu0 %v1400, 112
        %v2251 = vpop.permute.xlu0 %2250
        %2252 = vrot.lane.b32.xlu0 %v1401, 112
        %v2253 = vpop.permute.xlu0 %2252
        %2254 = vrot.lane.b32.xlu0 %v1430, 112
        %v2255 = vpop.permute.xlu0 %2254
        %2256 = vrot.lane.b32.xlu0 %v1431, 112
        %v2257 = vpop.permute.xlu0 %2256
        %2258 = vrot.lane.b32.xlu0 %v1432, 112
        %v2259 = vpop.permute.xlu0 %2258
        %2260 = vrot.lane.b32.xlu0 %v1433, 112
        %v2261 = vpop.permute.xlu0 %2260
        %2262 = vrot.lane.b32.xlu0 %v1462, 112
        %v2263 = vpop.permute.xlu0 %2262
        %2264 = vrot.lane.b32.xlu0 %v1463, 112
        %v2265 = vpop.permute.xlu0 %2264
        %2266 = vrot.lane.b32.xlu0 %v1464, 112
        %v2267 = vpop.permute.xlu0 %2266
        %2268 = vrot.lane.b32.xlu0 %v1465, 112
        %v2269 = vpop.permute.xlu0 %2268
        %2270 = vrot.lane.b32.xlu0 %v1494, 112
        %v2271 = vpop.permute.xlu0 %2270
        %2272 = vrot.lane.b32.xlu0 %v1495, 112
        %v2273 = vpop.permute.xlu0 %2272
        %2274 = vrot.lane.b32.xlu0 %v1496, 112
        %v2275 = vpop.permute.xlu0 %2274
        %2276 = vrot.lane.b32.xlu0 %v1497, 112
        %v2277 = vpop.permute.xlu0 %2276
        %2278 = vrot.lane.b32.xlu0 %v1526, 112
        %v2279 = vpop.permute.xlu0 %2278
        %2280 = vrot.lane.b32.xlu0 %v1527, 112
        %v2281 = vpop.permute.xlu0 %2280
        %2282 = vrot.lane.b32.xlu0 %v1528, 112
        %v2283 = vpop.permute.xlu0 %2282
        %2284 = vrot.lane.b32.xlu0 %v1529, 112
        %v2285 = vpop.permute.xlu0 %2284
        %2286 = vrot.lane.b32.xlu0 %v1558, 112
        %v2287 = vpop.permute.xlu0 %2286
        %2288 = vrot.lane.b32.xlu0 %v1559, 112
        %v2289 = vpop.permute.xlu0 %2288
        %2290 = vrot.lane.b32.xlu0 %v1560, 112
        %v2291 = vpop.permute.xlu0 %2290
        %2292 = vrot.lane.b32.xlu0 %v1561, 112
        %v2293 = vpop.permute.xlu0 %2292
        %2294 = vrot.lane.b32.xlu0 %v1590, 112
        %v2295 = vpop.permute.xlu0 %2294
        %2296 = vrot.lane.b32.xlu0 %v1591, 112
        %v2297 = vpop.permute.xlu0 %2296
        %2298 = vrot.lane.b32.xlu0 %v1592, 112
        %v2299 = vpop.permute.xlu0 %2298
        %2300 = vrot.lane.b32.xlu0 %v1593, 112
        %v2301 = vpop.permute.xlu0 %2300
        %2302 = vrot.lane.b32.xlu0 %v1622, 112
        %v2303 = vpop.permute.xlu0 %2302
        %2304 = vrot.lane.b32.xlu0 %v1623, 112
        %v2305 = vpop.permute.xlu0 %2304
        %2306 = vrot.lane.b32.xlu0 %v1624, 112
        %v2307 = vpop.permute.xlu0 %2306
        %2308 = vrot.lane.b32.xlu0 %v1625, 112
        %v2309 = vpop.permute.xlu0 %2308
        %vm2342 = vcmask 130048
        %v2343 = vsel %vm2342, %v1398, %v1671
        %v2344 = vsel %vm2342, %v1399, %v1673
        %v2345 = vsel %vm2342, %v1400, %v1675
        %v2346 = vsel %vm2342, %v1401, %v1677
        %v2347 = vsel %vm2342, %v1430, %v1679
        %v2348 = vsel %vm2342, %v1431, %v1681
        %v2349 = vsel %vm2342, %v1432, %v1683
        %v2350 = vsel %vm2342, %v1433, %v1685
        %v2351 = vsel %vm2342, %v1462, %v1687
        %v2352 = vsel %vm2342, %v1463, %v1689
        %v2353 = vsel %vm2342, %v1464, %v1691
        %v2354 = vsel %vm2342, %v1465, %v1693
        %v2355 = vsel %vm2342, %v1494, %v1695
        %v2356 = vsel %vm2342, %v1495, %v1697
        %v2357 = vsel %vm2342, %v1496, %v1699
        %v2358 = vsel %vm2342, %v1497, %v1701
        %v2359 = vsel %vm2342, %v1526, %v1703
        %v2360 = vsel %vm2342, %v1527, %v1705
        %v2361 = vsel %vm2342, %v1528, %v1707
        %v2362 = vsel %vm2342, %v1529, %v1709
        %v2363 = vsel %vm2342, %v1558, %v1711
        %v2364 = vsel %vm2342, %v1559, %v1713
        %v2365 = vsel %vm2342, %v1560, %v1715
        %v2366 = vsel %vm2342, %v1561, %v1717
        %v2367 = vsel %vm2342, %v1590, %v1719
        %v2368 = vsel %vm2342, %v1591, %v1721
        %v2369 = vsel %vm2342, %v1592, %v1723
        %v2370 = vsel %vm2342, %v1593, %v1725
        %v2371 = vsel %vm2342, %v1622, %v1727
        %v2372 = vsel %vm2342, %v1623, %v1729
        %v2373 = vsel %vm2342, %v1624, %v1731
        %v2374 = vsel %vm2342, %v1625, %v1733
        %v2375 = vsel %vm1204, %v2343, %v1767
        %v2376 = vsel %vm1204, %v2344, %v1769
        %v2377 = vsel %vm1204, %v2345, %v1771
        %v2378 = vsel %vm1204, %v2346, %v1773
        %v2379 = vsel %vm1204, %v2347, %v1775
        %v2380 = vsel %vm1204, %v2348, %v1777
        %v2381 = vsel %vm1204, %v2349, %v1779
        %v2382 = vsel %vm1204, %v2350, %v1781
        %v2383 = vsel %vm1204, %v2351, %v1783
        %v2384 = vsel %vm1204, %v2352, %v1785
        %v2385 = vsel %vm1204, %v2353, %v1787
        %v2386 = vsel %vm1204, %v2354, %v1789
        %v2387 = vsel %vm1204, %v2355, %v1791
        %v2388 = vsel %vm1204, %v2356, %v1793
        %v2389 = vsel %vm1204, %v2357, %v1795
        %v2390 = vsel %vm1204, %v2358, %v1797
        %v2391 = vsel %vm1204, %v2359, %v1799
        %v2392 = vsel %vm1204, %v2360, %v1801
        %v2393 = vsel %vm1204, %v2361, %v1803
        %v2394 = vsel %vm1204, %v2362, %v1805
        %v2395 = vsel %vm1204, %v2363, %v1807
        %v2396 = vsel %vm1204, %v2364, %v1809
        %v2397 = vsel %vm1204, %v2365, %v1811
        %v2398 = vsel %vm1204, %v2366, %v1813
        %v2399 = vsel %vm1204, %v2367, %v1815
        %v2400 = vsel %vm1204, %v2368, %v1817
        %v2401 = vsel %vm1204, %v2369, %v1819
        %v2402 = vsel %vm1204, %v2370, %v1821
        %v2403 = vsel %vm1204, %v2371, %v1823
        %v2404 = vsel %vm1204, %v2372, %v1825
        %v2405 = vsel %vm1204, %v2373, %v1827
        %v2406 = vsel %vm1204, %v2374, %v1829
        %vm2407 = vcmask 392192
        %v2408 = vsel %vm2407, %v2375, %v1863
        %v2409 = vsel %vm2407, %v2376, %v1865
        %v2410 = vsel %vm2407, %v2377, %v1867
        %v2411 = vsel %vm2407, %v2378, %v1869
        %v2412 = vsel %vm2407, %v2379, %v1871
        %v2413 = vsel %vm2407, %v2380, %v1873
        %v2414 = vsel %vm2407, %v2381, %v1875
        %v2415 = vsel %vm2407, %v2382, %v1877
        %v2416 = vsel %vm2407, %v2383, %v1879
        %v2417 = vsel %vm2407, %v2384, %v1881
        %v2418 = vsel %vm2407, %v2385, %v1883
        %v2419 = vsel %vm2407, %v2386, %v1885
        %v2420 = vsel %vm2407, %v2387, %v1887
        %v2421 = vsel %vm2407, %v2388, %v1889
        %v2422 = vsel %vm2407, %v2389, %v1891
        %v2423 = vsel %vm2407, %v2390, %v1893
        %v2424 = vsel %vm2407, %v2391, %v1895
        %v2425 = vsel %vm2407, %v2392, %v1897
        %v2426 = vsel %vm2407, %v2393, %v1899
        %v2427 = vsel %vm2407, %v2394, %v1901
        %v2428 = vsel %vm2407, %v2395, %v1903
        %v2429 = vsel %vm2407, %v2396, %v1905
        %v2430 = vsel %vm2407, %v2397, %v1907
        %v2431 = vsel %vm2407, %v2398, %v1909
        %v2432 = vsel %vm2407, %v2399, %v1911
        %v2433 = vsel %vm2407, %v2400, %v1913
        %v2434 = vsel %vm2407, %v2401, %v1915
        %v2435 = vsel %vm2407, %v2402, %v1917
        %v2436 = vsel %vm2407, %v2403, %v1919
        %v2437 = vsel %vm2407, %v2404, %v1921
        %v2438 = vsel %vm2407, %v2405, %v1923
        %v2439 = vsel %vm2407, %v2406, %v1925
        %vm2440 = vcmask 523264
        %v2441 = vsel %vm2440, %v2408, %v1959
        %v2442 = vsel %vm2440, %v2409, %v1961
        %v2443 = vsel %vm2440, %v2410, %v1963
        %v2444 = vsel %vm2440, %v2411, %v1965
        %v2445 = vsel %vm2440, %v2412, %v1967
        %v2446 = vsel %vm2440, %v2413, %v1969
        %v2447 = vsel %vm2440, %v2414, %v1971
        %v2448 = vsel %vm2440, %v2415, %v1973
        %v2449 = vsel %vm2440, %v2416, %v1975
        %v2450 = vsel %vm2440, %v2417, %v1977
        %v2451 = vsel %vm2440, %v2418, %v1979
        %v2452 = vsel %vm2440, %v2419, %v1981
        %v2453 = vsel %vm2440, %v2420, %v1983
        %v2454 = vsel %vm2440, %v2421, %v1985
        %v2455 = vsel %vm2440, %v2422, %v1987
        %v2456 = vsel %vm2440, %v2423, %v1989
        %v2457 = vsel %vm2440, %v2424, %v1991
        %v2458 = vsel %vm2440, %v2425, %v1993
        %v2459 = vsel %vm2440, %v2426, %v1995
        %v2460 = vsel %vm2440, %v2427, %v1997
        %v2461 = vsel %vm2440, %v2428, %v1999
        %v2462 = vsel %vm2440, %v2429, %v2001
        %v2463 = vsel %vm2440, %v2430, %v2003
        %v2464 = vsel %vm2440, %v2431, %v2005
        %v2465 = vsel %vm2440, %v2432, %v2007
        %v2466 = vsel %vm2440, %v2433, %v2009
        %v2467 = vsel %vm2440, %v2434, %v2011
        %v2468 = vsel %vm2440, %v2435, %v2013
        %v2469 = vsel %vm2440, %v2436, %v2015
        %v2470 = vsel %vm2440, %v2437, %v2017
        %v2471 = vsel %vm2440, %v2438, %v2019
        %v2472 = vsel %vm2440, %v2439, %v2021
        %vm2473 = vcmask 654336
        %v2474 = vsel %vm2473, %v2441, %v2055
        %v2475 = vsel %vm2473, %v2442, %v2057
        %v2476 = vsel %vm2473, %v2443, %v2059
        %v2477 = vsel %vm2473, %v2444, %v2061
        %v2478 = vsel %vm2473, %v2445, %v2063
        %v2479 = vsel %vm2473, %v2446, %v2065
        %v2480 = vsel %vm2473, %v2447, %v2067
        %v2481 = vsel %vm2473, %v2448, %v2069
        %v2482 = vsel %vm2473, %v2449, %v2071
        %v2483 = vsel %vm2473, %v2450, %v2073
        %v2484 = vsel %vm2473, %v2451, %v2075
        %v2485 = vsel %vm2473, %v2452, %v2077
        %v2486 = vsel %vm2473, %v2453, %v2079
        %v2487 = vsel %vm2473, %v2454, %v2081
        %v2488 = vsel %vm2473, %v2455, %v2083
        %v2489 = vsel %vm2473, %v2456, %v2085
        %v2490 = vsel %vm2473, %v2457, %v2087
        %v2491 = vsel %vm2473, %v2458, %v2089
        %v2492 = vsel %vm2473, %v2459, %v2091
        %v2493 = vsel %vm2473, %v2460, %v2093
        %v2494 = vsel %vm2473, %v2461, %v2095
        %v2495 = vsel %vm2473, %v2462, %v2097
        %v2496 = vsel %vm2473, %v2463, %v2099
        %v2497 = vsel %vm2473, %v2464, %v2101
        %v2498 = vsel %vm2473, %v2465, %v2103
        %v2499 = vsel %vm2473, %v2466, %v2105
        %v2500 = vsel %vm2473, %v2467, %v2107
        %v2501 = vsel %vm2473, %v2468, %v2109
        %v2502 = vsel %vm2473, %v2469, %v2111
        %v2503 = vsel %vm2473, %v2470, %v2113
        %v2504 = vsel %vm2473, %v2471, %v2115
        %v2505 = vsel %vm2473, %v2472, %v2117
        %vm2506 = vcmask 785408
        %v2507 = vsel %vm2506, %v2474, %v2151
        %v2508 = vsel %vm2506, %v2475, %v2153
        %v2509 = vsel %vm2506, %v2476, %v2155
        %v2510 = vsel %vm2506, %v2477, %v2157
        %v2511 = vsel %vm2506, %v2478, %v2159
        %v2512 = vsel %vm2506, %v2479, %v2161
        %v2513 = vsel %vm2506, %v2480, %v2163
        %v2514 = vsel %vm2506, %v2481, %v2165
        %v2515 = vsel %vm2506, %v2482, %v2167
        %v2516 = vsel %vm2506, %v2483, %v2169
        %v2517 = vsel %vm2506, %v2484, %v2171
        %v2518 = vsel %vm2506, %v2485, %v2173
        %v2519 = vsel %vm2506, %v2486, %v2175
        %v2520 = vsel %vm2506, %v2487, %v2177
        %v2521 = vsel %vm2506, %v2488, %v2179
        %v2522 = vsel %vm2506, %v2489, %v2181
        %v2523 = vsel %vm2506, %v2490, %v2183
        %v2524 = vsel %vm2506, %v2491, %v2185
        %v2525 = vsel %vm2506, %v2492, %v2187
        %v2526 = vsel %vm2506, %v2493, %v2189
        %v2527 = vsel %vm2506, %v2494, %v2191
        %v2528 = vsel %vm2506, %v2495, %v2193
        %v2529 = vsel %vm2506, %v2496, %v2195
        %v2530 = vsel %vm2506, %v2497, %v2197
        %v2531 = vsel %vm2506, %v2498, %v2199
        %v2532 = vsel %vm2506, %v2499, %v2201
        %v2533 = vsel %vm2506, %v2500, %v2203
        %v2534 = vsel %vm2506, %v2501, %v2205
        %v2535 = vsel %vm2506, %v2502, %v2207
        %v2536 = vsel %vm2506, %v2503, %v2209
        %v2537 = vsel %vm2506, %v2504, %v2211
        %v2538 = vsel %vm2506, %v2505, %v2213
        %vm2539 = vcmask 916480
        %v2540 = vsel %vm2539, %v2507, %v2247
        %v2541 = vsel %vm2539, %v2508, %v2249
        %v2542 = vsel %vm2539, %v2509, %v2251
        %v2543 = vsel %vm2539, %v2510, %v2253
        %v2544 = vsel %vm2539, %v2511, %v2255
        %v2545 = vsel %vm2539, %v2512, %v2257
        %v2546 = vsel %vm2539, %v2513, %v2259
        %v2547 = vsel %vm2539, %v2514, %v2261
        %v2548 = vsel %vm2539, %v2515, %v2263
        %v2549 = vsel %vm2539, %v2516, %v2265
        %v2550 = vsel %vm2539, %v2517, %v2267
        %v2551 = vsel %vm2539, %v2518, %v2269
        %v2552 = vsel %vm2539, %v2519, %v2271
        %v2553 = vsel %vm2539, %v2520, %v2273
        %v2554 = vsel %vm2539, %v2521, %v2275
        %v2555 = vsel %vm2539, %v2522, %v2277
        %v2556 = vsel %vm2539, %v2523, %v2279
        %v2557 = vsel %vm2539, %v2524, %v2281
        %v2558 = vsel %vm2539, %v2525, %v2283
        %v2559 = vsel %vm2539, %v2526, %v2285
        %v2560 = vsel %vm2539, %v2527, %v2287
        %v2561 = vsel %vm2539, %v2528, %v2289
        %v2562 = vsel %vm2539, %v2529, %v2291
        %v2563 = vsel %vm2539, %v2530, %v2293
        %v2564 = vsel %vm2539, %v2531, %v2295
        %v2565 = vsel %vm2539, %v2532, %v2297
        %v2566 = vsel %vm2539, %v2533, %v2299
        %v2567 = vsel %vm2539, %v2534, %v2301
        %v2568 = vsel %vm2539, %v2535, %v2303
        %v2569 = vsel %vm2539, %v2536, %v2305
        %v2570 = vsel %vm2539, %v2537, %v2307
        %v2571 = vsel %vm2539, %v2538, %v2309
        %v2572 = vld [vmem:[#allocation7] sm:$0xff]
        %v2573 = vld [vmem:[#allocation7 + $0x8] sm:$0xff]
        %v2574 = vld [vmem:[#allocation7 + $0x10] sm:$0xff]
        %v2575 = vld [vmem:[#allocation7 + $0x18] sm:$0xff]
        %v2576 = vmul.f32 %v2540, %v2572
        %v2577 = vmul.f32 %v2541, %v2573
        %v2578 = vmul.f32 %v2542, %v2574
        %v2579 = vmul.f32 %v2543, %v2575
        %v2580 = vmul.f32 %v2544, %v2572
        %v2581 = vmul.f32 %v2545, %v2573
        %v2582 = vmul.f32 %v2546, %v2574
        %v2583 = vmul.f32 %v2547, %v2575
        %v2584 = vmul.f32 %v2548, %v2572
        %v2585 = vmul.f32 %v2549, %v2573
        %v2586 = vmul.f32 %v2550, %v2574
        %v2587 = vmul.f32 %v2551, %v2575
        %v2588 = vmul.f32 %v2552, %v2572
        %v2589 = vmul.f32 %v2553, %v2573
        %v2590 = vmul.f32 %v2554, %v2574
        %v2591 = vmul.f32 %v2555, %v2575
        %v2592 = vmul.f32 %v2556, %v2572
        %v2593 = vmul.f32 %v2557, %v2573
        %v2594 = vmul.f32 %v2558, %v2574
        %v2595 = vmul.f32 %v2559, %v2575
        %v2596 = vmul.f32 %v2560, %v2572
        %v2597 = vmul.f32 %v2561, %v2573
        %v2598 = vmul.f32 %v2562, %v2574
        %v2599 = vmul.f32 %v2563, %v2575
        %v2600 = vmul.f32 %v2564, %v2572
        %v2601 = vmul.f32 %v2565, %v2573
        %v2602 = vmul.f32 %v2566, %v2574
        %v2603 = vmul.f32 %v2567, %v2575
        %v2604 = vmul.f32 %v2568, %v2572
        %v2605 = vmul.f32 %v2569, %v2573
        %v2606 = vmul.f32 %v2570, %v2574
        %v2607 = vmul.f32 %v2571, %v2575
        %v2608 = vsel %vm1204, %v1271, 0
        %v2610 = vsel %vm1204, %v1274, 0
        %2612 = vmatpush.msra.mxu0 0.0
        %2613 = vmatpush.msra.mxu0 0.0
        %2614 = vmatpush.msra.mxu0 0.0
        %2615 = vmatpush.msra.mxu0 0.0
        %2616 = vmatpush.msra.mxu0 0.0
        %2617 = vmatpush.msra.mxu0 0.0
        %2618 = vmatpush.msra.mxu0 0.0
        %2619 = vmatpush.msra.mxu0 0.0
        %2620 = vmatpush.msra.mxu0 0.0
        %2621 = vmatpush.msra.mxu0 0.0
        %2622 = vmatpush.msra.mxu0 0.0
        %2623 = vmatpush.msra.mxu0 0.0
        %2624 = vmatpush.msra.mxu0 %v2579
        %2625 = vmatpush.msra.mxu0 %v2578
        %2626 = vmatpush.msra.mxu0 %v2577
        %2627 = vmatpush.msra.mxu0 %v2576
        %2628 = vmatmul.f32.gmra.mxu0 %v2608
        %v2629 = vpop.f32.mrf.mxu0
        %v2630 = vadd.f32 0.0, %v2629
        %2631 = vmatmul.f32.gmra.mxu0 %v2610
        %v2632 = vpop.f32.mrf.mxu0
        %v2633 = vadd.f32 0.0, %v2632
        %2634 = vdwg.mxu0
        %v2635 = vsel %vm1204, %v1277, 0
        %v2637 = vsel %vm1204, %v1280, 0
        %2639 = vmatpush.msra.mxu0 0.0
        %2640 = vmatpush.msra.mxu0 0.0
        %2641 = vmatpush.msra.mxu0 0.0
        %2642 = vmatpush.msra.mxu0 0.0
        %2643 = vmatpush.msra.mxu0 0.0
        %2644 = vmatpush.msra.mxu0 0.0
        %2645 = vmatpush.msra.mxu0 0.0
        %2646 = vmatpush.msra.mxu0 0.0
        %2647 = vmatpush.msra.mxu0 0.0
        %2648 = vmatpush.msra.mxu0 0.0
        %2649 = vmatpush.msra.mxu0 0.0
        %2650 = vmatpush.msra.mxu0 0.0
        %2651 = vmatpush.msra.mxu0 %v2583
        %2652 = vmatpush.msra.mxu0 %v2582
        %2653 = vmatpush.msra.mxu0 %v2581
        %2654 = vmatpush.msra.mxu0 %v2580
        %2655 = vmatmul.f32.gmra.mxu0 %v2635
        %v2656 = vpop.f32.mrf.mxu0
        %v2657 = vadd.f32 0.0, %v2656
        %2658 = vmatmul.f32.gmra.mxu0 %v2637
        %v2659 = vpop.f32.mrf.mxu0
        %v2660 = vadd.f32 0.0, %v2659
        %2661 = vdwg.mxu0
        %v2662 = vsel %vm1204, %v1283, 0
        %v2664 = vsel %vm1204, %v1286, 0
        %2666 = vmatpush.msra.mxu0 0.0
        %2667 = vmatpush.msra.mxu0 0.0
        %2668 = vmatpush.msra.mxu0 0.0
        %2669 = vmatpush.msra.mxu0 0.0
        %2670 = vmatpush.msra.mxu0 0.0
        %2671 = vmatpush.msra.mxu0 0.0
        %2672 = vmatpush.msra.mxu0 0.0
        %2673 = vmatpush.msra.mxu0 0.0
        %2674 = vmatpush.msra.mxu0 0.0
        %2675 = vmatpush.msra.mxu0 0.0
        %2676 = vmatpush.msra.mxu0 0.0
        %2677 = vmatpush.msra.mxu0 0.0
        %2678 = vmatpush.msra.mxu0 %v2587
        %2679 = vmatpush.msra.mxu0 %v2586
        %2680 = vmatpush.msra.mxu0 %v2585
        %2681 = vmatpush.msra.mxu0 %v2584
        %2682 = vmatmul.f32.gmra.mxu0 %v2662
        %v2683 = vpop.f32.mrf.mxu0
        %v2684 = vadd.f32 0.0, %v2683
        %2685 = vmatmul.f32.gmra.mxu0 %v2664
        %v2686 = vpop.f32.mrf.mxu0
        %v2687 = vadd.f32 0.0, %v2686
        %2688 = vdwg.mxu0
        %v2689 = vsel %vm1204, %v1289, 0
        %v2691 = vsel %vm1204, %v1292, 0
        %2693 = vmatpush.msra.mxu0 0.0
        %2694 = vmatpush.msra.mxu0 0.0
        %2695 = vmatpush.msra.mxu0 0.0
        %2696 = vmatpush.msra.mxu0 0.0
        %2697 = vmatpush.msra.mxu0 0.0
        %2698 = vmatpush.msra.mxu0 0.0
        %2699 = vmatpush.msra.mxu0 0.0
        %2700 = vmatpush.msra.mxu0 0.0
        %2701 = vmatpush.msra.mxu0 0.0
        %2702 = vmatpush.msra.mxu0 0.0
        %2703 = vmatpush.msra.mxu0 0.0
        %2704 = vmatpush.msra.mxu0 0.0
        %2705 = vmatpush.msra.mxu0 %v2591
        %2706 = vmatpush.msra.mxu0 %v2590
        %2707 = vmatpush.msra.mxu0 %v2589
        %2708 = vmatpush.msra.mxu0 %v2588
        %2709 = vmatmul.f32.gmra.mxu0 %v2689
        %v2710 = vpop.f32.mrf.mxu0
        %v2711 = vadd.f32 0.0, %v2710
        %2712 = vmatmul.f32.gmra.mxu0 %v2691
        %v2713 = vpop.f32.mrf.mxu0
        %v2714 = vadd.f32 0.0, %v2713
        %2715 = vdwg.mxu0
        %v2716 = vsel %vm1204, %v1295, 0
        %v2718 = vsel %vm1204, %v1298, 0
        %2720 = vmatpush.msra.mxu0 0.0
        %2721 = vmatpush.msra.mxu0 0.0
        %2722 = vmatpush.msra.mxu0 0.0
        %2723 = vmatpush.msra.mxu0 0.0
        %2724 = vmatpush.msra.mxu0 0.0
        %2725 = vmatpush.msra.mxu0 0.0
        %2726 = vmatpush.msra.mxu0 0.0
        %2727 = vmatpush.msra.mxu0 0.0
        %2728 = vmatpush.msra.mxu0 0.0
        %2729 = vmatpush.msra.mxu0 0.0
        %2730 = vmatpush.msra.mxu0 0.0
        %2731 = vmatpush.msra.mxu0 0.0
        %2732 = vmatpush.msra.mxu0 %v2595
        %2733 = vmatpush.msra.mxu0 %v2594
        %2734 = vmatpush.msra.mxu0 %v2593
        %2735 = vmatpush.msra.mxu0 %v2592
        %2736 = vmatmul.f32.gmra.mxu0 %v2716
        %v2737 = vpop.f32.mrf.mxu0
        %v2738 = vadd.f32 0.0, %v2737
        %2739 = vmatmul.f32.gmra.mxu0 %v2718
        %v2740 = vpop.f32.mrf.mxu0
        %v2741 = vadd.f32 0.0, %v2740
        %2742 = vdwg.mxu0
        %v2743 = vsel %vm1204, %v1301, 0
        %v2745 = vsel %vm1204, %v1304, 0
        %2747 = vmatpush.msra.mxu0 0.0
        %2748 = vmatpush.msra.mxu0 0.0
        %2749 = vmatpush.msra.mxu0 0.0
        %2750 = vmatpush.msra.mxu0 0.0
        %2751 = vmatpush.msra.mxu0 0.0
        %2752 = vmatpush.msra.mxu0 0.0
        %2753 = vmatpush.msra.mxu0 0.0
        %2754 = vmatpush.msra.mxu0 0.0
        %2755 = vmatpush.msra.mxu0 0.0
        %2756 = vmatpush.msra.mxu0 0.0
        %2757 = vmatpush.msra.mxu0 0.0
        %2758 = vmatpush.msra.mxu0 0.0
        %2759 = vmatpush.msra.mxu0 %v2599
        %2760 = vmatpush.msra.mxu0 %v2598
        %2761 = vmatpush.msra.mxu0 %v2597
        %2762 = vmatpush.msra.mxu0 %v2596
        %2763 = vmatmul.f32.gmra.mxu0 %v2743
        %v2764 = vpop.f32.mrf.mxu0
        %v2765 = vadd.f32 0.0, %v2764
        %2766 = vmatmul.f32.gmra.mxu0 %v2745
        %v2767 = vpop.f32.mrf.mxu0
        %v2768 = vadd.f32 0.0, %v2767
        %2769 = vdwg.mxu0
        %v2770 = vsel %vm1204, %v1307, 0
        %v2772 = vsel %vm1204, %v1310, 0
        %2774 = vmatpush.msra.mxu0 0.0
        %2775 = vmatpush.msra.mxu0 0.0
        %2776 = vmatpush.msra.mxu0 0.0
        %2777 = vmatpush.msra.mxu0 0.0
        %2778 = vmatpush.msra.mxu0 0.0
        %2779 = vmatpush.msra.mxu0 0.0
        %2780 = vmatpush.msra.mxu0 0.0
        %2781 = vmatpush.msra.mxu0 0.0
        %2782 = vmatpush.msra.mxu0 0.0
        %2783 = vmatpush.msra.mxu0 0.0
        %2784 = vmatpush.msra.mxu0 0.0
        %2785 = vmatpush.msra.mxu0 0.0
        %2786 = vmatpush.msra.mxu0 %v2603
        %2787 = vmatpush.msra.mxu0 %v2602
        %2788 = vmatpush.msra.mxu0 %v2601
        %2789 = vmatpush.msra.mxu0 %v2600
        %2790 = vmatmul.f32.gmra.mxu0 %v2770
        %v2791 = vpop.f32.mrf.mxu0
        %v2792 = vadd.f32 0.0, %v2791
        %2793 = vmatmul.f32.gmra.mxu0 %v2772
        %v2794 = vpop.f32.mrf.mxu0
        %v2795 = vadd.f32 0.0, %v2794
        %2796 = vdwg.mxu0
        %v2797 = vsel %vm1204, %v1313, 0
        %v2799 = vsel %vm1204, %v1316, 0
        %2801 = vmatpush.msra.mxu0 0.0
        %2802 = vmatpush.msra.mxu0 0.0
        %2803 = vmatpush.msra.mxu0 0.0
        %2804 = vmatpush.msra.mxu0 0.0
        %2805 = vmatpush.msra.mxu0 0.0
        %2806 = vmatpush.msra.mxu0 0.0
        %2807 = vmatpush.msra.mxu0 0.0
        %2808 = vmatpush.msra.mxu0 0.0
        %2809 = vmatpush.msra.mxu0 0.0
        %2810 = vmatpush.msra.mxu0 0.0
        %2811 = vmatpush.msra.mxu0 0.0
        %2812 = vmatpush.msra.mxu0 0.0
        %2813 = vmatpush.msra.mxu0 %v2607
        %2814 = vmatpush.msra.mxu0 %v2606
        %2815 = vmatpush.msra.mxu0 %v2605
        %2816 = vmatpush.msra.mxu0 %v2604
        %2817 = vmatmul.f32.gmra.mxu0 %v2797
        %v2818 = vpop.f32.mrf.mxu0
        %v2819 = vadd.f32 0.0, %v2818
        %2820 = vmatmul.f32.gmra.mxu0 %v2799
        %v2821 = vpop.f32.mrf.mxu0
        %v2822 = vadd.f32 0.0, %v2821
        %2823 = vdwg.mxu0
        %2840 = vrot.lane.b32.xlu0 %v2630, 112
        %v2841 = vpop.permute.xlu0 %2840
        %2842 = vrot.lane.b32.xlu0 %v2633, 112
        %v2843 = vpop.permute.xlu0 %2842
        %2844 = vrot.lane.b32.xlu0 %v2657, 112
        %v2845 = vpop.permute.xlu0 %2844
        %2846 = vrot.lane.b32.xlu0 %v2660, 112
        %v2847 = vpop.permute.xlu0 %2846
        %2848 = vrot.lane.b32.xlu0 %v2684, 112
        %v2849 = vpop.permute.xlu0 %2848
        %2850 = vrot.lane.b32.xlu0 %v2687, 112
        %v2851 = vpop.permute.xlu0 %2850
        %2852 = vrot.lane.b32.xlu0 %v2711, 112
        %v2853 = vpop.permute.xlu0 %2852
        %2854 = vrot.lane.b32.xlu0 %v2714, 112
        %v2855 = vpop.permute.xlu0 %2854
        %2856 = vrot.lane.b32.xlu0 %v2738, 112
        %v2857 = vpop.permute.xlu0 %2856
        %2858 = vrot.lane.b32.xlu0 %v2741, 112
        %v2859 = vpop.permute.xlu0 %2858
        %2860 = vrot.lane.b32.xlu0 %v2765, 112
        %v2861 = vpop.permute.xlu0 %2860
        %2862 = vrot.lane.b32.xlu0 %v2768, 112
        %v2863 = vpop.permute.xlu0 %2862
        %2864 = vrot.lane.b32.xlu0 %v2792, 112
        %v2865 = vpop.permute.xlu0 %2864
        %2866 = vrot.lane.b32.xlu0 %v2795, 112
        %v2867 = vpop.permute.xlu0 %2866
        %2868 = vrot.lane.b32.xlu0 %v2819, 112
        %v2869 = vpop.permute.xlu0 %2868
        %2870 = vrot.lane.b32.xlu0 %v2822, 112
        %v2871 = vpop.permute.xlu0 %2870
        %2888 = vrot.lane.b32.xlu0 %v2630, 96
        %v2889 = vpop.permute.xlu0 %2888
        %2890 = vrot.lane.b32.xlu0 %v2633, 96
        %v2891 = vpop.permute.xlu0 %2890
        %2892 = vrot.lane.b32.xlu0 %v2657, 96
        %v2893 = vpop.permute.xlu0 %2892
        %2894 = vrot.lane.b32.xlu0 %v2660, 96
        %v2895 = vpop.permute.xlu0 %2894
        %2896 = vrot.lane.b32.xlu0 %v2684, 96
        %v2897 = vpop.permute.xlu0 %2896
        %2898 = vrot.lane.b32.xlu0 %v2687, 96
        %v2899 = vpop.permute.xlu0 %2898
        %2900 = vrot.lane.b32.xlu0 %v2711, 96
        %v2901 = vpop.permute.xlu0 %2900
        %2902 = vrot.lane.b32.xlu0 %v2714, 96
        %v2903 = vpop.permute.xlu0 %2902
        %2904 = vrot.lane.b32.xlu0 %v2738, 96
        %v2905 = vpop.permute.xlu0 %2904
        %2906 = vrot.lane.b32.xlu0 %v2741, 96
        %v2907 = vpop.permute.xlu0 %2906
        %2908 = vrot.lane.b32.xlu0 %v2765, 96
        %v2909 = vpop.permute.xlu0 %2908
        %2910 = vrot.lane.b32.xlu0 %v2768, 96
        %v2911 = vpop.permute.xlu0 %2910
        %2912 = vrot.lane.b32.xlu0 %v2792, 96
        %v2913 = vpop.permute.xlu0 %2912
        %2914 = vrot.lane.b32.xlu0 %v2795, 96
        %v2915 = vpop.permute.xlu0 %2914
        %2916 = vrot.lane.b32.xlu0 %v2819, 96
        %v2917 = vpop.permute.xlu0 %2916
        %2918 = vrot.lane.b32.xlu0 %v2822, 96
        %v2919 = vpop.permute.xlu0 %2918
        %2936 = vrot.lane.b32.xlu0 %v2630, 80
        %v2937 = vpop.permute.xlu0 %2936
        %2938 = vrot.lane.b32.xlu0 %v2633, 80
        %v2939 = vpop.permute.xlu0 %2938
        %2940 = vrot.lane.b32.xlu0 %v2657, 80
        %v2941 = vpop.permute.xlu0 %2940
        %2942 = vrot.lane.b32.xlu0 %v2660, 80
        %v2943 = vpop.permute.xlu0 %2942
        %2944 = vrot.lane.b32.xlu0 %v2684, 80
        %v2945 = vpop.permute.xlu0 %2944
        %2946 = vrot.lane.b32.xlu0 %v2687, 80
        %v2947 = vpop.permute.xlu0 %2946
        %2948 = vrot.lane.b32.xlu0 %v2711, 80
        %v2949 = vpop.permute.xlu0 %2948
        %2950 = vrot.lane.b32.xlu0 %v2714, 80
        %v2951 = vpop.permute.xlu0 %2950
        %2952 = vrot.lane.b32.xlu0 %v2738, 80
        %v2953 = vpop.permute.xlu0 %2952
        %2954 = vrot.lane.b32.xlu0 %v2741, 80
        %v2955 = vpop.permute.xlu0 %2954
        %2956 = vrot.lane.b32.xlu0 %v2765, 80
        %v2957 = vpop.permute.xlu0 %2956
        %2958 = vrot.lane.b32.xlu0 %v2768, 80
        %v2959 = vpop.permute.xlu0 %2958
        %2960 = vrot.lane.b32.xlu0 %v2792, 80
        %v2961 = vpop.permute.xlu0 %2960
        %2962 = vrot.lane.b32.xlu0 %v2795, 80
        %v2963 = vpop.permute.xlu0 %2962
        %2964 = vrot.lane.b32.xlu0 %v2819, 80
        %v2965 = vpop.permute.xlu0 %2964
        %2966 = vrot.lane.b32.xlu0 %v2822, 80
        %v2967 = vpop.permute.xlu0 %2966
        %2984 = vrot.lane.b32.xlu0 %v2630, 64
        %v2985 = vpop.permute.xlu0 %2984
        %2986 = vrot.lane.b32.xlu0 %v2633, 64
        %v2987 = vpop.permute.xlu0 %2986
        %2988 = vrot.lane.b32.xlu0 %v2657, 64
        %v2989 = vpop.permute.xlu0 %2988
        %2990 = vrot.lane.b32.xlu0 %v2660, 64
        %v2991 = vpop.permute.xlu0 %2990
        %2992 = vrot.lane.b32.xlu0 %v2684, 64
        %v2993 = vpop.permute.xlu0 %2992
        %2994 = vrot.lane.b32.xlu0 %v2687, 64
        %v2995 = vpop.permute.xlu0 %2994
        %2996 = vrot.lane.b32.xlu0 %v2711, 64
        %v2997 = vpop.permute.xlu0 %2996
        %2998 = vrot.lane.b32.xlu0 %v2714, 64
        %v2999 = vpop.permute.xlu0 %2998
        %3000 = vrot.lane.b32.xlu0 %v2738, 64
        %v3001 = vpop.permute.xlu0 %3000
        %3002 = vrot.lane.b32.xlu0 %v2741, 64
        %v3003 = vpop.permute.xlu0 %3002
        %3004 = vrot.lane.b32.xlu0 %v2765, 64
        %v3005 = vpop.permute.xlu0 %3004
        %3006 = vrot.lane.b32.xlu0 %v2768, 64
        %v3007 = vpop.permute.xlu0 %3006
        %3008 = vrot.lane.b32.xlu0 %v2792, 64
        %v3009 = vpop.permute.xlu0 %3008
        %3010 = vrot.lane.b32.xlu0 %v2795, 64
        %v3011 = vpop.permute.xlu0 %3010
        %3012 = vrot.lane.b32.xlu0 %v2819, 64
        %v3013 = vpop.permute.xlu0 %3012
        %3014 = vrot.lane.b32.xlu0 %v2822, 64
        %v3015 = vpop.permute.xlu0 %3014
        %3032 = vrot.lane.b32.xlu0 %v2630, 48
        %v3033 = vpop.permute.xlu0 %3032
        %3034 = vrot.lane.b32.xlu0 %v2633, 48
        %v3035 = vpop.permute.xlu0 %3034
        %3036 = vrot.lane.b32.xlu0 %v2657, 48
        %v3037 = vpop.permute.xlu0 %3036
        %3038 = vrot.lane.b32.xlu0 %v2660, 48
        %v3039 = vpop.permute.xlu0 %3038
        %3040 = vrot.lane.b32.xlu0 %v2684, 48
        %v3041 = vpop.permute.xlu0 %3040
        %3042 = vrot.lane.b32.xlu0 %v2687, 48
        %v3043 = vpop.permute.xlu0 %3042
        %3044 = vrot.lane.b32.xlu0 %v2711, 48
        %v3045 = vpop.permute.xlu0 %3044
        %3046 = vrot.lane.b32.xlu0 %v2714, 48
        %v3047 = vpop.permute.xlu0 %3046
        %3048 = vrot.lane.b32.xlu0 %v2738, 48
        %v3049 = vpop.permute.xlu0 %3048
        %3050 = vrot.lane.b32.xlu0 %v2741, 48
        %v3051 = vpop.permute.xlu0 %3050
        %3052 = vrot.lane.b32.xlu0 %v2765, 48
        %v3053 = vpop.permute.xlu0 %3052
        %3054 = vrot.lane.b32.xlu0 %v2768, 48
        %v3055 = vpop.permute.xlu0 %3054
        %3056 = vrot.lane.b32.xlu0 %v2792, 48
        %v3057 = vpop.permute.xlu0 %3056
        %3058 = vrot.lane.b32.xlu0 %v2795, 48
        %v3059 = vpop.permute.xlu0 %3058
        %3060 = vrot.lane.b32.xlu0 %v2819, 48
        %v3061 = vpop.permute.xlu0 %3060
        %3062 = vrot.lane.b32.xlu0 %v2822, 48
        %v3063 = vpop.permute.xlu0 %3062
        %3080 = vrot.lane.b32.xlu0 %v2630, 32
        %v3081 = vpop.permute.xlu0 %3080
        %3082 = vrot.lane.b32.xlu0 %v2633, 32
        %v3083 = vpop.permute.xlu0 %3082
        %3084 = vrot.lane.b32.xlu0 %v2657, 32
        %v3085 = vpop.permute.xlu0 %3084
        %3086 = vrot.lane.b32.xlu0 %v2660, 32
        %v3087 = vpop.permute.xlu0 %3086
        %3088 = vrot.lane.b32.xlu0 %v2684, 32
        %v3089 = vpop.permute.xlu0 %3088
        %3090 = vrot.lane.b32.xlu0 %v2687, 32
        %v3091 = vpop.permute.xlu0 %3090
        %3092 = vrot.lane.b32.xlu0 %v2711, 32
        %v3093 = vpop.permute.xlu0 %3092
        %3094 = vrot.lane.b32.xlu0 %v2714, 32
        %v3095 = vpop.permute.xlu0 %3094
        %3096 = vrot.lane.b32.xlu0 %v2738, 32
        %v3097 = vpop.permute.xlu0 %3096
        %3098 = vrot.lane.b32.xlu0 %v2741, 32
        %v3099 = vpop.permute.xlu0 %3098
        %3100 = vrot.lane.b32.xlu0 %v2765, 32
        %v3101 = vpop.permute.xlu0 %3100
        %3102 = vrot.lane.b32.xlu0 %v2768, 32
        %v3103 = vpop.permute.xlu0 %3102
        %3104 = vrot.lane.b32.xlu0 %v2792, 32
        %v3105 = vpop.permute.xlu0 %3104
        %3106 = vrot.lane.b32.xlu0 %v2795, 32
        %v3107 = vpop.permute.xlu0 %3106
        %3108 = vrot.lane.b32.xlu0 %v2819, 32
        %v3109 = vpop.permute.xlu0 %3108
        %3110 = vrot.lane.b32.xlu0 %v2822, 32
        %v3111 = vpop.permute.xlu0 %3110
        %3128 = vrot.lane.b32.xlu0 %v2630, 16
        %v3129 = vpop.permute.xlu0 %3128
        %3130 = vrot.lane.b32.xlu0 %v2633, 16
        %v3131 = vpop.permute.xlu0 %3130
        %3132 = vrot.lane.b32.xlu0 %v2657, 16
        %v3133 = vpop.permute.xlu0 %3132
        %3134 = vrot.lane.b32.xlu0 %v2660, 16
        %v3135 = vpop.permute.xlu0 %3134
        %3136 = vrot.lane.b32.xlu0 %v2684, 16
        %v3137 = vpop.permute.xlu0 %3136
        %3138 = vrot.lane.b32.xlu0 %v2687, 16
        %v3139 = vpop.permute.xlu0 %3138
        %3140 = vrot.lane.b32.xlu0 %v2711, 16
        %v3141 = vpop.permute.xlu0 %3140
        %3142 = vrot.lane.b32.xlu0 %v2714, 16
        %v3143 = vpop.permute.xlu0 %3142
        %3144 = vrot.lane.b32.xlu0 %v2738, 16
        %v3145 = vpop.permute.xlu0 %3144
        %3146 = vrot.lane.b32.xlu0 %v2741, 16
        %v3147 = vpop.permute.xlu0 %3146
        %3148 = vrot.lane.b32.xlu0 %v2765, 16
        %v3149 = vpop.permute.xlu0 %3148
        %3150 = vrot.lane.b32.xlu0 %v2768, 16
        %v3151 = vpop.permute.xlu0 %3150
        %3152 = vrot.lane.b32.xlu0 %v2792, 16
        %v3153 = vpop.permute.xlu0 %3152
        %3154 = vrot.lane.b32.xlu0 %v2795, 16
        %v3155 = vpop.permute.xlu0 %3154
        %3156 = vrot.lane.b32.xlu0 %v2819, 16
        %v3157 = vpop.permute.xlu0 %3156
        %3158 = vrot.lane.b32.xlu0 %v2822, 16
        %v3159 = vpop.permute.xlu0 %3158
        %v3176 = vrot.slane %v2889, 4
        %v3177 = vsel %vm492, %v3176, %v2630
        %v3178 = vrot.slane %v2630, 4
        %v3179 = vsel %vm492, %v2889, %v3178
        %v3181 = vunpack.c.l.s4 1983009808
        %v3182 = vunpack.c.0.s8 %v3181
        %v3183 = vperm.slane %v3177, %v3182
        %v3185 = vunpack.c.l.s4 1983009808
        %v3186 = vunpack.c.0.s8 %v3185
        %v3187 = vperm.slane %v3179, %v3186
        %v3188 = vrot.slane %v2937, 4
        %v3189 = vsel %vm492, %v3188, %v2841
        %v3190 = vrot.slane %v2841, 4
        %v3191 = vsel %vm492, %v2937, %v3190
        %v3193 = vunpack.c.l.s4 1983009808
        %v3194 = vunpack.c.0.s8 %v3193
        %v3195 = vperm.slane %v3189, %v3194
        %v3197 = vunpack.c.l.s4 1983009808
        %v3198 = vunpack.c.0.s8 %v3197
        %v3199 = vperm.slane %v3191, %v3198
        %v3200 = vrot.slane %v3081, 4
        %v3201 = vsel %vm492, %v3200, %v2985
        %v3202 = vrot.slane %v2985, 4
        %v3203 = vsel %vm492, %v3081, %v3202
        %v3205 = vunpack.c.l.s4 1983009808
        %v3206 = vunpack.c.0.s8 %v3205
        %v3207 = vperm.slane %v3201, %v3206
        %v3209 = vunpack.c.l.s4 1983009808
        %v3210 = vunpack.c.0.s8 %v3209
        %v3211 = vperm.slane %v3203, %v3210
        %v3212 = vrot.slane %v3129, 4
        %v3213 = vsel %vm492, %v3212, %v3033
        %v3214 = vrot.slane %v3033, 4
        %v3215 = vsel %vm492, %v3129, %v3214
        %v3217 = vunpack.c.l.s4 1983009808
        %v3218 = vunpack.c.0.s8 %v3217
        %v3219 = vperm.slane %v3213, %v3218
        %v3221 = vunpack.c.l.s4 1983009808
        %v3222 = vunpack.c.0.s8 %v3221
        %v3223 = vperm.slane %v3215, %v3222
        %v3224 = vrot.slane %v3195, 4
        %v3225 = vsel %vm492, %v3224, %v3183
        %v3226 = vrot.slane %v3183, 4
        %v3227 = vsel %vm492, %v3195, %v3226
        %v3229 = vunpack.c.l.s4 1934713408
        %v3230 = vunpack.c.0.s8 %v3229
        %v3231 = vperm.slane %v3225, %v3230
        %v3233 = vunpack.c.l.s4 1934713408
        %v3234 = vunpack.c.0.s8 %v3233
        %v3235 = vperm.slane %v3227, %v3234
        %v3236 = vrot.slane %v3199, 4
        %v3237 = vsel %vm492, %v3236, %v3187
        %v3238 = vrot.slane %v3187, 4
        %v3239 = vsel %vm492, %v3199, %v3238
        %v3241 = vunpack.c.l.s4 1934713408
        %v3242 = vunpack.c.0.s8 %v3241
        %v3243 = vperm.slane %v3237, %v3242
        %v3245 = vunpack.c.l.s4 1934713408
        %v3246 = vunpack.c.0.s8 %v3245
        %v3247 = vperm.slane %v3239, %v3246
        %v3248 = vrot.slane %v3219, 4
        %v3249 = vsel %vm492, %v3248, %v3207
        %v3250 = vrot.slane %v3207, 4
        %v3251 = vsel %vm492, %v3219, %v3250
        %v3253 = vunpack.c.l.s4 1934713408
        %v3254 = vunpack.c.0.s8 %v3253
        %v3255 = vperm.slane %v3249, %v3254
        %v3257 = vunpack.c.l.s4 1934713408
        %v3258 = vunpack.c.0.s8 %v3257
        %v3259 = vperm.slane %v3251, %v3258
        %v3260 = vrot.slane %v3223, 4
        %v3261 = vsel %vm492, %v3260, %v3211
        %v3262 = vrot.slane %v3211, 4
        %v3263 = vsel %vm492, %v3223, %v3262
        %v3265 = vunpack.c.l.s4 1934713408
        %v3266 = vunpack.c.0.s8 %v3265
        %v3267 = vperm.slane %v3261, %v3266
        %v3269 = vunpack.c.l.s4 1934713408
        %v3270 = vunpack.c.0.s8 %v3269
        %v3271 = vperm.slane %v3263, %v3270
        %v3272 = vrot.slane %v3255, 4
        %v3273 = vsel %vm492, %v3272, %v3231
        %v3274 = vrot.slane %v3231, 4
        %v3275 = vsel %vm492, %v3255, %v3274
        %v3276 = vrot.slane %v3259, 4
        %v3277 = vsel %vm492, %v3276, %v3235
        %v3278 = vrot.slane %v3235, 4
        %v3279 = vsel %vm492, %v3259, %v3278
        %v3280 = vrot.slane %v3267, 4
        %v3281 = vsel %vm492, %v3280, %v3243
        %v3282 = vrot.slane %v3243, 4
        %v3283 = vsel %vm492, %v3267, %v3282
        %v3284 = vrot.slane %v3271, 4
        %v3285 = vsel %vm492, %v3284, %v3247
        %v3286 = vrot.slane %v3247, 4
        %v3287 = vsel %vm492, %v3271, %v3286
        %v3288 = vrot.slane %v2891, 4
        %v3289 = vsel %vm492, %v3288, %v2633
        %v3290 = vrot.slane %v2633, 4
        %v3291 = vsel %vm492, %v2891, %v3290
        %v3293 = vunpack.c.l.s4 1983009808
        %v3294 = vunpack.c.0.s8 %v3293
        %v3295 = vperm.slane %v3289, %v3294
        %v3297 = vunpack.c.l.s4 1983009808
        %v3298 = vunpack.c.0.s8 %v3297
        %v3299 = vperm.slane %v3291, %v3298
        %v3300 = vrot.slane %v2939, 4
        %v3301 = vsel %vm492, %v3300, %v2843
        %v3302 = vrot.slane %v2843, 4
        %v3303 = vsel %vm492, %v2939, %v3302
        %v3305 = vunpack.c.l.s4 1983009808
        %v3306 = vunpack.c.0.s8 %v3305
        %v3307 = vperm.slane %v3301, %v3306
        %v3309 = vunpack.c.l.s4 1983009808
        %v3310 = vunpack.c.0.s8 %v3309
        %v3311 = vperm.slane %v3303, %v3310
        %v3312 = vrot.slane %v3083, 4
        %v3313 = vsel %vm492, %v3312, %v2987
        %v3314 = vrot.slane %v2987, 4
        %v3315 = vsel %vm492, %v3083, %v3314
        %v3317 = vunpack.c.l.s4 1983009808
        %v3318 = vunpack.c.0.s8 %v3317
        %v3319 = vperm.slane %v3313, %v3318
        %v3321 = vunpack.c.l.s4 1983009808
        %v3322 = vunpack.c.0.s8 %v3321
        %v3323 = vperm.slane %v3315, %v3322
        %v3324 = vrot.slane %v3131, 4
        %v3325 = vsel %vm492, %v3324, %v3035
        %v3326 = vrot.slane %v3035, 4
        %v3327 = vsel %vm492, %v3131, %v3326
        %v3329 = vunpack.c.l.s4 1983009808
        %v3330 = vunpack.c.0.s8 %v3329
        %v3331 = vperm.slane %v3325, %v3330
        %v3333 = vunpack.c.l.s4 1983009808
        %v3334 = vunpack.c.0.s8 %v3333
        %v3335 = vperm.slane %v3327, %v3334
        %v3336 = vrot.slane %v3307, 4
        %v3337 = vsel %vm492, %v3336, %v3295
        %v3338 = vrot.slane %v3295, 4
        %v3339 = vsel %vm492, %v3307, %v3338
        %v3341 = vunpack.c.l.s4 1934713408
        %v3342 = vunpack.c.0.s8 %v3341
        %v3343 = vperm.slane %v3337, %v3342
        %v3345 = vunpack.c.l.s4 1934713408
        %v3346 = vunpack.c.0.s8 %v3345
        %v3347 = vperm.slane %v3339, %v3346
        %v3348 = vrot.slane %v3311, 4
        %v3349 = vsel %vm492, %v3348, %v3299
        %v3350 = vrot.slane %v3299, 4
        %v3351 = vsel %vm492, %v3311, %v3350
        %v3353 = vunpack.c.l.s4 1934713408
        %v3354 = vunpack.c.0.s8 %v3353
        %v3355 = vperm.slane %v3349, %v3354
        %v3357 = vunpack.c.l.s4 1934713408
        %v3358 = vunpack.c.0.s8 %v3357
        %v3359 = vperm.slane %v3351, %v3358
        %v3360 = vrot.slane %v3331, 4
        %v3361 = vsel %vm492, %v3360, %v3319
        %v3362 = vrot.slane %v3319, 4
        %v3363 = vsel %vm492, %v3331, %v3362
        %v3365 = vunpack.c.l.s4 1934713408
        %v3366 = vunpack.c.0.s8 %v3365
        %v3367 = vperm.slane %v3361, %v3366
        %v3369 = vunpack.c.l.s4 1934713408
        %v3370 = vunpack.c.0.s8 %v3369
        %v3371 = vperm.slane %v3363, %v3370
        %v3372 = vrot.slane %v3335, 4
        %v3373 = vsel %vm492, %v3372, %v3323
        %v3374 = vrot.slane %v3323, 4
        %v3375 = vsel %vm492, %v3335, %v3374
        %v3377 = vunpack.c.l.s4 1934713408
        %v3378 = vunpack.c.0.s8 %v3377
        %v3379 = vperm.slane %v3373, %v3378
        %v3381 = vunpack.c.l.s4 1934713408
        %v3382 = vunpack.c.0.s8 %v3381
        %v3383 = vperm.slane %v3375, %v3382
        %v3384 = vrot.slane %v3367, 4
        %v3385 = vsel %vm492, %v3384, %v3343
        %v3386 = vrot.slane %v3343, 4
        %v3387 = vsel %vm492, %v3367, %v3386
        %v3388 = vrot.slane %v3371, 4
        %v3389 = vsel %vm492, %v3388, %v3347
        %v3390 = vrot.slane %v3347, 4
        %v3391 = vsel %vm492, %v3371, %v3390
        %v3392 = vrot.slane %v3379, 4
        %v3393 = vsel %vm492, %v3392, %v3355
        %v3394 = vrot.slane %v3355, 4
        %v3395 = vsel %vm492, %v3379, %v3394
        %v3396 = vrot.slane %v3383, 4
        %v3397 = vsel %vm492, %v3396, %v3359
        %v3398 = vrot.slane %v3359, 4
        %v3399 = vsel %vm492, %v3383, %v3398
        %v3400 = vrot.slane %v2893, 4
        %v3401 = vsel %vm492, %v3400, %v2657
        %v3402 = vrot.slane %v2657, 4
        %v3403 = vsel %vm492, %v2893, %v3402
        %v3405 = vunpack.c.l.s4 1983009808
        %v3406 = vunpack.c.0.s8 %v3405
        %v3407 = vperm.slane %v3401, %v3406
        %v3409 = vunpack.c.l.s4 1983009808
        %v3410 = vunpack.c.0.s8 %v3409
        %v3411 = vperm.slane %v3403, %v3410
        %v3412 = vrot.slane %v2941, 4
        %v3413 = vsel %vm492, %v3412, %v2845
        %v3414 = vrot.slane %v2845, 4
        %v3415 = vsel %vm492, %v2941, %v3414
        %v3417 = vunpack.c.l.s4 1983009808
        %v3418 = vunpack.c.0.s8 %v3417
        %v3419 = vperm.slane %v3413, %v3418
        %v3421 = vunpack.c.l.s4 1983009808
        %v3422 = vunpack.c.0.s8 %v3421
        %v3423 = vperm.slane %v3415, %v3422
        %v3424 = vrot.slane %v3085, 4
        %v3425 = vsel %vm492, %v3424, %v2989
        %v3426 = vrot.slane %v2989, 4
        %v3427 = vsel %vm492, %v3085, %v3426
        %v3429 = vunpack.c.l.s4 1983009808
        %v3430 = vunpack.c.0.s8 %v3429
        %v3431 = vperm.slane %v3425, %v3430
        %v3433 = vunpack.c.l.s4 1983009808
        %v3434 = vunpack.c.0.s8 %v3433
        %v3435 = vperm.slane %v3427, %v3434
        %v3436 = vrot.slane %v3133, 4
        %v3437 = vsel %vm492, %v3436, %v3037
        %v3438 = vrot.slane %v3037, 4
        %v3439 = vsel %vm492, %v3133, %v3438
        %v3441 = vunpack.c.l.s4 1983009808
        %v3442 = vunpack.c.0.s8 %v3441
        %v3443 = vperm.slane %v3437, %v3442
        %v3445 = vunpack.c.l.s4 1983009808
        %v3446 = vunpack.c.0.s8 %v3445
        %v3447 = vperm.slane %v3439, %v3446
        %v3448 = vrot.slane %v3419, 4
        %v3449 = vsel %vm492, %v3448, %v3407
        %v3450 = vrot.slane %v3407, 4
        %v3451 = vsel %vm492, %v3419, %v3450
        %v3453 = vunpack.c.l.s4 1934713408
        %v3454 = vunpack.c.0.s8 %v3453
        %v3455 = vperm.slane %v3449, %v3454
        %v3457 = vunpack.c.l.s4 1934713408
        %v3458 = vunpack.c.0.s8 %v3457
        %v3459 = vperm.slane %v3451, %v3458
        %v3460 = vrot.slane %v3423, 4
        %v3461 = vsel %vm492, %v3460, %v3411
        %v3462 = vrot.slane %v3411, 4
        %v3463 = vsel %vm492, %v3423, %v3462
        %v3465 = vunpack.c.l.s4 1934713408
        %v3466 = vunpack.c.0.s8 %v3465
        %v3467 = vperm.slane %v3461, %v3466
        %v3469 = vunpack.c.l.s4 1934713408
        %v3470 = vunpack.c.0.s8 %v3469
        %v3471 = vperm.slane %v3463, %v3470
        %v3472 = vrot.slane %v3443, 4
        %v3473 = vsel %vm492, %v3472, %v3431
        %v3474 = vrot.slane %v3431, 4
        %v3475 = vsel %vm492, %v3443, %v3474
        %v3477 = vunpack.c.l.s4 1934713408
        %v3478 = vunpack.c.0.s8 %v3477
        %v3479 = vperm.slane %v3473, %v3478
        %v3481 = vunpack.c.l.s4 1934713408
        %v3482 = vunpack.c.0.s8 %v3481
        %v3483 = vperm.slane %v3475, %v3482
        %v3484 = vrot.slane %v3447, 4
        %v3485 = vsel %vm492, %v3484, %v3435
        %v3486 = vrot.slane %v3435, 4
        %v3487 = vsel %vm492, %v3447, %v3486
        %v3489 = vunpack.c.l.s4 1934713408
        %v3490 = vunpack.c.0.s8 %v3489
        %v3491 = vperm.slane %v3485, %v3490
        %v3493 = vunpack.c.l.s4 1934713408
        %v3494 = vunpack.c.0.s8 %v3493
        %v3495 = vperm.slane %v3487, %v3494
        %v3496 = vrot.slane %v3479, 4
        %v3497 = vsel %vm492, %v3496, %v3455
        %v3498 = vrot.slane %v3455, 4
        %v3499 = vsel %vm492, %v3479, %v3498
        %v3500 = vrot.slane %v3483, 4
        %v3501 = vsel %vm492, %v3500, %v3459
        %v3502 = vrot.slane %v3459, 4
        %v3503 = vsel %vm492, %v3483, %v3502
        %v3504 = vrot.slane %v3491, 4
        %v3505 = vsel %vm492, %v3504, %v3467
        %v3506 = vrot.slane %v3467, 4
        %v3507 = vsel %vm492, %v3491, %v3506
        %v3508 = vrot.slane %v3495, 4
        %v3509 = vsel %vm492, %v3508, %v3471
        %v3510 = vrot.slane %v3471, 4
        %v3511 = vsel %vm492, %v3495, %v3510
        %v3512 = vrot.slane %v2895, 4
        %v3513 = vsel %vm492, %v3512, %v2660
        %v3514 = vrot.slane %v2660, 4
        %v3515 = vsel %vm492, %v2895, %v3514
        %v3517 = vunpack.c.l.s4 1983009808
        %v3518 = vunpack.c.0.s8 %v3517
        %v3519 = vperm.slane %v3513, %v3518
        %v3521 = vunpack.c.l.s4 1983009808
        %v3522 = vunpack.c.0.s8 %v3521
        %v3523 = vperm.slane %v3515, %v3522
        %v3524 = vrot.slane %v2943, 4
        %v3525 = vsel %vm492, %v3524, %v2847
        %v3526 = vrot.slane %v2847, 4
        %v3527 = vsel %vm492, %v2943, %v3526
        %v3529 = vunpack.c.l.s4 1983009808
        %v3530 = vunpack.c.0.s8 %v3529
        %v3531 = vperm.slane %v3525, %v3530
        %v3533 = vunpack.c.l.s4 1983009808
        %v3534 = vunpack.c.0.s8 %v3533
        %v3535 = vperm.slane %v3527, %v3534
        %v3536 = vrot.slane %v3087, 4
        %v3537 = vsel %vm492, %v3536, %v2991
        %v3538 = vrot.slane %v2991, 4
        %v3539 = vsel %vm492, %v3087, %v3538
        %v3541 = vunpack.c.l.s4 1983009808
        %v3542 = vunpack.c.0.s8 %v3541
        %v3543 = vperm.slane %v3537, %v3542
        %v3545 = vunpack.c.l.s4 1983009808
        %v3546 = vunpack.c.0.s8 %v3545
        %v3547 = vperm.slane %v3539, %v3546
        %v3548 = vrot.slane %v3135, 4
        %v3549 = vsel %vm492, %v3548, %v3039
        %v3550 = vrot.slane %v3039, 4
        %v3551 = vsel %vm492, %v3135, %v3550
        %v3553 = vunpack.c.l.s4 1983009808
        %v3554 = vunpack.c.0.s8 %v3553
        %v3555 = vperm.slane %v3549, %v3554
        %v3557 = vunpack.c.l.s4 1983009808
        %v3558 = vunpack.c.0.s8 %v3557
        %v3559 = vperm.slane %v3551, %v3558
        %v3560 = vrot.slane %v3531, 4
        %v3561 = vsel %vm492, %v3560, %v3519
        %v3562 = vrot.slane %v3519, 4
        %v3563 = vsel %vm492, %v3531, %v3562
        %v3565 = vunpack.c.l.s4 1934713408
        %v3566 = vunpack.c.0.s8 %v3565
        %v3567 = vperm.slane %v3561, %v3566
        %v3569 = vunpack.c.l.s4 1934713408
        %v3570 = vunpack.c.0.s8 %v3569
        %v3571 = vperm.slane %v3563, %v3570
        %v3572 = vrot.slane %v3535, 4
        %v3573 = vsel %vm492, %v3572, %v3523
        %v3574 = vrot.slane %v3523, 4
        %v3575 = vsel %vm492, %v3535, %v3574
        %v3577 = vunpack.c.l.s4 1934713408
        %v3578 = vunpack.c.0.s8 %v3577
        %v3579 = vperm.slane %v3573, %v3578
        %v3581 = vunpack.c.l.s4 1934713408
        %v3582 = vunpack.c.0.s8 %v3581
        %v3583 = vperm.slane %v3575, %v3582
        %v3584 = vrot.slane %v3555, 4
        %v3585 = vsel %vm492, %v3584, %v3543
        %v3586 = vrot.slane %v3543, 4
        %v3587 = vsel %vm492, %v3555, %v3586
        %v3589 = vunpack.c.l.s4 1934713408
        %v3590 = vunpack.c.0.s8 %v3589
        %v3591 = vperm.slane %v3585, %v3590
        %v3593 = vunpack.c.l.s4 1934713408
        %v3594 = vunpack.c.0.s8 %v3593
        %v3595 = vperm.slane %v3587, %v3594
        %v3596 = vrot.slane %v3559, 4
        %v3597 = vsel %vm492, %v3596, %v3547
        %v3598 = vrot.slane %v3547, 4
        %v3599 = vsel %vm492, %v3559, %v3598
        %v3601 = vunpack.c.l.s4 1934713408
        %v3602 = vunpack.c.0.s8 %v3601
        %v3603 = vperm.slane %v3597, %v3602
        %v3605 = vunpack.c.l.s4 1934713408
        %v3606 = vunpack.c.0.s8 %v3605
        %v3607 = vperm.slane %v3599, %v3606
        %v3608 = vrot.slane %v3591, 4
        %v3609 = vsel %vm492, %v3608, %v3567
        %v3610 = vrot.slane %v3567, 4
        %v3611 = vsel %vm492, %v3591, %v3610
        %v3612 = vrot.slane %v3595, 4
        %v3613 = vsel %vm492, %v3612, %v3571
        %v3614 = vrot.slane %v3571, 4
        %v3615 = vsel %vm492, %v3595, %v3614
        %v3616 = vrot.slane %v3603, 4
        %v3617 = vsel %vm492, %v3616, %v3579
        %v3618 = vrot.slane %v3579, 4
        %v3619 = vsel %vm492, %v3603, %v3618
        %v3620 = vrot.slane %v3607, 4
        %v3621 = vsel %vm492, %v3620, %v3583
        %v3622 = vrot.slane %v3583, 4
        %v3623 = vsel %vm492, %v3607, %v3622
        %v3624 = vrot.slane %v2897, 4
        %v3625 = vsel %vm492, %v3624, %v2684
        %v3626 = vrot.slane %v2684, 4
        %v3627 = vsel %vm492, %v2897, %v3626
        %v3629 = vunpack.c.l.s4 1983009808
        %v3630 = vunpack.c.0.s8 %v3629
        %v3631 = vperm.slane %v3625, %v3630
        %v3633 = vunpack.c.l.s4 1983009808
        %v3634 = vunpack.c.0.s8 %v3633
        %v3635 = vperm.slane %v3627, %v3634
        %v3636 = vrot.slane %v2945, 4
        %v3637 = vsel %vm492, %v3636, %v2849
        %v3638 = vrot.slane %v2849, 4
        %v3639 = vsel %vm492, %v2945, %v3638
        %v3641 = vunpack.c.l.s4 1983009808
        %v3642 = vunpack.c.0.s8 %v3641
        %v3643 = vperm.slane %v3637, %v3642
        %v3645 = vunpack.c.l.s4 1983009808
        %v3646 = vunpack.c.0.s8 %v3645
        %v3647 = vperm.slane %v3639, %v3646
        %v3648 = vrot.slane %v3089, 4
        %v3649 = vsel %vm492, %v3648, %v2993
        %v3650 = vrot.slane %v2993, 4
        %v3651 = vsel %vm492, %v3089, %v3650
        %v3653 = vunpack.c.l.s4 1983009808
        %v3654 = vunpack.c.0.s8 %v3653
        %v3655 = vperm.slane %v3649, %v3654
        %v3657 = vunpack.c.l.s4 1983009808
        %v3658 = vunpack.c.0.s8 %v3657
        %v3659 = vperm.slane %v3651, %v3658
        %v3660 = vrot.slane %v3137, 4
        %v3661 = vsel %vm492, %v3660, %v3041
        %v3662 = vrot.slane %v3041, 4
        %v3663 = vsel %vm492, %v3137, %v3662
        %v3665 = vunpack.c.l.s4 1983009808
        %v3666 = vunpack.c.0.s8 %v3665
        %v3667 = vperm.slane %v3661, %v3666
        %v3669 = vunpack.c.l.s4 1983009808
        %v3670 = vunpack.c.0.s8 %v3669
        %v3671 = vperm.slane %v3663, %v3670
        %v3672 = vrot.slane %v3643, 4
        %v3673 = vsel %vm492, %v3672, %v3631
        %v3674 = vrot.slane %v3631, 4
        %v3675 = vsel %vm492, %v3643, %v3674
        %v3677 = vunpack.c.l.s4 1934713408
        %v3678 = vunpack.c.0.s8 %v3677
        %v3679 = vperm.slane %v3673, %v3678
        %v3681 = vunpack.c.l.s4 1934713408
        %v3682 = vunpack.c.0.s8 %v3681
        %v3683 = vperm.slane %v3675, %v3682
        %v3684 = vrot.slane %v3647, 4
        %v3685 = vsel %vm492, %v3684, %v3635
        %v3686 = vrot.slane %v3635, 4
        %v3687 = vsel %vm492, %v3647, %v3686
        %v3689 = vunpack.c.l.s4 1934713408
        %v3690 = vunpack.c.0.s8 %v3689
        %v3691 = vperm.slane %v3685, %v3690
        %v3693 = vunpack.c.l.s4 1934713408
        %v3694 = vunpack.c.0.s8 %v3693
        %v3695 = vperm.slane %v3687, %v3694
        %v3696 = vrot.slane %v3667, 4
        %v3697 = vsel %vm492, %v3696, %v3655
        %v3698 = vrot.slane %v3655, 4
        %v3699 = vsel %vm492, %v3667, %v3698
        %v3701 = vunpack.c.l.s4 1934713408
        %v3702 = vunpack.c.0.s8 %v3701
        %v3703 = vperm.slane %v3697, %v3702
        %v3705 = vunpack.c.l.s4 1934713408
        %v3706 = vunpack.c.0.s8 %v3705
        %v3707 = vperm.slane %v3699, %v3706
        %v3708 = vrot.slane %v3671, 4
        %v3709 = vsel %vm492, %v3708, %v3659
        %v3710 = vrot.slane %v3659, 4
        %v3711 = vsel %vm492, %v3671, %v3710
        %v3713 = vunpack.c.l.s4 1934713408
        %v3714 = vunpack.c.0.s8 %v3713
        %v3715 = vperm.slane %v3709, %v3714
        %v3717 = vunpack.c.l.s4 1934713408
        %v3718 = vunpack.c.0.s8 %v3717
        %v3719 = vperm.slane %v3711, %v3718
        %v3720 = vrot.slane %v3703, 4
        %v3721 = vsel %vm492, %v3720, %v3679
        %v3722 = vrot.slane %v3679, 4
        %v3723 = vsel %vm492, %v3703, %v3722
        %v3724 = vrot.slane %v3707, 4
        %v3725 = vsel %vm492, %v3724, %v3683
        %v3726 = vrot.slane %v3683, 4
        %v3727 = vsel %vm492, %v3707, %v3726
        %v3728 = vrot.slane %v3715, 4
        %v3729 = vsel %vm492, %v3728, %v3691
        %v3730 = vrot.slane %v3691, 4
        %v3731 = vsel %vm492, %v3715, %v3730
        %v3732 = vrot.slane %v3719, 4
        %v3733 = vsel %vm492, %v3732, %v3695
        %v3734 = vrot.slane %v3695, 4
        %v3735 = vsel %vm492, %v3719, %v3734
        %v3736 = vrot.slane %v2899, 4
        %v3737 = vsel %vm492, %v3736, %v2687
        %v3738 = vrot.slane %v2687, 4
        %v3739 = vsel %vm492, %v2899, %v3738
        %v3741 = vunpack.c.l.s4 1983009808
        %v3742 = vunpack.c.0.s8 %v3741
        %v3743 = vperm.slane %v3737, %v3742
        %v3745 = vunpack.c.l.s4 1983009808
        %v3746 = vunpack.c.0.s8 %v3745
        %v3747 = vperm.slane %v3739, %v3746
        %v3748 = vrot.slane %v2947, 4
        %v3749 = vsel %vm492, %v3748, %v2851
        %v3750 = vrot.slane %v2851, 4
        %v3751 = vsel %vm492, %v2947, %v3750
        %v3753 = vunpack.c.l.s4 1983009808
        %v3754 = vunpack.c.0.s8 %v3753
        %v3755 = vperm.slane %v3749, %v3754
        %v3757 = vunpack.c.l.s4 1983009808
        %v3758 = vunpack.c.0.s8 %v3757
        %v3759 = vperm.slane %v3751, %v3758
        %v3760 = vrot.slane %v3091, 4
        %v3761 = vsel %vm492, %v3760, %v2995
        %v3762 = vrot.slane %v2995, 4
        %v3763 = vsel %vm492, %v3091, %v3762
        %v3765 = vunpack.c.l.s4 1983009808
        %v3766 = vunpack.c.0.s8 %v3765
        %v3767 = vperm.slane %v3761, %v3766
        %v3769 = vunpack.c.l.s4 1983009808
        %v3770 = vunpack.c.0.s8 %v3769
        %v3771 = vperm.slane %v3763, %v3770
        %v3772 = vrot.slane %v3139, 4
        %v3773 = vsel %vm492, %v3772, %v3043
        %v3774 = vrot.slane %v3043, 4
        %v3775 = vsel %vm492, %v3139, %v3774
        %v3777 = vunpack.c.l.s4 1983009808
        %v3778 = vunpack.c.0.s8 %v3777
        %v3779 = vperm.slane %v3773, %v3778
        %v3781 = vunpack.c.l.s4 1983009808
        %v3782 = vunpack.c.0.s8 %v3781
        %v3783 = vperm.slane %v3775, %v3782
        %v3784 = vrot.slane %v3755, 4
        %v3785 = vsel %vm492, %v3784, %v3743
        %v3786 = vrot.slane %v3743, 4
        %v3787 = vsel %vm492, %v3755, %v3786
        %v3789 = vunpack.c.l.s4 1934713408
        %v3790 = vunpack.c.0.s8 %v3789
        %v3791 = vperm.slane %v3785, %v3790
        %v3793 = vunpack.c.l.s4 1934713408
        %v3794 = vunpack.c.0.s8 %v3793
        %v3795 = vperm.slane %v3787, %v3794
        %v3796 = vrot.slane %v3759, 4
        %v3797 = vsel %vm492, %v3796, %v3747
        %v3798 = vrot.slane %v3747, 4
        %v3799 = vsel %vm492, %v3759, %v3798
        %v3801 = vunpack.c.l.s4 1934713408
        %v3802 = vunpack.c.0.s8 %v3801
        %v3803 = vperm.slane %v3797, %v3802
        %v3805 = vunpack.c.l.s4 1934713408
        %v3806 = vunpack.c.0.s8 %v3805
        %v3807 = vperm.slane %v3799, %v3806
        %v3808 = vrot.slane %v3779, 4
        %v3809 = vsel %vm492, %v3808, %v3767
        %v3810 = vrot.slane %v3767, 4
        %v3811 = vsel %vm492, %v3779, %v3810
        %v3813 = vunpack.c.l.s4 1934713408
        %v3814 = vunpack.c.0.s8 %v3813
        %v3815 = vperm.slane %v3809, %v3814
        %v3817 = vunpack.c.l.s4 1934713408
        %v3818 = vunpack.c.0.s8 %v3817
        %v3819 = vperm.slane %v3811, %v3818
        %v3820 = vrot.slane %v3783, 4
        %v3821 = vsel %vm492, %v3820, %v3771
        %v3822 = vrot.slane %v3771, 4
        %v3823 = vsel %vm492, %v3783, %v3822
        %v3825 = vunpack.c.l.s4 1934713408
        %v3826 = vunpack.c.0.s8 %v3825
        %v3827 = vperm.slane %v3821, %v3826
        %v3829 = vunpack.c.l.s4 1934713408
        %v3830 = vunpack.c.0.s8 %v3829
        %v3831 = vperm.slane %v3823, %v3830
        %v3832 = vrot.slane %v3815, 4
        %v3833 = vsel %vm492, %v3832, %v3791
        %v3834 = vrot.slane %v3791, 4
        %v3835 = vsel %vm492, %v3815, %v3834
        %v3836 = vrot.slane %v3819, 4
        %v3837 = vsel %vm492, %v3836, %v3795
        %v3838 = vrot.slane %v3795, 4
        %v3839 = vsel %vm492, %v3819, %v3838
        %v3840 = vrot.slane %v3827, 4
        %v3841 = vsel %vm492, %v3840, %v3803
        %v3842 = vrot.slane %v3803, 4
        %v3843 = vsel %vm492, %v3827, %v3842
        %v3844 = vrot.slane %v3831, 4
        %v3845 = vsel %vm492, %v3844, %v3807
        %v3846 = vrot.slane %v3807, 4
        %v3847 = vsel %vm492, %v3831, %v3846
        %v3848 = vrot.slane %v2901, 4
        %v3849 = vsel %vm492, %v3848, %v2711
        %v3850 = vrot.slane %v2711, 4
        %v3851 = vsel %vm492, %v2901, %v3850
        %v3853 = vunpack.c.l.s4 1983009808
        %v3854 = vunpack.c.0.s8 %v3853
        %v3855 = vperm.slane %v3849, %v3854
        %v3857 = vunpack.c.l.s4 1983009808
        %v3858 = vunpack.c.0.s8 %v3857
        %v3859 = vperm.slane %v3851, %v3858
        %v3860 = vrot.slane %v2949, 4
        %v3861 = vsel %vm492, %v3860, %v2853
        %v3862 = vrot.slane %v2853, 4
        %v3863 = vsel %vm492, %v2949, %v3862
        %v3865 = vunpack.c.l.s4 1983009808
        %v3866 = vunpack.c.0.s8 %v3865
        %v3867 = vperm.slane %v3861, %v3866
        %v3869 = vunpack.c.l.s4 1983009808
        %v3870 = vunpack.c.0.s8 %v3869
        %v3871 = vperm.slane %v3863, %v3870
        %v3872 = vrot.slane %v3093, 4
        %v3873 = vsel %vm492, %v3872, %v2997
        %v3874 = vrot.slane %v2997, 4
        %v3875 = vsel %vm492, %v3093, %v3874
        %v3877 = vunpack.c.l.s4 1983009808
        %v3878 = vunpack.c.0.s8 %v3877
        %v3879 = vperm.slane %v3873, %v3878
        %v3881 = vunpack.c.l.s4 1983009808
        %v3882 = vunpack.c.0.s8 %v3881
        %v3883 = vperm.slane %v3875, %v3882
        %v3884 = vrot.slane %v3141, 4
        %v3885 = vsel %vm492, %v3884, %v3045
        %v3886 = vrot.slane %v3045, 4
        %v3887 = vsel %vm492, %v3141, %v3886
        %v3889 = vunpack.c.l.s4 1983009808
        %v3890 = vunpack.c.0.s8 %v3889
        %v3891 = vperm.slane %v3885, %v3890
        %v3893 = vunpack.c.l.s4 1983009808
        %v3894 = vunpack.c.0.s8 %v3893
        %v3895 = vperm.slane %v3887, %v3894
        %v3896 = vrot.slane %v3867, 4
        %v3897 = vsel %vm492, %v3896, %v3855
        %v3898 = vrot.slane %v3855, 4
        %v3899 = vsel %vm492, %v3867, %v3898
        %v3901 = vunpack.c.l.s4 1934713408
        %v3902 = vunpack.c.0.s8 %v3901
        %v3903 = vperm.slane %v3897, %v3902
        %v3905 = vunpack.c.l.s4 1934713408
        %v3906 = vunpack.c.0.s8 %v3905
        %v3907 = vperm.slane %v3899, %v3906
        %v3908 = vrot.slane %v3871, 4
        %v3909 = vsel %vm492, %v3908, %v3859
        %v3910 = vrot.slane %v3859, 4
        %v3911 = vsel %vm492, %v3871, %v3910
        %v3913 = vunpack.c.l.s4 1934713408
        %v3914 = vunpack.c.0.s8 %v3913
        %v3915 = vperm.slane %v3909, %v3914
        %v3917 = vunpack.c.l.s4 1934713408
        %v3918 = vunpack.c.0.s8 %v3917
        %v3919 = vperm.slane %v3911, %v3918
        %v3920 = vrot.slane %v3891, 4
        %v3921 = vsel %vm492, %v3920, %v3879
        %v3922 = vrot.slane %v3879, 4
        %v3923 = vsel %vm492, %v3891, %v3922
        %v3925 = vunpack.c.l.s4 1934713408
        %v3926 = vunpack.c.0.s8 %v3925
        %v3927 = vperm.slane %v3921, %v3926
        %v3929 = vunpack.c.l.s4 1934713408
        %v3930 = vunpack.c.0.s8 %v3929
        %v3931 = vperm.slane %v3923, %v3930
        %v3932 = vrot.slane %v3895, 4
        %v3933 = vsel %vm492, %v3932, %v3883
        %v3934 = vrot.slane %v3883, 4
        %v3935 = vsel %vm492, %v3895, %v3934
        %v3937 = vunpack.c.l.s4 1934713408
        %v3938 = vunpack.c.0.s8 %v3937
        %v3939 = vperm.slane %v3933, %v3938
        %v3941 = vunpack.c.l.s4 1934713408
        %v3942 = vunpack.c.0.s8 %v3941
        %v3943 = vperm.slane %v3935, %v3942
        %v3944 = vrot.slane %v3927, 4
        %v3945 = vsel %vm492, %v3944, %v3903
        %v3946 = vrot.slane %v3903, 4
        %v3947 = vsel %vm492, %v3927, %v3946
        %v3948 = vrot.slane %v3931, 4
        %v3949 = vsel %vm492, %v3948, %v3907
        %v3950 = vrot.slane %v3907, 4
        %v3951 = vsel %vm492, %v3931, %v3950
        %v3952 = vrot.slane %v3939, 4
        %v3953 = vsel %vm492, %v3952, %v3915
        %v3954 = vrot.slane %v3915, 4
        %v3955 = vsel %vm492, %v3939, %v3954
        %v3956 = vrot.slane %v3943, 4
        %v3957 = vsel %vm492, %v3956, %v3919
        %v3958 = vrot.slane %v3919, 4
        %v3959 = vsel %vm492, %v3943, %v3958
        %v3960 = vrot.slane %v2903, 4
        %v3961 = vsel %vm492, %v3960, %v2714
        %v3962 = vrot.slane %v2714, 4
        %v3963 = vsel %vm492, %v2903, %v3962
        %v3965 = vunpack.c.l.s4 1983009808
        %v3966 = vunpack.c.0.s8 %v3965
        %v3967 = vperm.slane %v3961, %v3966
        %v3969 = vunpack.c.l.s4 1983009808
        %v3970 = vunpack.c.0.s8 %v3969
        %v3971 = vperm.slane %v3963, %v3970
        %v3972 = vrot.slane %v2951, 4
        %v3973 = vsel %vm492, %v3972, %v2855
        %v3974 = vrot.slane %v2855, 4
        %v3975 = vsel %vm492, %v2951, %v3974
        %v3977 = vunpack.c.l.s4 1983009808
        %v3978 = vunpack.c.0.s8 %v3977
        %v3979 = vperm.slane %v3973, %v3978
        %v3981 = vunpack.c.l.s4 1983009808
        %v3982 = vunpack.c.0.s8 %v3981
        %v3983 = vperm.slane %v3975, %v3982
        %v3984 = vrot.slane %v3095, 4
        %v3985 = vsel %vm492, %v3984, %v2999
        %v3986 = vrot.slane %v2999, 4
        %v3987 = vsel %vm492, %v3095, %v3986
        %v3989 = vunpack.c.l.s4 1983009808
        %v3990 = vunpack.c.0.s8 %v3989
        %v3991 = vperm.slane %v3985, %v3990
        %v3993 = vunpack.c.l.s4 1983009808
        %v3994 = vunpack.c.0.s8 %v3993
        %v3995 = vperm.slane %v3987, %v3994
        %v3996 = vrot.slane %v3143, 4
        %v3997 = vsel %vm492, %v3996, %v3047
        %v3998 = vrot.slane %v3047, 4
        %v3999 = vsel %vm492, %v3143, %v3998
        %v4001 = vunpack.c.l.s4 1983009808
        %v4002 = vunpack.c.0.s8 %v4001
        %v4003 = vperm.slane %v3997, %v4002
        %v4005 = vunpack.c.l.s4 1983009808
        %v4006 = vunpack.c.0.s8 %v4005
        %v4007 = vperm.slane %v3999, %v4006
        %v4008 = vrot.slane %v3979, 4
        %v4009 = vsel %vm492, %v4008, %v3967
        %v4010 = vrot.slane %v3967, 4
        %v4011 = vsel %vm492, %v3979, %v4010
        %v4013 = vunpack.c.l.s4 1934713408
        %v4014 = vunpack.c.0.s8 %v4013
        %v4015 = vperm.slane %v4009, %v4014
        %v4017 = vunpack.c.l.s4 1934713408
        %v4018 = vunpack.c.0.s8 %v4017
        %v4019 = vperm.slane %v4011, %v4018
        %v4020 = vrot.slane %v3983, 4
        %v4021 = vsel %vm492, %v4020, %v3971
        %v4022 = vrot.slane %v3971, 4
        %v4023 = vsel %vm492, %v3983, %v4022
        %v4025 = vunpack.c.l.s4 1934713408
        %v4026 = vunpack.c.0.s8 %v4025
        %v4027 = vperm.slane %v4021, %v4026
        %v4029 = vunpack.c.l.s4 1934713408
        %v4030 = vunpack.c.0.s8 %v4029
        %v4031 = vperm.slane %v4023, %v4030
        %v4032 = vrot.slane %v4003, 4
        %v4033 = vsel %vm492, %v4032, %v3991
        %v4034 = vrot.slane %v3991, 4
        %v4035 = vsel %vm492, %v4003, %v4034
        %v4037 = vunpack.c.l.s4 1934713408
        %v4038 = vunpack.c.0.s8 %v4037
        %v4039 = vperm.slane %v4033, %v4038
        %v4041 = vunpack.c.l.s4 1934713408
        %v4042 = vunpack.c.0.s8 %v4041
        %v4043 = vperm.slane %v4035, %v4042
        %v4044 = vrot.slane %v4007, 4
        %v4045 = vsel %vm492, %v4044, %v3995
        %v4046 = vrot.slane %v3995, 4
        %v4047 = vsel %vm492, %v4007, %v4046
        %v4049 = vunpack.c.l.s4 1934713408
        %v4050 = vunpack.c.0.s8 %v4049
        %v4051 = vperm.slane %v4045, %v4050
        %v4053 = vunpack.c.l.s4 1934713408
        %v4054 = vunpack.c.0.s8 %v4053
        %v4055 = vperm.slane %v4047, %v4054
        %v4056 = vrot.slane %v4039, 4
        %v4057 = vsel %vm492, %v4056, %v4015
        %v4058 = vrot.slane %v4015, 4
        %v4059 = vsel %vm492, %v4039, %v4058
        %v4060 = vrot.slane %v4043, 4
        %v4061 = vsel %vm492, %v4060, %v4019
        %v4062 = vrot.slane %v4019, 4
        %v4063 = vsel %vm492, %v4043, %v4062
        %v4064 = vrot.slane %v4051, 4
        %v4065 = vsel %vm492, %v4064, %v4027
        %v4066 = vrot.slane %v4027, 4
        %v4067 = vsel %vm492, %v4051, %v4066
        %v4068 = vrot.slane %v4055, 4
        %v4069 = vsel %vm492, %v4068, %v4031
        %v4070 = vrot.slane %v4031, 4
        %v4071 = vsel %vm492, %v4055, %v4070
        %v4072 = vrot.slane %v2905, 4
        %v4073 = vsel %vm492, %v4072, %v2738
        %v4074 = vrot.slane %v2738, 4
        %v4075 = vsel %vm492, %v2905, %v4074
        %v4077 = vunpack.c.l.s4 1983009808
        %v4078 = vunpack.c.0.s8 %v4077
        %v4079 = vperm.slane %v4073, %v4078
        %v4081 = vunpack.c.l.s4 1983009808
        %v4082 = vunpack.c.0.s8 %v4081
        %v4083 = vperm.slane %v4075, %v4082
        %v4084 = vrot.slane %v2953, 4
        %v4085 = vsel %vm492, %v4084, %v2857
        %v4086 = vrot.slane %v2857, 4
        %v4087 = vsel %vm492, %v2953, %v4086
        %v4089 = vunpack.c.l.s4 1983009808
        %v4090 = vunpack.c.0.s8 %v4089
        %v4091 = vperm.slane %v4085, %v4090
        %v4093 = vunpack.c.l.s4 1983009808
        %v4094 = vunpack.c.0.s8 %v4093
        %v4095 = vperm.slane %v4087, %v4094
        %v4096 = vrot.slane %v3097, 4
        %v4097 = vsel %vm492, %v4096, %v3001
        %v4098 = vrot.slane %v3001, 4
        %v4099 = vsel %vm492, %v3097, %v4098
        %v4101 = vunpack.c.l.s4 1983009808
        %v4102 = vunpack.c.0.s8 %v4101
        %v4103 = vperm.slane %v4097, %v4102
        %v4105 = vunpack.c.l.s4 1983009808
        %v4106 = vunpack.c.0.s8 %v4105
        %v4107 = vperm.slane %v4099, %v4106
        %v4108 = vrot.slane %v3145, 4
        %v4109 = vsel %vm492, %v4108, %v3049
        %v4110 = vrot.slane %v3049, 4
        %v4111 = vsel %vm492, %v3145, %v4110
        %v4113 = vunpack.c.l.s4 1983009808
        %v4114 = vunpack.c.0.s8 %v4113
        %v4115 = vperm.slane %v4109, %v4114
        %v4117 = vunpack.c.l.s4 1983009808
        %v4118 = vunpack.c.0.s8 %v4117
        %v4119 = vperm.slane %v4111, %v4118
        %v4120 = vrot.slane %v4091, 4
        %v4121 = vsel %vm492, %v4120, %v4079
        %v4122 = vrot.slane %v4079, 4
        %v4123 = vsel %vm492, %v4091, %v4122
        %v4125 = vunpack.c.l.s4 1934713408
        %v4126 = vunpack.c.0.s8 %v4125
        %v4127 = vperm.slane %v4121, %v4126
        %v4129 = vunpack.c.l.s4 1934713408
        %v4130 = vunpack.c.0.s8 %v4129
        %v4131 = vperm.slane %v4123, %v4130
        %v4132 = vrot.slane %v4095, 4
        %v4133 = vsel %vm492, %v4132, %v4083
        %v4134 = vrot.slane %v4083, 4
        %v4135 = vsel %vm492, %v4095, %v4134
        %v4137 = vunpack.c.l.s4 1934713408
        %v4138 = vunpack.c.0.s8 %v4137
        %v4139 = vperm.slane %v4133, %v4138
        %v4141 = vunpack.c.l.s4 1934713408
        %v4142 = vunpack.c.0.s8 %v4141
        %v4143 = vperm.slane %v4135, %v4142
        %v4144 = vrot.slane %v4115, 4
        %v4145 = vsel %vm492, %v4144, %v4103
        %v4146 = vrot.slane %v4103, 4
        %v4147 = vsel %vm492, %v4115, %v4146
        %v4149 = vunpack.c.l.s4 1934713408
        %v4150 = vunpack.c.0.s8 %v4149
        %v4151 = vperm.slane %v4145, %v4150
        %v4153 = vunpack.c.l.s4 1934713408
        %v4154 = vunpack.c.0.s8 %v4153
        %v4155 = vperm.slane %v4147, %v4154
        %v4156 = vrot.slane %v4119, 4
        %v4157 = vsel %vm492, %v4156, %v4107
        %v4158 = vrot.slane %v4107, 4
        %v4159 = vsel %vm492, %v4119, %v4158
        %v4161 = vunpack.c.l.s4 1934713408
        %v4162 = vunpack.c.0.s8 %v4161
        %v4163 = vperm.slane %v4157, %v4162
        %v4165 = vunpack.c.l.s4 1934713408
        %v4166 = vunpack.c.0.s8 %v4165
        %v4167 = vperm.slane %v4159, %v4166
        %v4168 = vrot.slane %v4151, 4
        %v4169 = vsel %vm492, %v4168, %v4127
        %v4170 = vrot.slane %v4127, 4
        %v4171 = vsel %vm492, %v4151, %v4170
        %v4172 = vrot.slane %v4155, 4
        %v4173 = vsel %vm492, %v4172, %v4131
        %v4174 = vrot.slane %v4131, 4
        %v4175 = vsel %vm492, %v4155, %v4174
        %v4176 = vrot.slane %v4163, 4
        %v4177 = vsel %vm492, %v4176, %v4139
        %v4178 = vrot.slane %v4139, 4
        %v4179 = vsel %vm492, %v4163, %v4178
        %v4180 = vrot.slane %v4167, 4
        %v4181 = vsel %vm492, %v4180, %v4143
        %v4182 = vrot.slane %v4143, 4
        %v4183 = vsel %vm492, %v4167, %v4182
        %v4184 = vrot.slane %v2907, 4
        %v4185 = vsel %vm492, %v4184, %v2741
        %v4186 = vrot.slane %v2741, 4
        %v4187 = vsel %vm492, %v2907, %v4186
        %v4189 = vunpack.c.l.s4 1983009808
        %v4190 = vunpack.c.0.s8 %v4189
        %v4191 = vperm.slane %v4185, %v4190
        %v4193 = vunpack.c.l.s4 1983009808
        %v4194 = vunpack.c.0.s8 %v4193
        %v4195 = vperm.slane %v4187, %v4194
        %v4196 = vrot.slane %v2955, 4
        %v4197 = vsel %vm492, %v4196, %v2859
        %v4198 = vrot.slane %v2859, 4
        %v4199 = vsel %vm492, %v2955, %v4198
        %v4201 = vunpack.c.l.s4 1983009808
        %v4202 = vunpack.c.0.s8 %v4201
        %v4203 = vperm.slane %v4197, %v4202
        %v4205 = vunpack.c.l.s4 1983009808
        %v4206 = vunpack.c.0.s8 %v4205
        %v4207 = vperm.slane %v4199, %v4206
        %v4208 = vrot.slane %v3099, 4
        %v4209 = vsel %vm492, %v4208, %v3003
        %v4210 = vrot.slane %v3003, 4
        %v4211 = vsel %vm492, %v3099, %v4210
        %v4213 = vunpack.c.l.s4 1983009808
        %v4214 = vunpack.c.0.s8 %v4213
        %v4215 = vperm.slane %v4209, %v4214
        %v4217 = vunpack.c.l.s4 1983009808
        %v4218 = vunpack.c.0.s8 %v4217
        %v4219 = vperm.slane %v4211, %v4218
        %v4220 = vrot.slane %v3147, 4
        %v4221 = vsel %vm492, %v4220, %v3051
        %v4222 = vrot.slane %v3051, 4
        %v4223 = vsel %vm492, %v3147, %v4222
        %v4225 = vunpack.c.l.s4 1983009808
        %v4226 = vunpack.c.0.s8 %v4225
        %v4227 = vperm.slane %v4221, %v4226
        %v4229 = vunpack.c.l.s4 1983009808
        %v4230 = vunpack.c.0.s8 %v4229
        %v4231 = vperm.slane %v4223, %v4230
        %v4232 = vrot.slane %v4203, 4
        %v4233 = vsel %vm492, %v4232, %v4191
        %v4234 = vrot.slane %v4191, 4
        %v4235 = vsel %vm492, %v4203, %v4234
        %v4237 = vunpack.c.l.s4 1934713408
        %v4238 = vunpack.c.0.s8 %v4237
        %v4239 = vperm.slane %v4233, %v4238
        %v4241 = vunpack.c.l.s4 1934713408
        %v4242 = vunpack.c.0.s8 %v4241
        %v4243 = vperm.slane %v4235, %v4242
        %v4244 = vrot.slane %v4207, 4
        %v4245 = vsel %vm492, %v4244, %v4195
        %v4246 = vrot.slane %v4195, 4
        %v4247 = vsel %vm492, %v4207, %v4246
        %v4249 = vunpack.c.l.s4 1934713408
        %v4250 = vunpack.c.0.s8 %v4249
        %v4251 = vperm.slane %v4245, %v4250
        %v4253 = vunpack.c.l.s4 1934713408
        %v4254 = vunpack.c.0.s8 %v4253
        %v4255 = vperm.slane %v4247, %v4254
        %v4256 = vrot.slane %v4227, 4
        %v4257 = vsel %vm492, %v4256, %v4215
        %v4258 = vrot.slane %v4215, 4
        %v4259 = vsel %vm492, %v4227, %v4258
        %v4261 = vunpack.c.l.s4 1934713408
        %v4262 = vunpack.c.0.s8 %v4261
        %v4263 = vperm.slane %v4257, %v4262
        %v4265 = vunpack.c.l.s4 1934713408
        %v4266 = vunpack.c.0.s8 %v4265
        %v4267 = vperm.slane %v4259, %v4266
        %v4268 = vrot.slane %v4231, 4
        %v4269 = vsel %vm492, %v4268, %v4219
        %v4270 = vrot.slane %v4219, 4
        %v4271 = vsel %vm492, %v4231, %v4270
        %v4273 = vunpack.c.l.s4 1934713408
        %v4274 = vunpack.c.0.s8 %v4273
        %v4275 = vperm.slane %v4269, %v4274
        %v4277 = vunpack.c.l.s4 1934713408
        %v4278 = vunpack.c.0.s8 %v4277
        %v4279 = vperm.slane %v4271, %v4278
        %v4280 = vrot.slane %v4263, 4
        %v4281 = vsel %vm492, %v4280, %v4239
        %v4282 = vrot.slane %v4239, 4
        %v4283 = vsel %vm492, %v4263, %v4282
        %v4284 = vrot.slane %v4267, 4
        %v4285 = vsel %vm492, %v4284, %v4243
        %v4286 = vrot.slane %v4243, 4
        %v4287 = vsel %vm492, %v4267, %v4286
        %v4288 = vrot.slane %v4275, 4
        %v4289 = vsel %vm492, %v4288, %v4251
        %v4290 = vrot.slane %v4251, 4
        %v4291 = vsel %vm492, %v4275, %v4290
        %v4292 = vrot.slane %v4279, 4
        %v4293 = vsel %vm492, %v4292, %v4255
        %v4294 = vrot.slane %v4255, 4
        %v4295 = vsel %vm492, %v4279, %v4294
        %v4296 = vrot.slane %v2909, 4
        %v4297 = vsel %vm492, %v4296, %v2765
        %v4298 = vrot.slane %v2765, 4
        %v4299 = vsel %vm492, %v2909, %v4298
        %v4301 = vunpack.c.l.s4 1983009808
        %v4302 = vunpack.c.0.s8 %v4301
        %v4303 = vperm.slane %v4297, %v4302
        %v4305 = vunpack.c.l.s4 1983009808
        %v4306 = vunpack.c.0.s8 %v4305
        %v4307 = vperm.slane %v4299, %v4306
        %v4308 = vrot.slane %v2957, 4
        %v4309 = vsel %vm492, %v4308, %v2861
        %v4310 = vrot.slane %v2861, 4
        %v4311 = vsel %vm492, %v2957, %v4310
        %v4313 = vunpack.c.l.s4 1983009808
        %v4314 = vunpack.c.0.s8 %v4313
        %v4315 = vperm.slane %v4309, %v4314
        %v4317 = vunpack.c.l.s4 1983009808
        %v4318 = vunpack.c.0.s8 %v4317
        %v4319 = vperm.slane %v4311, %v4318
        %v4320 = vrot.slane %v3101, 4
        %v4321 = vsel %vm492, %v4320, %v3005
        %v4322 = vrot.slane %v3005, 4
        %v4323 = vsel %vm492, %v3101, %v4322
        %v4325 = vunpack.c.l.s4 1983009808
        %v4326 = vunpack.c.0.s8 %v4325
        %v4327 = vperm.slane %v4321, %v4326
        %v4329 = vunpack.c.l.s4 1983009808
        %v4330 = vunpack.c.0.s8 %v4329
        %v4331 = vperm.slane %v4323, %v4330
        %v4332 = vrot.slane %v3149, 4
        %v4333 = vsel %vm492, %v4332, %v3053
        %v4334 = vrot.slane %v3053, 4
        %v4335 = vsel %vm492, %v3149, %v4334
        %v4337 = vunpack.c.l.s4 1983009808
        %v4338 = vunpack.c.0.s8 %v4337
        %v4339 = vperm.slane %v4333, %v4338
        %v4341 = vunpack.c.l.s4 1983009808
        %v4342 = vunpack.c.0.s8 %v4341
        %v4343 = vperm.slane %v4335, %v4342
        %v4344 = vrot.slane %v4315, 4
        %v4345 = vsel %vm492, %v4344, %v4303
        %v4346 = vrot.slane %v4303, 4
        %v4347 = vsel %vm492, %v4315, %v4346
        %v4349 = vunpack.c.l.s4 1934713408
        %v4350 = vunpack.c.0.s8 %v4349
        %v4351 = vperm.slane %v4345, %v4350
        %v4353 = vunpack.c.l.s4 1934713408
        %v4354 = vunpack.c.0.s8 %v4353
        %v4355 = vperm.slane %v4347, %v4354
        %v4356 = vrot.slane %v4319, 4
        %v4357 = vsel %vm492, %v4356, %v4307
        %v4358 = vrot.slane %v4307, 4
        %v4359 = vsel %vm492, %v4319, %v4358
        %v4361 = vunpack.c.l.s4 1934713408
        %v4362 = vunpack.c.0.s8 %v4361
        %v4363 = vperm.slane %v4357, %v4362
        %v4365 = vunpack.c.l.s4 1934713408
        %v4366 = vunpack.c.0.s8 %v4365
        %v4367 = vperm.slane %v4359, %v4366
        %v4368 = vrot.slane %v4339, 4
        %v4369 = vsel %vm492, %v4368, %v4327
        %v4370 = vrot.slane %v4327, 4
        %v4371 = vsel %vm492, %v4339, %v4370
        %v4373 = vunpack.c.l.s4 1934713408
        %v4374 = vunpack.c.0.s8 %v4373
        %v4375 = vperm.slane %v4369, %v4374
        %v4377 = vunpack.c.l.s4 1934713408
        %v4378 = vunpack.c.0.s8 %v4377
        %v4379 = vperm.slane %v4371, %v4378
        %v4380 = vrot.slane %v4343, 4
        %v4381 = vsel %vm492, %v4380, %v4331
        %v4382 = vrot.slane %v4331, 4
        %v4383 = vsel %vm492, %v4343, %v4382
        %v4385 = vunpack.c.l.s4 1934713408
        %v4386 = vunpack.c.0.s8 %v4385
        %v4387 = vperm.slane %v4381, %v4386
        %v4389 = vunpack.c.l.s4 1934713408
        %v4390 = vunpack.c.0.s8 %v4389
        %v4391 = vperm.slane %v4383, %v4390
        %v4392 = vrot.slane %v4375, 4
        %v4393 = vsel %vm492, %v4392, %v4351
        %v4394 = vrot.slane %v4351, 4
        %v4395 = vsel %vm492, %v4375, %v4394
        %v4396 = vrot.slane %v4379, 4
        %v4397 = vsel %vm492, %v4396, %v4355
        %v4398 = vrot.slane %v4355, 4
        %v4399 = vsel %vm492, %v4379, %v4398
        %v4400 = vrot.slane %v4387, 4
        %v4401 = vsel %vm492, %v4400, %v4363
        %v4402 = vrot.slane %v4363, 4
        %v4403 = vsel %vm492, %v4387, %v4402
        %v4404 = vrot.slane %v4391, 4
        %v4405 = vsel %vm492, %v4404, %v4367
        %v4406 = vrot.slane %v4367, 4
        %v4407 = vsel %vm492, %v4391, %v4406
        %v4408 = vrot.slane %v2911, 4
        %v4409 = vsel %vm492, %v4408, %v2768
        %v4410 = vrot.slane %v2768, 4
        %v4411 = vsel %vm492, %v2911, %v4410
        %v4413 = vunpack.c.l.s4 1983009808
        %v4414 = vunpack.c.0.s8 %v4413
        %v4415 = vperm.slane %v4409, %v4414
        %v4417 = vunpack.c.l.s4 1983009808
        %v4418 = vunpack.c.0.s8 %v4417
        %v4419 = vperm.slane %v4411, %v4418
        %v4420 = vrot.slane %v2959, 4
        %v4421 = vsel %vm492, %v4420, %v2863
        %v4422 = vrot.slane %v2863, 4
        %v4423 = vsel %vm492, %v2959, %v4422
        %v4425 = vunpack.c.l.s4 1983009808
        %v4426 = vunpack.c.0.s8 %v4425
        %v4427 = vperm.slane %v4421, %v4426
        %v4429 = vunpack.c.l.s4 1983009808
        %v4430 = vunpack.c.0.s8 %v4429
        %v4431 = vperm.slane %v4423, %v4430
        %v4432 = vrot.slane %v3103, 4
        %v4433 = vsel %vm492, %v4432, %v3007
        %v4434 = vrot.slane %v3007, 4
        %v4435 = vsel %vm492, %v3103, %v4434
        %v4437 = vunpack.c.l.s4 1983009808
        %v4438 = vunpack.c.0.s8 %v4437
        %v4439 = vperm.slane %v4433, %v4438
        %v4441 = vunpack.c.l.s4 1983009808
        %v4442 = vunpack.c.0.s8 %v4441
        %v4443 = vperm.slane %v4435, %v4442
        %v4444 = vrot.slane %v3151, 4
        %v4445 = vsel %vm492, %v4444, %v3055
        %v4446 = vrot.slane %v3055, 4
        %v4447 = vsel %vm492, %v3151, %v4446
        %v4449 = vunpack.c.l.s4 1983009808
        %v4450 = vunpack.c.0.s8 %v4449
        %v4451 = vperm.slane %v4445, %v4450
        %v4453 = vunpack.c.l.s4 1983009808
        %v4454 = vunpack.c.0.s8 %v4453
        %v4455 = vperm.slane %v4447, %v4454
        %v4456 = vrot.slane %v4427, 4
        %v4457 = vsel %vm492, %v4456, %v4415
        %v4458 = vrot.slane %v4415, 4
        %v4459 = vsel %vm492, %v4427, %v4458
        %v4461 = vunpack.c.l.s4 1934713408
        %v4462 = vunpack.c.0.s8 %v4461
        %v4463 = vperm.slane %v4457, %v4462
        %v4465 = vunpack.c.l.s4 1934713408
        %v4466 = vunpack.c.0.s8 %v4465
        %v4467 = vperm.slane %v4459, %v4466
        %v4468 = vrot.slane %v4431, 4
        %v4469 = vsel %vm492, %v4468, %v4419
        %v4470 = vrot.slane %v4419, 4
        %v4471 = vsel %vm492, %v4431, %v4470
        %v4473 = vunpack.c.l.s4 1934713408
        %v4474 = vunpack.c.0.s8 %v4473
        %v4475 = vperm.slane %v4469, %v4474
        %v4477 = vunpack.c.l.s4 1934713408
        %v4478 = vunpack.c.0.s8 %v4477
        %v4479 = vperm.slane %v4471, %v4478
        %v4480 = vrot.slane %v4451, 4
        %v4481 = vsel %vm492, %v4480, %v4439
        %v4482 = vrot.slane %v4439, 4
        %v4483 = vsel %vm492, %v4451, %v4482
        %v4485 = vunpack.c.l.s4 1934713408
        %v4486 = vunpack.c.0.s8 %v4485
        %v4487 = vperm.slane %v4481, %v4486
        %v4489 = vunpack.c.l.s4 1934713408
        %v4490 = vunpack.c.0.s8 %v4489
        %v4491 = vperm.slane %v4483, %v4490
        %v4492 = vrot.slane %v4455, 4
        %v4493 = vsel %vm492, %v4492, %v4443
        %v4494 = vrot.slane %v4443, 4
        %v4495 = vsel %vm492, %v4455, %v4494
        %v4497 = vunpack.c.l.s4 1934713408
        %v4498 = vunpack.c.0.s8 %v4497
        %v4499 = vperm.slane %v4493, %v4498
        %v4501 = vunpack.c.l.s4 1934713408
        %v4502 = vunpack.c.0.s8 %v4501
        %v4503 = vperm.slane %v4495, %v4502
        %v4504 = vrot.slane %v4487, 4
        %v4505 = vsel %vm492, %v4504, %v4463
        %v4506 = vrot.slane %v4463, 4
        %v4507 = vsel %vm492, %v4487, %v4506
        %v4508 = vrot.slane %v4491, 4
        %v4509 = vsel %vm492, %v4508, %v4467
        %v4510 = vrot.slane %v4467, 4
        %v4511 = vsel %vm492, %v4491, %v4510
        %v4512 = vrot.slane %v4499, 4
        %v4513 = vsel %vm492, %v4512, %v4475
        %v4514 = vrot.slane %v4475, 4
        %v4515 = vsel %vm492, %v4499, %v4514
        %v4516 = vrot.slane %v4503, 4
        %v4517 = vsel %vm492, %v4516, %v4479
        %v4518 = vrot.slane %v4479, 4
        %v4519 = vsel %vm492, %v4503, %v4518
        %v4520 = vrot.slane %v2913, 4
        %v4521 = vsel %vm492, %v4520, %v2792
        %v4522 = vrot.slane %v2792, 4
        %v4523 = vsel %vm492, %v2913, %v4522
        %v4525 = vunpack.c.l.s4 1983009808
        %v4526 = vunpack.c.0.s8 %v4525
        %v4527 = vperm.slane %v4521, %v4526
        %v4529 = vunpack.c.l.s4 1983009808
        %v4530 = vunpack.c.0.s8 %v4529
        %v4531 = vperm.slane %v4523, %v4530
        %v4532 = vrot.slane %v2961, 4
        %v4533 = vsel %vm492, %v4532, %v2865
        %v4534 = vrot.slane %v2865, 4
        %v4535 = vsel %vm492, %v2961, %v4534
        %v4537 = vunpack.c.l.s4 1983009808
        %v4538 = vunpack.c.0.s8 %v4537
        %v4539 = vperm.slane %v4533, %v4538
        %v4541 = vunpack.c.l.s4 1983009808
        %v4542 = vunpack.c.0.s8 %v4541
        %v4543 = vperm.slane %v4535, %v4542
        %v4544 = vrot.slane %v3105, 4
        %v4545 = vsel %vm492, %v4544, %v3009
        %v4546 = vrot.slane %v3009, 4
        %v4547 = vsel %vm492, %v3105, %v4546
        %v4549 = vunpack.c.l.s4 1983009808
        %v4550 = vunpack.c.0.s8 %v4549
        %v4551 = vperm.slane %v4545, %v4550
        %v4553 = vunpack.c.l.s4 1983009808
        %v4554 = vunpack.c.0.s8 %v4553
        %v4555 = vperm.slane %v4547, %v4554
        %v4556 = vrot.slane %v3153, 4
        %v4557 = vsel %vm492, %v4556, %v3057
        %v4558 = vrot.slane %v3057, 4
        %v4559 = vsel %vm492, %v3153, %v4558
        %v4561 = vunpack.c.l.s4 1983009808
        %v4562 = vunpack.c.0.s8 %v4561
        %v4563 = vperm.slane %v4557, %v4562
        %v4565 = vunpack.c.l.s4 1983009808
        %v4566 = vunpack.c.0.s8 %v4565
        %v4567 = vperm.slane %v4559, %v4566
        %v4568 = vrot.slane %v4539, 4
        %v4569 = vsel %vm492, %v4568, %v4527
        %v4570 = vrot.slane %v4527, 4
        %v4571 = vsel %vm492, %v4539, %v4570
        %v4573 = vunpack.c.l.s4 1934713408
        %v4574 = vunpack.c.0.s8 %v4573
        %v4575 = vperm.slane %v4569, %v4574
        %v4577 = vunpack.c.l.s4 1934713408
        %v4578 = vunpack.c.0.s8 %v4577
        %v4579 = vperm.slane %v4571, %v4578
        %v4580 = vrot.slane %v4543, 4
        %v4581 = vsel %vm492, %v4580, %v4531
        %v4582 = vrot.slane %v4531, 4
        %v4583 = vsel %vm492, %v4543, %v4582
        %v4585 = vunpack.c.l.s4 1934713408
        %v4586 = vunpack.c.0.s8 %v4585
        %v4587 = vperm.slane %v4581, %v4586
        %v4589 = vunpack.c.l.s4 1934713408
        %v4590 = vunpack.c.0.s8 %v4589
        %v4591 = vperm.slane %v4583, %v4590
        %v4592 = vrot.slane %v4563, 4
        %v4593 = vsel %vm492, %v4592, %v4551
        %v4594 = vrot.slane %v4551, 4
        %v4595 = vsel %vm492, %v4563, %v4594
        %v4597 = vunpack.c.l.s4 1934713408
        %v4598 = vunpack.c.0.s8 %v4597
        %v4599 = vperm.slane %v4593, %v4598
        %v4601 = vunpack.c.l.s4 1934713408
        %v4602 = vunpack.c.0.s8 %v4601
        %v4603 = vperm.slane %v4595, %v4602
        %v4604 = vrot.slane %v4567, 4
        %v4605 = vsel %vm492, %v4604, %v4555
        %v4606 = vrot.slane %v4555, 4
        %v4607 = vsel %vm492, %v4567, %v4606
        %v4609 = vunpack.c.l.s4 1934713408
        %v4610 = vunpack.c.0.s8 %v4609
        %v4611 = vperm.slane %v4605, %v4610
        %v4613 = vunpack.c.l.s4 1934713408
        %v4614 = vunpack.c.0.s8 %v4613
        %v4615 = vperm.slane %v4607, %v4614
        %v4616 = vrot.slane %v4599, 4
        %v4617 = vsel %vm492, %v4616, %v4575
        %v4618 = vrot.slane %v4575, 4
        %v4619 = vsel %vm492, %v4599, %v4618
        %v4620 = vrot.slane %v4603, 4
        %v4621 = vsel %vm492, %v4620, %v4579
        %v4622 = vrot.slane %v4579, 4
        %v4623 = vsel %vm492, %v4603, %v4622
        %v4624 = vrot.slane %v4611, 4
        %v4625 = vsel %vm492, %v4624, %v4587
        %v4626 = vrot.slane %v4587, 4
        %v4627 = vsel %vm492, %v4611, %v4626
        %v4628 = vrot.slane %v4615, 4
        %v4629 = vsel %vm492, %v4628, %v4591
        %v4630 = vrot.slane %v4591, 4
        %v4631 = vsel %vm492, %v4615, %v4630
        %v4632 = vrot.slane %v2915, 4
        %v4633 = vsel %vm492, %v4632, %v2795
        %v4634 = vrot.slane %v2795, 4
        %v4635 = vsel %vm492, %v2915, %v4634
        %v4637 = vunpack.c.l.s4 1983009808
        %v4638 = vunpack.c.0.s8 %v4637
        %v4639 = vperm.slane %v4633, %v4638
        %v4641 = vunpack.c.l.s4 1983009808
        %v4642 = vunpack.c.0.s8 %v4641
        %v4643 = vperm.slane %v4635, %v4642
        %v4644 = vrot.slane %v2963, 4
        %v4645 = vsel %vm492, %v4644, %v2867
        %v4646 = vrot.slane %v2867, 4
        %v4647 = vsel %vm492, %v2963, %v4646
        %v4649 = vunpack.c.l.s4 1983009808
        %v4650 = vunpack.c.0.s8 %v4649
        %v4651 = vperm.slane %v4645, %v4650
        %v4653 = vunpack.c.l.s4 1983009808
        %v4654 = vunpack.c.0.s8 %v4653
        %v4655 = vperm.slane %v4647, %v4654
        %v4656 = vrot.slane %v3107, 4
        %v4657 = vsel %vm492, %v4656, %v3011
        %v4658 = vrot.slane %v3011, 4
        %v4659 = vsel %vm492, %v3107, %v4658
        %v4661 = vunpack.c.l.s4 1983009808
        %v4662 = vunpack.c.0.s8 %v4661
        %v4663 = vperm.slane %v4657, %v4662
        %v4665 = vunpack.c.l.s4 1983009808
        %v4666 = vunpack.c.0.s8 %v4665
        %v4667 = vperm.slane %v4659, %v4666
        %v4668 = vrot.slane %v3155, 4
        %v4669 = vsel %vm492, %v4668, %v3059
        %v4670 = vrot.slane %v3059, 4
        %v4671 = vsel %vm492, %v3155, %v4670
        %v4673 = vunpack.c.l.s4 1983009808
        %v4674 = vunpack.c.0.s8 %v4673
        %v4675 = vperm.slane %v4669, %v4674
        %v4677 = vunpack.c.l.s4 1983009808
        %v4678 = vunpack.c.0.s8 %v4677
        %v4679 = vperm.slane %v4671, %v4678
        %v4680 = vrot.slane %v4651, 4
        %v4681 = vsel %vm492, %v4680, %v4639
        %v4682 = vrot.slane %v4639, 4
        %v4683 = vsel %vm492, %v4651, %v4682
        %v4685 = vunpack.c.l.s4 1934713408
        %v4686 = vunpack.c.0.s8 %v4685
        %v4687 = vperm.slane %v4681, %v4686
        %v4689 = vunpack.c.l.s4 1934713408
        %v4690 = vunpack.c.0.s8 %v4689
        %v4691 = vperm.slane %v4683, %v4690
        %v4692 = vrot.slane %v4655, 4
        %v4693 = vsel %vm492, %v4692, %v4643
        %v4694 = vrot.slane %v4643, 4
        %v4695 = vsel %vm492, %v4655, %v4694
        %v4697 = vunpack.c.l.s4 1934713408
        %v4698 = vunpack.c.0.s8 %v4697
        %v4699 = vperm.slane %v4693, %v4698
        %v4701 = vunpack.c.l.s4 1934713408
        %v4702 = vunpack.c.0.s8 %v4701
        %v4703 = vperm.slane %v4695, %v4702
        %v4704 = vrot.slane %v4675, 4
        %v4705 = vsel %vm492, %v4704, %v4663
        %v4706 = vrot.slane %v4663, 4
        %v4707 = vsel %vm492, %v4675, %v4706
        %v4709 = vunpack.c.l.s4 1934713408
        %v4710 = vunpack.c.0.s8 %v4709
        %v4711 = vperm.slane %v4705, %v4710
        %v4713 = vunpack.c.l.s4 1934713408
        %v4714 = vunpack.c.0.s8 %v4713
        %v4715 = vperm.slane %v4707, %v4714
        %v4716 = vrot.slane %v4679, 4
        %v4717 = vsel %vm492, %v4716, %v4667
        %v4718 = vrot.slane %v4667, 4
        %v4719 = vsel %vm492, %v4679, %v4718
        %v4721 = vunpack.c.l.s4 1934713408
        %v4722 = vunpack.c.0.s8 %v4721
        %v4723 = vperm.slane %v4717, %v4722
        %v4725 = vunpack.c.l.s4 1934713408
        %v4726 = vunpack.c.0.s8 %v4725
        %v4727 = vperm.slane %v4719, %v4726
        %v4728 = vrot.slane %v4711, 4
        %v4729 = vsel %vm492, %v4728, %v4687
        %v4730 = vrot.slane %v4687, 4
        %v4731 = vsel %vm492, %v4711, %v4730
        %v4732 = vrot.slane %v4715, 4
        %v4733 = vsel %vm492, %v4732, %v4691
        %v4734 = vrot.slane %v4691, 4
        %v4735 = vsel %vm492, %v4715, %v4734
        %v4736 = vrot.slane %v4723, 4
        %v4737 = vsel %vm492, %v4736, %v4699
        %v4738 = vrot.slane %v4699, 4
        %v4739 = vsel %vm492, %v4723, %v4738
        %v4740 = vrot.slane %v4727, 4
        %v4741 = vsel %vm492, %v4740, %v4703
        %v4742 = vrot.slane %v4703, 4
        %v4743 = vsel %vm492, %v4727, %v4742
        %v4744 = vrot.slane %v2917, 4
        %v4745 = vsel %vm492, %v4744, %v2819
        %v4746 = vrot.slane %v2819, 4
        %v4747 = vsel %vm492, %v2917, %v4746
        %v4749 = vunpack.c.l.s4 1983009808
        %v4750 = vunpack.c.0.s8 %v4749
        %v4751 = vperm.slane %v4745, %v4750
        %v4753 = vunpack.c.l.s4 1983009808
        %v4754 = vunpack.c.0.s8 %v4753
        %v4755 = vperm.slane %v4747, %v4754
        %v4756 = vrot.slane %v2965, 4
        %v4757 = vsel %vm492, %v4756, %v2869
        %v4758 = vrot.slane %v2869, 4
        %v4759 = vsel %vm492, %v2965, %v4758
        %v4761 = vunpack.c.l.s4 1983009808
        %v4762 = vunpack.c.0.s8 %v4761
        %v4763 = vperm.slane %v4757, %v4762
        %v4765 = vunpack.c.l.s4 1983009808
        %v4766 = vunpack.c.0.s8 %v4765
        %v4767 = vperm.slane %v4759, %v4766
        %v4768 = vrot.slane %v3109, 4
        %v4769 = vsel %vm492, %v4768, %v3013
        %v4770 = vrot.slane %v3013, 4
        %v4771 = vsel %vm492, %v3109, %v4770
        %v4773 = vunpack.c.l.s4 1983009808
        %v4774 = vunpack.c.0.s8 %v4773
        %v4775 = vperm.slane %v4769, %v4774
        %v4777 = vunpack.c.l.s4 1983009808
        %v4778 = vunpack.c.0.s8 %v4777
        %v4779 = vperm.slane %v4771, %v4778
        %v4780 = vrot.slane %v3157, 4
        %v4781 = vsel %vm492, %v4780, %v3061
        %v4782 = vrot.slane %v3061, 4
        %v4783 = vsel %vm492, %v3157, %v4782
        %v4785 = vunpack.c.l.s4 1983009808
        %v4786 = vunpack.c.0.s8 %v4785
        %v4787 = vperm.slane %v4781, %v4786
        %v4789 = vunpack.c.l.s4 1983009808
        %v4790 = vunpack.c.0.s8 %v4789
        %v4791 = vperm.slane %v4783, %v4790
        %v4792 = vrot.slane %v4763, 4
        %v4793 = vsel %vm492, %v4792, %v4751
        %v4794 = vrot.slane %v4751, 4
        %v4795 = vsel %vm492, %v4763, %v4794
        %v4797 = vunpack.c.l.s4 1934713408
        %v4798 = vunpack.c.0.s8 %v4797
        %v4799 = vperm.slane %v4793, %v4798
        %v4801 = vunpack.c.l.s4 1934713408
        %v4802 = vunpack.c.0.s8 %v4801
        %v4803 = vperm.slane %v4795, %v4802
        %v4804 = vrot.slane %v4767, 4
        %v4805 = vsel %vm492, %v4804, %v4755
        %v4806 = vrot.slane %v4755, 4
        %v4807 = vsel %vm492, %v4767, %v4806
        %v4809 = vunpack.c.l.s4 1934713408
        %v4810 = vunpack.c.0.s8 %v4809
        %v4811 = vperm.slane %v4805, %v4810
        %v4813 = vunpack.c.l.s4 1934713408
        %v4814 = vunpack.c.0.s8 %v4813
        %v4815 = vperm.slane %v4807, %v4814
        %v4816 = vrot.slane %v4787, 4
        %v4817 = vsel %vm492, %v4816, %v4775
        %v4818 = vrot.slane %v4775, 4
        %v4819 = vsel %vm492, %v4787, %v4818
        %v4821 = vunpack.c.l.s4 1934713408
        %v4822 = vunpack.c.0.s8 %v4821
        %v4823 = vperm.slane %v4817, %v4822
        %v4825 = vunpack.c.l.s4 1934713408
        %v4826 = vunpack.c.0.s8 %v4825
        %v4827 = vperm.slane %v4819, %v4826
        %v4828 = vrot.slane %v4791, 4
        %v4829 = vsel %vm492, %v4828, %v4779
        %v4830 = vrot.slane %v4779, 4
        %v4831 = vsel %vm492, %v4791, %v4830
        %v4833 = vunpack.c.l.s4 1934713408
        %v4834 = vunpack.c.0.s8 %v4833
        %v4835 = vperm.slane %v4829, %v4834
        %v4837 = vunpack.c.l.s4 1934713408
        %v4838 = vunpack.c.0.s8 %v4837
        %v4839 = vperm.slane %v4831, %v4838
        %v4840 = vrot.slane %v4823, 4
        %v4841 = vsel %vm492, %v4840, %v4799
        %v4842 = vrot.slane %v4799, 4
        %v4843 = vsel %vm492, %v4823, %v4842
        %v4844 = vrot.slane %v4827, 4
        %v4845 = vsel %vm492, %v4844, %v4803
        %v4846 = vrot.slane %v4803, 4
        %v4847 = vsel %vm492, %v4827, %v4846
        %v4848 = vrot.slane %v4835, 4
        %v4849 = vsel %vm492, %v4848, %v4811
        %v4850 = vrot.slane %v4811, 4
        %v4851 = vsel %vm492, %v4835, %v4850
        %v4852 = vrot.slane %v4839, 4
        %v4853 = vsel %vm492, %v4852, %v4815
        %v4854 = vrot.slane %v4815, 4
        %v4855 = vsel %vm492, %v4839, %v4854
        %v4856 = vrot.slane %v2919, 4
        %v4857 = vsel %vm492, %v4856, %v2822
        %v4858 = vrot.slane %v2822, 4
        %v4859 = vsel %vm492, %v2919, %v4858
        %v4861 = vunpack.c.l.s4 1983009808
        %v4862 = vunpack.c.0.s8 %v4861
        %v4863 = vperm.slane %v4857, %v4862
        %v4865 = vunpack.c.l.s4 1983009808
        %v4866 = vunpack.c.0.s8 %v4865
        %v4867 = vperm.slane %v4859, %v4866
        %v4868 = vrot.slane %v2967, 4
        %v4869 = vsel %vm492, %v4868, %v2871
        %v4870 = vrot.slane %v2871, 4
        %v4871 = vsel %vm492, %v2967, %v4870
        %v4873 = vunpack.c.l.s4 1983009808
        %v4874 = vunpack.c.0.s8 %v4873
        %v4875 = vperm.slane %v4869, %v4874
        %v4877 = vunpack.c.l.s4 1983009808
        %v4878 = vunpack.c.0.s8 %v4877
        %v4879 = vperm.slane %v4871, %v4878
        %v4880 = vrot.slane %v3111, 4
        %v4881 = vsel %vm492, %v4880, %v3015
        %v4882 = vrot.slane %v3015, 4
        %v4883 = vsel %vm492, %v3111, %v4882
        %v4885 = vunpack.c.l.s4 1983009808
        %v4886 = vunpack.c.0.s8 %v4885
        %v4887 = vperm.slane %v4881, %v4886
        %v4889 = vunpack.c.l.s4 1983009808
        %v4890 = vunpack.c.0.s8 %v4889
        %v4891 = vperm.slane %v4883, %v4890
        %v4892 = vrot.slane %v3159, 4
        %v4893 = vsel %vm492, %v4892, %v3063
        %v4894 = vrot.slane %v3063, 4
        %v4895 = vsel %vm492, %v3159, %v4894
        %v4897 = vunpack.c.l.s4 1983009808
        %v4898 = vunpack.c.0.s8 %v4897
        %v4899 = vperm.slane %v4893, %v4898
        %v4901 = vunpack.c.l.s4 1983009808
        %v4902 = vunpack.c.0.s8 %v4901
        %v4903 = vperm.slane %v4895, %v4902
        %v4904 = vrot.slane %v4875, 4
        %v4905 = vsel %vm492, %v4904, %v4863
        %v4906 = vrot.slane %v4863, 4
        %v4907 = vsel %vm492, %v4875, %v4906
        %v4909 = vunpack.c.l.s4 1934713408
        %v4910 = vunpack.c.0.s8 %v4909
        %v4911 = vperm.slane %v4905, %v4910
        %v4913 = vunpack.c.l.s4 1934713408
        %v4914 = vunpack.c.0.s8 %v4913
        %v4915 = vperm.slane %v4907, %v4914
        %v4916 = vrot.slane %v4879, 4
        %v4917 = vsel %vm492, %v4916, %v4867
        %v4918 = vrot.slane %v4867, 4
        %v4919 = vsel %vm492, %v4879, %v4918
        %v4921 = vunpack.c.l.s4 1934713408
        %v4922 = vunpack.c.0.s8 %v4921
        %v4923 = vperm.slane %v4917, %v4922
        %v4925 = vunpack.c.l.s4 1934713408
        %v4926 = vunpack.c.0.s8 %v4925
        %v4927 = vperm.slane %v4919, %v4926
        %v4928 = vrot.slane %v4899, 4
        %v4929 = vsel %vm492, %v4928, %v4887
        %v4930 = vrot.slane %v4887, 4
        %v4931 = vsel %vm492, %v4899, %v4930
        %v4933 = vunpack.c.l.s4 1934713408
        %v4934 = vunpack.c.0.s8 %v4933
        %v4935 = vperm.slane %v4929, %v4934
        %v4937 = vunpack.c.l.s4 1934713408
        %v4938 = vunpack.c.0.s8 %v4937
        %v4939 = vperm.slane %v4931, %v4938
        %v4940 = vrot.slane %v4903, 4
        %v4941 = vsel %vm492, %v4940, %v4891
        %v4942 = vrot.slane %v4891, 4
        %v4943 = vsel %vm492, %v4903, %v4942
        %v4945 = vunpack.c.l.s4 1934713408
        %v4946 = vunpack.c.0.s8 %v4945
        %v4947 = vperm.slane %v4941, %v4946
        %v4949 = vunpack.c.l.s4 1934713408
        %v4950 = vunpack.c.0.s8 %v4949
        %v4951 = vperm.slane %v4943, %v4950
        %v4952 = vrot.slane %v4935, 4
        %v4953 = vsel %vm492, %v4952, %v4911
        %v4954 = vrot.slane %v4911, 4
        %v4955 = vsel %vm492, %v4935, %v4954
        %v4956 = vrot.slane %v4939, 4
        %v4957 = vsel %vm492, %v4956, %v4915
        %v4958 = vrot.slane %v4915, 4
        %v4959 = vsel %vm492, %v4939, %v4958
        %v4960 = vrot.slane %v4947, 4
        %v4961 = vsel %vm492, %v4960, %v4923
        %v4962 = vrot.slane %v4923, 4
        %v4963 = vsel %vm492, %v4947, %v4962
        %v4964 = vrot.slane %v4951, 4
        %v4965 = vsel %vm492, %v4964, %v4927
        %v4966 = vrot.slane %v4927, 4
        %v4967 = vsel %vm492, %v4951, %v4966
        %v4968 = vsel %vm2342, %v3273, -inf
        %4969 = vmax.xlane.f32.xlu0 %v4968
        %v4970 = vpop.xlane.xlu0 %4969
        %v4971 = vsel %vm2342, %v3275, -inf
        %4972 = vmax.xlane.f32.xlu0 %v4971
        %v4973 = vpop.xlane.xlu0 %4972
        %v4974 = vsel %vm2342, %v3277, -inf
        %4975 = vmax.xlane.f32.xlu0 %v4974
        %v4976 = vpop.xlane.xlu0 %4975
        %v4977 = vsel %vm2342, %v3279, -inf
        %4978 = vmax.xlane.f32.xlu0 %v4977
        %v4979 = vpop.xlane.xlu0 %4978
        %v4980 = vsel %vm2342, %v3281, -inf
        %4981 = vmax.xlane.f32.xlu0 %v4980
        %v4982 = vpop.xlane.xlu0 %4981
        %v4983 = vsel %vm2342, %v3283, -inf
        %4984 = vmax.xlane.f32.xlu0 %v4983
        %v4985 = vpop.xlane.xlu0 %4984
        %v4986 = vsel %vm2342, %v3285, -inf
        %4987 = vmax.xlane.f32.xlu0 %v4986
        %v4988 = vpop.xlane.xlu0 %4987
        %v4989 = vsel %vm2342, %v3287, -inf
        %4990 = vmax.xlane.f32.xlu0 %v4989
        %v4991 = vpop.xlane.xlu0 %4990
        %v4992 = vsel %vm2342, %v3385, -inf
        %4993 = vmax.xlane.f32.xlu0 %v4992
        %v4994 = vpop.xlane.xlu0 %4993
        %v4995 = vsel %vm2342, %v3387, -inf
        %4996 = vmax.xlane.f32.xlu0 %v4995
        %v4997 = vpop.xlane.xlu0 %4996
        %v4998 = vsel %vm2342, %v3389, -inf
        %4999 = vmax.xlane.f32.xlu0 %v4998
        %v5000 = vpop.xlane.xlu0 %4999
        %v5001 = vsel %vm2342, %v3391, -inf
        %5002 = vmax.xlane.f32.xlu0 %v5001
        %v5003 = vpop.xlane.xlu0 %5002
        %v5004 = vsel %vm2342, %v3393, -inf
        %5005 = vmax.xlane.f32.xlu0 %v5004
        %v5006 = vpop.xlane.xlu0 %5005
        %v5007 = vsel %vm2342, %v3395, -inf
        %5008 = vmax.xlane.f32.xlu0 %v5007
        %v5009 = vpop.xlane.xlu0 %5008
        %v5010 = vsel %vm2342, %v3397, -inf
        %5011 = vmax.xlane.f32.xlu0 %v5010
        %v5012 = vpop.xlane.xlu0 %5011
        %v5013 = vsel %vm2342, %v3399, -inf
        %5014 = vmax.xlane.f32.xlu0 %v5013
        %v5015 = vpop.xlane.xlu0 %5014
        %v5016 = vsel %vm2342, %v3497, -inf
        %5017 = vmax.xlane.f32.xlu0 %v5016
        %v5018 = vpop.xlane.xlu0 %5017
        %v5019 = vsel %vm2342, %v3499, -inf
        %5020 = vmax.xlane.f32.xlu0 %v5019
        %v5021 = vpop.xlane.xlu0 %5020
        %v5022 = vsel %vm2342, %v3501, -inf
        %5023 = vmax.xlane.f32.xlu0 %v5022
        %v5024 = vpop.xlane.xlu0 %5023
        %v5025 = vsel %vm2342, %v3503, -inf
        %5026 = vmax.xlane.f32.xlu0 %v5025
        %v5027 = vpop.xlane.xlu0 %5026
        %v5028 = vsel %vm2342, %v3505, -inf
        %5029 = vmax.xlane.f32.xlu0 %v5028
        %v5030 = vpop.xlane.xlu0 %5029
        %v5031 = vsel %vm2342, %v3507, -inf
        %5032 = vmax.xlane.f32.xlu0 %v5031
        %v5033 = vpop.xlane.xlu0 %5032
        %v5034 = vsel %vm2342, %v3509, -inf
        %5035 = vmax.xlane.f32.xlu0 %v5034
        %v5036 = vpop.xlane.xlu0 %5035
        %v5037 = vsel %vm2342, %v3511, -inf
        %5038 = vmax.xlane.f32.xlu0 %v5037
        %v5039 = vpop.xlane.xlu0 %5038
        %v5040 = vsel %vm2342, %v3609, -inf
        %5041 = vmax.xlane.f32.xlu0 %v5040
        %v5042 = vpop.xlane.xlu0 %5041
        %v5043 = vsel %vm2342, %v3611, -inf
        %5044 = vmax.xlane.f32.xlu0 %v5043
        %v5045 = vpop.xlane.xlu0 %5044
        %v5046 = vsel %vm2342, %v3613, -inf
        %5047 = vmax.xlane.f32.xlu0 %v5046
        %v5048 = vpop.xlane.xlu0 %5047
        %v5049 = vsel %vm2342, %v3615, -inf
        %5050 = vmax.xlane.f32.xlu0 %v5049
        %v5051 = vpop.xlane.xlu0 %5050
        %v5052 = vsel %vm2342, %v3617, -inf
        %5053 = vmax.xlane.f32.xlu0 %v5052
        %v5054 = vpop.xlane.xlu0 %5053
        %v5055 = vsel %vm2342, %v3619, -inf
        %5056 = vmax.xlane.f32.xlu0 %v5055
        %v5057 = vpop.xlane.xlu0 %5056
        %v5058 = vsel %vm2342, %v3621, -inf
        %5059 = vmax.xlane.f32.xlu0 %v5058
        %v5060 = vpop.xlane.xlu0 %5059
        %v5061 = vsel %vm2342, %v3623, -inf
        %5062 = vmax.xlane.f32.xlu0 %v5061
        %v5063 = vpop.xlane.xlu0 %5062
        %v5064 = vsel %vm2342, %v3721, -inf
        %5065 = vmax.xlane.f32.xlu0 %v5064
        %v5066 = vpop.xlane.xlu0 %5065
        %v5067 = vsel %vm2342, %v3723, -inf
        %5068 = vmax.xlane.f32.xlu0 %v5067
        %v5069 = vpop.xlane.xlu0 %5068
        %v5070 = vsel %vm2342, %v3725, -inf
        %5071 = vmax.xlane.f32.xlu0 %v5070
        %v5072 = vpop.xlane.xlu0 %5071
        %v5073 = vsel %vm2342, %v3727, -inf
        %5074 = vmax.xlane.f32.xlu0 %v5073
        %v5075 = vpop.xlane.xlu0 %5074
        %v5076 = vsel %vm2342, %v3729, -inf
        %5077 = vmax.xlane.f32.xlu0 %v5076
        %v5078 = vpop.xlane.xlu0 %5077
        %v5079 = vsel %vm2342, %v3731, -inf
        %5080 = vmax.xlane.f32.xlu0 %v5079
        %v5081 = vpop.xlane.xlu0 %5080
        %v5082 = vsel %vm2342, %v3733, -inf
        %5083 = vmax.xlane.f32.xlu0 %v5082
        %v5084 = vpop.xlane.xlu0 %5083
        %v5085 = vsel %vm2342, %v3735, -inf
        %5086 = vmax.xlane.f32.xlu0 %v5085
        %v5087 = vpop.xlane.xlu0 %5086
        %v5088 = vsel %vm2342, %v3833, -inf
        %5089 = vmax.xlane.f32.xlu0 %v5088
        %v5090 = vpop.xlane.xlu0 %5089
        %v5091 = vsel %vm2342, %v3835, -inf
        %5092 = vmax.xlane.f32.xlu0 %v5091
        %v5093 = vpop.xlane.xlu0 %5092
        %v5094 = vsel %vm2342, %v3837, -inf
        %5095 = vmax.xlane.f32.xlu0 %v5094
        %v5096 = vpop.xlane.xlu0 %5095
        %v5097 = vsel %vm2342, %v3839, -inf
        %5098 = vmax.xlane.f32.xlu0 %v5097
        %v5099 = vpop.xlane.xlu0 %5098
        %v5100 = vsel %vm2342, %v3841, -inf
        %5101 = vmax.xlane.f32.xlu0 %v5100
        %v5102 = vpop.xlane.xlu0 %5101
        %v5103 = vsel %vm2342, %v3843, -inf
        %5104 = vmax.xlane.f32.xlu0 %v5103
        %v5105 = vpop.xlane.xlu0 %5104
        %v5106 = vsel %vm2342, %v3845, -inf
        %5107 = vmax.xlane.f32.xlu0 %v5106
        %v5108 = vpop.xlane.xlu0 %5107
        %v5109 = vsel %vm2342, %v3847, -inf
        %5110 = vmax.xlane.f32.xlu0 %v5109
        %v5111 = vpop.xlane.xlu0 %5110
        %v5112 = vsel %vm2342, %v3945, -inf
        %5113 = vmax.xlane.f32.xlu0 %v5112
        %v5114 = vpop.xlane.xlu0 %5113
        %v5115 = vsel %vm2342, %v3947, -inf
        %5116 = vmax.xlane.f32.xlu0 %v5115
        %v5117 = vpop.xlane.xlu0 %5116
        %v5118 = vsel %vm2342, %v3949, -inf
        %5119 = vmax.xlane.f32.xlu0 %v5118
        %v5120 = vpop.xlane.xlu0 %5119
        %v5121 = vsel %vm2342, %v3951, -inf
        %5122 = vmax.xlane.f32.xlu0 %v5121
        %v5123 = vpop.xlane.xlu0 %5122
        %v5124 = vsel %vm2342, %v3953, -inf
        %5125 = vmax.xlane.f32.xlu0 %v5124
        %v5126 = vpop.xlane.xlu0 %5125
        %v5127 = vsel %vm2342, %v3955, -inf
        %5128 = vmax.xlane.f32.xlu0 %v5127
        %v5129 = vpop.xlane.xlu0 %5128
        %v5130 = vsel %vm2342, %v3957, -inf
        %5131 = vmax.xlane.f32.xlu0 %v5130
        %v5132 = vpop.xlane.xlu0 %5131
        %v5133 = vsel %vm2342, %v3959, -inf
        %5134 = vmax.xlane.f32.xlu0 %v5133
        %v5135 = vpop.xlane.xlu0 %5134
        %v5136 = vsel %vm2342, %v4057, -inf
        %5137 = vmax.xlane.f32.xlu0 %v5136
        %v5138 = vpop.xlane.xlu0 %5137
        %v5139 = vsel %vm2342, %v4059, -inf
        %5140 = vmax.xlane.f32.xlu0 %v5139
        %v5141 = vpop.xlane.xlu0 %5140
        %v5142 = vsel %vm2342, %v4061, -inf
        %5143 = vmax.xlane.f32.xlu0 %v5142
        %v5144 = vpop.xlane.xlu0 %5143
        %v5145 = vsel %vm2342, %v4063, -inf
        %5146 = vmax.xlane.f32.xlu0 %v5145
        %v5147 = vpop.xlane.xlu0 %5146
        %v5148 = vsel %vm2342, %v4065, -inf
        %5149 = vmax.xlane.f32.xlu0 %v5148
        %v5150 = vpop.xlane.xlu0 %5149
        %v5151 = vsel %vm2342, %v4067, -inf
        %5152 = vmax.xlane.f32.xlu0 %v5151
        %v5153 = vpop.xlane.xlu0 %5152
        %v5154 = vsel %vm2342, %v4069, -inf
        %5155 = vmax.xlane.f32.xlu0 %v5154
        %v5156 = vpop.xlane.xlu0 %5155
        %v5157 = vsel %vm2342, %v4071, -inf
        %5158 = vmax.xlane.f32.xlu0 %v5157
        %v5159 = vpop.xlane.xlu0 %5158
        %v5160 = vsel %vm2342, %v4169, -inf
        %5161 = vmax.xlane.f32.xlu0 %v5160
        %v5162 = vpop.xlane.xlu0 %5161
        %v5163 = vsel %vm2342, %v4171, -inf
        %5164 = vmax.xlane.f32.xlu0 %v5163
        %v5165 = vpop.xlane.xlu0 %5164
        %v5166 = vsel %vm2342, %v4173, -inf
        %5167 = vmax.xlane.f32.xlu0 %v5166
        %v5168 = vpop.xlane.xlu0 %5167
        %v5169 = vsel %vm2342, %v4175, -inf
        %5170 = vmax.xlane.f32.xlu0 %v5169
        %v5171 = vpop.xlane.xlu0 %5170
        %v5172 = vsel %vm2342, %v4177, -inf
        %5173 = vmax.xlane.f32.xlu0 %v5172
        %v5174 = vpop.xlane.xlu0 %5173
        %v5175 = vsel %vm2342, %v4179, -inf
        %5176 = vmax.xlane.f32.xlu0 %v5175
        %v5177 = vpop.xlane.xlu0 %5176
        %v5178 = vsel %vm2342, %v4181, -inf
        %5179 = vmax.xlane.f32.xlu0 %v5178
        %v5180 = vpop.xlane.xlu0 %5179
        %v5181 = vsel %vm2342, %v4183, -inf
        %5182 = vmax.xlane.f32.xlu0 %v5181
        %v5183 = vpop.xlane.xlu0 %5182
        %v5184 = vsel %vm2342, %v4281, -inf
        %5185 = vmax.xlane.f32.xlu0 %v5184
        %v5186 = vpop.xlane.xlu0 %5185
        %v5187 = vsel %vm2342, %v4283, -inf
        %5188 = vmax.xlane.f32.xlu0 %v5187
        %v5189 = vpop.xlane.xlu0 %5188
        %v5190 = vsel %vm2342, %v4285, -inf
        %5191 = vmax.xlane.f32.xlu0 %v5190
        %v5192 = vpop.xlane.xlu0 %5191
        %v5193 = vsel %vm2342, %v4287, -inf
        %5194 = vmax.xlane.f32.xlu0 %v5193
        %v5195 = vpop.xlane.xlu0 %5194
        %v5196 = vsel %vm2342, %v4289, -inf
        %5197 = vmax.xlane.f32.xlu0 %v5196
        %v5198 = vpop.xlane.xlu0 %5197
        %v5199 = vsel %vm2342, %v4291, -inf
        %5200 = vmax.xlane.f32.xlu0 %v5199
        %v5201 = vpop.xlane.xlu0 %5200
        %v5202 = vsel %vm2342, %v4293, -inf
        %5203 = vmax.xlane.f32.xlu0 %v5202
        %v5204 = vpop.xlane.xlu0 %5203
        %v5205 = vsel %vm2342, %v4295, -inf
        %5206 = vmax.xlane.f32.xlu0 %v5205
        %v5207 = vpop.xlane.xlu0 %5206
        %v5208 = vsel %vm2342, %v4393, -inf
        %5209 = vmax.xlane.f32.xlu0 %v5208
        %v5210 = vpop.xlane.xlu0 %5209
        %v5211 = vsel %vm2342, %v4395, -inf
        %5212 = vmax.xlane.f32.xlu0 %v5211
        %v5213 = vpop.xlane.xlu0 %5212
        %v5214 = vsel %vm2342, %v4397, -inf
        %5215 = vmax.xlane.f32.xlu0 %v5214
        %v5216 = vpop.xlane.xlu0 %5215
        %v5217 = vsel %vm2342, %v4399, -inf
        %5218 = vmax.xlane.f32.xlu0 %v5217
        %v5219 = vpop.xlane.xlu0 %5218
        %v5220 = vsel %vm2342, %v4401, -inf
        %5221 = vmax.xlane.f32.xlu0 %v5220
        %v5222 = vpop.xlane.xlu0 %5221
        %v5223 = vsel %vm2342, %v4403, -inf
        %5224 = vmax.xlane.f32.xlu0 %v5223
        %v5225 = vpop.xlane.xlu0 %5224
        %v5226 = vsel %vm2342, %v4405, -inf
        %5227 = vmax.xlane.f32.xlu0 %v5226
        %v5228 = vpop.xlane.xlu0 %5227
        %v5229 = vsel %vm2342, %v4407, -inf
        %5230 = vmax.xlane.f32.xlu0 %v5229
        %v5231 = vpop.xlane.xlu0 %5230
        %v5232 = vsel %vm2342, %v4505, -inf
        %5233 = vmax.xlane.f32.xlu0 %v5232
        %v5234 = vpop.xlane.xlu0 %5233
        %v5235 = vsel %vm2342, %v4507, -inf
        %5236 = vmax.xlane.f32.xlu0 %v5235
        %v5237 = vpop.xlane.xlu0 %5236
        %v5238 = vsel %vm2342, %v4509, -inf
        %5239 = vmax.xlane.f32.xlu0 %v5238
        %v5240 = vpop.xlane.xlu0 %5239
        %v5241 = vsel %vm2342, %v4511, -inf
        %5242 = vmax.xlane.f32.xlu0 %v5241
        %v5243 = vpop.xlane.xlu0 %5242
        %v5244 = vsel %vm2342, %v4513, -inf
        %5245 = vmax.xlane.f32.xlu0 %v5244
        %v5246 = vpop.xlane.xlu0 %5245
        %v5247 = vsel %vm2342, %v4515, -inf
        %5248 = vmax.xlane.f32.xlu0 %v5247
        %v5249 = vpop.xlane.xlu0 %5248
        %v5250 = vsel %vm2342, %v4517, -inf
        %5251 = vmax.xlane.f32.xlu0 %v5250
        %v5252 = vpop.xlane.xlu0 %5251
        %v5253 = vsel %vm2342, %v4519, -inf
        %5254 = vmax.xlane.f32.xlu0 %v5253
        %v5255 = vpop.xlane.xlu0 %5254
        %v5256 = vsel %vm2342, %v4617, -inf
        %5257 = vmax.xlane.f32.xlu0 %v5256
        %v5258 = vpop.xlane.xlu0 %5257
        %v5259 = vsel %vm2342, %v4619, -inf
        %5260 = vmax.xlane.f32.xlu0 %v5259
        %v5261 = vpop.xlane.xlu0 %5260
        %v5262 = vsel %vm2342, %v4621, -inf
        %5263 = vmax.xlane.f32.xlu0 %v5262
        %v5264 = vpop.xlane.xlu0 %5263
        %v5265 = vsel %vm2342, %v4623, -inf
        %5266 = vmax.xlane.f32.xlu0 %v5265
        %v5267 = vpop.xlane.xlu0 %5266
        %v5268 = vsel %vm2342, %v4625, -inf
        %5269 = vmax.xlane.f32.xlu0 %v5268
        %v5270 = vpop.xlane.xlu0 %5269
        %v5271 = vsel %vm2342, %v4627, -inf
        %5272 = vmax.xlane.f32.xlu0 %v5271
        %v5273 = vpop.xlane.xlu0 %5272
        %v5274 = vsel %vm2342, %v4629, -inf
        %5275 = vmax.xlane.f32.xlu0 %v5274
        %v5276 = vpop.xlane.xlu0 %5275
        %v5277 = vsel %vm2342, %v4631, -inf
        %5278 = vmax.xlane.f32.xlu0 %v5277
        %v5279 = vpop.xlane.xlu0 %5278
        %v5280 = vsel %vm2342, %v4729, -inf
        %5281 = vmax.xlane.f32.xlu0 %v5280
        %v5282 = vpop.xlane.xlu0 %5281
        %v5283 = vsel %vm2342, %v4731, -inf
        %5284 = vmax.xlane.f32.xlu0 %v5283
        %v5285 = vpop.xlane.xlu0 %5284
        %v5286 = vsel %vm2342, %v4733, -inf
        %5287 = vmax.xlane.f32.xlu0 %v5286
        %v5288 = vpop.xlane.xlu0 %5287
        %v5289 = vsel %vm2342, %v4735, -inf
        %5290 = vmax.xlane.f32.xlu0 %v5289
        %v5291 = vpop.xlane.xlu0 %5290
        %v5292 = vsel %vm2342, %v4737, -inf
        %5293 = vmax.xlane.f32.xlu0 %v5292
        %v5294 = vpop.xlane.xlu0 %5293
        %v5295 = vsel %vm2342, %v4739, -inf
        %5296 = vmax.xlane.f32.xlu0 %v5295
        %v5297 = vpop.xlane.xlu0 %5296
        %v5298 = vsel %vm2342, %v4741, -inf
        %5299 = vmax.xlane.f32.xlu0 %v5298
        %v5300 = vpop.xlane.xlu0 %5299
        %v5301 = vsel %vm2342, %v4743, -inf
        %5302 = vmax.xlane.f32.xlu0 %v5301
        %v5303 = vpop.xlane.xlu0 %5302
        %v5304 = vsel %vm2342, %v4841, -inf
        %5305 = vmax.xlane.f32.xlu0 %v5304
        %v5306 = vpop.xlane.xlu0 %5305
        %v5307 = vsel %vm2342, %v4843, -inf
        %5308 = vmax.xlane.f32.xlu0 %v5307
        %v5309 = vpop.xlane.xlu0 %5308
        %v5310 = vsel %vm2342, %v4845, -inf
        %5311 = vmax.xlane.f32.xlu0 %v5310
        %v5312 = vpop.xlane.xlu0 %5311
        %v5313 = vsel %vm2342, %v4847, -inf
        %5314 = vmax.xlane.f32.xlu0 %v5313
        %v5315 = vpop.xlane.xlu0 %5314
        %v5316 = vsel %vm2342, %v4849, -inf
        %5317 = vmax.xlane.f32.xlu0 %v5316
        %v5318 = vpop.xlane.xlu0 %5317
        %v5319 = vsel %vm2342, %v4851, -inf
        %5320 = vmax.xlane.f32.xlu0 %v5319
        %v5321 = vpop.xlane.xlu0 %5320
        %v5322 = vsel %vm2342, %v4853, -inf
        %5323 = vmax.xlane.f32.xlu0 %v5322
        %v5324 = vpop.xlane.xlu0 %5323
        %v5325 = vsel %vm2342, %v4855, -inf
        %5326 = vmax.xlane.f32.xlu0 %v5325
        %v5327 = vpop.xlane.xlu0 %5326
        %v5328 = vsel %vm2342, %v4953, -inf
        %5329 = vmax.xlane.f32.xlu0 %v5328
        %v5330 = vpop.xlane.xlu0 %5329
        %v5331 = vsel %vm2342, %v4955, -inf
        %5332 = vmax.xlane.f32.xlu0 %v5331
        %v5333 = vpop.xlane.xlu0 %5332
        %v5334 = vsel %vm2342, %v4957, -inf
        %5335 = vmax.xlane.f32.xlu0 %v5334
        %v5336 = vpop.xlane.xlu0 %5335
        %v5337 = vsel %vm2342, %v4959, -inf
        %5338 = vmax.xlane.f32.xlu0 %v5337
        %v5339 = vpop.xlane.xlu0 %5338
        %v5340 = vsel %vm2342, %v4961, -inf
        %5341 = vmax.xlane.f32.xlu0 %v5340
        %v5342 = vpop.xlane.xlu0 %5341
        %v5343 = vsel %vm2342, %v4963, -inf
        %5344 = vmax.xlane.f32.xlu0 %v5343
        %v5345 = vpop.xlane.xlu0 %5344
        %v5346 = vsel %vm2342, %v4965, -inf
        %5347 = vmax.xlane.f32.xlu0 %v5346
        %v5348 = vpop.xlane.xlu0 %5347
        %v5349 = vsel %vm2342, %v4967, -inf
        %5350 = vmax.xlane.f32.xlu0 %v5349
        %v5351 = vpop.xlane.xlu0 %5350
        %v5352 = vld [vmem:[#allocation8] sm:$0xff]
        %v5481 = vlaneseq
        %v5482 = vand.u32 %v5481, 127
        %v5483 = vperm.slane %v4970, %v5482
        %v5484 = vperm.slane %v4973, %v5482
        %v5485 = vperm.slane %v4976, %v5482
        %v5486 = vperm.slane %v4979, %v5482
        %v5487 = vperm.slane %v4982, %v5482
        %v5488 = vperm.slane %v4985, %v5482
        %v5489 = vperm.slane %v4988, %v5482
        %v5490 = vperm.slane %v4991, %v5482
        %v5491 = vperm.slane %v4994, %v5482
        %v5492 = vperm.slane %v4997, %v5482
        %v5493 = vperm.slane %v5000, %v5482
        %v5494 = vperm.slane %v5003, %v5482
        %v5495 = vperm.slane %v5006, %v5482
        %v5496 = vperm.slane %v5009, %v5482
        %v5497 = vperm.slane %v5012, %v5482
        %v5498 = vperm.slane %v5015, %v5482
        %v5499 = vperm.slane %v5018, %v5482
        %v5500 = vperm.slane %v5021, %v5482
        %v5501 = vperm.slane %v5024, %v5482
        %v5502 = vperm.slane %v5027, %v5482
        %v5503 = vperm.slane %v5030, %v5482
        %v5504 = vperm.slane %v5033, %v5482
        %v5505 = vperm.slane %v5036, %v5482
        %v5506 = vperm.slane %v5039, %v5482
        %v5507 = vperm.slane %v5042, %v5482
        %v5508 = vperm.slane %v5045, %v5482
        %v5509 = vperm.slane %v5048, %v5482
        %v5510 = vperm.slane %v5051, %v5482
        %v5511 = vperm.slane %v5054, %v5482
        %v5512 = vperm.slane %v5057, %v5482
        %v5513 = vperm.slane %v5060, %v5482
        %v5514 = vperm.slane %v5063, %v5482
        %v5515 = vperm.slane %v5066, %v5482
        %v5516 = vperm.slane %v5069, %v5482
        %v5517 = vperm.slane %v5072, %v5482
        %v5518 = vperm.slane %v5075, %v5482
        %v5519 = vperm.slane %v5078, %v5482
        %v5520 = vperm.slane %v5081, %v5482
        %v5521 = vperm.slane %v5084, %v5482
        %v5522 = vperm.slane %v5087, %v5482
        %v5523 = vperm.slane %v5090, %v5482
        %v5524 = vperm.slane %v5093, %v5482
        %v5525 = vperm.slane %v5096, %v5482
        %v5526 = vperm.slane %v5099, %v5482
        %v5527 = vperm.slane %v5102, %v5482
        %v5528 = vperm.slane %v5105, %v5482
        %v5529 = vperm.slane %v5108, %v5482
        %v5530 = vperm.slane %v5111, %v5482
        %v5531 = vperm.slane %v5114, %v5482
        %v5532 = vperm.slane %v5117, %v5482
        %v5533 = vperm.slane %v5120, %v5482
        %v5534 = vperm.slane %v5123, %v5482
        %v5535 = vperm.slane %v5126, %v5482
        %v5536 = vperm.slane %v5129, %v5482
        %v5537 = vperm.slane %v5132, %v5482
        %v5538 = vperm.slane %v5135, %v5482
        %v5539 = vperm.slane %v5138, %v5482
        %v5540 = vperm.slane %v5141, %v5482
        %v5541 = vperm.slane %v5144, %v5482
        %v5542 = vperm.slane %v5147, %v5482
        %v5543 = vperm.slane %v5150, %v5482
        %v5544 = vperm.slane %v5153, %v5482
        %v5545 = vperm.slane %v5156, %v5482
        %v5546 = vperm.slane %v5159, %v5482
        %v5547 = vperm.slane %v5162, %v5482
        %v5548 = vperm.slane %v5165, %v5482
        %v5549 = vperm.slane %v5168, %v5482
        %v5550 = vperm.slane %v5171, %v5482
        %v5551 = vperm.slane %v5174, %v5482
        %v5552 = vperm.slane %v5177, %v5482
        %v5553 = vperm.slane %v5180, %v5482
        %v5554 = vperm.slane %v5183, %v5482
        %v5555 = vperm.slane %v5186, %v5482
        %v5556 = vperm.slane %v5189, %v5482
        %v5557 = vperm.slane %v5192, %v5482
        %v5558 = vperm.slane %v5195, %v5482
        %v5559 = vperm.slane %v5198, %v5482
        %v5560 = vperm.slane %v5201, %v5482
        %v5561 = vperm.slane %v5204, %v5482
        %v5562 = vperm.slane %v5207, %v5482
        %v5563 = vperm.slane %v5210, %v5482
        %v5564 = vperm.slane %v5213, %v5482
        %v5565 = vperm.slane %v5216, %v5482
        %v5566 = vperm.slane %v5219, %v5482
        %v5567 = vperm.slane %v5222, %v5482
        %v5568 = vperm.slane %v5225, %v5482
        %v5569 = vperm.slane %v5228, %v5482
        %v5570 = vperm.slane %v5231, %v5482
        %v5571 = vperm.slane %v5234, %v5482
        %v5572 = vperm.slane %v5237, %v5482
        %v5573 = vperm.slane %v5240, %v5482
        %v5574 = vperm.slane %v5243, %v5482
        %v5575 = vperm.slane %v5246, %v5482
        %v5576 = vperm.slane %v5249, %v5482
        %v5577 = vperm.slane %v5252, %v5482
        %v5578 = vperm.slane %v5255, %v5482
        %v5579 = vperm.slane %v5258, %v5482
        %v5580 = vperm.slane %v5261, %v5482
        %v5581 = vperm.slane %v5264, %v5482
        %v5582 = vperm.slane %v5267, %v5482
        %v5583 = vperm.slane %v5270, %v5482
        %v5584 = vperm.slane %v5273, %v5482
        %v5585 = vperm.slane %v5276, %v5482
        %v5586 = vperm.slane %v5279, %v5482
        %v5587 = vperm.slane %v5282, %v5482
        %v5588 = vperm.slane %v5285, %v5482
        %v5589 = vperm.slane %v5288, %v5482
        %v5590 = vperm.slane %v5291, %v5482
        %v5591 = vperm.slane %v5294, %v5482
        %v5592 = vperm.slane %v5297, %v5482
        %v5593 = vperm.slane %v5300, %v5482
        %v5594 = vperm.slane %v5303, %v5482
        %v5595 = vperm.slane %v5306, %v5482
        %v5596 = vperm.slane %v5309, %v5482
        %v5597 = vperm.slane %v5312, %v5482
        %v5598 = vperm.slane %v5315, %v5482
        %v5599 = vperm.slane %v5318, %v5482
        %v5600 = vperm.slane %v5321, %v5482
        %v5601 = vperm.slane %v5324, %v5482
        %v5602 = vperm.slane %v5327, %v5482
        %v5603 = vperm.slane %v5330, %v5482
        %v5604 = vperm.slane %v5333, %v5482
        %v5605 = vperm.slane %v5336, %v5482
        %v5606 = vperm.slane %v5339, %v5482
        %v5607 = vperm.slane %v5342, %v5482
        %v5608 = vperm.slane %v5345, %v5482
        %v5609 = vperm.slane %v5348, %v5482
        %v5610 = vperm.slane %v5351, %v5482
        %vm5611 = vcmask 1041409
        %v5612 = vsel %vm5611, %v5484, %v5483
        %vm5613 = vcmask 1042434
        %v5614 = vsel %vm5613, %v5485, %v5612
        %vm5615 = vcmask 1043459
        %v5616 = vsel %vm5615, %v5486, %v5614
        %vm5617 = vcmask 1044484
        %v5618 = vsel %vm5617, %v5487, %v5616
        %vm5619 = vcmask 1045509
        %v5620 = vsel %vm5619, %v5488, %v5618
        %vm5621 = vcmask 1046534
        %v5622 = vsel %vm5621, %v5489, %v5620
        %vm5623 = vcmask 1047559
        %v5624 = vsel %vm5623, %v5490, %v5622
        %v5625 = vsel %vm5611, %v5492, %v5491
        %v5626 = vsel %vm5613, %v5493, %v5625
        %v5627 = vsel %vm5615, %v5494, %v5626
        %v5628 = vsel %vm5617, %v5495, %v5627
        %v5629 = vsel %vm5619, %v5496, %v5628
        %v5630 = vsel %vm5621, %v5497, %v5629
        %v5631 = vsel %vm5623, %v5498, %v5630
        %v5632 = vsel %vm5611, %v5500, %v5499
        %v5633 = vsel %vm5613, %v5501, %v5632
        %v5634 = vsel %vm5615, %v5502, %v5633
        %v5635 = vsel %vm5617, %v5503, %v5634
        %v5636 = vsel %vm5619, %v5504, %v5635
        %v5637 = vsel %vm5621, %v5505, %v5636
        %v5638 = vsel %vm5623, %v5506, %v5637
        %v5639 = vsel %vm5611, %v5508, %v5507
        %v5640 = vsel %vm5613, %v5509, %v5639
        %v5641 = vsel %vm5615, %v5510, %v5640
        %v5642 = vsel %vm5617, %v5511, %v5641
        %v5643 = vsel %vm5619, %v5512, %v5642
        %v5644 = vsel %vm5621, %v5513, %v5643
        %v5645 = vsel %vm5623, %v5514, %v5644
        %v5646 = vsel %vm5611, %v5516, %v5515
        %v5647 = vsel %vm5613, %v5517, %v5646
        %v5648 = vsel %vm5615, %v5518, %v5647
        %v5649 = vsel %vm5617, %v5519, %v5648
        %v5650 = vsel %vm5619, %v5520, %v5649
        %v5651 = vsel %vm5621, %v5521, %v5650
        %v5652 = vsel %vm5623, %v5522, %v5651
        %v5653 = vsel %vm5611, %v5524, %v5523
        %v5654 = vsel %vm5613, %v5525, %v5653
        %v5655 = vsel %vm5615, %v5526, %v5654
        %v5656 = vsel %vm5617, %v5527, %v5655
        %v5657 = vsel %vm5619, %v5528, %v5656
        %v5658 = vsel %vm5621, %v5529, %v5657
        %v5659 = vsel %vm5623, %v5530, %v5658
        %v5660 = vsel %vm5611, %v5532, %v5531
        %v5661 = vsel %vm5613, %v5533, %v5660
        %v5662 = vsel %vm5615, %v5534, %v5661
        %v5663 = vsel %vm5617, %v5535, %v5662
        %v5664 = vsel %vm5619, %v5536, %v5663
        %v5665 = vsel %vm5621, %v5537, %v5664
        %v5666 = vsel %vm5623, %v5538, %v5665
        %v5667 = vsel %vm5611, %v5540, %v5539
        %v5668 = vsel %vm5613, %v5541, %v5667
        %v5669 = vsel %vm5615, %v5542, %v5668
        %v5670 = vsel %vm5617, %v5543, %v5669
        %v5671 = vsel %vm5619, %v5544, %v5670
        %v5672 = vsel %vm5621, %v5545, %v5671
        %v5673 = vsel %vm5623, %v5546, %v5672
        %v5674 = vsel %vm5611, %v5548, %v5547
        %v5675 = vsel %vm5613, %v5549, %v5674
        %v5676 = vsel %vm5615, %v5550, %v5675
        %v5677 = vsel %vm5617, %v5551, %v5676
        %v5678 = vsel %vm5619, %v5552, %v5677
        %v5679 = vsel %vm5621, %v5553, %v5678
        %v5680 = vsel %vm5623, %v5554, %v5679
        %v5681 = vsel %vm5611, %v5556, %v5555
        %v5682 = vsel %vm5613, %v5557, %v5681
        %v5683 = vsel %vm5615, %v5558, %v5682
        %v5684 = vsel %vm5617, %v5559, %v5683
        %v5685 = vsel %vm5619, %v5560, %v5684
        %v5686 = vsel %vm5621, %v5561, %v5685
        %v5687 = vsel %vm5623, %v5562, %v5686
        %v5688 = vsel %vm5611, %v5564, %v5563
        %v5689 = vsel %vm5613, %v5565, %v5688
        %v5690 = vsel %vm5615, %v5566, %v5689
        %v5691 = vsel %vm5617, %v5567, %v5690
        %v5692 = vsel %vm5619, %v5568, %v5691
        %v5693 = vsel %vm5621, %v5569, %v5692
        %v5694 = vsel %vm5623, %v5570, %v5693
        %v5695 = vsel %vm5611, %v5572, %v5571
        %v5696 = vsel %vm5613, %v5573, %v5695
        %v5697 = vsel %vm5615, %v5574, %v5696
        %v5698 = vsel %vm5617, %v5575, %v5697
        %v5699 = vsel %vm5619, %v5576, %v5698
        %v5700 = vsel %vm5621, %v5577, %v5699
        %v5701 = vsel %vm5623, %v5578, %v5700
        %v5702 = vsel %vm5611, %v5580, %v5579
        %v5703 = vsel %vm5613, %v5581, %v5702
        %v5704 = vsel %vm5615, %v5582, %v5703
        %v5705 = vsel %vm5617, %v5583, %v5704
        %v5706 = vsel %vm5619, %v5584, %v5705
        %v5707 = vsel %vm5621, %v5585, %v5706
        %v5708 = vsel %vm5623, %v5586, %v5707
        %v5709 = vsel %vm5611, %v5588, %v5587
        %v5710 = vsel %vm5613, %v5589, %v5709
        %v5711 = vsel %vm5615, %v5590, %v5710
        %v5712 = vsel %vm5617, %v5591, %v5711
        %v5713 = vsel %vm5619, %v5592, %v5712
        %v5714 = vsel %vm5621, %v5593, %v5713
        %v5715 = vsel %vm5623, %v5594, %v5714
        %v5716 = vsel %vm5611, %v5596, %v5595
        %v5717 = vsel %vm5613, %v5597, %v5716
        %v5718 = vsel %vm5615, %v5598, %v5717
        %v5719 = vsel %vm5617, %v5599, %v5718
        %v5720 = vsel %vm5619, %v5600, %v5719
        %v5721 = vsel %vm5621, %v5601, %v5720
        %v5722 = vsel %vm5623, %v5602, %v5721
        %v5723 = vsel %vm5611, %v5604, %v5603
        %v5724 = vsel %vm5613, %v5605, %v5723
        %v5725 = vsel %vm5615, %v5606, %v5724
        %v5726 = vsel %vm5617, %v5607, %v5725
        %v5727 = vsel %vm5619, %v5608, %v5726
        %v5728 = vsel %vm5621, %v5609, %v5727
        %v5729 = vsel %vm5623, %v5610, %v5728
        %vm5730 = vcmask 64512
        %v5731 = vsel %vm5730, %v5624, 0
        %v5733 = vsel %vm5730, %v5631, 0
        %v5735 = vsel %vm5730, %v5638, 0
        %v5737 = vsel %vm5730, %v5645, 0
        %v5739 = vsel %vm5730, %v5652, 0
        %v5741 = vsel %vm5730, %v5659, 0
        %v5743 = vsel %vm5730, %v5666, 0
        %v5745 = vsel %vm5730, %v5673, 0
        %v5747 = vsel %vm5730, %v5680, 0
        %v5749 = vsel %vm5730, %v5687, 0
        %v5751 = vsel %vm5730, %v5694, 0
        %v5753 = vsel %vm5730, %v5701, 0
        %v5755 = vsel %vm5730, %v5708, 0
        %v5757 = vsel %vm5730, %v5715, 0
        %v5759 = vsel %vm5730, %v5722, 0
        %v5761 = vsel %vm5730, %v5729, 0
        %5763 = vmatpush.msra.mxu0 0.0
        %5764 = vmatpush.msra.mxu0 0.0
        %5765 = vmatpush.msra.mxu0 0.0
        %5766 = vmatpush.msra.mxu0 0.0
        %5767 = vmatpush.msra.mxu0 0.0
        %5768 = vmatpush.msra.mxu0 0.0
        %5769 = vmatpush.msra.mxu0 0.0
        %5770 = vmatpush.msra.mxu0 0.0
        %5771 = vmatpush.msra.mxu0 0.0
        %5772 = vmatpush.msra.mxu0 0.0
        %5773 = vmatpush.msra.mxu0 0.0
        %5774 = vmatpush.msra.mxu0 0.0
        %5775 = vmatpush.msra.mxu0 0.0
        %5776 = vmatpush.msra.mxu0 0.0
        %5777 = vmatpush.msra.mxu0 0.0
        %5778 = vmatpush.msra.mxu0 %v5352
        %5779 = vmatmul.f32.gmra.mxu0 %v5731
        %v5780 = vpop.f32.mrf.mxu0
        %v5781 = vadd.f32 0.0, %v5780
        %5782 = vmatmul.f32.gmra.mxu0 %v5733
        %v5783 = vpop.f32.mrf.mxu0
        %v5784 = vadd.f32 0.0, %v5783
        %5785 = vmatmul.f32.gmra.mxu0 %v5735
        %v5786 = vpop.f32.mrf.mxu0
        %v5787 = vadd.f32 0.0, %v5786
        %5788 = vmatmul.f32.gmra.mxu0 %v5737
        %v5789 = vpop.f32.mrf.mxu0
        %v5790 = vadd.f32 0.0, %v5789
        %5791 = vmatmul.f32.gmra.mxu0 %v5739
        %v5792 = vpop.f32.mrf.mxu0
        %v5793 = vadd.f32 0.0, %v5792
        %5794 = vmatmul.f32.gmra.mxu0 %v5741
        %v5795 = vpop.f32.mrf.mxu0
        %v5796 = vadd.f32 0.0, %v5795
        %5797 = vmatmul.f32.gmra.mxu0 %v5743
        %v5798 = vpop.f32.mrf.mxu0
        %v5799 = vadd.f32 0.0, %v5798
        %5800 = vmatmul.f32.gmra.mxu0 %v5745
        %v5801 = vpop.f32.mrf.mxu0
        %v5802 = vadd.f32 0.0, %v5801
        %5803 = vmatmul.f32.gmra.mxu0 %v5747
        %v5804 = vpop.f32.mrf.mxu0
        %v5805 = vadd.f32 0.0, %v5804
        %5806 = vmatmul.f32.gmra.mxu0 %v5749
        %v5807 = vpop.f32.mrf.mxu0
        %v5808 = vadd.f32 0.0, %v5807
        %5809 = vmatmul.f32.gmra.mxu0 %v5751
        %v5810 = vpop.f32.mrf.mxu0
        %v5811 = vadd.f32 0.0, %v5810
        %5812 = vmatmul.f32.gmra.mxu0 %v5753
        %v5813 = vpop.f32.mrf.mxu0
        %v5814 = vadd.f32 0.0, %v5813
        %5815 = vmatmul.f32.gmra.mxu0 %v5755
        %v5816 = vpop.f32.mrf.mxu0
        %v5817 = vadd.f32 0.0, %v5816
        %5818 = vmatmul.f32.gmra.mxu0 %v5757
        %v5819 = vpop.f32.mrf.mxu0
        %v5820 = vadd.f32 0.0, %v5819
        %5821 = vmatmul.f32.gmra.mxu0 %v5759
        %v5822 = vpop.f32.mrf.mxu0
        %v5823 = vadd.f32 0.0, %v5822
        %5824 = vmatmul.f32.gmra.mxu0 %v5761
        %v5825 = vpop.f32.mrf.mxu0
        %v5826 = vadd.f32 0.0, %v5825
        %5827 = vdwg.mxu0
        %v5828 = vsub.f32 %v2630, %v5781
        %v5829 = vsub.f32 %v2633, %v5784
        %v5830 = vsub.f32 %v2657, %v5787
        %v5831 = vsub.f32 %v2660, %v5790
        %v5832 = vsub.f32 %v2684, %v5793
        %v5833 = vsub.f32 %v2687, %v5796
        %v5834 = vsub.f32 %v2711, %v5799
        %v5835 = vsub.f32 %v2714, %v5802
        %v5836 = vsub.f32 %v2738, %v5805
        %v5837 = vsub.f32 %v2741, %v5808
        %v5838 = vsub.f32 %v2765, %v5811
        %v5839 = vsub.f32 %v2768, %v5814
        %v5840 = vsub.f32 %v2792, %v5817
        %v5841 = vsub.f32 %v2795, %v5820
        %v5842 = vsub.f32 %v2819, %v5823
        %v5843 = vsub.f32 %v2822, %v5826
        %v5844 = vmul.f32 %v5828, 1.442695
        %v5845 = vpow.pop %v5844
        %v5846 = vmul.f32 %v5829, 1.442695
        %v5847 = vpow.pop %v5846
        %v5848 = vmul.f32 %v5830, 1.442695
        %v5849 = vpow.pop %v5848
        %v5850 = vmul.f32 %v5831, 1.442695
        %v5851 = vpow.pop %v5850
        %v5852 = vmul.f32 %v5832, 1.442695
        %v5853 = vpow.pop %v5852
        %v5854 = vmul.f32 %v5833, 1.442695
        %v5855 = vpow.pop %v5854
        %v5856 = vmul.f32 %v5834, 1.442695
        %v5857 = vpow.pop %v5856
        %v5858 = vmul.f32 %v5835, 1.442695
        %v5859 = vpow.pop %v5858
        %v5860 = vmul.f32 %v5836, 1.442695
        %v5861 = vpow.pop %v5860
        %v5862 = vmul.f32 %v5837, 1.442695
        %v5863 = vpow.pop %v5862
        %v5864 = vmul.f32 %v5838, 1.442695
        %v5865 = vpow.pop %v5864
        %v5866 = vmul.f32 %v5839, 1.442695
        %v5867 = vpow.pop %v5866
        %v5868 = vmul.f32 %v5840, 1.442695
        %v5869 = vpow.pop %v5868
        %v5870 = vmul.f32 %v5841, 1.442695
        %v5871 = vpow.pop %v5870
        %v5872 = vmul.f32 %v5842, 1.442695
        %v5873 = vpow.pop %v5872
        %v5874 = vmul.f32 %v5843, 1.442695
        %v5875 = vpow.pop %v5874
        %v5876 = vld [vmem:[%s7] sm:$0xff]
        %v5877 = vld [vmem:[%s7 + $0x8] sm:$0xff]
        %v5878 = vld [vmem:[%s7 + $0x10] sm:$0xff]
        %v5879 = vld [vmem:[%s7 + $0x18] sm:$0xff]
        %v5880 = vld [vmem:[%s7 + $0x20] sm:$0xff]
        %v5881 = vld [vmem:[%s7 + $0x28] sm:$0xff]
        %v5882 = vld [vmem:[%s7 + $0x30] sm:$0xff]
        %v5883 = vld [vmem:[%s7 + $0x38] sm:$0xff]
        %v5884 = vld [vmem:[%s7 + $0x40] sm:$0xff]
        %v5885 = vld [vmem:[%s7 + $0x48] sm:$0xff]
        %v5886 = vld [vmem:[%s7 + $0x50] sm:$0xff]
        %v5887 = vld [vmem:[%s7 + $0x58] sm:$0xff]
        %v5888 = vld [vmem:[%s7 + $0x60] sm:$0xff]
        %v5889 = vld [vmem:[%s7 + $0x68] sm:$0xff]
        %v5890 = vld [vmem:[%s7 + $0x70] sm:$0xff]
        %v5891 = vld [vmem:[%s7 + $0x78] sm:$0xff]
        %5892 = vmatpush.msra.mxu0 %v5891
        %5893 = vmatpush.msra.mxu0 %v5890
        %5894 = vmatpush.msra.mxu0 %v5889
        %5895 = vmatpush.msra.mxu0 %v5888
        %5896 = vmatpush.msra.mxu0 %v5887
        %5897 = vmatpush.msra.mxu0 %v5886
        %5898 = vmatpush.msra.mxu0 %v5885
        %5899 = vmatpush.msra.mxu0 %v5884
        %5900 = vmatpush.msra.mxu0 %v5883
        %5901 = vmatpush.msra.mxu0 %v5882
        %5902 = vmatpush.msra.mxu0 %v5881
        %5903 = vmatpush.msra.mxu0 %v5880
        %5904 = vmatpush.msra.mxu0 %v5879
        %5905 = vmatpush.msra.mxu0 %v5878
        %5906 = vmatpush.msra.mxu0 %v5877
        %5907 = vmatpush.msra.mxu0 %v5876
        %5908 = vmatmul.f32.gmra.mxu0 %v5845
        %v5909 = vpop.f32.mrf.mxu0
        %v5910 = vadd.f32 0.0, %v5909
        %5911 = vmatmul.f32.gmra.mxu0 %v5847
        %v5912 = vpop.f32.mrf.mxu0
        %v5913 = vadd.f32 0.0, %v5912
        %5914 = vmatmul.f32.gmra.mxu0 %v5849
        %v5915 = vpop.f32.mrf.mxu0
        %v5916 = vadd.f32 0.0, %v5915
        %5917 = vmatmul.f32.gmra.mxu0 %v5851
        %v5918 = vpop.f32.mrf.mxu0
        %v5919 = vadd.f32 0.0, %v5918
        %5920 = vmatmul.f32.gmra.mxu0 %v5853
        %v5921 = vpop.f32.mrf.mxu0
        %v5922 = vadd.f32 0.0, %v5921
        %5923 = vmatmul.f32.gmra.mxu0 %v5855
        %v5924 = vpop.f32.mrf.mxu0
        %v5925 = vadd.f32 0.0, %v5924
        %5926 = vmatmul.f32.gmra.mxu0 %v5857
        %v5927 = vpop.f32.mrf.mxu0
        %v5928 = vadd.f32 0.0, %v5927
        %5929 = vmatmul.f32.gmra.mxu0 %v5859
        %v5930 = vpop.f32.mrf.mxu0
        %v5931 = vadd.f32 0.0, %v5930
        %5932 = vmatmul.f32.gmra.mxu0 %v5861
        %v5933 = vpop.f32.mrf.mxu0
        %v5934 = vadd.f32 0.0, %v5933
        %5935 = vmatmul.f32.gmra.mxu0 %v5863
        %v5936 = vpop.f32.mrf.mxu0
        %v5937 = vadd.f32 0.0, %v5936
        %5938 = vmatmul.f32.gmra.mxu0 %v5865
        %v5939 = vpop.f32.mrf.mxu0
        %v5940 = vadd.f32 0.0, %v5939
        %5941 = vmatmul.f32.gmra.mxu0 %v5867
        %v5942 = vpop.f32.mrf.mxu0
        %v5943 = vadd.f32 0.0, %v5942
        %5944 = vmatmul.f32.gmra.mxu0 %v5869
        %v5945 = vpop.f32.mrf.mxu0
        %v5946 = vadd.f32 0.0, %v5945
        %5947 = vmatmul.f32.gmra.mxu0 %v5871
        %v5948 = vpop.f32.mrf.mxu0
        %v5949 = vadd.f32 0.0, %v5948
        %5950 = vmatmul.f32.gmra.mxu0 %v5873
        %v5951 = vpop.f32.mrf.mxu0
        %v5952 = vadd.f32 0.0, %v5951
        %5953 = vmatmul.f32.gmra.mxu0 %v5875
        %v5954 = vpop.f32.mrf.mxu0
        %v5955 = vadd.f32 0.0, %v5954
        %5956 = vdwg.mxu0
        %v5957 = vrcp.pop %v5910
        %v5958 = vmul.f32 %v5910, %v5957
        %v5959 = vsub.f32 1.0, %v5958
        %v5960 = vmul.f32 %v5957, %v5959
        %v5961 = vadd.f32 %v5957, %v5960
        %vm5962 = vweird.f32 %v5910
        %vm5963 = vweird.f32 %v5957
        %vm5964 = vmor %vm5962, %vm5963
        %v5965 = vsel %vm5964, %v5957, %v5961
        %v5966 = vand.u32 2147483647, %v5910
        %vm5967 = vcmp.eq.f32.partialorder %v5966, 8.507059e+37
        %v5968 = vand.u32 %v5910, 2147483648
        %v5969 = vor.u32 1.1754944e-38, %v5968
        %v5970 = vsel %vm5967, %v5969, %v5965
        %v5971 = vmul.f32 %v5845, %v5970
        %v5972 = vrcp.pop %v5913
        %v5973 = vmul.f32 %v5913, %v5972
        %v5974 = vsub.f32 1.0, %v5973
        %v5975 = vmul.f32 %v5972, %v5974
        %v5976 = vadd.f32 %v5972, %v5975
        %vm5977 = vweird.f32 %v5913
        %vm5978 = vweird.f32 %v5972
        %vm5979 = vmor %vm5977, %vm5978
        %v5980 = vsel %vm5979, %v5972, %v5976
        %v5981 = vand.u32 2147483647, %v5913
        %vm5982 = vcmp.eq.f32.partialorder %v5981, 8.507059e+37
        %v5983 = vand.u32 %v5913, 2147483648
        %v5984 = vor.u32 1.1754944e-38, %v5983
        %v5985 = vsel %vm5982, %v5984, %v5980
        %v5986 = vmul.f32 %v5847, %v5985
        %v5987 = vrcp.pop %v5916
        %v5988 = vmul.f32 %v5916, %v5987
        %v5989 = vsub.f32 1.0, %v5988
        %v5990 = vmul.f32 %v5987, %v5989
        %v5991 = vadd.f32 %v5987, %v5990
        %vm5992 = vweird.f32 %v5916
        %vm5993 = vweird.f32 %v5987
        %vm5994 = vmor %vm5992, %vm5993
        %v5995 = vsel %vm5994, %v5987, %v5991
        %v5996 = vand.u32 2147483647, %v5916
        %vm5997 = vcmp.eq.f32.partialorder %v5996, 8.507059e+37
        %v5998 = vand.u32 %v5916, 2147483648
        %v5999 = vor.u32 1.1754944e-38, %v5998
        %v6000 = vsel %vm5997, %v5999, %v5995
        %v6001 = vmul.f32 %v5849, %v6000
        %v6002 = vrcp.pop %v5919
        %v6003 = vmul.f32 %v5919, %v6002
        %v6004 = vsub.f32 1.0, %v6003
        %v6005 = vmul.f32 %v6002, %v6004
        %v6006 = vadd.f32 %v6002, %v6005
        %vm6007 = vweird.f32 %v5919
        %vm6008 = vweird.f32 %v6002
        %vm6009 = vmor %vm6007, %vm6008
        %v6010 = vsel %vm6009, %v6002, %v6006
        %v6011 = vand.u32 2147483647, %v5919
        %vm6012 = vcmp.eq.f32.partialorder %v6011, 8.507059e+37
        %v6013 = vand.u32 %v5919, 2147483648
        %v6014 = vor.u32 1.1754944e-38, %v6013
        %v6015 = vsel %vm6012, %v6014, %v6010
        %v6016 = vmul.f32 %v5851, %v6015
        %v6017 = vrcp.pop %v5922
        %v6018 = vmul.f32 %v5922, %v6017
        %v6019 = vsub.f32 1.0, %v6018
        %v6020 = vmul.f32 %v6017, %v6019
        %v6021 = vadd.f32 %v6017, %v6020
        %vm6022 = vweird.f32 %v5922
        %vm6023 = vweird.f32 %v6017
        %vm6024 = vmor %vm6022, %vm6023
        %v6025 = vsel %vm6024, %v6017, %v6021
        %v6026 = vand.u32 2147483647, %v5922
        %vm6027 = vcmp.eq.f32.partialorder %v6026, 8.507059e+37
        %v6028 = vand.u32 %v5922, 2147483648
        %v6029 = vor.u32 1.1754944e-38, %v6028
        %v6030 = vsel %vm6027, %v6029, %v6025
        %v6031 = vmul.f32 %v5853, %v6030
        %v6032 = vrcp.pop %v5925
        %v6033 = vmul.f32 %v5925, %v6032
        %v6034 = vsub.f32 1.0, %v6033
        %v6035 = vmul.f32 %v6032, %v6034
        %v6036 = vadd.f32 %v6032, %v6035
        %vm6037 = vweird.f32 %v5925
        %vm6038 = vweird.f32 %v6032
        %vm6039 = vmor %vm6037, %vm6038
        %v6040 = vsel %vm6039, %v6032, %v6036
        %v6041 = vand.u32 2147483647, %v5925
        %vm6042 = vcmp.eq.f32.partialorder %v6041, 8.507059e+37
        %v6043 = vand.u32 %v5925, 2147483648
        %v6044 = vor.u32 1.1754944e-38, %v6043
        %v6045 = vsel %vm6042, %v6044, %v6040
        %v6046 = vmul.f32 %v5855, %v6045
        %v6047 = vrcp.pop %v5928
        %v6048 = vmul.f32 %v5928, %v6047
        %v6049 = vsub.f32 1.0, %v6048
        %v6050 = vmul.f32 %v6047, %v6049
        %v6051 = vadd.f32 %v6047, %v6050
        %vm6052 = vweird.f32 %v5928
        %vm6053 = vweird.f32 %v6047
        %vm6054 = vmor %vm6052, %vm6053
        %v6055 = vsel %vm6054, %v6047, %v6051
        %v6056 = vand.u32 2147483647, %v5928
        %vm6057 = vcmp.eq.f32.partialorder %v6056, 8.507059e+37
        %v6058 = vand.u32 %v5928, 2147483648
        %v6059 = vor.u32 1.1754944e-38, %v6058
        %v6060 = vsel %vm6057, %v6059, %v6055
        %v6061 = vmul.f32 %v5857, %v6060
        %v6062 = vrcp.pop %v5931
        %v6063 = vmul.f32 %v5931, %v6062
        %v6064 = vsub.f32 1.0, %v6063
        %v6065 = vmul.f32 %v6062, %v6064
        %v6066 = vadd.f32 %v6062, %v6065
        %vm6067 = vweird.f32 %v5931
        %vm6068 = vweird.f32 %v6062
        %vm6069 = vmor %vm6067, %vm6068
        %v6070 = vsel %vm6069, %v6062, %v6066
        %v6071 = vand.u32 2147483647, %v5931
        %vm6072 = vcmp.eq.f32.partialorder %v6071, 8.507059e+37
        %v6073 = vand.u32 %v5931, 2147483648
        %v6074 = vor.u32 1.1754944e-38, %v6073
        %v6075 = vsel %vm6072, %v6074, %v6070
        %v6076 = vmul.f32 %v5859, %v6075
        %v6077 = vrcp.pop %v5934
        %v6078 = vmul.f32 %v5934, %v6077
        %v6079 = vsub.f32 1.0, %v6078
        %v6080 = vmul.f32 %v6077, %v6079
        %v6081 = vadd.f32 %v6077, %v6080
        %vm6082 = vweird.f32 %v5934
        %vm6083 = vweird.f32 %v6077
        %vm6084 = vmor %vm6082, %vm6083
        %v6085 = vsel %vm6084, %v6077, %v6081
        %v6086 = vand.u32 2147483647, %v5934
        %vm6087 = vcmp.eq.f32.partialorder %v6086, 8.507059e+37
        %v6088 = vand.u32 %v5934, 2147483648
        %v6089 = vor.u32 1.1754944e-38, %v6088
        %v6090 = vsel %vm6087, %v6089, %v6085
        %v6091 = vmul.f32 %v5861, %v6090
        %v6092 = vrcp.pop %v5937
        %v6093 = vmul.f32 %v5937, %v6092
        %v6094 = vsub.f32 1.0, %v6093
        %v6095 = vmul.f32 %v6092, %v6094
        %v6096 = vadd.f32 %v6092, %v6095
        %vm6097 = vweird.f32 %v5937
        %vm6098 = vweird.f32 %v6092
        %vm6099 = vmor %vm6097, %vm6098
        %v6100 = vsel %vm6099, %v6092, %v6096
        %v6101 = vand.u32 2147483647, %v5937
        %vm6102 = vcmp.eq.f32.partialorder %v6101, 8.507059e+37
        %v6103 = vand.u32 %v5937, 2147483648
        %v6104 = vor.u32 1.1754944e-38, %v6103
        %v6105 = vsel %vm6102, %v6104, %v6100
        %v6106 = vmul.f32 %v5863, %v6105
        %v6107 = vrcp.pop %v5940
        %v6108 = vmul.f32 %v5940, %v6107
        %v6109 = vsub.f32 1.0, %v6108
        %v6110 = vmul.f32 %v6107, %v6109
        %v6111 = vadd.f32 %v6107, %v6110
        %vm6112 = vweird.f32 %v5940
        %vm6113 = vweird.f32 %v6107
        %vm6114 = vmor %vm6112, %vm6113
        %v6115 = vsel %vm6114, %v6107, %v6111
        %v6116 = vand.u32 2147483647, %v5940
        %vm6117 = vcmp.eq.f32.partialorder %v6116, 8.507059e+37
        %v6118 = vand.u32 %v5940, 2147483648
        %v6119 = vor.u32 1.1754944e-38, %v6118
        %v6120 = vsel %vm6117, %v6119, %v6115
        %v6121 = vmul.f32 %v5865, %v6120
        %v6122 = vrcp.pop %v5943
        %v6123 = vmul.f32 %v5943, %v6122
        %v6124 = vsub.f32 1.0, %v6123
        %v6125 = vmul.f32 %v6122, %v6124
        %v6126 = vadd.f32 %v6122, %v6125
        %vm6127 = vweird.f32 %v5943
        %vm6128 = vweird.f32 %v6122
        %vm6129 = vmor %vm6127, %vm6128
        %v6130 = vsel %vm6129, %v6122, %v6126
        %v6131 = vand.u32 2147483647, %v5943
        %vm6132 = vcmp.eq.f32.partialorder %v6131, 8.507059e+37
        %v6133 = vand.u32 %v5943, 2147483648
        %v6134 = vor.u32 1.1754944e-38, %v6133
        %v6135 = vsel %vm6132, %v6134, %v6130
        %v6136 = vmul.f32 %v5867, %v6135
        %v6137 = vrcp.pop %v5946
        %v6138 = vmul.f32 %v5946, %v6137
        %v6139 = vsub.f32 1.0, %v6138
        %v6140 = vmul.f32 %v6137, %v6139
        %v6141 = vadd.f32 %v6137, %v6140
        %vm6142 = vweird.f32 %v5946
        %vm6143 = vweird.f32 %v6137
        %vm6144 = vmor %vm6142, %vm6143
        %v6145 = vsel %vm6144, %v6137, %v6141
        %v6146 = vand.u32 2147483647, %v5946
        %vm6147 = vcmp.eq.f32.partialorder %v6146, 8.507059e+37
        %v6148 = vand.u32 %v5946, 2147483648
        %v6149 = vor.u32 1.1754944e-38, %v6148
        %v6150 = vsel %vm6147, %v6149, %v6145
        %v6151 = vmul.f32 %v5869, %v6150
        %v6152 = vrcp.pop %v5949
        %v6153 = vmul.f32 %v5949, %v6152
        %v6154 = vsub.f32 1.0, %v6153
        %v6155 = vmul.f32 %v6152, %v6154
        %v6156 = vadd.f32 %v6152, %v6155
        %vm6157 = vweird.f32 %v5949
        %vm6158 = vweird.f32 %v6152
        %vm6159 = vmor %vm6157, %vm6158
        %v6160 = vsel %vm6159, %v6152, %v6156
        %v6161 = vand.u32 2147483647, %v5949
        %vm6162 = vcmp.eq.f32.partialorder %v6161, 8.507059e+37
        %v6163 = vand.u32 %v5949, 2147483648
        %v6164 = vor.u32 1.1754944e-38, %v6163
        %v6165 = vsel %vm6162, %v6164, %v6160
        %v6166 = vmul.f32 %v5871, %v6165
        %v6167 = vrcp.pop %v5952
        %v6168 = vmul.f32 %v5952, %v6167
        %v6169 = vsub.f32 1.0, %v6168
        %v6170 = vmul.f32 %v6167, %v6169
        %v6171 = vadd.f32 %v6167, %v6170
        %vm6172 = vweird.f32 %v5952
        %vm6173 = vweird.f32 %v6167
        %vm6174 = vmor %vm6172, %vm6173
        %v6175 = vsel %vm6174, %v6167, %v6171
        %v6176 = vand.u32 2147483647, %v5952
        %vm6177 = vcmp.eq.f32.partialorder %v6176, 8.507059e+37
        %v6178 = vand.u32 %v5952, 2147483648
        %v6179 = vor.u32 1.1754944e-38, %v6178
        %v6180 = vsel %vm6177, %v6179, %v6175
        %v6181 = vmul.f32 %v5873, %v6180
        %v6182 = vrcp.pop %v5955
        %v6183 = vmul.f32 %v5955, %v6182
        %v6184 = vsub.f32 1.0, %v6183
        %v6185 = vmul.f32 %v6182, %v6184
        %v6186 = vadd.f32 %v6182, %v6185
        %vm6187 = vweird.f32 %v5955
        %vm6188 = vweird.f32 %v6182
        %vm6189 = vmor %vm6187, %vm6188
        %v6190 = vsel %vm6189, %v6182, %v6186
        %v6191 = vand.u32 2147483647, %v5955
        %vm6192 = vcmp.eq.f32.partialorder %v6191, 8.507059e+37
        %v6193 = vand.u32 %v5955, 2147483648
        %v6194 = vor.u32 1.1754944e-38, %v6193
        %v6195 = vsel %vm6192, %v6194, %v6190
        %v6196 = vmul.f32 %v5875, %v6195
        %v6197 = vld [vmem:[%s6] sm:$0xff]
        %v6198 = vld [vmem:[%s6 + $0x8] sm:$0xff]
        %v6199 = vld [vmem:[%s6 + $0x10] sm:$0xff]
        %v6200 = vld [vmem:[%s6 + $0x18] sm:$0xff]
        %v6201 = vld [vmem:[%s6 + $0x20] sm:$0xff]
        %v6202 = vld [vmem:[%s6 + $0x28] sm:$0xff]
        %v6203 = vld [vmem:[%s6 + $0x30] sm:$0xff]
        %v6204 = vld [vmem:[%s6 + $0x38] sm:$0xff]
        %v6205 = vld [vmem:[%s6 + $0x40] sm:$0xff]
        %v6206 = vld [vmem:[%s6 + $0x48] sm:$0xff]
        %v6207 = vld [vmem:[%s6 + $0x50] sm:$0xff]
        %v6208 = vld [vmem:[%s6 + $0x58] sm:$0xff]
        %v6209 = vld [vmem:[%s6 + $0x60] sm:$0xff]
        %v6210 = vld [vmem:[%s6 + $0x68] sm:$0xff]
        %v6211 = vld [vmem:[%s6 + $0x70] sm:$0xff]
        %v6212 = vld [vmem:[%s6 + $0x78] sm:$0xff]
        %6229 = vrot.lane.b32.xlu0 %v6197, 64
        %v6230 = vpop.permute.xlu0 %6229
        %6231 = vrot.lane.b32.xlu0 %v6198, 64
        %v6232 = vpop.permute.xlu0 %6231
        %6233 = vrot.lane.b32.xlu0 %v6199, 64
        %v6234 = vpop.permute.xlu0 %6233
        %6235 = vrot.lane.b32.xlu0 %v6200, 64
        %v6236 = vpop.permute.xlu0 %6235
        %6237 = vrot.lane.b32.xlu0 %v6201, 64
        %v6238 = vpop.permute.xlu0 %6237
        %6239 = vrot.lane.b32.xlu0 %v6202, 64
        %v6240 = vpop.permute.xlu0 %6239
        %6241 = vrot.lane.b32.xlu0 %v6203, 64
        %v6242 = vpop.permute.xlu0 %6241
        %6243 = vrot.lane.b32.xlu0 %v6204, 64
        %v6244 = vpop.permute.xlu0 %6243
        %6245 = vrot.lane.b32.xlu0 %v6205, 64
        %v6246 = vpop.permute.xlu0 %6245
        %6247 = vrot.lane.b32.xlu0 %v6206, 64
        %v6248 = vpop.permute.xlu0 %6247
        %6249 = vrot.lane.b32.xlu0 %v6207, 64
        %v6250 = vpop.permute.xlu0 %6249
        %6251 = vrot.lane.b32.xlu0 %v6208, 64
        %v6252 = vpop.permute.xlu0 %6251
        %6253 = vrot.lane.b32.xlu0 %v6209, 64
        %v6254 = vpop.permute.xlu0 %6253
        %6255 = vrot.lane.b32.xlu0 %v6210, 64
        %v6256 = vpop.permute.xlu0 %6255
        %6257 = vrot.lane.b32.xlu0 %v6211, 64
        %v6258 = vpop.permute.xlu0 %6257
        %6259 = vrot.lane.b32.xlu0 %v6212, 64
        %v6260 = vpop.permute.xlu0 %6259
        %v6277 = vmul.f32 %v1271, %v6230
        %v6278 = vmul.f32 %v1274, %v6232
        %v6279 = vmul.f32 %v1271, %v6234
        %v6280 = vmul.f32 %v1274, %v6236
        %v6281 = vmul.f32 %v1271, %v6238
        %v6282 = vmul.f32 %v1274, %v6240
        %v6283 = vmul.f32 %v1271, %v6242
        %v6284 = vmul.f32 %v1274, %v6244
        %v6285 = vmul.f32 %v1271, %v6246
        %v6286 = vmul.f32 %v1274, %v6248
        %v6287 = vmul.f32 %v1271, %v6250
        %v6288 = vmul.f32 %v1274, %v6252
        %v6289 = vmul.f32 %v1271, %v6254
        %v6290 = vmul.f32 %v1274, %v6256
        %v6291 = vmul.f32 %v1271, %v6258
        %v6292 = vmul.f32 %v1274, %v6260
        %v6293 = vmul.f32 %v1277, %v6230
        %v6294 = vmul.f32 %v1280, %v6232
        %v6295 = vmul.f32 %v1277, %v6234
        %v6296 = vmul.f32 %v1280, %v6236
        %v6297 = vmul.f32 %v1277, %v6238
        %v6298 = vmul.f32 %v1280, %v6240
        %v6299 = vmul.f32 %v1277, %v6242
        %v6300 = vmul.f32 %v1280, %v6244
        %v6301 = vmul.f32 %v1277, %v6246
        %v6302 = vmul.f32 %v1280, %v6248
        %v6303 = vmul.f32 %v1277, %v6250
        %v6304 = vmul.f32 %v1280, %v6252
        %v6305 = vmul.f32 %v1277, %v6254
        %v6306 = vmul.f32 %v1280, %v6256
        %v6307 = vmul.f32 %v1277, %v6258
        %v6308 = vmul.f32 %v1280, %v6260
        %v6309 = vmul.f32 %v1283, %v6230
        %v6310 = vmul.f32 %v1286, %v6232
        %v6311 = vmul.f32 %v1283, %v6234
        %v6312 = vmul.f32 %v1286, %v6236
        %v6313 = vmul.f32 %v1283, %v6238
        %v6314 = vmul.f32 %v1286, %v6240
        %v6315 = vmul.f32 %v1283, %v6242
        %v6316 = vmul.f32 %v1286, %v6244
        %v6317 = vmul.f32 %v1283, %v6246
        %v6318 = vmul.f32 %v1286, %v6248
        %v6319 = vmul.f32 %v1283, %v6250
        %v6320 = vmul.f32 %v1286, %v6252
        %v6321 = vmul.f32 %v1283, %v6254
        %v6322 = vmul.f32 %v1286, %v6256
        %v6323 = vmul.f32 %v1283, %v6258
        %v6324 = vmul.f32 %v1286, %v6260
        %v6325 = vmul.f32 %v1289, %v6230
        %v6326 = vmul.f32 %v1292, %v6232
        %v6327 = vmul.f32 %v1289, %v6234
        %v6328 = vmul.f32 %v1292, %v6236
        %v6329 = vmul.f32 %v1289, %v6238
        %v6330 = vmul.f32 %v1292, %v6240
        %v6331 = vmul.f32 %v1289, %v6242
        %v6332 = vmul.f32 %v1292, %v6244
        %v6333 = vmul.f32 %v1289, %v6246
        %v6334 = vmul.f32 %v1292, %v6248
        %v6335 = vmul.f32 %v1289, %v6250
        %v6336 = vmul.f32 %v1292, %v6252
        %v6337 = vmul.f32 %v1289, %v6254
        %v6338 = vmul.f32 %v1292, %v6256
        %v6339 = vmul.f32 %v1289, %v6258
        %v6340 = vmul.f32 %v1292, %v6260
        %v6341 = vmul.f32 %v1295, %v6230
        %v6342 = vmul.f32 %v1298, %v6232
        %v6343 = vmul.f32 %v1295, %v6234
        %v6344 = vmul.f32 %v1298, %v6236
        %v6345 = vmul.f32 %v1295, %v6238
        %v6346 = vmul.f32 %v1298, %v6240
        %v6347 = vmul.f32 %v1295, %v6242
        %v6348 = vmul.f32 %v1298, %v6244
        %v6349 = vmul.f32 %v1295, %v6246
        %v6350 = vmul.f32 %v1298, %v6248
        %v6351 = vmul.f32 %v1295, %v6250
        %v6352 = vmul.f32 %v1298, %v6252
        %v6353 = vmul.f32 %v1295, %v6254
        %v6354 = vmul.f32 %v1298, %v6256
        %v6355 = vmul.f32 %v1295, %v6258
        %v6356 = vmul.f32 %v1298, %v6260
        %v6357 = vmul.f32 %v1301, %v6230
        %v6358 = vmul.f32 %v1304, %v6232
        %v6359 = vmul.f32 %v1301, %v6234
        %v6360 = vmul.f32 %v1304, %v6236
        %v6361 = vmul.f32 %v1301, %v6238
        %v6362 = vmul.f32 %v1304, %v6240
        %v6363 = vmul.f32 %v1301, %v6242
        %v6364 = vmul.f32 %v1304, %v6244
        %v6365 = vmul.f32 %v1301, %v6246
        %v6366 = vmul.f32 %v1304, %v6248
        %v6367 = vmul.f32 %v1301, %v6250
        %v6368 = vmul.f32 %v1304, %v6252
        %v6369 = vmul.f32 %v1301, %v6254
        %v6370 = vmul.f32 %v1304, %v6256
        %v6371 = vmul.f32 %v1301, %v6258
        %v6372 = vmul.f32 %v1304, %v6260
        %v6373 = vmul.f32 %v1307, %v6230
        %v6374 = vmul.f32 %v1310, %v6232
        %v6375 = vmul.f32 %v1307, %v6234
        %v6376 = vmul.f32 %v1310, %v6236
        %v6377 = vmul.f32 %v1307, %v6238
        %v6378 = vmul.f32 %v1310, %v6240
        %v6379 = vmul.f32 %v1307, %v6242
        %v6380 = vmul.f32 %v1310, %v6244
        %v6381 = vmul.f32 %v1307, %v6246
        %v6382 = vmul.f32 %v1310, %v6248
        %v6383 = vmul.f32 %v1307, %v6250
        %v6384 = vmul.f32 %v1310, %v6252
        %v6385 = vmul.f32 %v1307, %v6254
        %v6386 = vmul.f32 %v1310, %v6256
        %v6387 = vmul.f32 %v1307, %v6258
        %v6388 = vmul.f32 %v1310, %v6260
        %v6389 = vmul.f32 %v1313, %v6230
        %v6390 = vmul.f32 %v1316, %v6232
        %v6391 = vmul.f32 %v1313, %v6234
        %v6392 = vmul.f32 %v1316, %v6236
        %v6393 = vmul.f32 %v1313, %v6238
        %v6394 = vmul.f32 %v1316, %v6240
        %v6395 = vmul.f32 %v1313, %v6242
        %v6396 = vmul.f32 %v1316, %v6244
        %v6397 = vmul.f32 %v1313, %v6246
        %v6398 = vmul.f32 %v1316, %v6248
        %v6399 = vmul.f32 %v1313, %v6250
        %v6400 = vmul.f32 %v1316, %v6252
        %v6401 = vmul.f32 %v1313, %v6254
        %v6402 = vmul.f32 %v1316, %v6256
        %v6403 = vmul.f32 %v1313, %v6258
        %v6404 = vmul.f32 %v1316, %v6260
        %6421 = vrot.lane.b32.xlu0 %v6277, 64
        %v6422 = vpop.permute.xlu0 %6421
        %6423 = vrot.lane.b32.xlu0 %v6278, 64
        %v6424 = vpop.permute.xlu0 %6423
        %6425 = vrot.lane.b32.xlu0 %v6279, 64
        %v6426 = vpop.permute.xlu0 %6425
        %6427 = vrot.lane.b32.xlu0 %v6280, 64
        %v6428 = vpop.permute.xlu0 %6427
        %6429 = vrot.lane.b32.xlu0 %v6281, 64
        %v6430 = vpop.permute.xlu0 %6429
        %6431 = vrot.lane.b32.xlu0 %v6282, 64
        %v6432 = vpop.permute.xlu0 %6431
        %6433 = vrot.lane.b32.xlu0 %v6283, 64
        %v6434 = vpop.permute.xlu0 %6433
        %6435 = vrot.lane.b32.xlu0 %v6284, 64
        %v6436 = vpop.permute.xlu0 %6435
        %6437 = vrot.lane.b32.xlu0 %v6285, 64
        %v6438 = vpop.permute.xlu0 %6437
        %6439 = vrot.lane.b32.xlu0 %v6286, 64
        %v6440 = vpop.permute.xlu0 %6439
        %6441 = vrot.lane.b32.xlu0 %v6287, 64
        %v6442 = vpop.permute.xlu0 %6441
        %6443 = vrot.lane.b32.xlu0 %v6288, 64
        %v6444 = vpop.permute.xlu0 %6443
        %6445 = vrot.lane.b32.xlu0 %v6289, 64
        %v6446 = vpop.permute.xlu0 %6445
        %6447 = vrot.lane.b32.xlu0 %v6290, 64
        %v6448 = vpop.permute.xlu0 %6447
        %6449 = vrot.lane.b32.xlu0 %v6291, 64
        %v6450 = vpop.permute.xlu0 %6449
        %6451 = vrot.lane.b32.xlu0 %v6292, 64
        %v6452 = vpop.permute.xlu0 %6451
        %6469 = vmatpush.msra.mxu0 %v6452
        %6470 = vmatpush.msra.mxu0 %v6450
        %6471 = vmatpush.msra.mxu0 %v6448
        %6472 = vmatpush.msra.mxu0 %v6446
        %6473 = vmatpush.msra.mxu0 %v6444
        %6474 = vmatpush.msra.mxu0 %v6442
        %6475 = vmatpush.msra.mxu0 %v6440
        %6476 = vmatpush.msra.mxu0 %v6438
        %6477 = vmatpush.msra.mxu0 %v6436
        %6478 = vmatpush.msra.mxu0 %v6434
        %6479 = vmatpush.msra.mxu0 %v6432
        %6480 = vmatpush.msra.mxu0 %v6430
        %6481 = vmatpush.msra.mxu0 %v6428
        %6482 = vmatpush.msra.mxu0 %v6426
        %6483 = vmatpush.msra.mxu0 %v6424
        %6484 = vmatpush.msra.mxu0 %v6422
        %6485 = vmatmul.f32.gmra.mxu0 %v5971
        %v6486 = vpop.f32.mrf.mxu0
        %v6487 = vadd.f32 0.0, %v6486
        %6488 = vmatmul.f32.gmra.mxu0 %v5986
        %v6489 = vpop.f32.mrf.mxu0
        %v6490 = vadd.f32 0.0, %v6489
        %6491 = vdwg.mxu0
        %6508 = vrot.lane.b32.xlu0 %v6293, 64
        %v6509 = vpop.permute.xlu0 %6508
        %6510 = vrot.lane.b32.xlu0 %v6294, 64
        %v6511 = vpop.permute.xlu0 %6510
        %6512 = vrot.lane.b32.xlu0 %v6295, 64
        %v6513 = vpop.permute.xlu0 %6512
        %6514 = vrot.lane.b32.xlu0 %v6296, 64
        %v6515 = vpop.permute.xlu0 %6514
        %6516 = vrot.lane.b32.xlu0 %v6297, 64
        %v6517 = vpop.permute.xlu0 %6516
        %6518 = vrot.lane.b32.xlu0 %v6298, 64
        %v6519 = vpop.permute.xlu0 %6518
        %6520 = vrot.lane.b32.xlu0 %v6299, 64
        %v6521 = vpop.permute.xlu0 %6520
        %6522 = vrot.lane.b32.xlu0 %v6300, 64
        %v6523 = vpop.permute.xlu0 %6522
        %6524 = vrot.lane.b32.xlu0 %v6301, 64
        %v6525 = vpop.permute.xlu0 %6524
        %6526 = vrot.lane.b32.xlu0 %v6302, 64
        %v6527 = vpop.permute.xlu0 %6526
        %6528 = vrot.lane.b32.xlu0 %v6303, 64
        %v6529 = vpop.permute.xlu0 %6528
        %6530 = vrot.lane.b32.xlu0 %v6304, 64
        %v6531 = vpop.permute.xlu0 %6530
        %6532 = vrot.lane.b32.xlu0 %v6305, 64
        %v6533 = vpop.permute.xlu0 %6532
        %6534 = vrot.lane.b32.xlu0 %v6306, 64
        %v6535 = vpop.permute.xlu0 %6534
        %6536 = vrot.lane.b32.xlu0 %v6307, 64
        %v6537 = vpop.permute.xlu0 %6536
        %6538 = vrot.lane.b32.xlu0 %v6308, 64
        %v6539 = vpop.permute.xlu0 %6538
        %6556 = vmatpush.msra.mxu0 %v6539
        %6557 = vmatpush.msra.mxu0 %v6537
        %6558 = vmatpush.msra.mxu0 %v6535
        %6559 = vmatpush.msra.mxu0 %v6533
        %6560 = vmatpush.msra.mxu0 %v6531
        %6561 = vmatpush.msra.mxu0 %v6529
        %6562 = vmatpush.msra.mxu0 %v6527
        %6563 = vmatpush.msra.mxu0 %v6525
        %6564 = vmatpush.msra.mxu0 %v6523
        %6565 = vmatpush.msra.mxu0 %v6521
        %6566 = vmatpush.msra.mxu0 %v6519
        %6567 = vmatpush.msra.mxu0 %v6517
        %6568 = vmatpush.msra.mxu0 %v6515
        %6569 = vmatpush.msra.mxu0 %v6513
        %6570 = vmatpush.msra.mxu0 %v6511
        %6571 = vmatpush.msra.mxu0 %v6509
        %6572 = vmatmul.f32.gmra.mxu0 %v6001
        %v6573 = vpop.f32.mrf.mxu0
        %v6574 = vadd.f32 0.0, %v6573
        %6575 = vmatmul.f32.gmra.mxu0 %v6016
        %v6576 = vpop.f32.mrf.mxu0
        %v6577 = vadd.f32 0.0, %v6576
        %6578 = vdwg.mxu0
        %6595 = vrot.lane.b32.xlu0 %v6309, 64
        %v6596 = vpop.permute.xlu0 %6595
        %6597 = vrot.lane.b32.xlu0 %v6310, 64
        %v6598 = vpop.permute.xlu0 %6597
        %6599 = vrot.lane.b32.xlu0 %v6311, 64
        %v6600 = vpop.permute.xlu0 %6599
        %6601 = vrot.lane.b32.xlu0 %v6312, 64
        %v6602 = vpop.permute.xlu0 %6601
        %6603 = vrot.lane.b32.xlu0 %v6313, 64
        %v6604 = vpop.permute.xlu0 %6603
        %6605 = vrot.lane.b32.xlu0 %v6314, 64
        %v6606 = vpop.permute.xlu0 %6605
        %6607 = vrot.lane.b32.xlu0 %v6315, 64
        %v6608 = vpop.permute.xlu0 %6607
        %6609 = vrot.lane.b32.xlu0 %v6316, 64
        %v6610 = vpop.permute.xlu0 %6609
        %6611 = vrot.lane.b32.xlu0 %v6317, 64
        %v6612 = vpop.permute.xlu0 %6611
        %6613 = vrot.lane.b32.xlu0 %v6318, 64
        %v6614 = vpop.permute.xlu0 %6613
        %6615 = vrot.lane.b32.xlu0 %v6319, 64
        %v6616 = vpop.permute.xlu0 %6615
        %6617 = vrot.lane.b32.xlu0 %v6320, 64
        %v6618 = vpop.permute.xlu0 %6617
        %6619 = vrot.lane.b32.xlu0 %v6321, 64
        %v6620 = vpop.permute.xlu0 %6619
        %6621 = vrot.lane.b32.xlu0 %v6322, 64
        %v6622 = vpop.permute.xlu0 %6621
        %6623 = vrot.lane.b32.xlu0 %v6323, 64
        %v6624 = vpop.permute.xlu0 %6623
        %6625 = vrot.lane.b32.xlu0 %v6324, 64
        %v6626 = vpop.permute.xlu0 %6625
        %6643 = vmatpush.msra.mxu0 %v6626
        %6644 = vmatpush.msra.mxu0 %v6624
        %6645 = vmatpush.msra.mxu0 %v6622
        %6646 = vmatpush.msra.mxu0 %v6620
        %6647 = vmatpush.msra.mxu0 %v6618
        %6648 = vmatpush.msra.mxu0 %v6616
        %6649 = vmatpush.msra.mxu0 %v6614
        %6650 = vmatpush.msra.mxu0 %v6612
        %6651 = vmatpush.msra.mxu0 %v6610
        %6652 = vmatpush.msra.mxu0 %v6608
        %6653 = vmatpush.msra.mxu0 %v6606
        %6654 = vmatpush.msra.mxu0 %v6604
        %6655 = vmatpush.msra.mxu0 %v6602
        %6656 = vmatpush.msra.mxu0 %v6600
        %6657 = vmatpush.msra.mxu0 %v6598
        %6658 = vmatpush.msra.mxu0 %v6596
        %6659 = vmatmul.f32.gmra.mxu0 %v6031
        %v6660 = vpop.f32.mrf.mxu0
        %v6661 = vadd.f32 0.0, %v6660
        %6662 = vmatmul.f32.gmra.mxu0 %v6046
        %v6663 = vpop.f32.mrf.mxu0
        %v6664 = vadd.f32 0.0, %v6663
        %6665 = vdwg.mxu0
        %6682 = vrot.lane.b32.xlu0 %v6325, 64
        %v6683 = vpop.permute.xlu0 %6682
        %6684 = vrot.lane.b32.xlu0 %v6326, 64
        %v6685 = vpop.permute.xlu0 %6684
        %6686 = vrot.lane.b32.xlu0 %v6327, 64
        %v6687 = vpop.permute.xlu0 %6686
        %6688 = vrot.lane.b32.xlu0 %v6328, 64
        %v6689 = vpop.permute.xlu0 %6688
        %6690 = vrot.lane.b32.xlu0 %v6329, 64
        %v6691 = vpop.permute.xlu0 %6690
        %6692 = vrot.lane.b32.xlu0 %v6330, 64
        %v6693 = vpop.permute.xlu0 %6692
        %6694 = vrot.lane.b32.xlu0 %v6331, 64
        %v6695 = vpop.permute.xlu0 %6694
        %6696 = vrot.lane.b32.xlu0 %v6332, 64
        %v6697 = vpop.permute.xlu0 %6696
        %6698 = vrot.lane.b32.xlu0 %v6333, 64
        %v6699 = vpop.permute.xlu0 %6698
        %6700 = vrot.lane.b32.xlu0 %v6334, 64
        %v6701 = vpop.permute.xlu0 %6700
        %6702 = vrot.lane.b32.xlu0 %v6335, 64
        %v6703 = vpop.permute.xlu0 %6702
        %6704 = vrot.lane.b32.xlu0 %v6336, 64
        %v6705 = vpop.permute.xlu0 %6704
        %6706 = vrot.lane.b32.xlu0 %v6337, 64
        %v6707 = vpop.permute.xlu0 %6706
        %6708 = vrot.lane.b32.xlu0 %v6338, 64
        %v6709 = vpop.permute.xlu0 %6708
        %6710 = vrot.lane.b32.xlu0 %v6339, 64
        %v6711 = vpop.permute.xlu0 %6710
        %6712 = vrot.lane.b32.xlu0 %v6340, 64
        %v6713 = vpop.permute.xlu0 %6712
        %6730 = vmatpush.msra.mxu0 %v6713
        %6731 = vmatpush.msra.mxu0 %v6711
        %6732 = vmatpush.msra.mxu0 %v6709
        %6733 = vmatpush.msra.mxu0 %v6707
        %6734 = vmatpush.msra.mxu0 %v6705
        %6735 = vmatpush.msra.mxu0 %v6703
        %6736 = vmatpush.msra.mxu0 %v6701
        %6737 = vmatpush.msra.mxu0 %v6699
        %6738 = vmatpush.msra.mxu0 %v6697
        %6739 = vmatpush.msra.mxu0 %v6695
        %6740 = vmatpush.msra.mxu0 %v6693
        %6741 = vmatpush.msra.mxu0 %v6691
        %6742 = vmatpush.msra.mxu0 %v6689
        %6743 = vmatpush.msra.mxu0 %v6687
        %6744 = vmatpush.msra.mxu0 %v6685
        %6745 = vmatpush.msra.mxu0 %v6683
        %6746 = vmatmul.f32.gmra.mxu0 %v6061
        %v6747 = vpop.f32.mrf.mxu0
        %v6748 = vadd.f32 0.0, %v6747
        %6749 = vmatmul.f32.gmra.mxu0 %v6076
        %v6750 = vpop.f32.mrf.mxu0
        %v6751 = vadd.f32 0.0, %v6750
        %6752 = vdwg.mxu0
        %6769 = vrot.lane.b32.xlu0 %v6341, 64
        %v6770 = vpop.permute.xlu0 %6769
        %6771 = vrot.lane.b32.xlu0 %v6342, 64
        %v6772 = vpop.permute.xlu0 %6771
        %6773 = vrot.lane.b32.xlu0 %v6343, 64
        %v6774 = vpop.permute.xlu0 %6773
        %6775 = vrot.lane.b32.xlu0 %v6344, 64
        %v6776 = vpop.permute.xlu0 %6775
        %6777 = vrot.lane.b32.xlu0 %v6345, 64
        %v6778 = vpop.permute.xlu0 %6777
        %6779 = vrot.lane.b32.xlu0 %v6346, 64
        %v6780 = vpop.permute.xlu0 %6779
        %6781 = vrot.lane.b32.xlu0 %v6347, 64
        %v6782 = vpop.permute.xlu0 %6781
        %6783 = vrot.lane.b32.xlu0 %v6348, 64
        %v6784 = vpop.permute.xlu0 %6783
        %6785 = vrot.lane.b32.xlu0 %v6349, 64
        %v6786 = vpop.permute.xlu0 %6785
        %6787 = vrot.lane.b32.xlu0 %v6350, 64
        %v6788 = vpop.permute.xlu0 %6787
        %6789 = vrot.lane.b32.xlu0 %v6351, 64
        %v6790 = vpop.permute.xlu0 %6789
        %6791 = vrot.lane.b32.xlu0 %v6352, 64
        %v6792 = vpop.permute.xlu0 %6791
        %6793 = vrot.lane.b32.xlu0 %v6353, 64
        %v6794 = vpop.permute.xlu0 %6793
        %6795 = vrot.lane.b32.xlu0 %v6354, 64
        %v6796 = vpop.permute.xlu0 %6795
        %6797 = vrot.lane.b32.xlu0 %v6355, 64
        %v6798 = vpop.permute.xlu0 %6797
        %6799 = vrot.lane.b32.xlu0 %v6356, 64
        %v6800 = vpop.permute.xlu0 %6799
        %6817 = vmatpush.msra.mxu0 %v6800
        %6818 = vmatpush.msra.mxu0 %v6798
        %6819 = vmatpush.msra.mxu0 %v6796
        %6820 = vmatpush.msra.mxu0 %v6794
        %6821 = vmatpush.msra.mxu0 %v6792
        %6822 = vmatpush.msra.mxu0 %v6790
        %6823 = vmatpush.msra.mxu0 %v6788
        %6824 = vmatpush.msra.mxu0 %v6786
        %6825 = vmatpush.msra.mxu0 %v6784
        %6826 = vmatpush.msra.mxu0 %v6782
        %6827 = vmatpush.msra.mxu0 %v6780
        %6828 = vmatpush.msra.mxu0 %v6778
        %6829 = vmatpush.msra.mxu0 %v6776
        %6830 = vmatpush.msra.mxu0 %v6774
        %6831 = vmatpush.msra.mxu0 %v6772
        %6832 = vmatpush.msra.mxu0 %v6770
        %6833 = vmatmul.f32.gmra.mxu0 %v6091
        %v6834 = vpop.f32.mrf.mxu0
        %v6835 = vadd.f32 0.0, %v6834
        %6836 = vmatmul.f32.gmra.mxu0 %v6106
        %v6837 = vpop.f32.mrf.mxu0
        %v6838 = vadd.f32 0.0, %v6837
        %6839 = vdwg.mxu0
        %6856 = vrot.lane.b32.xlu0 %v6357, 64
        %v6857 = vpop.permute.xlu0 %6856
        %6858 = vrot.lane.b32.xlu0 %v6358, 64
        %v6859 = vpop.permute.xlu0 %6858
        %6860 = vrot.lane.b32.xlu0 %v6359, 64
        %v6861 = vpop.permute.xlu0 %6860
        %6862 = vrot.lane.b32.xlu0 %v6360, 64
        %v6863 = vpop.permute.xlu0 %6862
        %6864 = vrot.lane.b32.xlu0 %v6361, 64
        %v6865 = vpop.permute.xlu0 %6864
        %6866 = vrot.lane.b32.xlu0 %v6362, 64
        %v6867 = vpop.permute.xlu0 %6866
        %6868 = vrot.lane.b32.xlu0 %v6363, 64
        %v6869 = vpop.permute.xlu0 %6868
        %6870 = vrot.lane.b32.xlu0 %v6364, 64
        %v6871 = vpop.permute.xlu0 %6870
        %6872 = vrot.lane.b32.xlu0 %v6365, 64
        %v6873 = vpop.permute.xlu0 %6872
        %6874 = vrot.lane.b32.xlu0 %v6366, 64
        %v6875 = vpop.permute.xlu0 %6874
        %6876 = vrot.lane.b32.xlu0 %v6367, 64
        %v6877 = vpop.permute.xlu0 %6876
        %6878 = vrot.lane.b32.xlu0 %v6368, 64
        %v6879 = vpop.permute.xlu0 %6878
        %6880 = vrot.lane.b32.xlu0 %v6369, 64
        %v6881 = vpop.permute.xlu0 %6880
        %6882 = vrot.lane.b32.xlu0 %v6370, 64
        %v6883 = vpop.permute.xlu0 %6882
        %6884 = vrot.lane.b32.xlu0 %v6371, 64
        %v6885 = vpop.permute.xlu0 %6884
        %6886 = vrot.lane.b32.xlu0 %v6372, 64
        %v6887 = vpop.permute.xlu0 %6886
        %6904 = vmatpush.msra.mxu0 %v6887
        %6905 = vmatpush.msra.mxu0 %v6885
        %6906 = vmatpush.msra.mxu0 %v6883
        %6907 = vmatpush.msra.mxu0 %v6881
        %6908 = vmatpush.msra.mxu0 %v6879
        %6909 = vmatpush.msra.mxu0 %v6877
        %6910 = vmatpush.msra.mxu0 %v6875
        %6911 = vmatpush.msra.mxu0 %v6873
        %6912 = vmatpush.msra.mxu0 %v6871
        %6913 = vmatpush.msra.mxu0 %v6869
        %6914 = vmatpush.msra.mxu0 %v6867
        %6915 = vmatpush.msra.mxu0 %v6865
        %6916 = vmatpush.msra.mxu0 %v6863
        %6917 = vmatpush.msra.mxu0 %v6861
        %6918 = vmatpush.msra.mxu0 %v6859
        %6919 = vmatpush.msra.mxu0 %v6857
        %6920 = vmatmul.f32.gmra.mxu0 %v6121
        %v6921 = vpop.f32.mrf.mxu0
        %v6922 = vadd.f32 0.0, %v6921
        %6923 = vmatmul.f32.gmra.mxu0 %v6136
        %v6924 = vpop.f32.mrf.mxu0
        %v6925 = vadd.f32 0.0, %v6924
        %6926 = vdwg.mxu0
        %6943 = vrot.lane.b32.xlu0 %v6373, 64
        %v6944 = vpop.permute.xlu0 %6943
        %6945 = vrot.lane.b32.xlu0 %v6374, 64
        %v6946 = vpop.permute.xlu0 %6945
        %6947 = vrot.lane.b32.xlu0 %v6375, 64
        %v6948 = vpop.permute.xlu0 %6947
        %6949 = vrot.lane.b32.xlu0 %v6376, 64
        %v6950 = vpop.permute.xlu0 %6949
        %6951 = vrot.lane.b32.xlu0 %v6377, 64
        %v6952 = vpop.permute.xlu0 %6951
        %6953 = vrot.lane.b32.xlu0 %v6378, 64
        %v6954 = vpop.permute.xlu0 %6953
        %6955 = vrot.lane.b32.xlu0 %v6379, 64
        %v6956 = vpop.permute.xlu0 %6955
        %6957 = vrot.lane.b32.xlu0 %v6380, 64
        %v6958 = vpop.permute.xlu0 %6957
        %6959 = vrot.lane.b32.xlu0 %v6381, 64
        %v6960 = vpop.permute.xlu0 %6959
        %6961 = vrot.lane.b32.xlu0 %v6382, 64
        %v6962 = vpop.permute.xlu0 %6961
        %6963 = vrot.lane.b32.xlu0 %v6383, 64
        %v6964 = vpop.permute.xlu0 %6963
        %6965 = vrot.lane.b32.xlu0 %v6384, 64
        %v6966 = vpop.permute.xlu0 %6965
        %6967 = vrot.lane.b32.xlu0 %v6385, 64
        %v6968 = vpop.permute.xlu0 %6967
        %6969 = vrot.lane.b32.xlu0 %v6386, 64
        %v6970 = vpop.permute.xlu0 %6969
        %6971 = vrot.lane.b32.xlu0 %v6387, 64
        %v6972 = vpop.permute.xlu0 %6971
        %6973 = vrot.lane.b32.xlu0 %v6388, 64
        %v6974 = vpop.permute.xlu0 %6973
        %6991 = vmatpush.msra.mxu0 %v6974
        %6992 = vmatpush.msra.mxu0 %v6972
        %6993 = vmatpush.msra.mxu0 %v6970
        %6994 = vmatpush.msra.mxu0 %v6968
        %6995 = vmatpush.msra.mxu0 %v6966
        %6996 = vmatpush.msra.mxu0 %v6964
        %6997 = vmatpush.msra.mxu0 %v6962
        %6998 = vmatpush.msra.mxu0 %v6960
        %6999 = vmatpush.msra.mxu0 %v6958
        %7000 = vmatpush.msra.mxu0 %v6956
        %7001 = vmatpush.msra.mxu0 %v6954
        %7002 = vmatpush.msra.mxu0 %v6952
        %7003 = vmatpush.msra.mxu0 %v6950
        %7004 = vmatpush.msra.mxu0 %v6948
        %7005 = vmatpush.msra.mxu0 %v6946
        %7006 = vmatpush.msra.mxu0 %v6944
        %7007 = vmatmul.f32.gmra.mxu0 %v6151
        %v7008 = vpop.f32.mrf.mxu0
        %v7009 = vadd.f32 0.0, %v7008
        %7010 = vmatmul.f32.gmra.mxu0 %v6166
        %v7011 = vpop.f32.mrf.mxu0
        %v7012 = vadd.f32 0.0, %v7011
        %7013 = vdwg.mxu0
        %7030 = vrot.lane.b32.xlu0 %v6389, 64
        %v7031 = vpop.permute.xlu0 %7030
        %7032 = vrot.lane.b32.xlu0 %v6390, 64
        %v7033 = vpop.permute.xlu0 %7032
        %7034 = vrot.lane.b32.xlu0 %v6391, 64
        %v7035 = vpop.permute.xlu0 %7034
        %7036 = vrot.lane.b32.xlu0 %v6392, 64
        %v7037 = vpop.permute.xlu0 %7036
        %7038 = vrot.lane.b32.xlu0 %v6393, 64
        %v7039 = vpop.permute.xlu0 %7038
        %7040 = vrot.lane.b32.xlu0 %v6394, 64
        %v7041 = vpop.permute.xlu0 %7040
        %7042 = vrot.lane.b32.xlu0 %v6395, 64
        %v7043 = vpop.permute.xlu0 %7042
        %7044 = vrot.lane.b32.xlu0 %v6396, 64
        %v7045 = vpop.permute.xlu0 %7044
        %7046 = vrot.lane.b32.xlu0 %v6397, 64
        %v7047 = vpop.permute.xlu0 %7046
        %7048 = vrot.lane.b32.xlu0 %v6398, 64
        %v7049 = vpop.permute.xlu0 %7048
        %7050 = vrot.lane.b32.xlu0 %v6399, 64
        %v7051 = vpop.permute.xlu0 %7050
        %7052 = vrot.lane.b32.xlu0 %v6400, 64
        %v7053 = vpop.permute.xlu0 %7052
        %7054 = vrot.lane.b32.xlu0 %v6401, 64
        %v7055 = vpop.permute.xlu0 %7054
        %7056 = vrot.lane.b32.xlu0 %v6402, 64
        %v7057 = vpop.permute.xlu0 %7056
        %7058 = vrot.lane.b32.xlu0 %v6403, 64
        %v7059 = vpop.permute.xlu0 %7058
        %7060 = vrot.lane.b32.xlu0 %v6404, 64
        %v7061 = vpop.permute.xlu0 %7060
        %7078 = vmatpush.msra.mxu0 %v7061
        %7079 = vmatpush.msra.mxu0 %v7059
        %7080 = vmatpush.msra.mxu0 %v7057
        %7081 = vmatpush.msra.mxu0 %v7055
        %7082 = vmatpush.msra.mxu0 %v7053
        %7083 = vmatpush.msra.mxu0 %v7051
        %7084 = vmatpush.msra.mxu0 %v7049
        %7085 = vmatpush.msra.mxu0 %v7047
        %7086 = vmatpush.msra.mxu0 %v7045
        %7087 = vmatpush.msra.mxu0 %v7043
        %7088 = vmatpush.msra.mxu0 %v7041
        %7089 = vmatpush.msra.mxu0 %v7039
        %7090 = vmatpush.msra.mxu0 %v7037
        %7091 = vmatpush.msra.mxu0 %v7035
        %7092 = vmatpush.msra.mxu0 %v7033
        %7093 = vmatpush.msra.mxu0 %v7031
        %7094 = vmatmul.f32.gmra.mxu0 %v6181
        %v7095 = vpop.f32.mrf.mxu0
        %v7096 = vadd.f32 0.0, %v7095
        %7097 = vmatmul.f32.gmra.mxu0 %v6196
        %v7098 = vpop.f32.mrf.mxu0
        %v7099 = vadd.f32 0.0, %v7098
        %7100 = vdwg.mxu0
        %v7101 = vld [vmem:[#allocation5] sm:$0xff]
        %v7102 = vld [vmem:[#allocation5 + $0x8] sm:$0xff]
        %v7103 = vld [vmem:[#allocation5 + $0x10] sm:$0xff]
        %v7104 = vld [vmem:[#allocation5 + $0x18] sm:$0xff]
        %v7105 = vld [vmem:[%s4] sm:$0x1]
        %v7107 = vperm.slane %v7105, 0
        %v7110 = vsel %vm1204, %v6487, 0
        %v7113 = vsel %vm1204, %v6490, 0
        %v7116 = vsel %vm1204, %v6574, 0
        %v7119 = vsel %vm1204, %v6577, 0
        %v7122 = vsel %vm1204, %v6661, 0
        %v7125 = vsel %vm1204, %v6664, 0
        %v7128 = vsel %vm1204, %v6748, 0
        %v7131 = vsel %vm1204, %v6751, 0
        %v7134 = vsel %vm1204, %v6835, 0
        %v7137 = vsel %vm1204, %v6838, 0
        %v7140 = vsel %vm1204, %v6922, 0
        %v7143 = vsel %vm1204, %v6925, 0
        %v7146 = vsel %vm1204, %v7009, 0
        %v7149 = vsel %vm1204, %v7012, 0
        %v7152 = vsel %vm1204, %v7096, 0
        %v7155 = vsel %vm1204, %v7099, 0
        %7157 = vmatpush.msra.mxu0 0.0
        %7158 = vmatpush.msra.mxu0 0.0
        %7159 = vmatpush.msra.mxu0 0.0
        %7160 = vmatpush.msra.mxu0 0.0
        %7161 = vmatpush.msra.mxu0 0.0
        %7162 = vmatpush.msra.mxu0 0.0
        %7163 = vmatpush.msra.mxu0 0.0
        %7164 = vmatpush.msra.mxu0 0.0
        %7165 = vmatpush.msra.mxu0 0.0
        %7166 = vmatpush.msra.mxu0 0.0
        %7167 = vmatpush.msra.mxu0 0.0
        %7168 = vmatpush.msra.mxu0 0.0
        %7169 = vmatpush.msra.mxu0 %v7104
        %7170 = vmatpush.msra.mxu0 %v7103
        %7171 = vmatpush.msra.mxu0 %v7102
        %7172 = vmatpush.msra.mxu0 %v7101
        %7173 = vmatmul.f32.gmra.mxu0 %v7110
        %v7174 = vpop.f32.mrf.mxu0
        %v7175 = vadd.f32 %v7107, %v7174
        %7176 = vmatmul.f32.gmra.mxu0 %v7113
        %v7177 = vpop.f32.mrf.mxu0
        %v7178 = vadd.f32 %v7107, %v7177
        %7179 = vmatmul.f32.gmra.mxu0 %v7116
        %v7180 = vpop.f32.mrf.mxu0
        %v7181 = vadd.f32 %v7107, %v7180
        %7182 = vmatmul.f32.gmra.mxu0 %v7119
        %v7183 = vpop.f32.mrf.mxu0
        %v7184 = vadd.f32 %v7107, %v7183
        %7185 = vmatmul.f32.gmra.mxu0 %v7122
        %v7186 = vpop.f32.mrf.mxu0
        %v7187 = vadd.f32 %v7107, %v7186
        %7188 = vmatmul.f32.gmra.mxu0 %v7125
        %v7189 = vpop.f32.mrf.mxu0
        %v7190 = vadd.f32 %v7107, %v7189
        %7191 = vmatmul.f32.gmra.mxu0 %v7128
        %v7192 = vpop.f32.mrf.mxu0
        %v7193 = vadd.f32 %v7107, %v7192
        %7194 = vmatmul.f32.gmra.mxu0 %v7131
        %v7195 = vpop.f32.mrf.mxu0
        %v7196 = vadd.f32 %v7107, %v7195
        %7197 = vmatmul.f32.gmra.mxu0 %v7134
        %v7198 = vpop.f32.mrf.mxu0
        %v7199 = vadd.f32 %v7107, %v7198
        %7200 = vmatmul.f32.gmra.mxu0 %v7137
        %v7201 = vpop.f32.mrf.mxu0
        %v7202 = vadd.f32 %v7107, %v7201
        %7203 = vmatmul.f32.gmra.mxu0 %v7140
        %v7204 = vpop.f32.mrf.mxu0
        %v7205 = vadd.f32 %v7107, %v7204
        %7206 = vmatmul.f32.gmra.mxu0 %v7143
        %v7207 = vpop.f32.mrf.mxu0
        %v7208 = vadd.f32 %v7107, %v7207
        %7209 = vmatmul.f32.gmra.mxu0 %v7146
        %v7210 = vpop.f32.mrf.mxu0
        %v7211 = vadd.f32 %v7107, %v7210
        %7212 = vmatmul.f32.gmra.mxu0 %v7149
        %v7213 = vpop.f32.mrf.mxu0
        %v7214 = vadd.f32 %v7107, %v7213
        %7215 = vmatmul.f32.gmra.mxu0 %v7152
        %v7216 = vpop.f32.mrf.mxu0
        %v7217 = vadd.f32 %v7107, %v7216
        %7218 = vmatmul.f32.gmra.mxu0 %v7155
        %v7219 = vpop.f32.mrf.mxu0
        %v7220 = vadd.f32 %v7107, %v7219
        %7221 = vdwg.mxu0
        %v7222 = vadd.f32 %v7175, %v956
        %v7223 = vadd.f32 %v7178, %v957
        %v7224 = vadd.f32 %v7181, %v988
        %v7225 = vadd.f32 %v7184, %v989
        %v7226 = vadd.f32 %v7187, %v1020
        %v7227 = vadd.f32 %v7190, %v1021
        %v7228 = vadd.f32 %v7193, %v1052
        %v7229 = vadd.f32 %v7196, %v1053
        %v7230 = vadd.f32 %v7199, %v1084
        %v7231 = vadd.f32 %v7202, %v1085
        %v7232 = vadd.f32 %v7205, %v1116
        %v7233 = vadd.f32 %v7208, %v1117
        %v7234 = vadd.f32 %v7211, %v1148
        %v7235 = vadd.f32 %v7214, %v1149
        %v7236 = vadd.f32 %v7217, %v1180
        %v7237 = vadd.f32 %v7220, %v1181
        %7238 = vxpose.xlu0.b32.start [1/16] %v7222, 128
        %7239 = vxpose.xlu0.b32.cont [2/16] %v7223, 128
        %7240 = vxpose.xlu0.b32.cont [3/16] 0.0, 128
        %7241 = vxpose.xlu0.b32.cont [4/16] 0.0, 128
        %7242 = vxpose.xlu0.b32.cont [5/16] 0.0, 128
        %7243 = vxpose.xlu0.b32.cont [6/16] 0.0, 128
        %7244 = vxpose.xlu0.b32.cont [7/16] 0.0, 128
        %7245 = vxpose.xlu0.b32.cont [8/16] 0.0, 128
        %7246 = vxpose.xlu0.b32.cont [9/16] 0.0, 128
        %7247 = vxpose.xlu0.b32.cont [10/16] 0.0, 128
        %7248 = vxpose.xlu0.b32.cont [11/16] 0.0, 128
        %7249 = vxpose.xlu0.b32.cont [12/16] 0.0, 128
        %7250 = vxpose.xlu0.b32.cont [13/16] 0.0, 128
        %7251 = vxpose.xlu0.b32.cont [14/16] 0.0, 128
        %7252 = vxpose.xlu0.b32.cont [15/16] 0.0, 128
        %7253 = vxpose.xlu0.b32.end [16/16] 0.0, 128
        %v7254 = vpop.trf.xlu0
        %v7255 = vpop.trf.xlu0
        %v7256 = vpop.trf.xlu0
        %v7257 = vpop.trf.xlu0
        %v7258 = vpop.trf.xlu0
        %v7259 = vpop.trf.xlu0
        %v7260 = vpop.trf.xlu0
        %v7261 = vpop.trf.xlu0
        %v7262 = vpop.trf.xlu0
        %v7263 = vpop.trf.xlu0
        %v7264 = vpop.trf.xlu0
        %v7265 = vpop.trf.xlu0
        %v7266 = vpop.trf.xlu0
        %v7267 = vpop.trf.xlu0
        %v7268 = vpop.trf.xlu0
        %v7269 = vpop.trf.xlu0
        %7270 = vxpose.xlu0.b32.start [1/16] %v7224, 128
        %7271 = vxpose.xlu0.b32.cont [2/16] %v7225, 128
        %7272 = vxpose.xlu0.b32.cont [3/16] 0.0, 128
        %7273 = vxpose.xlu0.b32.cont [4/16] 0.0, 128
        %7274 = vxpose.xlu0.b32.cont [5/16] 0.0, 128
        %7275 = vxpose.xlu0.b32.cont [6/16] 0.0, 128
        %7276 = vxpose.xlu0.b32.cont [7/16] 0.0, 128
        %7277 = vxpose.xlu0.b32.cont [8/16] 0.0, 128
        %7278 = vxpose.xlu0.b32.cont [9/16] 0.0, 128
        %7279 = vxpose.xlu0.b32.cont [10/16] 0.0, 128
        %7280 = vxpose.xlu0.b32.cont [11/16] 0.0, 128
        %7281 = vxpose.xlu0.b32.cont [12/16] 0.0, 128
        %7282 = vxpose.xlu0.b32.cont [13/16] 0.0, 128
        %7283 = vxpose.xlu0.b32.cont [14/16] 0.0, 128
        %7284 = vxpose.xlu0.b32.cont [15/16] 0.0, 128
        %7285 = vxpose.xlu0.b32.end [16/16] 0.0, 128
        %v7286 = vpop.trf.xlu0
        %v7287 = vpop.trf.xlu0
        %v7288 = vpop.trf.xlu0
        %v7289 = vpop.trf.xlu0
        %v7290 = vpop.trf.xlu0
        %v7291 = vpop.trf.xlu0
        %v7292 = vpop.trf.xlu0
        %v7293 = vpop.trf.xlu0
        %v7294 = vpop.trf.xlu0
        %v7295 = vpop.trf.xlu0
        %v7296 = vpop.trf.xlu0
        %v7297 = vpop.trf.xlu0
        %v7298 = vpop.trf.xlu0
        %v7299 = vpop.trf.xlu0
        %v7300 = vpop.trf.xlu0
        %v7301 = vpop.trf.xlu0
        %7302 = vxpose.xlu0.b32.start [1/16] %v7226, 128
        %7303 = vxpose.xlu0.b32.cont [2/16] %v7227, 128
        %7304 = vxpose.xlu0.b32.cont [3/16] 0.0, 128
        %7305 = vxpose.xlu0.b32.cont [4/16] 0.0, 128
        %7306 = vxpose.xlu0.b32.cont [5/16] 0.0, 128
        %7307 = vxpose.xlu0.b32.cont [6/16] 0.0, 128
        %7308 = vxpose.xlu0.b32.cont [7/16] 0.0, 128
        %7309 = vxpose.xlu0.b32.cont [8/16] 0.0, 128
        %7310 = vxpose.xlu0.b32.cont [9/16] 0.0, 128
        %7311 = vxpose.xlu0.b32.cont [10/16] 0.0, 128
        %7312 = vxpose.xlu0.b32.cont [11/16] 0.0, 128
        %7313 = vxpose.xlu0.b32.cont [12/16] 0.0, 128
        %7314 = vxpose.xlu0.b32.cont [13/16] 0.0, 128
        %7315 = vxpose.xlu0.b32.cont [14/16] 0.0, 128
        %7316 = vxpose.xlu0.b32.cont [15/16] 0.0, 128
        %7317 = vxpose.xlu0.b32.end [16/16] 0.0, 128
        %v7318 = vpop.trf.xlu0
        %v7319 = vpop.trf.xlu0
        %v7320 = vpop.trf.xlu0
        %v7321 = vpop.trf.xlu0
        %v7322 = vpop.trf.xlu0
        %v7323 = vpop.trf.xlu0
        %v7324 = vpop.trf.xlu0
        %v7325 = vpop.trf.xlu0
        %v7326 = vpop.trf.xlu0
        %v7327 = vpop.trf.xlu0
        %v7328 = vpop.trf.xlu0
        %v7329 = vpop.trf.xlu0
        %v7330 = vpop.trf.xlu0
        %v7331 = vpop.trf.xlu0
        %v7332 = vpop.trf.xlu0
        %v7333 = vpop.trf.xlu0
        %7334 = vxpose.xlu0.b32.start [1/16] %v7228, 128
        %7335 = vxpose.xlu0.b32.cont [2/16] %v7229, 128
        %7336 = vxpose.xlu0.b32.cont [3/16] 0.0, 128
        %7337 = vxpose.xlu0.b32.cont [4/16] 0.0, 128
        %7338 = vxpose.xlu0.b32.cont [5/16] 0.0, 128
        %7339 = vxpose.xlu0.b32.cont [6/16] 0.0, 128
        %7340 = vxpose.xlu0.b32.cont [7/16] 0.0, 128
        %7341 = vxpose.xlu0.b32.cont [8/16] 0.0, 128
        %7342 = vxpose.xlu0.b32.cont [9/16] 0.0, 128
        %7343 = vxpose.xlu0.b32.cont [10/16] 0.0, 128
        %7344 = vxpose.xlu0.b32.cont [11/16] 0.0, 128
        %7345 = vxpose.xlu0.b32.cont [12/16] 0.0, 128
        %7346 = vxpose.xlu0.b32.cont [13/16] 0.0, 128
        %7347 = vxpose.xlu0.b32.cont [14/16] 0.0, 128
        %7348 = vxpose.xlu0.b32.cont [15/16] 0.0, 128
        %7349 = vxpose.xlu0.b32.end [16/16] 0.0, 128
        %v7350 = vpop.trf.xlu0
        %v7351 = vpop.trf.xlu0
        %v7352 = vpop.trf.xlu0
        %v7353 = vpop.trf.xlu0
        %v7354 = vpop.trf.xlu0
        %v7355 = vpop.trf.xlu0
        %v7356 = vpop.trf.xlu0
        %v7357 = vpop.trf.xlu0
        %v7358 = vpop.trf.xlu0
        %v7359 = vpop.trf.xlu0
        %v7360 = vpop.trf.xlu0
        %v7361 = vpop.trf.xlu0
        %v7362 = vpop.trf.xlu0
        %v7363 = vpop.trf.xlu0
        %v7364 = vpop.trf.xlu0
        %v7365 = vpop.trf.xlu0
        %7366 = vxpose.xlu0.b32.start [1/16] %v7230, 128
        %7367 = vxpose.xlu0.b32.cont [2/16] %v7231, 128
        %7368 = vxpose.xlu0.b32.cont [3/16] 0.0, 128
        %7369 = vxpose.xlu0.b32.cont [4/16] 0.0, 128
        %7370 = vxpose.xlu0.b32.cont [5/16] 0.0, 128
        %7371 = vxpose.xlu0.b32.cont [6/16] 0.0, 128
        %7372 = vxpose.xlu0.b32.cont [7/16] 0.0, 128
        %7373 = vxpose.xlu0.b32.cont [8/16] 0.0, 128
        %7374 = vxpose.xlu0.b32.cont [9/16] 0.0, 128
        %7375 = vxpose.xlu0.b32.cont [10/16] 0.0, 128
        %7376 = vxpose.xlu0.b32.cont [11/16] 0.0, 128
        %7377 = vxpose.xlu0.b32.cont [12/16] 0.0, 128
        %7378 = vxpose.xlu0.b32.cont [13/16] 0.0, 128
        %7379 = vxpose.xlu0.b32.cont [14/16] 0.0, 128
        %7380 = vxpose.xlu0.b32.cont [15/16] 0.0, 128
        %7381 = vxpose.xlu0.b32.end [16/16] 0.0, 128
        %v7382 = vpop.trf.xlu0
        %v7383 = vpop.trf.xlu0
        %v7384 = vpop.trf.xlu0
        %v7385 = vpop.trf.xlu0
        %v7386 = vpop.trf.xlu0
        %v7387 = vpop.trf.xlu0
        %v7388 = vpop.trf.xlu0
        %v7389 = vpop.trf.xlu0
        %v7390 = vpop.trf.xlu0
        %v7391 = vpop.trf.xlu0
        %v7392 = vpop.trf.xlu0
        %v7393 = vpop.trf.xlu0
        %v7394 = vpop.trf.xlu0
        %v7395 = vpop.trf.xlu0
        %v7396 = vpop.trf.xlu0
        %v7397 = vpop.trf.xlu0
        %7398 = vxpose.xlu0.b32.start [1/16] %v7232, 128
        %7399 = vxpose.xlu0.b32.cont [2/16] %v7233, 128
        %7400 = vxpose.xlu0.b32.cont [3/16] 0.0, 128
        %7401 = vxpose.xlu0.b32.cont [4/16] 0.0, 128
        %7402 = vxpose.xlu0.b32.cont [5/16] 0.0, 128
        %7403 = vxpose.xlu0.b32.cont [6/16] 0.0, 128
        %7404 = vxpose.xlu0.b32.cont [7/16] 0.0, 128
        %7405 = vxpose.xlu0.b32.cont [8/16] 0.0, 128
        %7406 = vxpose.xlu0.b32.cont [9/16] 0.0, 128
        %7407 = vxpose.xlu0.b32.cont [10/16] 0.0, 128
        %7408 = vxpose.xlu0.b32.cont [11/16] 0.0, 128
        %7409 = vxpose.xlu0.b32.cont [12/16] 0.0, 128
        %7410 = vxpose.xlu0.b32.cont [13/16] 0.0, 128
        %7411 = vxpose.xlu0.b32.cont [14/16] 0.0, 128
        %7412 = vxpose.xlu0.b32.cont [15/16] 0.0, 128
        %7413 = vxpose.xlu0.b32.end [16/16] 0.0, 128
        %v7414 = vpop.trf.xlu0
        %v7415 = vpop.trf.xlu0
        %v7416 = vpop.trf.xlu0
        %v7417 = vpop.trf.xlu0
        %v7418 = vpop.trf.xlu0
        %v7419 = vpop.trf.xlu0
        %v7420 = vpop.trf.xlu0
        %v7421 = vpop.trf.xlu0
        %v7422 = vpop.trf.xlu0
        %v7423 = vpop.trf.xlu0
        %v7424 = vpop.trf.xlu0
        %v7425 = vpop.trf.xlu0
        %v7426 = vpop.trf.xlu0
        %v7427 = vpop.trf.xlu0
        %v7428 = vpop.trf.xlu0
        %v7429 = vpop.trf.xlu0
        %7430 = vxpose.xlu0.b32.start [1/16] %v7234, 128
        %7431 = vxpose.xlu0.b32.cont [2/16] %v7235, 128
        %7432 = vxpose.xlu0.b32.cont [3/16] 0.0, 128
        %7433 = vxpose.xlu0.b32.cont [4/16] 0.0, 128
        %7434 = vxpose.xlu0.b32.cont [5/16] 0.0, 128
        %7435 = vxpose.xlu0.b32.cont [6/16] 0.0, 128
        %7436 = vxpose.xlu0.b32.cont [7/16] 0.0, 128
        %7437 = vxpose.xlu0.b32.cont [8/16] 0.0, 128
        %7438 = vxpose.xlu0.b32.cont [9/16] 0.0, 128
        %7439 = vxpose.xlu0.b32.cont [10/16] 0.0, 128
        %7440 = vxpose.xlu0.b32.cont [11/16] 0.0, 128
        %7441 = vxpose.xlu0.b32.cont [12/16] 0.0, 128
        %7442 = vxpose.xlu0.b32.cont [13/16] 0.0, 128
        %7443 = vxpose.xlu0.b32.cont [14/16] 0.0, 128
        %7444 = vxpose.xlu0.b32.cont [15/16] 0.0, 128
        %7445 = vxpose.xlu0.b32.end [16/16] 0.0, 128
        %v7446 = vpop.trf.xlu0
        %v7447 = vpop.trf.xlu0
        %v7448 = vpop.trf.xlu0
        %v7449 = vpop.trf.xlu0
        %v7450 = vpop.trf.xlu0
        %v7451 = vpop.trf.xlu0
        %v7452 = vpop.trf.xlu0
        %v7453 = vpop.trf.xlu0
        %v7454 = vpop.trf.xlu0
        %v7455 = vpop.trf.xlu0
        %v7456 = vpop.trf.xlu0
        %v7457 = vpop.trf.xlu0
        %v7458 = vpop.trf.xlu0
        %v7459 = vpop.trf.xlu0
        %v7460 = vpop.trf.xlu0
        %v7461 = vpop.trf.xlu0
        %7462 = vxpose.xlu0.b32.start [1/16] %v7236, 128
        %7463 = vxpose.xlu0.b32.cont [2/16] %v7237, 128
        %7464 = vxpose.xlu0.b32.cont [3/16] 0.0, 128
        %7465 = vxpose.xlu0.b32.cont [4/16] 0.0, 128
        %7466 = vxpose.xlu0.b32.cont [5/16] 0.0, 128
        %7467 = vxpose.xlu0.b32.cont [6/16] 0.0, 128
        %7468 = vxpose.xlu0.b32.cont [7/16] 0.0, 128
        %7469 = vxpose.xlu0.b32.cont [8/16] 0.0, 128
        %7470 = vxpose.xlu0.b32.cont [9/16] 0.0, 128
        %7471 = vxpose.xlu0.b32.cont [10/16] 0.0, 128
        %7472 = vxpose.xlu0.b32.cont [11/16] 0.0, 128
        %7473 = vxpose.xlu0.b32.cont [12/16] 0.0, 128
        %7474 = vxpose.xlu0.b32.cont [13/16] 0.0, 128
        %7475 = vxpose.xlu0.b32.cont [14/16] 0.0, 128
        %7476 = vxpose.xlu0.b32.cont [15/16] 0.0, 128
        %7477 = vxpose.xlu0.b32.end [16/16] 0.0, 128
        %v7478 = vpop.trf.xlu0
        %v7479 = vpop.trf.xlu0
        %v7480 = vpop.trf.xlu0
        %v7481 = vpop.trf.xlu0
        %v7482 = vpop.trf.xlu0
        %v7483 = vpop.trf.xlu0
        %v7484 = vpop.trf.xlu0
        %v7485 = vpop.trf.xlu0
        %v7486 = vpop.trf.xlu0
        %v7487 = vpop.trf.xlu0
        %v7488 = vpop.trf.xlu0
        %v7489 = vpop.trf.xlu0
        %v7490 = vpop.trf.xlu0
        %v7491 = vpop.trf.xlu0
        %v7492 = vpop.trf.xlu0
        %v7493 = vpop.trf.xlu0
        %v7494 = vrot.slane %v7318, 4
        %v7495 = vsel %vm492, %v7494, %v7254
        %v7496 = vrot.slane %v7254, 4
        %v7497 = vsel %vm492, %v7318, %v7496
        %v7499 = vunpack.c.l.s4 1983009808
        %v7500 = vunpack.c.0.s8 %v7499
        %v7501 = vperm.slane %v7495, %v7500
        %v7503 = vunpack.c.l.s4 1983009808
        %v7504 = vunpack.c.0.s8 %v7503
        %v7505 = vperm.slane %v7497, %v7504
        %v7506 = vrot.slane %v7350, 4
        %v7507 = vsel %vm492, %v7506, %v7286
        %v7508 = vrot.slane %v7286, 4
        %v7509 = vsel %vm492, %v7350, %v7508
        %v7511 = vunpack.c.l.s4 1983009808
        %v7512 = vunpack.c.0.s8 %v7511
        %v7513 = vperm.slane %v7507, %v7512
        %v7515 = vunpack.c.l.s4 1983009808
        %v7516 = vunpack.c.0.s8 %v7515
        %v7517 = vperm.slane %v7509, %v7516
        %v7518 = vrot.slane %v7446, 4
        %v7519 = vsel %vm492, %v7518, %v7382
        %v7520 = vrot.slane %v7382, 4
        %v7521 = vsel %vm492, %v7446, %v7520
        %v7523 = vunpack.c.l.s4 1983009808
        %v7524 = vunpack.c.0.s8 %v7523
        %v7525 = vperm.slane %v7519, %v7524
        %v7527 = vunpack.c.l.s4 1983009808
        %v7528 = vunpack.c.0.s8 %v7527
        %v7529 = vperm.slane %v7521, %v7528
        %v7530 = vrot.slane %v7478, 4
        %v7531 = vsel %vm492, %v7530, %v7414
        %v7532 = vrot.slane %v7414, 4
        %v7533 = vsel %vm492, %v7478, %v7532
        %v7535 = vunpack.c.l.s4 1983009808
        %v7536 = vunpack.c.0.s8 %v7535
        %v7537 = vperm.slane %v7531, %v7536
        %v7539 = vunpack.c.l.s4 1983009808
        %v7540 = vunpack.c.0.s8 %v7539
        %v7541 = vperm.slane %v7533, %v7540
        %v7542 = vrot.slane %v7513, 4
        %v7543 = vsel %vm492, %v7542, %v7501
        %v7544 = vrot.slane %v7501, 4
        %v7545 = vsel %vm492, %v7513, %v7544
        %v7547 = vunpack.c.l.s4 1934713408
        %v7548 = vunpack.c.0.s8 %v7547
        %v7549 = vperm.slane %v7543, %v7548
        %v7551 = vunpack.c.l.s4 1934713408
        %v7552 = vunpack.c.0.s8 %v7551
        %v7553 = vperm.slane %v7545, %v7552
        %v7554 = vrot.slane %v7517, 4
        %v7555 = vsel %vm492, %v7554, %v7505
        %v7556 = vrot.slane %v7505, 4
        %v7557 = vsel %vm492, %v7517, %v7556
        %v7559 = vunpack.c.l.s4 1934713408
        %v7560 = vunpack.c.0.s8 %v7559
        %v7561 = vperm.slane %v7555, %v7560
        %v7563 = vunpack.c.l.s4 1934713408
        %v7564 = vunpack.c.0.s8 %v7563
        %v7565 = vperm.slane %v7557, %v7564
        %v7566 = vrot.slane %v7537, 4
        %v7567 = vsel %vm492, %v7566, %v7525
        %v7568 = vrot.slane %v7525, 4
        %v7569 = vsel %vm492, %v7537, %v7568
        %v7571 = vunpack.c.l.s4 1934713408
        %v7572 = vunpack.c.0.s8 %v7571
        %v7573 = vperm.slane %v7567, %v7572
        %v7575 = vunpack.c.l.s4 1934713408
        %v7576 = vunpack.c.0.s8 %v7575
        %v7577 = vperm.slane %v7569, %v7576
        %v7578 = vrot.slane %v7541, 4
        %v7579 = vsel %vm492, %v7578, %v7529
        %v7580 = vrot.slane %v7529, 4
        %v7581 = vsel %vm492, %v7541, %v7580
        %v7583 = vunpack.c.l.s4 1934713408
        %v7584 = vunpack.c.0.s8 %v7583
        %v7585 = vperm.slane %v7579, %v7584
        %v7587 = vunpack.c.l.s4 1934713408
        %v7588 = vunpack.c.0.s8 %v7587
        %v7589 = vperm.slane %v7581, %v7588
        %v7590 = vrot.slane %v7573, 4
        %v7591 = vsel %vm492, %v7590, %v7549
        %v7592 = vrot.slane %v7549, 4
        %v7593 = vsel %vm492, %v7573, %v7592
        %v7594 = vrot.slane %v7577, 4
        %v7595 = vsel %vm492, %v7594, %v7553
        %v7596 = vrot.slane %v7553, 4
        %v7597 = vsel %vm492, %v7577, %v7596
        %v7598 = vrot.slane %v7585, 4
        %v7599 = vsel %vm492, %v7598, %v7561
        %v7600 = vrot.slane %v7561, 4
        %v7601 = vsel %vm492, %v7585, %v7600
        %v7602 = vrot.slane %v7589, 4
        %v7603 = vsel %vm492, %v7602, %v7565
        %v7604 = vrot.slane %v7565, 4
        %v7605 = vsel %vm492, %v7589, %v7604
        %v7606 = vrot.slane %v7319, 4
        %v7607 = vsel %vm492, %v7606, %v7255
        %v7608 = vrot.slane %v7255, 4
        %v7609 = vsel %vm492, %v7319, %v7608
        %v7611 = vunpack.c.l.s4 1983009808
        %v7612 = vunpack.c.0.s8 %v7611
        %v7613 = vperm.slane %v7607, %v7612
        %v7615 = vunpack.c.l.s4 1983009808
        %v7616 = vunpack.c.0.s8 %v7615
        %v7617 = vperm.slane %v7609, %v7616
        %v7618 = vrot.slane %v7351, 4
        %v7619 = vsel %vm492, %v7618, %v7287
        %v7620 = vrot.slane %v7287, 4
        %v7621 = vsel %vm492, %v7351, %v7620
        %v7623 = vunpack.c.l.s4 1983009808
        %v7624 = vunpack.c.0.s8 %v7623
        %v7625 = vperm.slane %v7619, %v7624
        %v7627 = vunpack.c.l.s4 1983009808
        %v7628 = vunpack.c.0.s8 %v7627
        %v7629 = vperm.slane %v7621, %v7628
        %v7630 = vrot.slane %v7447, 4
        %v7631 = vsel %vm492, %v7630, %v7383
        %v7632 = vrot.slane %v7383, 4
        %v7633 = vsel %vm492, %v7447, %v7632
        %v7635 = vunpack.c.l.s4 1983009808
        %v7636 = vunpack.c.0.s8 %v7635
        %v7637 = vperm.slane %v7631, %v7636
        %v7639 = vunpack.c.l.s4 1983009808
        %v7640 = vunpack.c.0.s8 %v7639
        %v7641 = vperm.slane %v7633, %v7640
        %v7642 = vrot.slane %v7479, 4
        %v7643 = vsel %vm492, %v7642, %v7415
        %v7644 = vrot.slane %v7415, 4
        %v7645 = vsel %vm492, %v7479, %v7644
        %v7647 = vunpack.c.l.s4 1983009808
        %v7648 = vunpack.c.0.s8 %v7647
        %v7649 = vperm.slane %v7643, %v7648
        %v7651 = vunpack.c.l.s4 1983009808
        %v7652 = vunpack.c.0.s8 %v7651
        %v7653 = vperm.slane %v7645, %v7652
        %v7654 = vrot.slane %v7625, 4
        %v7655 = vsel %vm492, %v7654, %v7613
        %v7656 = vrot.slane %v7613, 4
        %v7657 = vsel %vm492, %v7625, %v7656
        %v7659 = vunpack.c.l.s4 1934713408
        %v7660 = vunpack.c.0.s8 %v7659
        %v7661 = vperm.slane %v7655, %v7660
        %v7663 = vunpack.c.l.s4 1934713408
        %v7664 = vunpack.c.0.s8 %v7663
        %v7665 = vperm.slane %v7657, %v7664
        %v7666 = vrot.slane %v7629, 4
        %v7667 = vsel %vm492, %v7666, %v7617
        %v7668 = vrot.slane %v7617, 4
        %v7669 = vsel %vm492, %v7629, %v7668
        %v7671 = vunpack.c.l.s4 1934713408
        %v7672 = vunpack.c.0.s8 %v7671
        %v7673 = vperm.slane %v7667, %v7672
        %v7675 = vunpack.c.l.s4 1934713408
        %v7676 = vunpack.c.0.s8 %v7675
        %v7677 = vperm.slane %v7669, %v7676
        %v7678 = vrot.slane %v7649, 4
        %v7679 = vsel %vm492, %v7678, %v7637
        %v7680 = vrot.slane %v7637, 4
        %v7681 = vsel %vm492, %v7649, %v7680
        %v7683 = vunpack.c.l.s4 1934713408
        %v7684 = vunpack.c.0.s8 %v7683
        %v7685 = vperm.slane %v7679, %v7684
        %v7687 = vunpack.c.l.s4 1934713408
        %v7688 = vunpack.c.0.s8 %v7687
        %v7689 = vperm.slane %v7681, %v7688
        %v7690 = vrot.slane %v7653, 4
        %v7691 = vsel %vm492, %v7690, %v7641
        %v7692 = vrot.slane %v7641, 4
        %v7693 = vsel %vm492, %v7653, %v7692
        %v7695 = vunpack.c.l.s4 1934713408
        %v7696 = vunpack.c.0.s8 %v7695
        %v7697 = vperm.slane %v7691, %v7696
        %v7699 = vunpack.c.l.s4 1934713408
        %v7700 = vunpack.c.0.s8 %v7699
        %v7701 = vperm.slane %v7693, %v7700
        %v7702 = vrot.slane %v7685, 4
        %v7703 = vsel %vm492, %v7702, %v7661
        %v7704 = vrot.slane %v7661, 4
        %v7705 = vsel %vm492, %v7685, %v7704
        %v7706 = vrot.slane %v7689, 4
        %v7707 = vsel %vm492, %v7706, %v7665
        %v7708 = vrot.slane %v7665, 4
        %v7709 = vsel %vm492, %v7689, %v7708
        %v7710 = vrot.slane %v7697, 4
        %v7711 = vsel %vm492, %v7710, %v7673
        %v7712 = vrot.slane %v7673, 4
        %v7713 = vsel %vm492, %v7697, %v7712
        %v7714 = vrot.slane %v7701, 4
        %v7715 = vsel %vm492, %v7714, %v7677
        %v7716 = vrot.slane %v7677, 4
        %v7717 = vsel %vm492, %v7701, %v7716
        %v7718 = vrot.slane %v7320, 4
        %v7719 = vsel %vm492, %v7718, %v7256
        %v7720 = vrot.slane %v7256, 4
        %v7721 = vsel %vm492, %v7320, %v7720
        %v7723 = vunpack.c.l.s4 1983009808
        %v7724 = vunpack.c.0.s8 %v7723
        %v7725 = vperm.slane %v7719, %v7724
        %v7727 = vunpack.c.l.s4 1983009808
        %v7728 = vunpack.c.0.s8 %v7727
        %v7729 = vperm.slane %v7721, %v7728
        %v7730 = vrot.slane %v7352, 4
        %v7731 = vsel %vm492, %v7730, %v7288
        %v7732 = vrot.slane %v7288, 4
        %v7733 = vsel %vm492, %v7352, %v7732
        %v7735 = vunpack.c.l.s4 1983009808
        %v7736 = vunpack.c.0.s8 %v7735
        %v7737 = vperm.slane %v7731, %v7736
        %v7739 = vunpack.c.l.s4 1983009808
        %v7740 = vunpack.c.0.s8 %v7739
        %v7741 = vperm.slane %v7733, %v7740
        %v7742 = vrot.slane %v7448, 4
        %v7743 = vsel %vm492, %v7742, %v7384
        %v7744 = vrot.slane %v7384, 4
        %v7745 = vsel %vm492, %v7448, %v7744
        %v7747 = vunpack.c.l.s4 1983009808
        %v7748 = vunpack.c.0.s8 %v7747
        %v7749 = vperm.slane %v7743, %v7748
        %v7751 = vunpack.c.l.s4 1983009808
        %v7752 = vunpack.c.0.s8 %v7751
        %v7753 = vperm.slane %v7745, %v7752
        %v7754 = vrot.slane %v7480, 4
        %v7755 = vsel %vm492, %v7754, %v7416
        %v7756 = vrot.slane %v7416, 4
        %v7757 = vsel %vm492, %v7480, %v7756
        %v7759 = vunpack.c.l.s4 1983009808
        %v7760 = vunpack.c.0.s8 %v7759
        %v7761 = vperm.slane %v7755, %v7760
        %v7763 = vunpack.c.l.s4 1983009808
        %v7764 = vunpack.c.0.s8 %v7763
        %v7765 = vperm.slane %v7757, %v7764
        %v7766 = vrot.slane %v7737, 4
        %v7767 = vsel %vm492, %v7766, %v7725
        %v7768 = vrot.slane %v7725, 4
        %v7769 = vsel %vm492, %v7737, %v7768
        %v7771 = vunpack.c.l.s4 1934713408
        %v7772 = vunpack.c.0.s8 %v7771
        %v7773 = vperm.slane %v7767, %v7772
        %v7775 = vunpack.c.l.s4 1934713408
        %v7776 = vunpack.c.0.s8 %v7775
        %v7777 = vperm.slane %v7769, %v7776
        %v7778 = vrot.slane %v7741, 4
        %v7779 = vsel %vm492, %v7778, %v7729
        %v7780 = vrot.slane %v7729, 4
        %v7781 = vsel %vm492, %v7741, %v7780
        %v7783 = vunpack.c.l.s4 1934713408
        %v7784 = vunpack.c.0.s8 %v7783
        %v7785 = vperm.slane %v7779, %v7784
        %v7787 = vunpack.c.l.s4 1934713408
        %v7788 = vunpack.c.0.s8 %v7787
        %v7789 = vperm.slane %v7781, %v7788
        %v7790 = vrot.slane %v7761, 4
        %v7791 = vsel %vm492, %v7790, %v7749
        %v7792 = vrot.slane %v7749, 4
        %v7793 = vsel %vm492, %v7761, %v7792
        %v7795 = vunpack.c.l.s4 1934713408
        %v7796 = vunpack.c.0.s8 %v7795
        %v7797 = vperm.slane %v7791, %v7796
        %v7799 = vunpack.c.l.s4 1934713408
        %v7800 = vunpack.c.0.s8 %v7799
        %v7801 = vperm.slane %v7793, %v7800
        %v7802 = vrot.slane %v7765, 4
        %v7803 = vsel %vm492, %v7802, %v7753
        %v7804 = vrot.slane %v7753, 4
        %v7805 = vsel %vm492, %v7765, %v7804
        %v7807 = vunpack.c.l.s4 1934713408
        %v7808 = vunpack.c.0.s8 %v7807
        %v7809 = vperm.slane %v7803, %v7808
        %v7811 = vunpack.c.l.s4 1934713408
        %v7812 = vunpack.c.0.s8 %v7811
        %v7813 = vperm.slane %v7805, %v7812
        %v7814 = vrot.slane %v7797, 4
        %v7815 = vsel %vm492, %v7814, %v7773
        %v7816 = vrot.slane %v7773, 4
        %v7817 = vsel %vm492, %v7797, %v7816
        %v7818 = vrot.slane %v7801, 4
        %v7819 = vsel %vm492, %v7818, %v7777
        %v7820 = vrot.slane %v7777, 4
        %v7821 = vsel %vm492, %v7801, %v7820
        %v7822 = vrot.slane %v7809, 4
        %v7823 = vsel %vm492, %v7822, %v7785
        %v7824 = vrot.slane %v7785, 4
        %v7825 = vsel %vm492, %v7809, %v7824
        %v7826 = vrot.slane %v7813, 4
        %v7827 = vsel %vm492, %v7826, %v7789
        %v7828 = vrot.slane %v7789, 4
        %v7829 = vsel %vm492, %v7813, %v7828
        %v7830 = vrot.slane %v7321, 4
        %v7831 = vsel %vm492, %v7830, %v7257
        %v7832 = vrot.slane %v7257, 4
        %v7833 = vsel %vm492, %v7321, %v7832
        %v7835 = vunpack.c.l.s4 1983009808
        %v7836 = vunpack.c.0.s8 %v7835
        %v7837 = vperm.slane %v7831, %v7836
        %v7839 = vunpack.c.l.s4 1983009808
        %v7840 = vunpack.c.0.s8 %v7839
        %v7841 = vperm.slane %v7833, %v7840
        %v7842 = vrot.slane %v7353, 4
        %v7843 = vsel %vm492, %v7842, %v7289
        %v7844 = vrot.slane %v7289, 4
        %v7845 = vsel %vm492, %v7353, %v7844
        %v7847 = vunpack.c.l.s4 1983009808
        %v7848 = vunpack.c.0.s8 %v7847
        %v7849 = vperm.slane %v7843, %v7848
        %v7851 = vunpack.c.l.s4 1983009808
        %v7852 = vunpack.c.0.s8 %v7851
        %v7853 = vperm.slane %v7845, %v7852
        %v7854 = vrot.slane %v7449, 4
        %v7855 = vsel %vm492, %v7854, %v7385
        %v7856 = vrot.slane %v7385, 4
        %v7857 = vsel %vm492, %v7449, %v7856
        %v7859 = vunpack.c.l.s4 1983009808
        %v7860 = vunpack.c.0.s8 %v7859
        %v7861 = vperm.slane %v7855, %v7860
        %v7863 = vunpack.c.l.s4 1983009808
        %v7864 = vunpack.c.0.s8 %v7863
        %v7865 = vperm.slane %v7857, %v7864
        %v7866 = vrot.slane %v7481, 4
        %v7867 = vsel %vm492, %v7866, %v7417
        %v7868 = vrot.slane %v7417, 4
        %v7869 = vsel %vm492, %v7481, %v7868
        %v7871 = vunpack.c.l.s4 1983009808
        %v7872 = vunpack.c.0.s8 %v7871
        %v7873 = vperm.slane %v7867, %v7872
        %v7875 = vunpack.c.l.s4 1983009808
        %v7876 = vunpack.c.0.s8 %v7875
        %v7877 = vperm.slane %v7869, %v7876
        %v7878 = vrot.slane %v7849, 4
        %v7879 = vsel %vm492, %v7878, %v7837
        %v7880 = vrot.slane %v7837, 4
        %v7881 = vsel %vm492, %v7849, %v7880
        %v7883 = vunpack.c.l.s4 1934713408
        %v7884 = vunpack.c.0.s8 %v7883
        %v7885 = vperm.slane %v7879, %v7884
        %v7887 = vunpack.c.l.s4 1934713408
        %v7888 = vunpack.c.0.s8 %v7887
        %v7889 = vperm.slane %v7881, %v7888
        %v7890 = vrot.slane %v7853, 4
        %v7891 = vsel %vm492, %v7890, %v7841
        %v7892 = vrot.slane %v7841, 4
        %v7893 = vsel %vm492, %v7853, %v7892
        %v7895 = vunpack.c.l.s4 1934713408
        %v7896 = vunpack.c.0.s8 %v7895
        %v7897 = vperm.slane %v7891, %v7896
        %v7899 = vunpack.c.l.s4 1934713408
        %v7900 = vunpack.c.0.s8 %v7899
        %v7901 = vperm.slane %v7893, %v7900
        %v7902 = vrot.slane %v7873, 4
        %v7903 = vsel %vm492, %v7902, %v7861
        %v7904 = vrot.slane %v7861, 4
        %v7905 = vsel %vm492, %v7873, %v7904
        %v7907 = vunpack.c.l.s4 1934713408
        %v7908 = vunpack.c.0.s8 %v7907
        %v7909 = vperm.slane %v7903, %v7908
        %v7911 = vunpack.c.l.s4 1934713408
        %v7912 = vunpack.c.0.s8 %v7911
        %v7913 = vperm.slane %v7905, %v7912
        %v7914 = vrot.slane %v7877, 4
        %v7915 = vsel %vm492, %v7914, %v7865
        %v7916 = vrot.slane %v7865, 4
        %v7917 = vsel %vm492, %v7877, %v7916
        %v7919 = vunpack.c.l.s4 1934713408
        %v7920 = vunpack.c.0.s8 %v7919
        %v7921 = vperm.slane %v7915, %v7920
        %v7923 = vunpack.c.l.s4 1934713408
        %v7924 = vunpack.c.0.s8 %v7923
        %v7925 = vperm.slane %v7917, %v7924
        %v7926 = vrot.slane %v7909, 4
        %v7927 = vsel %vm492, %v7926, %v7885
        %v7928 = vrot.slane %v7885, 4
        %v7929 = vsel %vm492, %v7909, %v7928
        %v7930 = vrot.slane %v7913, 4
        %v7931 = vsel %vm492, %v7930, %v7889
        %v7932 = vrot.slane %v7889, 4
        %v7933 = vsel %vm492, %v7913, %v7932
        %v7934 = vrot.slane %v7921, 4
        %v7935 = vsel %vm492, %v7934, %v7897
        %v7936 = vrot.slane %v7897, 4
        %v7937 = vsel %vm492, %v7921, %v7936
        %v7938 = vrot.slane %v7925, 4
        %v7939 = vsel %vm492, %v7938, %v7901
        %v7940 = vrot.slane %v7901, 4
        %v7941 = vsel %vm492, %v7925, %v7940
        %7943 = vrot.lane.b32.xlu0 %v7593, 16
        %v7944 = vpop.permute.xlu0 %7943
        %7947 = vrot.lane.b32.xlu0 %v7595, 32
        %v7948 = vpop.permute.xlu0 %7947
        %7951 = vrot.lane.b32.xlu0 %v7597, 48
        %v7952 = vpop.permute.xlu0 %7951
        %7955 = vrot.lane.b32.xlu0 %v7599, 64
        %v7956 = vpop.permute.xlu0 %7955
        %7959 = vrot.lane.b32.xlu0 %v7601, 80
        %v7960 = vpop.permute.xlu0 %7959
        %7963 = vrot.lane.b32.xlu0 %v7603, 96
        %v7964 = vpop.permute.xlu0 %7963
        %7967 = vrot.lane.b32.xlu0 %v7605, 112
        %v7968 = vpop.permute.xlu0 %7967
        %7971 = vrot.lane.b32.xlu0 %v7705, 16
        %v7972 = vpop.permute.xlu0 %7971
        %7975 = vrot.lane.b32.xlu0 %v7707, 32
        %v7976 = vpop.permute.xlu0 %7975
        %7979 = vrot.lane.b32.xlu0 %v7709, 48
        %v7980 = vpop.permute.xlu0 %7979
        %7983 = vrot.lane.b32.xlu0 %v7711, 64
        %v7984 = vpop.permute.xlu0 %7983
        %7987 = vrot.lane.b32.xlu0 %v7713, 80
        %v7988 = vpop.permute.xlu0 %7987
        %7991 = vrot.lane.b32.xlu0 %v7715, 96
        %v7992 = vpop.permute.xlu0 %7991
        %7995 = vrot.lane.b32.xlu0 %v7717, 112
        %v7996 = vpop.permute.xlu0 %7995
        %7999 = vrot.lane.b32.xlu0 %v7817, 16
        %v8000 = vpop.permute.xlu0 %7999
        %8003 = vrot.lane.b32.xlu0 %v7819, 32
        %v8004 = vpop.permute.xlu0 %8003
        %8007 = vrot.lane.b32.xlu0 %v7821, 48
        %v8008 = vpop.permute.xlu0 %8007
        %8011 = vrot.lane.b32.xlu0 %v7823, 64
        %v8012 = vpop.permute.xlu0 %8011
        %8015 = vrot.lane.b32.xlu0 %v7825, 80
        %v8016 = vpop.permute.xlu0 %8015
        %8019 = vrot.lane.b32.xlu0 %v7827, 96
        %v8020 = vpop.permute.xlu0 %8019
        %8023 = vrot.lane.b32.xlu0 %v7829, 112
        %v8024 = vpop.permute.xlu0 %8023
        %8027 = vrot.lane.b32.xlu0 %v7929, 16
        %v8028 = vpop.permute.xlu0 %8027
        %8031 = vrot.lane.b32.xlu0 %v7931, 32
        %v8032 = vpop.permute.xlu0 %8031
        %8035 = vrot.lane.b32.xlu0 %v7933, 48
        %v8036 = vpop.permute.xlu0 %8035
        %8039 = vrot.lane.b32.xlu0 %v7935, 64
        %v8040 = vpop.permute.xlu0 %8039
        %8043 = vrot.lane.b32.xlu0 %v7937, 80
        %v8044 = vpop.permute.xlu0 %8043
        %8047 = vrot.lane.b32.xlu0 %v7939, 96
        %v8048 = vpop.permute.xlu0 %8047
        %8051 = vrot.lane.b32.xlu0 %v7941, 112
        %v8052 = vpop.permute.xlu0 %8051
        %v8054 = vsel %vm2342, %v7591, %v7944
        %v8055 = vsel %vm1204, %v8054, %v7948
        %v8056 = vsel %vm2407, %v8055, %v7952
        %v8057 = vsel %vm2440, %v8056, %v7956
        %v8058 = vsel %vm2473, %v8057, %v7960
        %v8059 = vsel %vm2506, %v8058, %v7964
        %v8060 = vsel %vm2539, %v8059, %v7968
        %v8061 = vsel %vm2342, %v7703, %v7972
        %v8062 = vsel %vm1204, %v8061, %v7976
        %v8063 = vsel %vm2407, %v8062, %v7980
        %v8064 = vsel %vm2440, %v8063, %v7984
        %v8065 = vsel %vm2473, %v8064, %v7988
        %v8066 = vsel %vm2506, %v8065, %v7992
        %v8067 = vsel %vm2539, %v8066, %v7996
        %v8068 = vsel %vm2342, %v7815, %v8000
        %v8069 = vsel %vm1204, %v8068, %v8004
        %v8070 = vsel %vm2407, %v8069, %v8008
        %v8071 = vsel %vm2440, %v8070, %v8012
        %v8072 = vsel %vm2473, %v8071, %v8016
        %v8073 = vsel %vm2506, %v8072, %v8020
        %v8074 = vsel %vm2539, %v8073, %v8024
        %v8075 = vsel %vm2342, %v7927, %v8028
        %v8076 = vsel %vm1204, %v8075, %v8032
        %v8077 = vsel %vm2407, %v8076, %v8036
        %v8078 = vsel %vm2440, %v8077, %v8040
        %v8079 = vsel %vm2473, %v8078, %v8044
        %v8080 = vsel %vm2506, %v8079, %v8048
        %v8081 = vsel %vm2539, %v8080, %v8052
        %8082 = vst [vmem:[%s398] sm:$0xff] %v8060
        %8083 = vst [vmem:[%s398 + $0x8] sm:$0xff] %v8067
        %8084 = vst [vmem:[%s398 + $0x10] sm:$0xff] %v8074
        %8085 = vst [vmem:[%s398 + $0x18] sm:$0xff] %v8081
        %s8086 = sand.u32 %s230, 1
        %s8087 = scalar_lea.sflag [#allocation4], %s8086
        %s8088 = sand.u32 %s230, 1
        %s8089 = smul.addr %s8088, 32
        %s8090 = scalar_lea.vmem [#allocation10], %s8089
        // Predicated region
        $region73: #{tpu_custom_call.1} parent=55 // pred_check
          %p8091 = pneg %p240
        $region74: #{tpu_custom_call.1} parent=55 // pred_check_branch
          %8093 = sbr.rel (%p8091) target = $region76
        $region75: #{tpu_custom_call.1} parent=55 // pred_region
          %8095 = vsyncadd %s8087, 0
          %s8096 = smul.addr %s28, 4
          %s8097 = smul.addr %s8096, 8
          %s8098 = scalar_lea.hbm %s9, %s8097
          %s8100 = sshll.u32 %s8090, 4
          %s8101 = int_to_ptr.vmem [resolvable:$true] %s8100
          %s8102 = sshll.u32 %s8098, 4
          %s8103 = int_to_ptr.hbm [resolvable:$true] %s8102
          %8105 = dma.vmem_to_hbm [thread:$0]  %s8101, 512, %s8103, %s8087
        $region76: #{tpu_custom_call.1} parent=55 // pred_fallthru
          _
      $region56: #{tpu_custom_call.1} parent=5 // pred_fallthru
        _
      %p8106 = scmp.le.s32.totalorder 2, %s23
      // Predicated region
      $region77: #{tpu_custom_call.1} parent=5 // pred_check
        %p8107 = pneg %p8106
      $region78: #{tpu_custom_call.1} parent=5 // pred_check_branch
        %8109 = sbr.rel (%p8107) target = $region80
      $region79: #{tpu_custom_call.1} parent=5 // pred_region
        %s8110 = ssub.s32 %s23, 2
        // Predicated region
        $region81: #{tpu_custom_call.1} parent=79 // pred_check
          %p8111 = pneg %p246
        $region82: #{tpu_custom_call.1} parent=79 // pred_check_branch
          %8113 = sbr.rel (%p8111) target = $region84
        $region83: #{tpu_custom_call.1} parent=79 // pred_region
          %s8114 = sand.u32 %s231, 1
          %s8115 = scalar_lea.sflag [#allocation4], %s8114
          %s8116 = sand.u32 %s231, 1
          %s8117 = smul.addr %s8116, 32
          %s8118 = scalar_lea.vmem [#allocation10], %s8117
          %8120 = dma.done %s8115, 512
        $region84: #{tpu_custom_call.1} parent=79 // pred_fallthru
          _
      $region80: #{tpu_custom_call.1} parent=5 // pred_fallthru
        _
    $region6: #{tpu_custom_call.1} parent=1 // loop_footer
      %s27 = sadd.s32 1, %s23
    $region7: #{tpu_custom_call.1} parent=1 // loop_footer_branch
      %22 = sbr.rel target = $region3
    $region8: #{tpu_custom_call.1} parent=1 // loop_exit
      _
    %8121 = vsyncpa [#allocation3], 1
    %s8122 = scalar_lea.sflag [#allocation3], 1
    %8123 = vsyncpa %s8122, 1
    %8124 = vsyncpa [#allocation6], 1
    %8125 = vsyncpa [#allocation9], 1
    %8126 = vsyncpa [#allocation4], 1
    %s8127 = scalar_lea.sflag [#allocation4], 1
    %8128 = vsyncpa %s8127, 1

</llo_original>
